<compile_context>
chip_gen: v6e
topology: v6e:2x2x1
jax: 0.10.0
libtpu: 0.0.40
codegen_flags: <defaults>
</compile_context>

<pallas_src>
import jax
import jax.numpy as jnp
from jax.experimental import pallas as pl
from jax.experimental.pallas import tpu as pltpu

NEG_SLOPE = 0.01  # F.leaky_relu default


def _leaky(v):
    return jnp.where(v > 0, v, NEG_SLOPE * v)


# ---------------------------------------------------------------------------
# Fused conv3x3(stride 1, pad 1) + bias + leaky_relu + maxpool2x2.
# Kernel computes, for one image and one spatial tile of the *pooled* output:
#   acc_p = W(Cout, Kpad) @ Xcol_phase_p(Kpad, TN)      for p in 0..3
#   out   = leaky( max_p(acc_p) + bias )                 (Cout, TN)  lane-dense
# ---------------------------------------------------------------------------
def conv_pool_kernel(x_ref, w_ref, b_ref, o_ref):
    # x_ref: (1, 4, Kpad, TN), w_ref: (Cout, Kpad), b_ref: (Cout, 1)
    w = w_ref[...]
    m = jnp.dot(w, x_ref[0, 0], preferred_element_type=jnp.float32)
    for p in range(1, 4):
        m = jnp.maximum(
            m, jnp.dot(w, x_ref[0, p], preferred_element_type=jnp.float32))
    o_ref[0] = _leaky(m + b_ref[...]).astype(o_ref.dtype)


def conv3x3_leaky_pool(x_bchw, w_oihw, bias, *, spatial_tile=256):
    """x: (B, Cin, H, W) f32 -> pooled activation (B, Cout, (H//2)*(W//2)) f32."""
    B, Cin, H, W = x_bchw.shape
    Cout = w_oihw.shape[0]
    Ho, Wo = H // 2, W // 2
    HoWo = Ho * Wo
    K = 9 * Cin
    Kpad = ((K + 7) // 8) * 8          # 27 -> 32 for conv1; 288 stays 288 for conv2

    # Phase-wise patch extraction (cheap XLA strided slices, channels-first,
    # K order = (ci, kh, kw) to match w.reshape(Cout, Cin*9)).
    xp = jnp.pad(x_bchw, ((0, 0), (0, 0), (1, 1), (1, 1)))
    phases = []
    for py in range(2):
        for px in range(2):
            taps = [xp[:, :, py + kh: py + kh + H: 2, px + kw: px + kw + W: 2]
                    for kh in range(3) for kw in range(3)]
            phases.append(jnp.stack(taps, axis=2).reshape(B, K, HoWo))
    x_col = jnp.stack(phases, axis=1)                      # (B, 4, K, Ho*Wo)

    w_col = w_oihw.reshape(Cout, K)                        # (Cout, 9*Cin)
    if Kpad != K:
        x_col = jnp.pad(x_col, ((0, 0), (0, 0), (0, Kpad - K), (0, 0)))
        w_col = jnp.pad(w_col, ((0, 0), (0, Kpad - K)))
    b2d = bias.reshape(Cout, 1)

    tn = min(spatial_tile, HoWo)
    assert HoWo % tn == 0 and tn % 128 == 0
    nt = HoWo // tn

    out = pl.pallas_call(
        conv_pool_kernel,
        out_shape=jax.ShapeDtypeStruct((B, Cout, HoWo), jnp.float32),
        grid_spec=pltpu.PrefetchScalarGridSpec(
            num_scalar_prefetch=0,
            grid=(B, nt),
            in_specs=[
                pl.BlockSpec((1, 4, Kpad, tn), lambda b, j: (b, 0, 0, j)),
                pl.BlockSpec((Cout, Kpad), lambda b, j: (0, 0)),
                pl.BlockSpec((Cout, 1), lambda b, j: (0, 0)),
            ],
            out_specs=pl.BlockSpec((1, Cout, tn), lambda b, j: (b, 0, j)),
        ),
        compiler_params=pltpu.CompilerParams(
            dimension_semantics=("parallel", "parallel")),
    )(x_col, w_col, b2d)
    return out                                              # (B, Cout, Ho*Wo)


# ---------------------------------------------------------------------------
# FC head: fc1 (16384 -> 128) + leaky_relu + fc2 (128 -> 2).
# K-tiled (tk=8192 -> 2 weight-streaming steps) with a VMEM accumulator.
# Weights stay in PyTorch (out, in) layout; the contraction uses an in-kernel
# transposed matmul, so no 8 MiB host-side transpose is materialized.
# ---------------------------------------------------------------------------
def fc_head_kernel(x_ref, w1_ref, b1_ref, w2_ref, b2_ref, o_ref, acc_ref):
    k = pl.program_id(0)

    @pl.when(k == 0)
    def _():
        acc_ref[...] = jnp.zeros_like(acc_ref)

    # (B, tk) @ (H1, tk)^T -> (B, H1)
    acc_ref[...] += jnp.dot(x_ref[...], w1_ref[...].T,
                            preferred_element_type=jnp.float32)

    @pl.when(k == pl.num_programs(0) - 1)
    def _():
        h = _leaky(acc_ref[...] + b1_ref[...])
        o_ref[...] = (jnp.dot(h, w2_ref[...].T,
                              preferred_element_type=jnp.float32)
                      + b2_ref[...]).astype(o_ref.dtype)


def fc_head(feats, fc1_w, fc1_b, fc2_w, fc2_b, *, tk=8192):
    B, K = feats.shape
    H1 = fc1_w.shape[0]   # 128
    O = fc2_w.shape[0]    # 2
    assert K % tk == 0, "fc_head: reduction dim must be divisible by tk"
    nk = K // tk
    b1 = fc1_b.reshape(1, H1)
    b2 = fc2_b.reshape(1, O)

    # Note (v7x): the only grid axis is the weight-streaming reduction ("arbitrary").
    # At B=2 splitting work across the 2 TensorCores would double the dominant
    # fc1-weight HBM traffic, so the head intentionally stays single-core; add a
    # leading parallel batch axis here if batch grows.
    return pl.pallas_call(
        fc_head_kernel,
        out_shape=jax.ShapeDtypeStruct((B, O), jnp.float32),
        grid_spec=pltpu.PrefetchScalarGridSpec(
            num_scalar_prefetch=0,
            grid=(nk,),
            in_specs=[
                pl.BlockSpec((B, tk), lambda k: (0, k)),
                pl.BlockSpec((H1, tk), lambda k: (0, k)),
                pl.BlockSpec((1, H1), lambda k: (0, 0)),
                pl.BlockSpec((O, H1), lambda k: (0, 0)),
                pl.BlockSpec((1, O), lambda k: (0, 0)),
            ],
            out_specs=pl.BlockSpec((B, O), lambda k: (0, 0)),
            scratch_shapes=[pltpu.VMEM((B, H1), jnp.float32)],
        ),
        compiler_params=pltpu.CompilerParams(
            dimension_semantics=("arbitrary",)),
    )(feats, fc1_w, b1, fc2_w, b2)


# ---------------------------------------------------------------------------
# Full forward pass (input is PyTorch-style NCHW; stays channels-first throughout)
# ---------------------------------------------------------------------------
def anime_cnn_forward(x_nchw, params):
    B = x_nchw.shape[0]
    # conv1 + leaky + pool : (B, 3, 64, 64) -> (B, 32, 32*32)
    x = conv3x3_leaky_pool(x_nchw, params["conv1_w"], params["conv1_b"],
                           spatial_tile=256)
    x = x.reshape(B, 32, 32, 32)          # free metadata reshape back to (B, C, H, W)
    # conv2 + leaky + pool : (B, 32, 32, 32) -> (B, 64, 16*16)
    x = conv3x3_leaky_pool(x, params["conv2_w"], params["conv2_b"],
                           spatial_tile=128)
    # Already (C, H, W)-ordered, so this matches PyTorch's x.view(-1, 64*16*16)
    # with no transpose.
    feats = x.reshape(B, 64 * 16 * 16)
    return fc_head(feats, params["fc1_w"], params["fc1_b"],
                   params["fc2_w"], params["fc2_b"], tk=8192)


def init_params(key):
    ks = jax.random.split(key, 8)

    def u(k, shape, fan_in):
        bound = 1.0 / jnp.sqrt(jnp.float32(fan_in))
        return jax.random.uniform(k, shape, jnp.float32, -bound, bound)

    return {
        "conv1_w": u(ks[0], (32, 3, 3, 3), 3 * 9),
        "conv1_b": u(ks[1], (32,), 3 * 9),
        "conv2_w": u(ks[2], (64, 32, 3, 3), 32 * 9),
        "conv2_b": u(ks[3], (64,), 32 * 9),
        "fc1_w":   u(ks[4], (128, 64 * 16 * 16), 64 * 16 * 16),
        "fc1_b":   u(ks[5], (128,), 64 * 16 * 16),
        "fc2_w":   u(ks[6], (2, 128), 128),
        "fc2_b":   u(ks[7], (2,), 128),
    }


if __name__ == "__main__":
    key = jax.random.PRNGKey(0)
    pkey, xkey = jax.random.split(key)
    params = init_params(pkey)
    # fc1 = Linear(64*16*16, 128) implies a 64x64 spatial input after two 2x pools.
    x = jax.random.normal(xkey, (2, 3, 64, 64), jnp.float32)

    out = jax.jit(anime_cnn_forward)(x, params)
    jax.block_until_ready(out)
    assert out.shape == (2, 2) and out.dtype == jnp.float32
    print("KERNEL_OK")
</pallas_src>

<mosaic_0001>
module attributes {stable_mosaic.version = 11 : i64} {
  func.func @conv_pool_kernel(%arg0: i32, %arg1: i32, %arg2: memref<1x4x32x256xf32, #tpu.memory_space<vmem>>, %arg3: memref<32x32xf32, #tpu.memory_space<vmem>>, %arg4: memref<32x1xf32, #tpu.memory_space<vmem>>, %arg5: memref<1x32x256xf32, #tpu.memory_space<vmem>>) attributes {dimension_semantics = [#tpu.dimension_semantics<parallel>, #tpu.dimension_semantics<parallel>], iteration_bounds = array<i64: 2, 4>, scalar_prefetch = 0 : i64, scratch_operands = 0 : i64, tpu.core_type = #tpu.core_type<tc>, window_params = [{transform_indices = @transform_0, window_bounds = array<i64: 1, 4, 32, 256>}, {pipeline_mode = #tpu.pipeline_mode<synchronous>, transform_indices = @transform_1, window_bounds = array<i64: 32, 32>}, {pipeline_mode = #tpu.pipeline_mode<synchronous>, transform_indices = @transform_2, window_bounds = array<i64: 32, 1>}, {transform_indices = @transform_3, window_bounds = array<i64: 1, 32, 256>}]} {
    %c0 = arith.constant 0 : index
    %c0_0 = arith.constant 0 : index
    %0 = vector.load %arg3[%c0, %c0_0] : memref<32x32xf32, #tpu.memory_space<vmem>>, vector<32x32xf32>
    %c0_1 = arith.constant 0 : index
    %c0_2 = arith.constant 0 : index
    %c0_3 = arith.constant 0 : index
    %c0_4 = arith.constant 0 : index
    %1 = vector.load %arg2[%c0_1, %c0_2, %c0_3, %c0_4] : memref<1x4x32x256xf32, #tpu.memory_space<vmem>>, vector<1x1x32x256xf32>
    %2 = vector.shape_cast %1 : vector<1x1x32x256xf32> to vector<32x256xf32>
    %cst = arith.constant dense<0.000000e+00> : vector<32x256xf32>
    %3 = tpu.matmul %0, %2, %cst {dimension_numbers = #tpu.dot_dimension_numbers<[1], [0], [0], [1], [0, 0, 1, 1], [], []>} : vector<32x32xf32>, vector<32x256xf32>, vector<32x256xf32> -> vector<32x256xf32>
    %c0_5 = arith.constant 0 : index
    %c1 = arith.constant 1 : index
    %c0_6 = arith.constant 0 : index
    %c0_7 = arith.constant 0 : index
    %4 = vector.load %arg2[%c0_5, %c1, %c0_6, %c0_7] : memref<1x4x32x256xf32, #tpu.memory_space<vmem>>, vector<1x1x32x256xf32>
    %5 = vector.shape_cast %4 : vector<1x1x32x256xf32> to vector<32x256xf32>
    %cst_8 = arith.constant dense<0.000000e+00> : vector<32x256xf32>
    %6 = tpu.matmul %0, %5, %cst_8 {dimension_numbers = #tpu.dot_dimension_numbers<[1], [0], [0], [1], [0, 0, 1, 1], [], []>} : vector<32x32xf32>, vector<32x256xf32>, vector<32x256xf32> -> vector<32x256xf32>
    %7 = arith.maximumf %3, %6 : vector<32x256xf32>
    %c0_9 = arith.constant 0 : index
    %c2 = arith.constant 2 : index
    %c0_10 = arith.constant 0 : index
    %c0_11 = arith.constant 0 : index
    %8 = vector.load %arg2[%c0_9, %c2, %c0_10, %c0_11] : memref<1x4x32x256xf32, #tpu.memory_space<vmem>>, vector<1x1x32x256xf32>
    %9 = vector.shape_cast %8 : vector<1x1x32x256xf32> to vector<32x256xf32>
    %cst_12 = arith.constant dense<0.000000e+00> : vector<32x256xf32>
    %10 = tpu.matmul %0, %9, %cst_12 {dimension_numbers = #tpu.dot_dimension_numbers<[1], [0], [0], [1], [0, 0, 1, 1], [], []>} : vector<32x32xf32>, vector<32x256xf32>, vector<32x256xf32> -> vector<32x256xf32>
    %11 = arith.maximumf %7, %10 : vector<32x256xf32>
    %c0_13 = arith.constant 0 : index
    %c3 = arith.constant 3 : index
    %c0_14 = arith.constant 0 : index
    %c0_15 = arith.constant 0 : index
    %12 = vector.load %arg2[%c0_13, %c3, %c0_14, %c0_15] : memref<1x4x32x256xf32, #tpu.memory_space<vmem>>, vector<1x1x32x256xf32>
    %13 = vector.shape_cast %12 : vector<1x1x32x256xf32> to vector<32x256xf32>
    %cst_16 = arith.constant dense<0.000000e+00> : vector<32x256xf32>
    %14 = tpu.matmul %0, %13, %cst_16 {dimension_numbers = #tpu.dot_dimension_numbers<[1], [0], [0], [1], [0, 0, 1, 1], [], []>} : vector<32x32xf32>, vector<32x256xf32>, vector<32x256xf32> -> vector<32x256xf32>
    %15 = arith.maximumf %11, %14 : vector<32x256xf32>
    %c0_17 = arith.constant 0 : index
    %c0_18 = arith.constant 0 : index
    %16 = vector.load %arg4[%c0_17, %c0_18] : memref<32x1xf32, #tpu.memory_space<vmem>>, vector<32x1xf32>
    %17 = vector.broadcast %16 : vector<32x1xf32> to vector<32x256xf32>
    %18 = arith.addf %15, %17 : vector<32x256xf32>
    %cst_19 = arith.constant 0.000000e+00 : f32
    %19 = vector.broadcast %cst_19 : f32 to vector<32x256xf32>
    %20 = arith.cmpf ogt, %18, %19 : vector<32x256xf32>
    %cst_20 = arith.constant 0.00999999977 : f32
    %21 = vector.broadcast %cst_20 : f32 to vector<32x256xf32>
    %22 = arith.mulf %21, %18 : vector<32x256xf32>
    %23 = arith.select %20, %18, %22 : vector<32x256xi1>, vector<32x256xf32>
    %c0_21 = arith.constant 0 : index
    %c0_22 = arith.constant 0 : index
    %c0_23 = arith.constant 0 : index
    %24 = vector.load %arg5[%c0_21, %c0_22, %c0_23] : memref<1x32x256xf32, #tpu.memory_space<vmem>>, vector<1x32x256xf32>
    %25 = vector.shape_cast %24 : vector<1x32x256xf32> to vector<32x256xf32>
    %26 = vector.shape_cast %23 : vector<32x256xf32> to vector<1x32x256xf32>
    tpu.vector_store %arg5[%c0_21, %c0_22, %c0_23], %26 {strides = array<i32>} : memref<1x32x256xf32, #tpu.memory_space<vmem>>, vector<1x32x256xf32>,
    return
  }
  func.func @transform_0(%arg0: i32, %arg1: i32) -> (i32, i32, i32, i32) {
    %c0_i32 = arith.constant 0 : i32
    %c0_i32_0 = arith.constant 0 : i32
    %c0_i32_1 = arith.constant 0 : i32
    return %arg0, %c0_i32, %c0_i32_0, %arg1 : i32, i32, i32, i32
  }
  func.func @transform_1(%arg0: i32, %arg1: i32) -> (i32, i32) {
    %c0_i32 = arith.constant 0 : i32
    %c0_i32_0 = arith.constant 0 : i32
    %c0_i32_1 = arith.constant 0 : i32
    return %c0_i32, %c0_i32_0 : i32, i32
  }
  func.func @transform_2(%arg0: i32, %arg1: i32) -> (i32, i32) {
    %c0_i32 = arith.constant 0 : i32
    %c0_i32_0 = arith.constant 0 : i32
    %c0_i32_1 = arith.constant 0 : i32
    return %c0_i32, %c0_i32_0 : i32, i32
  }
  func.func @transform_3(%arg0: i32, %arg1: i32) -> (i32, i32, i32) {
    %c0_i32 = arith.constant 0 : i32
    %c0_i32_0 = arith.constant 0 : i32
    return %arg0, %c0_i32, %arg1 : i32, i32, i32
  }
}

module attributes {stable_mosaic.version = 11 : i64} {
  func.func @conv_pool_kernel(%arg0: i32, %arg1: i32, %arg2: memref<1x4x288x128xf32, #tpu.memory_space<vmem>>, %arg3: memref<64x288xf32, #tpu.memory_space<vmem>>, %arg4: memref<64x1xf32, #tpu.memory_space<vmem>>, %arg5: memref<1x64x128xf32, #tpu.memory_space<vmem>>) attributes {dimension_semantics = [#tpu.dimension_semantics<parallel>, #tpu.dimension_semantics<parallel>], iteration_bounds = array<i64: 2, 2>, scalar_prefetch = 0 : i64, scratch_operands = 0 : i64, tpu.core_type = #tpu.core_type<tc>, window_params = [{transform_indices = @transform_0, window_bounds = array<i64: 1, 4, 288, 128>}, {pipeline_mode = #tpu.pipeline_mode<synchronous>, transform_indices = @transform_1, window_bounds = array<i64: 64, 288>}, {pipeline_mode = #tpu.pipeline_mode<synchronous>, transform_indices = @transform_2, window_bounds = array<i64: 64, 1>}, {transform_indices = @transform_3, window_bounds = array<i64: 1, 64, 128>}]} {
    %c0 = arith.constant 0 : index
    %c0_0 = arith.constant 0 : index
    %0 = vector.load %arg3[%c0, %c0_0] : memref<64x288xf32, #tpu.memory_space<vmem>>, vector<64x288xf32>
    %c0_1 = arith.constant 0 : index
    %c0_2 = arith.constant 0 : index
    %c0_3 = arith.constant 0 : index
    %c0_4 = arith.constant 0 : index
    %1 = vector.load %arg2[%c0_1, %c0_2, %c0_3, %c0_4] : memref<1x4x288x128xf32, #tpu.memory_space<vmem>>, vector<1x1x288x128xf32>
    %2 = vector.shape_cast %1 : vector<1x1x288x128xf32> to vector<288x128xf32>
    %cst = arith.constant dense<0.000000e+00> : vector<64x128xf32>
    %3 = tpu.matmul %0, %2, %cst {dimension_numbers = #tpu.dot_dimension_numbers<[1], [0], [0], [1], [0, 0, 1, 1], [], []>} : vector<64x288xf32>, vector<288x128xf32>, vector<64x128xf32> -> vector<64x128xf32>
    %c0_5 = arith.constant 0 : index
    %c1 = arith.constant 1 : index
    %c0_6 = arith.constant 0 : index
    %c0_7 = arith.constant 0 : index
    %4 = vector.load %arg2[%c0_5, %c1, %c0_6, %c0_7] : memref<1x4x288x128xf32, #tpu.memory_space<vmem>>, vector<1x1x288x128xf32>
    %5 = vector.shape_cast %4 : vector<1x1x288x128xf32> to vector<288x128xf32>
    %cst_8 = arith.constant dense<0.000000e+00> : vector<64x128xf32>
    %6 = tpu.matmul %0, %5, %cst_8 {dimension_numbers = #tpu.dot_dimension_numbers<[1], [0], [0], [1], [0, 0, 1, 1], [], []>} : vector<64x288xf32>, vector<288x128xf32>, vector<64x128xf32> -> vector<64x128xf32>
    %7 = arith.maximumf %3, %6 : vector<64x128xf32>
    %c0_9 = arith.constant 0 : index
    %c2 = arith.constant 2 : index
    %c0_10 = arith.constant 0 : index
    %c0_11 = arith.constant 0 : index
    %8 = vector.load %arg2[%c0_9, %c2, %c0_10, %c0_11] : memref<1x4x288x128xf32, #tpu.memory_space<vmem>>, vector<1x1x288x128xf32>
    %9 = vector.shape_cast %8 : vector<1x1x288x128xf32> to vector<288x128xf32>
    %cst_12 = arith.constant dense<0.000000e+00> : vector<64x128xf32>
    %10 = tpu.matmul %0, %9, %cst_12 {dimension_numbers = #tpu.dot_dimension_numbers<[1], [0], [0], [1], [0, 0, 1, 1], [], []>} : vector<64x288xf32>, vector<288x128xf32>, vector<64x128xf32> -> vector<64x128xf32>
    %11 = arith.maximumf %7, %10 : vector<64x128xf32>
    %c0_13 = arith.constant 0 : index
    %c3 = arith.constant 3 : index
    %c0_14 = arith.constant 0 : index
    %c0_15 = arith.constant 0 : index
    %12 = vector.load %arg2[%c0_13, %c3, %c0_14, %c0_15] : memref<1x4x288x128xf32, #tpu.memory_space<vmem>>, vector<1x1x288x128xf32>
    %13 = vector.shape_cast %12 : vector<1x1x288x128xf32> to vector<288x128xf32>
    %cst_16 = arith.constant dense<0.000000e+00> : vector<64x128xf32>
    %14 = tpu.matmul %0, %13, %cst_16 {dimension_numbers = #tpu.dot_dimension_numbers<[1], [0], [0], [1], [0, 0, 1, 1], [], []>} : vector<64x288xf32>, vector<288x128xf32>, vector<64x128xf32> -> vector<64x128xf32>
    %15 = arith.maximumf %11, %14 : vector<64x128xf32>
    %c0_17 = arith.constant 0 : index
    %c0_18 = arith.constant 0 : index
    %16 = vector.load %arg4[%c0_17, %c0_18] : memref<64x1xf32, #tpu.memory_space<vmem>>, vector<64x1xf32>
    %17 = vector.broadcast %16 : vector<64x1xf32> to vector<64x128xf32>
    %18 = arith.addf %15, %17 : vector<64x128xf32>
    %cst_19 = arith.constant 0.000000e+00 : f32
    %19 = vector.broadcast %cst_19 : f32 to vector<64x128xf32>
    %20 = arith.cmpf ogt, %18, %19 : vector<64x128xf32>
    %cst_20 = arith.constant 0.00999999977 : f32
    %21 = vector.broadcast %cst_20 : f32 to vector<64x128xf32>
    %22 = arith.mulf %21, %18 : vector<64x128xf32>
    %23 = arith.select %20, %18, %22 : vector<64x128xi1>, vector<64x128xf32>
    %c0_21 = arith.constant 0 : index
    %c0_22 = arith.constant 0 : index
    %c0_23 = arith.constant 0 : index
    %24 = vector.load %arg5[%c0_21, %c0_22, %c0_23] : memref<1x64x128xf32, #tpu.memory_space<vmem>>, vector<1x64x128xf32>
    %25 = vector.shape_cast %24 : vector<1x64x128xf32> to vector<64x128xf32>
    %26 = vector.shape_cast %23 : vector<64x128xf32> to vector<1x64x128xf32>
    tpu.vector_store %arg5[%c0_21, %c0_22, %c0_23], %26 {strides = array<i32>} : memref<1x64x128xf32, #tpu.memory_space<vmem>>, vector<1x64x128xf32>,
    return
  }
  func.func @transform_0(%arg0: i32, %arg1: i32) -> (i32, i32, i32, i32) {
    %c0_i32 = arith.constant 0 : i32
    %c0_i32_0 = arith.constant 0 : i32
    %c0_i32_1 = arith.constant 0 : i32
    return %arg0, %c0_i32, %c0_i32_0, %arg1 : i32, i32, i32, i32
  }
  func.func @transform_1(%arg0: i32, %arg1: i32) -> (i32, i32) {
    %c0_i32 = arith.constant 0 : i32
    %c0_i32_0 = arith.constant 0 : i32
    %c0_i32_1 = arith.constant 0 : i32
    return %c0_i32, %c0_i32_0 : i32, i32
  }
  func.func @transform_2(%arg0: i32, %arg1: i32) -> (i32, i32) {
    %c0_i32 = arith.constant 0 : i32
    %c0_i32_0 = arith.constant 0 : i32
    %c0_i32_1 = arith.constant 0 : i32
    return %c0_i32, %c0_i32_0 : i32, i32
  }
  func.func @transform_3(%arg0: i32, %arg1: i32) -> (i32, i32, i32) {
    %c0_i32 = arith.constant 0 : i32
    %c0_i32_0 = arith.constant 0 : i32
    return %arg0, %c0_i32, %arg1 : i32, i32, i32
  }
}

module attributes {stable_mosaic.version = 11 : i64} {
  func.func @fc_head_kernel(%arg0: i32, %arg1: memref<2x8192xf32, #tpu.memory_space<vmem>>, %arg2: memref<128x8192xf32, #tpu.memory_space<vmem>>, %arg3: memref<1x128xf32, #tpu.memory_space<vmem>>, %arg4: memref<2x128xf32, #tpu.memory_space<vmem>>, %arg5: memref<1x2xf32, #tpu.memory_space<vmem>>, %arg6: memref<2x2xf32, #tpu.memory_space<vmem>>, %arg7: memref<2x128xf32, #tpu.memory_space<vmem>>) attributes {dimension_semantics = [#tpu.dimension_semantics<arbitrary>], iteration_bounds = array<i64: 2>, scalar_prefetch = 0 : i64, scratch_operands = 1 : i64, tpu.core_type = #tpu.core_type<tc>, window_params = [{transform_indices = @transform_0, window_bounds = array<i64: 2, 8192>}, {transform_indices = @transform_1, window_bounds = array<i64: 128, 8192>}, {pipeline_mode = #tpu.pipeline_mode<synchronous>, transform_indices = @transform_2, window_bounds = array<i64: 1, 128>}, {pipeline_mode = #tpu.pipeline_mode<synchronous>, transform_indices = @transform_3, window_bounds = array<i64: 2, 128>}, {pipeline_mode = #tpu.pipeline_mode<synchronous>, transform_indices = @transform_4, window_bounds = array<i64: 1, 2>}, {pipeline_mode = #tpu.pipeline_mode<synchronous>, transform_indices = @transform_5, window_bounds = array<i64: 2, 2>}]} {
    %c0_i32 = arith.constant 0 : i32
    %0 = arith.cmpi eq, %arg0, %c0_i32 : i32
    %1 = arith.extui %0 : i1 to i32
    %c0_i32_0 = arith.constant 0 : i32
    %2 = arith.cmpi ne, %1, %c0_i32_0 : i32
    scf.if %2 {
      %cst_9 = arith.constant 0.000000e+00 : f32
      %13 = vector.broadcast %cst_9 : f32 to vector<2x128xf32>
      %c0_10 = arith.constant 0 : index
      %c0_11 = arith.constant 0 : index
      %14 = vector.load %arg7[%c0_10, %c0_11] : memref<2x128xf32, #tpu.memory_space<vmem>>, vector<2x128xf32>
      tpu.vector_store %arg7[%c0_10, %c0_11], %13 {strides = array<i32>} : memref<2x128xf32, #tpu.memory_space<vmem>>, vector<2x128xf32>,
    } else {
    }
    %c0 = arith.constant 0 : index
    %c0_1 = arith.constant 0 : index
    %3 = vector.load %arg7[%c0, %c0_1] : memref<2x128xf32, #tpu.memory_space<vmem>>, vector<2x128xf32>
    %c0_2 = arith.constant 0 : index
    %c0_3 = arith.constant 0 : index
    %4 = vector.load %arg1[%c0_2, %c0_3] : memref<2x8192xf32, #tpu.memory_space<vmem>>, vector<2x8192xf32>
    %c0_4 = arith.constant 0 : index
    %c0_5 = arith.constant 0 : index
    %5 = vector.load %arg2[%c0_4, %c0_5] : memref<128x8192xf32, #tpu.memory_space<vmem>>, vector<128x8192xf32>
    %6 = tpu.transpose %5, [1, 0] : vector<128x8192xf32> -> vector<8192x128xf32>
    %cst = arith.constant dense<0.000000e+00> : vector<2x128xf32>
    %7 = tpu.matmul %4, %6, %cst {dimension_numbers = #tpu.dot_dimension_numbers<[1], [0], [0], [1], [0, 0, 1, 1], [], []>} : vector<2x8192xf32>, vector<8192x128xf32>, vector<2x128xf32> -> vector<2x128xf32>
    %8 = arith.addf %3, %7 : vector<2x128xf32>
    %c0_6 = arith.constant 0 : index
    %c0_7 = arith.constant 0 : index
    %9 = vector.load %arg7[%c0_6, %c0_7] : memref<2x128xf32, #tpu.memory_space<vmem>>, vector<2x128xf32>
    tpu.vector_store %arg7[%c0_6, %c0_7], %8 {strides = array<i32>} : memref<2x128xf32, #tpu.memory_space<vmem>>, vector<2x128xf32>,
    %c1_i32 = arith.constant 1 : i32
    %10 = arith.cmpi eq, %arg0, %c1_i32 : i32
    %11 = arith.extui %10 : i1 to i32
    %c0_i32_8 = arith.constant 0 : i32
    %12 = arith.cmpi ne, %11, %c0_i32_8 : i32
    scf.if %12 {
      %c0_9 = arith.constant 0 : index
      %c0_10 = arith.constant 0 : index
      %13 = vector.load %arg7[%c0_9, %c0_10] : memref<2x128xf32, #tpu.memory_space<vmem>>, vector<2x128xf32>
      %c0_11 = arith.constant 0 : index
      %c0_12 = arith.constant 0 : index
      %14 = vector.load %arg3[%c0_11, %c0_12] : memref<1x128xf32, #tpu.memory_space<vmem>>, vector<1x128xf32>
      %15 = vector.broadcast %14 : vector<1x128xf32> to vector<2x128xf32>
      %16 = arith.addf %13, %15 : vector<2x128xf32>
      %cst_13 = arith.constant 0.000000e+00 : f32
      %17 = vector.broadcast %cst_13 : f32 to vector<2x128xf32>
      %18 = arith.cmpf ogt, %16, %17 : vector<2x128xf32>
      %cst_14 = arith.constant 0.00999999977 : f32
      %19 = vector.broadcast %cst_14 : f32 to vector<2x128xf32>
      %20 = arith.mulf %19, %16 : vector<2x128xf32>
      %21 = arith.select %18, %16, %20 : vector<2x128xi1>, vector<2x128xf32>
      %c0_15 = arith.constant 0 : index
      %c0_16 = arith.constant 0 : index
      %22 = vector.load %arg4[%c0_15, %c0_16] : memref<2x128xf32, #tpu.memory_space<vmem>>, vector<2x128xf32>
      %23 = tpu.transpose %22, [1, 0] : vector<2x128xf32> -> vector<128x2xf32>
      %cst_17 = arith.constant dense<0.000000e+00> : vector<2x2xf32>
      %24 = tpu.matmul %21, %23, %cst_17 {dimension_numbers = #tpu.dot_dimension_numbers<[1], [0], [0], [1], [0, 0, 1, 1], [], []>} : vector<2x128xf32>, vector<128x2xf32>, vector<2x2xf32> -> vector<2x2xf32>
      %c0_18 = arith.constant 0 : index
      %c0_19 = arith.constant 0 : index
      %25 = vector.load %arg5[%c0_18, %c0_19] : memref<1x2xf32, #tpu.memory_space<vmem>>, vector<1x2xf32>
      %26 = vector.broadcast %25 : vector<1x2xf32> to vector<2x2xf32>
      %27 = arith.addf %24, %26 : vector<2x2xf32>
      %c0_20 = arith.constant 0 : index
      %c0_21 = arith.constant 0 : index
      %28 = vector.load %arg6[%c0_20, %c0_21] : memref<2x2xf32, #tpu.memory_space<vmem>>, vector<2x2xf32>
      tpu.vector_store %arg6[%c0_20, %c0_21], %27 {strides = array<i32>} : memref<2x2xf32, #tpu.memory_space<vmem>>, vector<2x2xf32>,
    } else {
    }
    return
  }
  func.func @transform_0(%arg0: i32) -> (i32, i32) {
    %c0_i32 = arith.constant 0 : i32
    %c0_i32_0 = arith.constant 0 : i32
    return %c0_i32, %arg0 : i32, i32
  }
  func.func @transform_1(%arg0: i32) -> (i32, i32) {
    %c0_i32 = arith.constant 0 : i32
    %c0_i32_0 = arith.constant 0 : i32
    return %c0_i32, %arg0 : i32, i32
  }
  func.func @transform_2(%arg0: i32) -> (i32, i32) {
    %c0_i32 = arith.constant 0 : i32
    %c0_i32_0 = arith.constant 0 : i32
    %c0_i32_1 = arith.constant 0 : i32
    return %c0_i32, %c0_i32_0 : i32, i32
  }
  func.func @transform_3(%arg0: i32) -> (i32, i32) {
    %c0_i32 = arith.constant 0 : i32
    %c0_i32_0 = arith.constant 0 : i32
    %c0_i32_1 = arith.constant 0 : i32
    return %c0_i32, %c0_i32_0 : i32, i32
  }
  func.func @transform_4(%arg0: i32) -> (i32, i32) {
    %c0_i32 = arith.constant 0 : i32
    %c0_i32_0 = arith.constant 0 : i32
    %c0_i32_1 = arith.constant 0 : i32
    return %c0_i32, %c0_i32_0 : i32, i32
  }
  func.func @transform_5(%arg0: i32) -> (i32, i32) {
    %c0_i32 = arith.constant 0 : i32
    %c0_i32_0 = arith.constant 0 : i32
    %c0_i32_1 = arith.constant 0 : i32
    return %c0_i32, %c0_i32_0 : i32, i32
  }
}

</mosaic_0001>

<llo_original>
// kernel: anime_cnn_forward.3
$region0: #{anime_cnn_forward.3}
  #allocation0 [shape = 'u32[]', space=smem, size = 0x4, offset = 0x4, fixed_abs, tag = 'smem constant byte address 0x4 - core index']
  #allocation1 [shape = 'u32[144,128]{1,0:T(1,128)}', space=vmem, size = 0x12000, scoped, tag = 'internal scratch']
  %s0 = inlined_call_operand.vmem [shape: f32[2,4,32,1024], index: 0, kind: input, shape index: {}]
  %s1 = inlined_call_operand.vmem [shape: f32[32,32], index: 1, kind: input, shape index: {}]
  %s2 = inlined_call_operand.vmem [shape: f32[32,1], index: 2, kind: input, shape index: {}]
  %s3 = inlined_call_operand.vmem [shape: f32[2,32,1024], index: 3, kind: output, shape index: {}]
  %s4 = sld [smem:[#allocation0]]
  $region87: #{anime_cnn_forward.3} parent=0
    _
  %s6 = ssub.s32 1, %s4
  %s7 = scalar_select 0, %s6, %s4
  $region1: #{anime_cnn_forward.3} parent=0
    #allocation2 [shape = 'u8[262144]{0}', space=vmem, size = 0x40000, scoped, tag = 'input window, operand 0']
    #allocation3 [shape = 'u8[65536]{0}', space=vmem, size = 0x10000, scoped, tag = 'output window, operand 0']
    loop: start=0, step=1, limit=10
    $region2: #{anime_cnn_forward.3} parent=1 // loop_pre_header
      _
    $region3: #{anime_cnn_forward.3} parent=1 // loop_header
      %s9 = sphi 0, %s13
      %p10 = scmp.ge.s32.totalorder %s9, 10
      %s16 = sphi 0, %s28
      %s17 = sphi 0, %s24
      %s18 = sphi 0, %s16
      %s19 = sphi 0, %s17
      %s20 = sphi 0, %s18
      %s21 = sphi 0, %s19
      %s33 = sphi 0, %s35
      %s36 = sphi 0, %s33
      %s37 = sphi 0, %s36
      %s53 = sphi 0, %s37
      %s57 = sphi 0, %s57
      %s59 = sphi 0, %s57
      %s60 = sphi 0, %s59
      %s74 = sphi 0, %s60
      %s78 = sphi 0, %s78
      %s80 = sphi 0, %s78
      %s81 = sphi 0, %s80
      %s95 = sphi 0, %s81
      %s103 = sphi 0, %s105
      %s106 = sphi 0, %s103
      %s107 = sphi 0, %s106
      %s123 = sphi 0, %s107
    $region4: #{anime_cnn_forward.3} parent=1 // loop_header_branch
      %12 = sbr.rel (%p10) target = $region8
    $region5: #{anime_cnn_forward.3} parent=1 // loop_body
      %s14 = ssub.s32 %s9, 1
      %s15 = ssub.s32 %s9, 2
      %s22 = sadd.s32 1, %s17
      %p23 = scmp.ge.s32.totalorder %s22, 4
      %s24 = scalar_select %p23, 0, %s22
      %s25 = sadd.s32 1, %s16
      %s26 = scalar_select %p23, %s25, %s16
      %p27 = scmp.ge.s32.totalorder %s26, 2
      %s28 = scalar_select %p27, 0, %s26
      %s29 = ssub.s32 %s16, %s28
      %s30 = ssub.s32 %s17, %s24
      %s31 = sor.u32 %s29, %s30
      %p32 = scmp.eq.s32.totalorder %s31, 0
      %s34 = sadd.s32 %s33, 1
      %s35 = scalar_select %p32, %s33, %s34
      %p38 = pneg %p32
      %p39 = scmp.eq.s32.totalorder %s9, 7
      %p40 = por %p38, %p39
      %p41 = scmp.ne.s32.totalorder %s33, %s36
      %p42 = scmp.eq.s32.totalorder %s9, 0
      %p43 = por %p41, %p42
      %p44 = scmp.ne.s32.totalorder %s33, %s36
      %p45 = scmp.eq.s32.totalorder %s14, 7
      %p46 = por %p44, %p45
      %p47 = scmp.ne.s32.totalorder %s36, %s37
      %p48 = scmp.eq.s32.totalorder %s14, 0
      %p49 = por %p47, %p48
      %p50 = scmp.ne.s32.totalorder %s36, %s37
      %p51 = scmp.eq.s32.totalorder %s15, 7
      %p52 = por %p50, %p51
      %p54 = scmp.ne.s32.totalorder %s37, %s53
      %p55 = scmp.eq.s32.totalorder %s15, 0
      %p56 = por %p54, %p55
      %s58 = sadd.s32 %s57, 1
      %p61 = scmp.eq.s32.totalorder %s9, 7
      %p62 = scmp.ne.s32.totalorder %s57, %s59
      %p63 = scmp.eq.s32.totalorder %s9, 0
      %p64 = por %p62, %p63
      %p65 = scmp.ne.s32.totalorder %s57, %s59
      %p66 = scmp.eq.s32.totalorder %s14, 7
      %p67 = por %p65, %p66
      %p68 = scmp.ne.s32.totalorder %s59, %s60
      %p69 = scmp.eq.s32.totalorder %s14, 0
      %p70 = por %p68, %p69
      %p71 = scmp.ne.s32.totalorder %s59, %s60
      %p72 = scmp.eq.s32.totalorder %s15, 7
      %p73 = por %p71, %p72
      %p75 = scmp.ne.s32.totalorder %s60, %s74
      %p76 = scmp.eq.s32.totalorder %s15, 0
      %p77 = por %p75, %p76
      %s79 = sadd.s32 %s78, 1
      %p82 = scmp.eq.s32.totalorder %s9, 7
      %p83 = scmp.ne.s32.totalorder %s78, %s80
      %p84 = scmp.eq.s32.totalorder %s9, 0
      %p85 = por %p83, %p84
      %p86 = scmp.ne.s32.totalorder %s78, %s80
      %p87 = scmp.eq.s32.totalorder %s14, 7
      %p88 = por %p86, %p87
      %p89 = scmp.ne.s32.totalorder %s80, %s81
      %p90 = scmp.eq.s32.totalorder %s14, 0
      %p91 = por %p89, %p90
      %p92 = scmp.ne.s32.totalorder %s80, %s81
      %p93 = scmp.eq.s32.totalorder %s15, 7
      %p94 = por %p92, %p93
      %p96 = scmp.ne.s32.totalorder %s81, %s95
      %p97 = scmp.eq.s32.totalorder %s15, 0
      %p98 = por %p96, %p97
      %s99 = ssub.s32 %s16, %s28
      %s100 = ssub.s32 %s17, %s24
      %s101 = sor.u32 %s99, %s100
      %p102 = scmp.eq.s32.totalorder %s101, 0
      %s104 = sadd.s32 %s103, 1
      %s105 = scalar_select %p102, %s103, %s104
      %p108 = pneg %p102
      %p109 = scmp.eq.s32.totalorder %s9, 7
      %p110 = por %p108, %p109
      %p111 = scmp.ne.s32.totalorder %s103, %s106
      %p112 = scmp.eq.s32.totalorder %s9, 0
      %p113 = por %p111, %p112
      %p114 = scmp.ne.s32.totalorder %s103, %s106
      %p115 = scmp.eq.s32.totalorder %s14, 7
      %p116 = por %p114, %p115
      %p117 = scmp.ne.s32.totalorder %s106, %s107
      %p118 = scmp.eq.s32.totalorder %s14, 0
      %p119 = por %p117, %p118
      %p120 = scmp.ne.s32.totalorder %s106, %s107
      %p121 = scmp.eq.s32.totalorder %s15, 7
      %p122 = por %p120, %p121
      %p124 = scmp.ne.s32.totalorder %s107, %s123
      %p125 = scmp.eq.s32.totalorder %s15, 0
      %p126 = por %p124, %p125
      %p127 = scmp.le.s32.totalorder 1, %s9
      %p128 = scmp.lt.s32.totalorder %s9, 9
      %p129 = pnand %p127, %p128
      %p130 = pneg %p129
      // Predicated region
      $region9: #{anime_cnn_forward.3} parent=5 // pred_check
        _
      $region10: #{anime_cnn_forward.3} parent=5 // pred_check_branch
        %132 = sbr.rel (%p129) target = $region12
      $region11: #{anime_cnn_forward.3} parent=5 // pred_region
        %s133 = ssub.s32 %s9, 1
        // Predicated region
        $region13: #{anime_cnn_forward.3} parent=11 // pred_check
          %p134 = pneg %p70
        $region14: #{anime_cnn_forward.3} parent=11 // pred_check_branch
          %136 = sbr.rel (%p134) target = $region16
        $region15: #{anime_cnn_forward.3} parent=11 // pred_region
          _
        $region16: #{anime_cnn_forward.3} parent=11 // pred_fallthru
          _
        // Predicated region
        $region17: #{anime_cnn_forward.3} parent=11 // pred_check
          %p137 = pneg %p91
        $region18: #{anime_cnn_forward.3} parent=11 // pred_check_branch
          %139 = sbr.rel (%p137) target = $region20
        $region19: #{anime_cnn_forward.3} parent=11 // pred_region
          _
        $region20: #{anime_cnn_forward.3} parent=11 // pred_fallthru
          _
      $region12: #{anime_cnn_forward.3} parent=5 // pred_fallthru
        _
      %p140 = scmp.lt.s32.totalorder %s9, 8
      // Predicated region
      $region21: #{anime_cnn_forward.3} parent=5 // pred_check
        %p141 = pneg %p140
      $region22: #{anime_cnn_forward.3} parent=5 // pred_check_branch
        %143 = sbr.rel (%p141) target = $region24
      $region23: #{anime_cnn_forward.3} parent=5 // pred_region
        // Predicated region
        $region25: #{anime_cnn_forward.3} parent=23 // pred_check
          %p144 = pneg %p43
        $region26: #{anime_cnn_forward.3} parent=23 // pred_check_branch
          %146 = sbr.rel (%p144) target = $region28
        $region27: #{anime_cnn_forward.3} parent=23 // pred_region
          %s147 = sand.u32 %s33, 1
          %s148 = sand.u32 %s33, 1
          %s149 = smul.addr %s148, 256
          %s150 = scalar_lea.vmem [#allocation2], %s149
          %s151 = smul.u32 2, %s17
          %s152 = smul.addr %s16, 128
          %s153 = sadd.s32 %s151, %s152
          %s154 = smul.addr %s153, 8
          %s155 = scalar_lea.vmem %s0, %s154
          // Predicated region
          $region29: #{anime_cnn_forward.3} parent=27 // pred_check
            _
          $region30: #{anime_cnn_forward.3} parent=27 // pred_check_branch
            %157 = sbr.rel (0) target = $region32
          $region31: #{anime_cnn_forward.3} parent=27 // pred_region
            // Predicated region
            $region33: #{anime_cnn_forward.3} parent=31 // pred_check
              _
            $region34: #{anime_cnn_forward.3} parent=31 // pred_check_branch
              %159 = sbr.rel (0) target = $region36
            $region35: #{anime_cnn_forward.3} parent=31 // pred_region
              loop: start=0, step=1, limit=1
              $region37: #{anime_cnn_forward.3} parent=35 // loop_pre_header
                _
              $region38: #{anime_cnn_forward.3} parent=35 // loop_header
                %s161 = sphi 0, %s165
                %p162 = scmp.ge.s32.totalorder %s161, 1
                %s166 = sphi %s155, %s155
                %s167 = sphi %s150, %s150
              $region39: #{anime_cnn_forward.3} parent=35 // loop_header_branch
                %164 = sbr.rel (%p162) target = $region43
              $region40: #{anime_cnn_forward.3} parent=35 // loop_body
                %v168 = vld [vmem:[%s166] sm:$0xff]
                %169 = vst [vmem:[%s167] sm:$0xff] %v168
                %v170 = vld [vmem:[%s166 + $0x8] sm:$0xff]
                %171 = vst [vmem:[%s167 + $0x8] sm:$0xff] %v170
                %v172 = vld [vmem:[%s166 + $0x40] sm:$0xff]
                %173 = vst [vmem:[%s167 + $0x10] sm:$0xff] %v172
                %v174 = vld [vmem:[%s166 + $0x48] sm:$0xff]
                %175 = vst [vmem:[%s167 + $0x18] sm:$0xff] %v174
                %v176 = vld [vmem:[%s166 + $0x80] sm:$0xff]
                %177 = vst [vmem:[%s167 + $0x20] sm:$0xff] %v176
                %v178 = vld [vmem:[%s166 + $0x88] sm:$0xff]
                %179 = vst [vmem:[%s167 + $0x28] sm:$0xff] %v178
                %v180 = vld [vmem:[%s166 + $0xc0] sm:$0xff]
                %181 = vst [vmem:[%s167 + $0x30] sm:$0xff] %v180
                %v182 = vld [vmem:[%s166 + $0xc8] sm:$0xff]
                %183 = vst [vmem:[%s167 + $0x38] sm:$0xff] %v182
                %v184 = vld [vmem:[%s166 + $0x100] sm:$0xff]
                %185 = vst [vmem:[%s167 + $0x40] sm:$0xff] %v184
                %v186 = vld [vmem:[%s166 + $0x108] sm:$0xff]
                %187 = vst [vmem:[%s167 + $0x48] sm:$0xff] %v186
                %v188 = vld [vmem:[%s166 + $0x140] sm:$0xff]
                %189 = vst [vmem:[%s167 + $0x50] sm:$0xff] %v188
                %v190 = vld [vmem:[%s166 + $0x148] sm:$0xff]
                %191 = vst [vmem:[%s167 + $0x58] sm:$0xff] %v190
                %v192 = vld [vmem:[%s166 + $0x180] sm:$0xff]
                %193 = vst [vmem:[%s167 + $0x60] sm:$0xff] %v192
                %v194 = vld [vmem:[%s166 + $0x188] sm:$0xff]
                %195 = vst [vmem:[%s167 + $0x68] sm:$0xff] %v194
                %v196 = vld [vmem:[%s166 + $0x1c0] sm:$0xff]
                %197 = vst [vmem:[%s167 + $0x70] sm:$0xff] %v196
                %v198 = vld [vmem:[%s166 + $0x1c8] sm:$0xff]
                %199 = vst [vmem:[%s167 + $0x78] sm:$0xff] %v198
                %v200 = vld [vmem:[%s166 + $0x200] sm:$0xff]
                %201 = vst [vmem:[%s167 + $0x80] sm:$0xff] %v200
                %v202 = vld [vmem:[%s166 + $0x208] sm:$0xff]
                %203 = vst [vmem:[%s167 + $0x88] sm:$0xff] %v202
                %v204 = vld [vmem:[%s166 + $0x240] sm:$0xff]
                %205 = vst [vmem:[%s167 + $0x90] sm:$0xff] %v204
                %v206 = vld [vmem:[%s166 + $0x248] sm:$0xff]
                %207 = vst [vmem:[%s167 + $0x98] sm:$0xff] %v206
                %v208 = vld [vmem:[%s166 + $0x280] sm:$0xff]
                %209 = vst [vmem:[%s167 + $0xa0] sm:$0xff] %v208
                %v210 = vld [vmem:[%s166 + $0x288] sm:$0xff]
                %211 = vst [vmem:[%s167 + $0xa8] sm:$0xff] %v210
                %v212 = vld [vmem:[%s166 + $0x2c0] sm:$0xff]
                %213 = vst [vmem:[%s167 + $0xb0] sm:$0xff] %v212
                %v214 = vld [vmem:[%s166 + $0x2c8] sm:$0xff]
                %215 = vst [vmem:[%s167 + $0xb8] sm:$0xff] %v214
                %v216 = vld [vmem:[%s166 + $0x300] sm:$0xff]
                %217 = vst [vmem:[%s167 + $0xc0] sm:$0xff] %v216
                %v218 = vld [vmem:[%s166 + $0x308] sm:$0xff]
                %219 = vst [vmem:[%s167 + $0xc8] sm:$0xff] %v218
                %v220 = vld [vmem:[%s166 + $0x340] sm:$0xff]
                %221 = vst [vmem:[%s167 + $0xd0] sm:$0xff] %v220
                %v222 = vld [vmem:[%s166 + $0x348] sm:$0xff]
                %223 = vst [vmem:[%s167 + $0xd8] sm:$0xff] %v222
                %v224 = vld [vmem:[%s166 + $0x380] sm:$0xff]
                %225 = vst [vmem:[%s167 + $0xe0] sm:$0xff] %v224
                %v226 = vld [vmem:[%s166 + $0x388] sm:$0xff]
                %227 = vst [vmem:[%s167 + $0xe8] sm:$0xff] %v226
                %v228 = vld [vmem:[%s166 + $0x3c0] sm:$0xff]
                %229 = vst [vmem:[%s167 + $0xf0] sm:$0xff] %v228
                %v230 = vld [vmem:[%s166 + $0x3c8] sm:$0xff]
                %231 = vst [vmem:[%s167 + $0xf8] sm:$0xff] %v230
              $region41: #{anime_cnn_forward.3} parent=35 // loop_footer
                %s165 = sadd.s32 1, %s161
              $region42: #{anime_cnn_forward.3} parent=35 // loop_footer_branch
                %160 = sbr.rel target = $region38
              $region43: #{anime_cnn_forward.3} parent=35 // loop_exit
                _
            $region36: #{anime_cnn_forward.3} parent=31 // pred_fallthru
              _
            // Predicated region
            $region44: #{anime_cnn_forward.3} parent=31 // pred_check
              _
            $region45: #{anime_cnn_forward.3} parent=31 // pred_check_branch
              %233 = sbr.rel target = $region47
            $region46: #{anime_cnn_forward.3} parent=31 // pred_region
              _
            $region47: #{anime_cnn_forward.3} parent=31 // pred_fallthru
              _
          $region32: #{anime_cnn_forward.3} parent=27 // pred_fallthru
            _
          %234 = vnop
        $region28: #{anime_cnn_forward.3} parent=23 // pred_fallthru
          _
      $region24: #{anime_cnn_forward.3} parent=5 // pred_fallthru
        _
      %p235 = scmp.le.s32.totalorder 1, %s9
      %p236 = scmp.lt.s32.totalorder %s9, 9
      %p237 = pnand %p235, %p236
      %p238 = pneg %p237
      // Predicated region
      $region48: #{anime_cnn_forward.3} parent=5 // pred_check
        _
      $region49: #{anime_cnn_forward.3} parent=5 // pred_check_branch
        %240 = sbr.rel (%p237) target = $region51
      $region50: #{anime_cnn_forward.3} parent=5 // pred_region
        %s241 = ssub.s32 %s9, 1
        %s242 = sand.u32 %s36, 1
        %s243 = sand.u32 %s36, 1
        %s244 = smul.addr %s243, 256
        %s245 = scalar_lea.vmem [#allocation2], %s244
        // Predicated region
        $region52: #{anime_cnn_forward.3} parent=50 // pred_check
          %p246 = pneg %p49
        $region53: #{anime_cnn_forward.3} parent=50 // pred_check_branch
          %248 = sbr.rel (%p246) target = $region55
        $region54: #{anime_cnn_forward.3} parent=50 // pred_region
          _
        $region55: #{anime_cnn_forward.3} parent=50 // pred_fallthru
          _
        %s249 = sand.u32 %s36, 1
        %s250 = sand.u32 %s36, 1
        %s251 = smul.addr %s250, 256
        %s252 = scalar_lea.vmem [#allocation2], %s251
        %p253 = pneg %p49
        %p254 = pneg %p46
        %p255 = pneg %p70
        %p256 = pneg %p67
        %p257 = pneg %p91
        %p258 = pneg %p88
        %p259 = pneg %p119
        %p260 = pneg %p116
        %s261 = sand.u32 %s106, 1
        %s262 = sand.u32 %s106, 1
        %s263 = smul.addr %s262, 64
        %s264 = scalar_lea.vmem [#allocation3], %s263
        %s265 = smul.u32 2, %s19
        %s266 = smul.u32 2, %s19
        %v267 = vld [vmem:[%s1] sm:$0xff]
        %v268 = vld [vmem:[%s1 + $0x8] sm:$0xff]
        %v269 = vld [vmem:[%s1 + $0x10] sm:$0xff]
        %v270 = vld [vmem:[%s1 + $0x18] sm:$0xff]
        %v271 = vld [vmem:[%s245] sm:$0xff]
        %v272 = vld [vmem:[%s245 + $0x8] sm:$0xff]
        %v273 = vld [vmem:[%s245 + $0x10] sm:$0xff]
        %v274 = vld [vmem:[%s245 + $0x18] sm:$0xff]
        %v275 = vld [vmem:[%s245 + $0x20] sm:$0xff]
        %v276 = vld [vmem:[%s245 + $0x28] sm:$0xff]
        %v277 = vld [vmem:[%s245 + $0x30] sm:$0xff]
        %v278 = vld [vmem:[%s245 + $0x38] sm:$0xff]
        %vm279 = vcmask 261120
        %v281 = vsel %vm279, %v267, 0
        %v284 = vsel %vm279, %v268, 0
        %v287 = vsel %vm279, %v269, 0
        %v290 = vsel %vm279, %v270, 0
        %292 = vmatprep.subr.mxu0 0.0
        %293 = vmatpush1.msra.mxu0 0.0
        %294 = vmatprep.subr.mxu0 0.0
        %295 = vmatpush1.msra.mxu0 0.0
        %296 = vmatprep.subr.mxu0 0.0
        %297 = vmatpush1.msra.mxu0 0.0
        %298 = vmatprep.subr.mxu0 0.0
        %299 = vmatpush1.msra.mxu0 0.0
        %300 = vmatprep.subr.mxu0 0.0
        %301 = vmatpush1.msra.mxu0 0.0
        %302 = vmatprep.subr.mxu0 0.0
        %303 = vmatpush1.msra.mxu0 0.0
        %304 = vmatprep.subr.mxu0 0.0
        %305 = vmatpush1.msra.mxu0 0.0
        %306 = vmatprep.subr.mxu0 0.0
        %307 = vmatpush1.msra.mxu0 0.0
        %308 = vmatprep.subr.mxu0 0.0
        %309 = vmatpush1.msra.mxu0 0.0
        %310 = vmatprep.subr.mxu0 0.0
        %311 = vmatpush1.msra.mxu0 0.0
        %312 = vmatprep.subr.mxu0 0.0
        %313 = vmatpush1.msra.mxu0 0.0
        %314 = vmatprep.subr.mxu0 0.0
        %315 = vmatpush1.msra.mxu0 0.0
        %316 = vmatprep.subr.mxu0 %v278
        %317 = vmatpush1.msra.mxu0 %v277
        %318 = vmatprep.subr.mxu0 %v276
        %319 = vmatpush1.msra.mxu0 %v275
        %320 = vmatprep.subr.mxu0 %v274
        %321 = vmatpush1.msra.mxu0 %v273
        %322 = vmatprep.subr.mxu0 %v272
        %323 = vmatpush1.msra.mxu0 %v271
        %324 = vmatprep.subr.mxu0 0.0
        %325 = vmatpush2.msra.mxu0 0.0
        %326 = vmatprep.subr.mxu0 0.0
        %327 = vmatpush2.msra.mxu0 0.0
        %328 = vmatprep.subr.mxu0 0.0
        %329 = vmatpush2.msra.mxu0 0.0
        %330 = vmatprep.subr.mxu0 0.0
        %331 = vmatpush2.msra.mxu0 0.0
        %332 = vmatprep.subr.mxu0 0.0
        %333 = vmatpush2.msra.mxu0 0.0
        %334 = vmatprep.subr.mxu0 0.0
        %335 = vmatpush2.msra.mxu0 0.0
        %336 = vmatprep.subr.mxu0 0.0
        %337 = vmatpush2.msra.mxu0 0.0
        %338 = vmatprep.subr.mxu0 0.0
        %339 = vmatpush2.msra.mxu0 0.0
        %340 = vmatprep.subr.mxu0 0.0
        %341 = vmatpush2.msra.mxu0 0.0
        %342 = vmatprep.subr.mxu0 0.0
        %343 = vmatpush2.msra.mxu0 0.0
        %344 = vmatprep.subr.mxu0 0.0
        %345 = vmatpush2.msra.mxu0 0.0
        %346 = vmatprep.subr.mxu0 0.0
        %347 = vmatpush2.msra.mxu0 0.0
        %348 = vmatprep.subr.mxu0 0.0
        %349 = vmatpush2.msra.mxu0 0.0
        %350 = vmatprep.subr.mxu0 0.0
        %351 = vmatpush2.msra.mxu0 0.0
        %352 = vmatprep.subr.mxu0 0.0
        %353 = vmatpush2.msra.mxu0 0.0
        %354 = vmatprep.subr.mxu0 0.0
        %355 = vmatpush2.msra.mxu0 0.0
        %356 = vmatprep.mubr.f32.mxu0 0.0
        %357 = vmatmul.mubr.f32.gmra.mxu0 %v281
        %v358 = vpop.f32.mrf.mxu0
        %v359 = vadd.f32 0.0, %v358
        %v360 = vpop.f32.mrf.mxu0
        %v361 = vadd.f32 0.0, %v360
        %362 = vmatprep.mubr.f32.mxu0 0.0
        %363 = vmatmul.mubr.f32.gmra.mxu0 %v284
        %v364 = vpop.f32.mrf.mxu0
        %v365 = vadd.f32 0.0, %v364
        %v366 = vpop.f32.mrf.mxu0
        %v367 = vadd.f32 0.0, %v366
        %368 = vmatprep.mubr.f32.mxu0 0.0
        %369 = vmatmul.mubr.f32.gmra.mxu0 %v287
        %v370 = vpop.f32.mrf.mxu0
        %v371 = vadd.f32 0.0, %v370
        %v372 = vpop.f32.mrf.mxu0
        %v373 = vadd.f32 0.0, %v372
        %374 = vmatprep.mubr.f32.mxu0 0.0
        %375 = vmatmul.mubr.f32.gmra.mxu0 %v290
        %v376 = vpop.f32.mrf.mxu0
        %v377 = vadd.f32 0.0, %v376
        %v378 = vpop.f32.mrf.mxu0
        %v379 = vadd.f32 0.0, %v378
        %380 = vdwg.mxu0
        %s381 = scalar_lea.vmem %s245, 64 [#allocation2]
        %v382 = vld [vmem:[%s381] sm:$0xff]
        %v383 = vld [vmem:[%s381 + $0x8] sm:$0xff]
        %v384 = vld [vmem:[%s381 + $0x10] sm:$0xff]
        %v385 = vld [vmem:[%s381 + $0x18] sm:$0xff]
        %v386 = vld [vmem:[%s381 + $0x20] sm:$0xff]
        %v387 = vld [vmem:[%s381 + $0x28] sm:$0xff]
        %v388 = vld [vmem:[%s381 + $0x30] sm:$0xff]
        %v389 = vld [vmem:[%s381 + $0x38] sm:$0xff]
        %390 = vmatprep.subr.mxu0 0.0
        %391 = vmatpush1.msra.mxu0 0.0
        %392 = vmatprep.subr.mxu0 0.0
        %393 = vmatpush1.msra.mxu0 0.0
        %394 = vmatprep.subr.mxu0 0.0
        %395 = vmatpush1.msra.mxu0 0.0
        %396 = vmatprep.subr.mxu0 0.0
        %397 = vmatpush1.msra.mxu0 0.0
        %398 = vmatprep.subr.mxu0 0.0
        %399 = vmatpush1.msra.mxu0 0.0
        %400 = vmatprep.subr.mxu0 0.0
        %401 = vmatpush1.msra.mxu0 0.0
        %402 = vmatprep.subr.mxu0 0.0
        %403 = vmatpush1.msra.mxu0 0.0
        %404 = vmatprep.subr.mxu0 0.0
        %405 = vmatpush1.msra.mxu0 0.0
        %406 = vmatprep.subr.mxu0 0.0
        %407 = vmatpush1.msra.mxu0 0.0
        %408 = vmatprep.subr.mxu0 0.0
        %409 = vmatpush1.msra.mxu0 0.0
        %410 = vmatprep.subr.mxu0 0.0
        %411 = vmatpush1.msra.mxu0 0.0
        %412 = vmatprep.subr.mxu0 0.0
        %413 = vmatpush1.msra.mxu0 0.0
        %414 = vmatprep.subr.mxu0 %v389
        %415 = vmatpush1.msra.mxu0 %v388
        %416 = vmatprep.subr.mxu0 %v387
        %417 = vmatpush1.msra.mxu0 %v386
        %418 = vmatprep.subr.mxu0 %v385
        %419 = vmatpush1.msra.mxu0 %v384
        %420 = vmatprep.subr.mxu0 %v383
        %421 = vmatpush1.msra.mxu0 %v382
        %422 = vmatprep.subr.mxu0 0.0
        %423 = vmatpush2.msra.mxu0 0.0
        %424 = vmatprep.subr.mxu0 0.0
        %425 = vmatpush2.msra.mxu0 0.0
        %426 = vmatprep.subr.mxu0 0.0
        %427 = vmatpush2.msra.mxu0 0.0
        %428 = vmatprep.subr.mxu0 0.0
        %429 = vmatpush2.msra.mxu0 0.0
        %430 = vmatprep.subr.mxu0 0.0
        %431 = vmatpush2.msra.mxu0 0.0
        %432 = vmatprep.subr.mxu0 0.0
        %433 = vmatpush2.msra.mxu0 0.0
        %434 = vmatprep.subr.mxu0 0.0
        %435 = vmatpush2.msra.mxu0 0.0
        %436 = vmatprep.subr.mxu0 0.0
        %437 = vmatpush2.msra.mxu0 0.0
        %438 = vmatprep.subr.mxu0 0.0
        %439 = vmatpush2.msra.mxu0 0.0
        %440 = vmatprep.subr.mxu0 0.0
        %441 = vmatpush2.msra.mxu0 0.0
        %442 = vmatprep.subr.mxu0 0.0
        %443 = vmatpush2.msra.mxu0 0.0
        %444 = vmatprep.subr.mxu0 0.0
        %445 = vmatpush2.msra.mxu0 0.0
        %446 = vmatprep.subr.mxu0 0.0
        %447 = vmatpush2.msra.mxu0 0.0
        %448 = vmatprep.subr.mxu0 0.0
        %449 = vmatpush2.msra.mxu0 0.0
        %450 = vmatprep.subr.mxu0 0.0
        %451 = vmatpush2.msra.mxu0 0.0
        %452 = vmatprep.subr.mxu0 0.0
        %453 = vmatpush2.msra.mxu0 0.0
        %454 = vmatprep.mubr.f32.mxu0 0.0
        %455 = vmatmul.mubr.f32.gmra.mxu0 %v281
        %v456 = vpop.f32.mrf.mxu0
        %v457 = vadd.f32 0.0, %v456
        %v458 = vpop.f32.mrf.mxu0
        %v459 = vadd.f32 0.0, %v458
        %460 = vmatprep.mubr.f32.mxu0 0.0
        %461 = vmatmul.mubr.f32.gmra.mxu0 %v284
        %v462 = vpop.f32.mrf.mxu0
        %v463 = vadd.f32 0.0, %v462
        %v464 = vpop.f32.mrf.mxu0
        %v465 = vadd.f32 0.0, %v464
        %466 = vmatprep.mubr.f32.mxu0 0.0
        %467 = vmatmul.mubr.f32.gmra.mxu0 %v287
        %v468 = vpop.f32.mrf.mxu0
        %v469 = vadd.f32 0.0, %v468
        %v470 = vpop.f32.mrf.mxu0
        %v471 = vadd.f32 0.0, %v470
        %472 = vmatprep.mubr.f32.mxu0 0.0
        %473 = vmatmul.mubr.f32.gmra.mxu0 %v290
        %v474 = vpop.f32.mrf.mxu0
        %v475 = vadd.f32 0.0, %v474
        %v476 = vpop.f32.mrf.mxu0
        %v477 = vadd.f32 0.0, %v476
        %478 = vdwg.mxu0
        %v479 = vmax.f32 %v359, %v457
        %v480 = vmax.f32 %v361, %v459
        %v481 = vmax.f32 %v365, %v463
        %v482 = vmax.f32 %v367, %v465
        %v483 = vmax.f32 %v371, %v469
        %v484 = vmax.f32 %v373, %v471
        %v485 = vmax.f32 %v377, %v475
        %v486 = vmax.f32 %v379, %v477
        %s487 = scalar_lea.vmem %s245, 128 [#allocation2]
        %v488 = vld [vmem:[%s487] sm:$0xff]
        %v489 = vld [vmem:[%s487 + $0x8] sm:$0xff]
        %v490 = vld [vmem:[%s487 + $0x10] sm:$0xff]
        %v491 = vld [vmem:[%s487 + $0x18] sm:$0xff]
        %v492 = vld [vmem:[%s487 + $0x20] sm:$0xff]
        %v493 = vld [vmem:[%s487 + $0x28] sm:$0xff]
        %v494 = vld [vmem:[%s487 + $0x30] sm:$0xff]
        %v495 = vld [vmem:[%s487 + $0x38] sm:$0xff]
        %496 = vmatprep.subr.mxu0 0.0
        %497 = vmatpush1.msra.mxu0 0.0
        %498 = vmatprep.subr.mxu0 0.0
        %499 = vmatpush1.msra.mxu0 0.0
        %500 = vmatprep.subr.mxu0 0.0
        %501 = vmatpush1.msra.mxu0 0.0
        %502 = vmatprep.subr.mxu0 0.0
        %503 = vmatpush1.msra.mxu0 0.0
        %504 = vmatprep.subr.mxu0 0.0
        %505 = vmatpush1.msra.mxu0 0.0
        %506 = vmatprep.subr.mxu0 0.0
        %507 = vmatpush1.msra.mxu0 0.0
        %508 = vmatprep.subr.mxu0 0.0
        %509 = vmatpush1.msra.mxu0 0.0
        %510 = vmatprep.subr.mxu0 0.0
        %511 = vmatpush1.msra.mxu0 0.0
        %512 = vmatprep.subr.mxu0 0.0
        %513 = vmatpush1.msra.mxu0 0.0
        %514 = vmatprep.subr.mxu0 0.0
        %515 = vmatpush1.msra.mxu0 0.0
        %516 = vmatprep.subr.mxu0 0.0
        %517 = vmatpush1.msra.mxu0 0.0
        %518 = vmatprep.subr.mxu0 0.0
        %519 = vmatpush1.msra.mxu0 0.0
        %520 = vmatprep.subr.mxu0 %v495
        %521 = vmatpush1.msra.mxu0 %v494
        %522 = vmatprep.subr.mxu0 %v493
        %523 = vmatpush1.msra.mxu0 %v492
        %524 = vmatprep.subr.mxu0 %v491
        %525 = vmatpush1.msra.mxu0 %v490
        %526 = vmatprep.subr.mxu0 %v489
        %527 = vmatpush1.msra.mxu0 %v488
        %528 = vmatprep.subr.mxu0 0.0
        %529 = vmatpush2.msra.mxu0 0.0
        %530 = vmatprep.subr.mxu0 0.0
        %531 = vmatpush2.msra.mxu0 0.0
        %532 = vmatprep.subr.mxu0 0.0
        %533 = vmatpush2.msra.mxu0 0.0
        %534 = vmatprep.subr.mxu0 0.0
        %535 = vmatpush2.msra.mxu0 0.0
        %536 = vmatprep.subr.mxu0 0.0
        %537 = vmatpush2.msra.mxu0 0.0
        %538 = vmatprep.subr.mxu0 0.0
        %539 = vmatpush2.msra.mxu0 0.0
        %540 = vmatprep.subr.mxu0 0.0
        %541 = vmatpush2.msra.mxu0 0.0
        %542 = vmatprep.subr.mxu0 0.0
        %543 = vmatpush2.msra.mxu0 0.0
        %544 = vmatprep.subr.mxu0 0.0
        %545 = vmatpush2.msra.mxu0 0.0
        %546 = vmatprep.subr.mxu0 0.0
        %547 = vmatpush2.msra.mxu0 0.0
        %548 = vmatprep.subr.mxu0 0.0
        %549 = vmatpush2.msra.mxu0 0.0
        %550 = vmatprep.subr.mxu0 0.0
        %551 = vmatpush2.msra.mxu0 0.0
        %552 = vmatprep.subr.mxu0 0.0
        %553 = vmatpush2.msra.mxu0 0.0
        %554 = vmatprep.subr.mxu0 0.0
        %555 = vmatpush2.msra.mxu0 0.0
        %556 = vmatprep.subr.mxu0 0.0
        %557 = vmatpush2.msra.mxu0 0.0
        %558 = vmatprep.subr.mxu0 0.0
        %559 = vmatpush2.msra.mxu0 0.0
        %560 = vmatprep.mubr.f32.mxu0 0.0
        %561 = vmatmul.mubr.f32.gmra.mxu0 %v281
        %v562 = vpop.f32.mrf.mxu0
        %v563 = vadd.f32 0.0, %v562
        %v564 = vpop.f32.mrf.mxu0
        %v565 = vadd.f32 0.0, %v564
        %566 = vmatprep.mubr.f32.mxu0 0.0
        %567 = vmatmul.mubr.f32.gmra.mxu0 %v284
        %v568 = vpop.f32.mrf.mxu0
        %v569 = vadd.f32 0.0, %v568
        %v570 = vpop.f32.mrf.mxu0
        %v571 = vadd.f32 0.0, %v570
        %572 = vmatprep.mubr.f32.mxu0 0.0
        %573 = vmatmul.mubr.f32.gmra.mxu0 %v287
        %v574 = vpop.f32.mrf.mxu0
        %v575 = vadd.f32 0.0, %v574
        %v576 = vpop.f32.mrf.mxu0
        %v577 = vadd.f32 0.0, %v576
        %578 = vmatprep.mubr.f32.mxu0 0.0
        %579 = vmatmul.mubr.f32.gmra.mxu0 %v290
        %v580 = vpop.f32.mrf.mxu0
        %v581 = vadd.f32 0.0, %v580
        %v582 = vpop.f32.mrf.mxu0
        %v583 = vadd.f32 0.0, %v582
        %584 = vdwg.mxu0
        %v585 = vmax.f32 %v479, %v563
        %v586 = vmax.f32 %v480, %v565
        %v587 = vmax.f32 %v481, %v569
        %v588 = vmax.f32 %v482, %v571
        %v589 = vmax.f32 %v483, %v575
        %v590 = vmax.f32 %v484, %v577
        %v591 = vmax.f32 %v485, %v581
        %v592 = vmax.f32 %v486, %v583
        %s593 = scalar_lea.vmem %s245, 192 [#allocation2]
        %v594 = vld [vmem:[%s593] sm:$0xff]
        %v595 = vld [vmem:[%s593 + $0x8] sm:$0xff]
        %v596 = vld [vmem:[%s593 + $0x10] sm:$0xff]
        %v597 = vld [vmem:[%s593 + $0x18] sm:$0xff]
        %v598 = vld [vmem:[%s593 + $0x20] sm:$0xff]
        %v599 = vld [vmem:[%s593 + $0x28] sm:$0xff]
        %v600 = vld [vmem:[%s593 + $0x30] sm:$0xff]
        %v601 = vld [vmem:[%s593 + $0x38] sm:$0xff]
        %602 = vmatprep.subr.mxu0 0.0
        %603 = vmatpush1.msra.mxu0 0.0
        %604 = vmatprep.subr.mxu0 0.0
        %605 = vmatpush1.msra.mxu0 0.0
        %606 = vmatprep.subr.mxu0 0.0
        %607 = vmatpush1.msra.mxu0 0.0
        %608 = vmatprep.subr.mxu0 0.0
        %609 = vmatpush1.msra.mxu0 0.0
        %610 = vmatprep.subr.mxu0 0.0
        %611 = vmatpush1.msra.mxu0 0.0
        %612 = vmatprep.subr.mxu0 0.0
        %613 = vmatpush1.msra.mxu0 0.0
        %614 = vmatprep.subr.mxu0 0.0
        %615 = vmatpush1.msra.mxu0 0.0
        %616 = vmatprep.subr.mxu0 0.0
        %617 = vmatpush1.msra.mxu0 0.0
        %618 = vmatprep.subr.mxu0 0.0
        %619 = vmatpush1.msra.mxu0 0.0
        %620 = vmatprep.subr.mxu0 0.0
        %621 = vmatpush1.msra.mxu0 0.0
        %622 = vmatprep.subr.mxu0 0.0
        %623 = vmatpush1.msra.mxu0 0.0
        %624 = vmatprep.subr.mxu0 0.0
        %625 = vmatpush1.msra.mxu0 0.0
        %626 = vmatprep.subr.mxu0 %v601
        %627 = vmatpush1.msra.mxu0 %v600
        %628 = vmatprep.subr.mxu0 %v599
        %629 = vmatpush1.msra.mxu0 %v598
        %630 = vmatprep.subr.mxu0 %v597
        %631 = vmatpush1.msra.mxu0 %v596
        %632 = vmatprep.subr.mxu0 %v595
        %633 = vmatpush1.msra.mxu0 %v594
        %634 = vmatprep.subr.mxu0 0.0
        %635 = vmatpush2.msra.mxu0 0.0
        %636 = vmatprep.subr.mxu0 0.0
        %637 = vmatpush2.msra.mxu0 0.0
        %638 = vmatprep.subr.mxu0 0.0
        %639 = vmatpush2.msra.mxu0 0.0
        %640 = vmatprep.subr.mxu0 0.0
        %641 = vmatpush2.msra.mxu0 0.0
        %642 = vmatprep.subr.mxu0 0.0
        %643 = vmatpush2.msra.mxu0 0.0
        %644 = vmatprep.subr.mxu0 0.0
        %645 = vmatpush2.msra.mxu0 0.0
        %646 = vmatprep.subr.mxu0 0.0
        %647 = vmatpush2.msra.mxu0 0.0
        %648 = vmatprep.subr.mxu0 0.0
        %649 = vmatpush2.msra.mxu0 0.0
        %650 = vmatprep.subr.mxu0 0.0
        %651 = vmatpush2.msra.mxu0 0.0
        %652 = vmatprep.subr.mxu0 0.0
        %653 = vmatpush2.msra.mxu0 0.0
        %654 = vmatprep.subr.mxu0 0.0
        %655 = vmatpush2.msra.mxu0 0.0
        %656 = vmatprep.subr.mxu0 0.0
        %657 = vmatpush2.msra.mxu0 0.0
        %658 = vmatprep.subr.mxu0 0.0
        %659 = vmatpush2.msra.mxu0 0.0
        %660 = vmatprep.subr.mxu0 0.0
        %661 = vmatpush2.msra.mxu0 0.0
        %662 = vmatprep.subr.mxu0 0.0
        %663 = vmatpush2.msra.mxu0 0.0
        %664 = vmatprep.subr.mxu0 0.0
        %665 = vmatpush2.msra.mxu0 0.0
        %666 = vmatprep.mubr.f32.mxu0 0.0
        %667 = vmatmul.mubr.f32.gmra.mxu0 %v281
        %v668 = vpop.f32.mrf.mxu0
        %v669 = vadd.f32 0.0, %v668
        %v670 = vpop.f32.mrf.mxu0
        %v671 = vadd.f32 0.0, %v670
        %672 = vmatprep.mubr.f32.mxu0 0.0
        %673 = vmatmul.mubr.f32.gmra.mxu0 %v284
        %v674 = vpop.f32.mrf.mxu0
        %v675 = vadd.f32 0.0, %v674
        %v676 = vpop.f32.mrf.mxu0
        %v677 = vadd.f32 0.0, %v676
        %678 = vmatprep.mubr.f32.mxu0 0.0
        %679 = vmatmul.mubr.f32.gmra.mxu0 %v287
        %v680 = vpop.f32.mrf.mxu0
        %v681 = vadd.f32 0.0, %v680
        %v682 = vpop.f32.mrf.mxu0
        %v683 = vadd.f32 0.0, %v682
        %684 = vmatprep.mubr.f32.mxu0 0.0
        %685 = vmatmul.mubr.f32.gmra.mxu0 %v290
        %v686 = vpop.f32.mrf.mxu0
        %v687 = vadd.f32 0.0, %v686
        %v688 = vpop.f32.mrf.mxu0
        %v689 = vadd.f32 0.0, %v688
        %690 = vdwg.mxu0
        %v691 = vmax.f32 %v585, %v669
        %v692 = vmax.f32 %v586, %v671
        %v693 = vmax.f32 %v587, %v675
        %v694 = vmax.f32 %v588, %v677
        %v695 = vmax.f32 %v589, %v681
        %v696 = vmax.f32 %v590, %v683
        %v697 = vmax.f32 %v591, %v687
        %v698 = vmax.f32 %v592, %v689
        %v699 = vld [vmem:[%s2] sm:$0xff]
        %v700 = vld [vmem:[%s2 + $0x8] sm:$0xff]
        %v701 = vld [vmem:[%s2 + $0x10] sm:$0xff]
        %v702 = vld [vmem:[%s2 + $0x18] sm:$0xff]
        %704 = vset.pattern.permute.xlu0 0
        %705 = vperm.xlu0 %704, %v699
        %v706 = vpop.permute.xlu0 %705
        %709 = vset.pattern.permute.xlu0 0
        %710 = vperm.xlu0 %709, %v700
        %v711 = vpop.permute.xlu0 %710
        %714 = vset.pattern.permute.xlu0 0
        %715 = vperm.xlu0 %714, %v701
        %v716 = vpop.permute.xlu0 %715
        %719 = vset.pattern.permute.xlu0 0
        %720 = vperm.xlu0 %719, %v702
        %v721 = vpop.permute.xlu0 %720
        %v723 = vadd.f32 %v691, %v706
        %v724 = vadd.f32 %v692, %v706
        %v725 = vadd.f32 %v693, %v711
        %v726 = vadd.f32 %v694, %v711
        %v727 = vadd.f32 %v695, %v716
        %v728 = vadd.f32 %v696, %v716
        %v729 = vadd.f32 %v697, %v721
        %v730 = vadd.f32 %v698, %v721
        %vm731 = vcmp.gt.f32.partialorder %v723, 0.0
        %vm732 = vcmp.gt.f32.partialorder %v724, 0.0
        %vm733 = vcmp.gt.f32.partialorder %v725, 0.0
        %vm734 = vcmp.gt.f32.partialorder %v726, 0.0
        %vm735 = vcmp.gt.f32.partialorder %v727, 0.0
        %vm736 = vcmp.gt.f32.partialorder %v728, 0.0
        %vm737 = vcmp.gt.f32.partialorder %v729, 0.0
        %vm738 = vcmp.gt.f32.partialorder %v730, 0.0
        %v739 = vmul.f32 %v723, 0.01
        %v740 = vmul.f32 %v724, 0.01
        %v741 = vmul.f32 %v725, 0.01
        %v742 = vmul.f32 %v726, 0.01
        %v743 = vmul.f32 %v727, 0.01
        %v744 = vmul.f32 %v728, 0.01
        %v745 = vmul.f32 %v729, 0.01
        %v746 = vmul.f32 %v730, 0.01
        %v747 = vsel %vm731, %v723, %v739
        %v748 = vsel %vm732, %v724, %v740
        %v749 = vsel %vm733, %v725, %v741
        %v750 = vsel %vm734, %v726, %v742
        %v751 = vsel %vm735, %v727, %v743
        %v752 = vsel %vm736, %v728, %v744
        %v753 = vsel %vm737, %v729, %v745
        %v754 = vsel %vm738, %v730, %v746
        %755 = vst [vmem:[%s264] sm:$0xff] %v747
        %756 = vst [vmem:[%s264 + $0x8] sm:$0xff] %v748
        %757 = vst [vmem:[%s264 + $0x10] sm:$0xff] %v749
        %758 = vst [vmem:[%s264 + $0x18] sm:$0xff] %v750
        %759 = vst [vmem:[%s264 + $0x20] sm:$0xff] %v751
        %760 = vst [vmem:[%s264 + $0x28] sm:$0xff] %v752
        %761 = vst [vmem:[%s264 + $0x30] sm:$0xff] %v753
        %762 = vst [vmem:[%s264 + $0x38] sm:$0xff] %v754
        %s763 = sand.u32 %s106, 1
        %s764 = sand.u32 %s106, 1
        %s765 = smul.addr %s764, 64
        %s766 = scalar_lea.vmem [#allocation3], %s765
        // Predicated region
        $region56: #{anime_cnn_forward.3} parent=50 // pred_check
          %p767 = pneg %p116
        $region57: #{anime_cnn_forward.3} parent=50 // pred_check_branch
          %769 = sbr.rel (%p767) target = $region59
        $region58: #{anime_cnn_forward.3} parent=50 // pred_region
          %s770 = smul.u32 2, %s19
          %s771 = smul.addr %s18, 32
          %s772 = sadd.s32 %s770, %s771
          %s773 = smul.addr %s772, 8
          %s774 = scalar_lea.vmem %s3, %s773
          // Predicated region
          $region60: #{anime_cnn_forward.3} parent=58 // pred_check
            _
          $region61: #{anime_cnn_forward.3} parent=58 // pred_check_branch
            %776 = sbr.rel (0) target = $region63
          $region62: #{anime_cnn_forward.3} parent=58 // pred_region
            // Predicated region
            $region64: #{anime_cnn_forward.3} parent=62 // pred_check
              _
            $region65: #{anime_cnn_forward.3} parent=62 // pred_check_branch
              %778 = sbr.rel (0) target = $region67
            $region66: #{anime_cnn_forward.3} parent=62 // pred_region
              loop: start=0, step=1, limit=1
              $region68: #{anime_cnn_forward.3} parent=66 // loop_pre_header
                _
              $region69: #{anime_cnn_forward.3} parent=66 // loop_header
                %s780 = sphi 0, %s784
                %p781 = scmp.ge.s32.totalorder %s780, 1
                %s785 = sphi %s766, %s766
                %s786 = sphi %s774, %s774
              $region70: #{anime_cnn_forward.3} parent=66 // loop_header_branch
                %783 = sbr.rel (%p781) target = $region74
              $region71: #{anime_cnn_forward.3} parent=66 // loop_body
                %v787 = vld [vmem:[%s785] sm:$0xff]
                %788 = vst [vmem:[%s786] sm:$0xff] %v787
                %v789 = vld [vmem:[%s785 + $0x8] sm:$0xff]
                %790 = vst [vmem:[%s786 + $0x8] sm:$0xff] %v789
                %v791 = vld [vmem:[%s785 + $0x10] sm:$0xff]
                %792 = vst [vmem:[%s786 + $0x40] sm:$0xff] %v791
                %v793 = vld [vmem:[%s785 + $0x18] sm:$0xff]
                %794 = vst [vmem:[%s786 + $0x48] sm:$0xff] %v793
                %v795 = vld [vmem:[%s785 + $0x20] sm:$0xff]
                %796 = vst [vmem:[%s786 + $0x80] sm:$0xff] %v795
                %v797 = vld [vmem:[%s785 + $0x28] sm:$0xff]
                %798 = vst [vmem:[%s786 + $0x88] sm:$0xff] %v797
                %v799 = vld [vmem:[%s785 + $0x30] sm:$0xff]
                %800 = vst [vmem:[%s786 + $0xc0] sm:$0xff] %v799
                %v801 = vld [vmem:[%s785 + $0x38] sm:$0xff]
                %802 = vst [vmem:[%s786 + $0xc8] sm:$0xff] %v801
              $region72: #{anime_cnn_forward.3} parent=66 // loop_footer
                %s784 = sadd.s32 1, %s780
              $region73: #{anime_cnn_forward.3} parent=66 // loop_footer_branch
                %779 = sbr.rel target = $region69
              $region74: #{anime_cnn_forward.3} parent=66 // loop_exit
                _
            $region67: #{anime_cnn_forward.3} parent=62 // pred_fallthru
              _
            // Predicated region
            $region75: #{anime_cnn_forward.3} parent=62 // pred_check
              _
            $region76: #{anime_cnn_forward.3} parent=62 // pred_check_branch
              %804 = sbr.rel target = $region78
            $region77: #{anime_cnn_forward.3} parent=62 // pred_region
              _
            $region78: #{anime_cnn_forward.3} parent=62 // pred_fallthru
              _
          $region63: #{anime_cnn_forward.3} parent=58 // pred_fallthru
            _
          %805 = vnop
        $region59: #{anime_cnn_forward.3} parent=50 // pred_fallthru
          _
      $region51: #{anime_cnn_forward.3} parent=5 // pred_fallthru
        _
      %p806 = scmp.le.s32.totalorder 2, %s9
      // Predicated region
      $region79: #{anime_cnn_forward.3} parent=5 // pred_check
        %p807 = pneg %p806
      $region80: #{anime_cnn_forward.3} parent=5 // pred_check_branch
        %809 = sbr.rel (%p807) target = $region82
      $region81: #{anime_cnn_forward.3} parent=5 // pred_region
        %s810 = ssub.s32 %s9, 2
        // Predicated region
        $region83: #{anime_cnn_forward.3} parent=81 // pred_check
          %p811 = pneg %p122
        $region84: #{anime_cnn_forward.3} parent=81 // pred_check_branch
          %813 = sbr.rel (%p811) target = $region86
        $region85: #{anime_cnn_forward.3} parent=81 // pred_region
          %s814 = sand.u32 %s107, 1
          %s815 = sand.u32 %s107, 1
          %s816 = smul.addr %s815, 64
          %s817 = scalar_lea.vmem [#allocation3], %s816
        $region86: #{anime_cnn_forward.3} parent=81 // pred_fallthru
          _
      $region82: #{anime_cnn_forward.3} parent=5 // pred_fallthru
        _
    $region6: #{anime_cnn_forward.3} parent=1 // loop_footer
      %s13 = sadd.s32 1, %s9
    $region7: #{anime_cnn_forward.3} parent=1 // loop_footer_branch
      %8 = sbr.rel target = $region3
    $region8: #{anime_cnn_forward.3} parent=1 // loop_exit
      _

// kernel: anime_cnn_forward.4
$region0: #{anime_cnn_forward.4}
  #allocation0 [shape = 'u32[]', space=smem, size = 0x4, offset = 0x4, fixed_abs, tag = 'smem constant byte address 0x4 - core index']
  #allocation1 [shape = 'u32[144,128]{1,0:T(1,128)}', space=vmem, size = 0x12000, scoped, tag = 'internal scratch']
  %s0 = inlined_call_operand.vmem [shape: f32[2,4,288,256], index: 0, kind: input, shape index: {}]
  %s1 = inlined_call_operand.vmem [shape: f32[64,288], index: 1, kind: input, shape index: {}]
  %s2 = inlined_call_operand.vmem [shape: f32[64,1], index: 2, kind: input, shape index: {}]
  %s3 = inlined_call_operand.vmem [shape: f32[2,64,256], index: 3, kind: output, shape index: {}]
  %s4 = sld [smem:[#allocation0]]
  $region117: #{anime_cnn_forward.4} parent=0
    _
  %s6 = ssub.s32 1, %s4
  %s7 = scalar_select 0, %s6, %s4
  $region1: #{anime_cnn_forward.4} parent=0
    #allocation2 [shape = 'u8[1179648]{0}', space=vmem, size = 0x120000, scoped, tag = 'input window, operand 0']
    #allocation3 [shape = 'u8[65536]{0}', space=vmem, size = 0x10000, scoped, tag = 'output window, operand 0']
    loop: start=0, step=1, limit=6
    $region2: #{anime_cnn_forward.4} parent=1 // loop_pre_header
      _
    $region3: #{anime_cnn_forward.4} parent=1 // loop_header
      %s9 = sphi 0, %s13
      %p10 = scmp.ge.s32.totalorder %s9, 6
      %s16 = sphi 0, %s28
      %s17 = sphi 0, %s24
      %s18 = sphi 0, %s16
      %s19 = sphi 0, %s17
      %s20 = sphi 0, %s18
      %s21 = sphi 0, %s19
      %s33 = sphi 0, %s35
      %s36 = sphi 0, %s33
      %s37 = sphi 0, %s36
      %s53 = sphi 0, %s37
      %s57 = sphi 0, %s57
      %s59 = sphi 0, %s57
      %s60 = sphi 0, %s59
      %s74 = sphi 0, %s60
      %s78 = sphi 0, %s78
      %s80 = sphi 0, %s78
      %s81 = sphi 0, %s80
      %s95 = sphi 0, %s81
      %s103 = sphi 0, %s105
      %s106 = sphi 0, %s103
      %s107 = sphi 0, %s106
      %s123 = sphi 0, %s107
    $region4: #{anime_cnn_forward.4} parent=1 // loop_header_branch
      %12 = sbr.rel (%p10) target = $region8
    $region5: #{anime_cnn_forward.4} parent=1 // loop_body
      %s14 = ssub.s32 %s9, 1
      %s15 = ssub.s32 %s9, 2
      %s22 = sadd.s32 1, %s17
      %p23 = scmp.ge.s32.totalorder %s22, 2
      %s24 = scalar_select %p23, 0, %s22
      %s25 = sadd.s32 1, %s16
      %s26 = scalar_select %p23, %s25, %s16
      %p27 = scmp.ge.s32.totalorder %s26, 2
      %s28 = scalar_select %p27, 0, %s26
      %s29 = ssub.s32 %s16, %s28
      %s30 = ssub.s32 %s17, %s24
      %s31 = sor.u32 %s29, %s30
      %p32 = scmp.eq.s32.totalorder %s31, 0
      %s34 = sadd.s32 %s33, 1
      %s35 = scalar_select %p32, %s33, %s34
      %p38 = pneg %p32
      %p39 = scmp.eq.s32.totalorder %s9, 3
      %p40 = por %p38, %p39
      %p41 = scmp.ne.s32.totalorder %s33, %s36
      %p42 = scmp.eq.s32.totalorder %s9, 0
      %p43 = por %p41, %p42
      %p44 = scmp.ne.s32.totalorder %s33, %s36
      %p45 = scmp.eq.s32.totalorder %s14, 3
      %p46 = por %p44, %p45
      %p47 = scmp.ne.s32.totalorder %s36, %s37
      %p48 = scmp.eq.s32.totalorder %s14, 0
      %p49 = por %p47, %p48
      %p50 = scmp.ne.s32.totalorder %s36, %s37
      %p51 = scmp.eq.s32.totalorder %s15, 3
      %p52 = por %p50, %p51
      %p54 = scmp.ne.s32.totalorder %s37, %s53
      %p55 = scmp.eq.s32.totalorder %s15, 0
      %p56 = por %p54, %p55
      %s58 = sadd.s32 %s57, 1
      %p61 = scmp.eq.s32.totalorder %s9, 3
      %p62 = scmp.ne.s32.totalorder %s57, %s59
      %p63 = scmp.eq.s32.totalorder %s9, 0
      %p64 = por %p62, %p63
      %p65 = scmp.ne.s32.totalorder %s57, %s59
      %p66 = scmp.eq.s32.totalorder %s14, 3
      %p67 = por %p65, %p66
      %p68 = scmp.ne.s32.totalorder %s59, %s60
      %p69 = scmp.eq.s32.totalorder %s14, 0
      %p70 = por %p68, %p69
      %p71 = scmp.ne.s32.totalorder %s59, %s60
      %p72 = scmp.eq.s32.totalorder %s15, 3
      %p73 = por %p71, %p72
      %p75 = scmp.ne.s32.totalorder %s60, %s74
      %p76 = scmp.eq.s32.totalorder %s15, 0
      %p77 = por %p75, %p76
      %s79 = sadd.s32 %s78, 1
      %p82 = scmp.eq.s32.totalorder %s9, 3
      %p83 = scmp.ne.s32.totalorder %s78, %s80
      %p84 = scmp.eq.s32.totalorder %s9, 0
      %p85 = por %p83, %p84
      %p86 = scmp.ne.s32.totalorder %s78, %s80
      %p87 = scmp.eq.s32.totalorder %s14, 3
      %p88 = por %p86, %p87
      %p89 = scmp.ne.s32.totalorder %s80, %s81
      %p90 = scmp.eq.s32.totalorder %s14, 0
      %p91 = por %p89, %p90
      %p92 = scmp.ne.s32.totalorder %s80, %s81
      %p93 = scmp.eq.s32.totalorder %s15, 3
      %p94 = por %p92, %p93
      %p96 = scmp.ne.s32.totalorder %s81, %s95
      %p97 = scmp.eq.s32.totalorder %s15, 0
      %p98 = por %p96, %p97
      %s99 = ssub.s32 %s16, %s28
      %s100 = ssub.s32 %s17, %s24
      %s101 = sor.u32 %s99, %s100
      %p102 = scmp.eq.s32.totalorder %s101, 0
      %s104 = sadd.s32 %s103, 1
      %s105 = scalar_select %p102, %s103, %s104
      %p108 = pneg %p102
      %p109 = scmp.eq.s32.totalorder %s9, 3
      %p110 = por %p108, %p109
      %p111 = scmp.ne.s32.totalorder %s103, %s106
      %p112 = scmp.eq.s32.totalorder %s9, 0
      %p113 = por %p111, %p112
      %p114 = scmp.ne.s32.totalorder %s103, %s106
      %p115 = scmp.eq.s32.totalorder %s14, 3
      %p116 = por %p114, %p115
      %p117 = scmp.ne.s32.totalorder %s106, %s107
      %p118 = scmp.eq.s32.totalorder %s14, 0
      %p119 = por %p117, %p118
      %p120 = scmp.ne.s32.totalorder %s106, %s107
      %p121 = scmp.eq.s32.totalorder %s15, 3
      %p122 = por %p120, %p121
      %p124 = scmp.ne.s32.totalorder %s107, %s123
      %p125 = scmp.eq.s32.totalorder %s15, 0
      %p126 = por %p124, %p125
      %p127 = scmp.le.s32.totalorder 1, %s9
      %p128 = scmp.lt.s32.totalorder %s9, 5
      %p129 = pnand %p127, %p128
      %p130 = pneg %p129
      // Predicated region
      $region9: #{anime_cnn_forward.4} parent=5 // pred_check
        _
      $region10: #{anime_cnn_forward.4} parent=5 // pred_check_branch
        %132 = sbr.rel (%p129) target = $region12
      $region11: #{anime_cnn_forward.4} parent=5 // pred_region
        %s133 = ssub.s32 %s9, 1
        // Predicated region
        $region13: #{anime_cnn_forward.4} parent=11 // pred_check
          %p134 = pneg %p70
        $region14: #{anime_cnn_forward.4} parent=11 // pred_check_branch
          %136 = sbr.rel (%p134) target = $region16
        $region15: #{anime_cnn_forward.4} parent=11 // pred_region
          _
        $region16: #{anime_cnn_forward.4} parent=11 // pred_fallthru
          _
        // Predicated region
        $region17: #{anime_cnn_forward.4} parent=11 // pred_check
          %p137 = pneg %p91
        $region18: #{anime_cnn_forward.4} parent=11 // pred_check_branch
          %139 = sbr.rel (%p137) target = $region20
        $region19: #{anime_cnn_forward.4} parent=11 // pred_region
          _
        $region20: #{anime_cnn_forward.4} parent=11 // pred_fallthru
          _
      $region12: #{anime_cnn_forward.4} parent=5 // pred_fallthru
        _
      %p140 = scmp.lt.s32.totalorder %s9, 4
      // Predicated region
      $region21: #{anime_cnn_forward.4} parent=5 // pred_check
        %p141 = pneg %p140
      $region22: #{anime_cnn_forward.4} parent=5 // pred_check_branch
        %143 = sbr.rel (%p141) target = $region24
      $region23: #{anime_cnn_forward.4} parent=5 // pred_region
        // Predicated region
        $region25: #{anime_cnn_forward.4} parent=23 // pred_check
          %p144 = pneg %p43
        $region26: #{anime_cnn_forward.4} parent=23 // pred_check_branch
          %146 = sbr.rel (%p144) target = $region28
        $region27: #{anime_cnn_forward.4} parent=23 // pred_region
          %s147 = sand.u32 %s33, 1
          %s148 = sand.u32 %s33, 1
          %s149 = smul.addr %s148, 1152
          %s150 = scalar_lea.vmem [#allocation2], %s149
          %s151 = smul.addr %s16, 288
          %s152 = sadd.s32 %s17, %s151
          %s153 = smul.addr %s152, 8
          %s154 = scalar_lea.vmem %s0, %s153
          // Predicated region
          $region29: #{anime_cnn_forward.4} parent=27 // pred_check
            _
          $region30: #{anime_cnn_forward.4} parent=27 // pred_check_branch
            %156 = sbr.rel (0) target = $region32
          $region31: #{anime_cnn_forward.4} parent=27 // pred_region
            // Predicated region
            $region33: #{anime_cnn_forward.4} parent=31 // pred_check
              _
            $region34: #{anime_cnn_forward.4} parent=31 // pred_check_branch
              %158 = sbr.rel (0) target = $region36
            $region35: #{anime_cnn_forward.4} parent=31 // pred_region
              // Predicated region
              $region48: #{anime_cnn_forward.4} parent=35 // pred_check
                _
              $region49: #{anime_cnn_forward.4} parent=35 // pred_check_branch
                %460 = sbr.rel (0) target = $region51
              $region50: #{anime_cnn_forward.4} parent=35 // pred_region
                loop: start=0, step=1, limit=1
                $region52: #{anime_cnn_forward.4} parent=50 // loop_pre_header
                  _
                $region53: #{anime_cnn_forward.4} parent=50 // loop_header
                  %s462 = sphi 0, %s466
                  %p463 = scmp.ge.s32.totalorder %s462, 1
                  %s467 = sphi %s154, %s154
                  %s468 = sphi %s150, %s150
                $region54: #{anime_cnn_forward.4} parent=50 // loop_header_branch
                  %465 = sbr.rel (%p463) target = $region58
                $region55: #{anime_cnn_forward.4} parent=50 // loop_body
                  %v469 = vld [vmem:[%s467] sm:$0xff]
                  %470 = vst [vmem:[%s468] sm:$0xff] %v469
                  %v471 = vld [vmem:[%s467 + $0x10] sm:$0xff]
                  %472 = vst [vmem:[%s468 + $0x8] sm:$0xff] %v471
                  %v473 = vld [vmem:[%s467 + $0x20] sm:$0xff]
                  %474 = vst [vmem:[%s468 + $0x10] sm:$0xff] %v473
                  %v475 = vld [vmem:[%s467 + $0x30] sm:$0xff]
                  %476 = vst [vmem:[%s468 + $0x18] sm:$0xff] %v475
                  %v477 = vld [vmem:[%s467 + $0x40] sm:$0xff]
                  %478 = vst [vmem:[%s468 + $0x20] sm:$0xff] %v477
                  %v479 = vld [vmem:[%s467 + $0x50] sm:$0xff]
                  %480 = vst [vmem:[%s468 + $0x28] sm:$0xff] %v479
                  %v481 = vld [vmem:[%s467 + $0x60] sm:$0xff]
                  %482 = vst [vmem:[%s468 + $0x30] sm:$0xff] %v481
                  %v483 = vld [vmem:[%s467 + $0x70] sm:$0xff]
                  %484 = vst [vmem:[%s468 + $0x38] sm:$0xff] %v483
                  %v485 = vld [vmem:[%s467 + $0x80] sm:$0xff]
                  %486 = vst [vmem:[%s468 + $0x40] sm:$0xff] %v485
                  %v487 = vld [vmem:[%s467 + $0x90] sm:$0xff]
                  %488 = vst [vmem:[%s468 + $0x48] sm:$0xff] %v487
                  %v489 = vld [vmem:[%s467 + $0xa0] sm:$0xff]
                  %490 = vst [vmem:[%s468 + $0x50] sm:$0xff] %v489
                  %v491 = vld [vmem:[%s467 + $0xb0] sm:$0xff]
                  %492 = vst [vmem:[%s468 + $0x58] sm:$0xff] %v491
                  %v493 = vld [vmem:[%s467 + $0xc0] sm:$0xff]
                  %494 = vst [vmem:[%s468 + $0x60] sm:$0xff] %v493
                  %v495 = vld [vmem:[%s467 + $0xd0] sm:$0xff]
                  %496 = vst [vmem:[%s468 + $0x68] sm:$0xff] %v495
                  %v497 = vld [vmem:[%s467 + $0xe0] sm:$0xff]
                  %498 = vst [vmem:[%s468 + $0x70] sm:$0xff] %v497
                  %v499 = vld [vmem:[%s467 + $0xf0] sm:$0xff]
                  %500 = vst [vmem:[%s468 + $0x78] sm:$0xff] %v499
                  %v501 = vld [vmem:[%s467 + $0x100] sm:$0xff]
                  %502 = vst [vmem:[%s468 + $0x80] sm:$0xff] %v501
                  %v503 = vld [vmem:[%s467 + $0x110] sm:$0xff]
                  %504 = vst [vmem:[%s468 + $0x88] sm:$0xff] %v503
                  %v505 = vld [vmem:[%s467 + $0x120] sm:$0xff]
                  %506 = vst [vmem:[%s468 + $0x90] sm:$0xff] %v505
                  %v507 = vld [vmem:[%s467 + $0x130] sm:$0xff]
                  %508 = vst [vmem:[%s468 + $0x98] sm:$0xff] %v507
                  %v509 = vld [vmem:[%s467 + $0x140] sm:$0xff]
                  %510 = vst [vmem:[%s468 + $0xa0] sm:$0xff] %v509
                  %v511 = vld [vmem:[%s467 + $0x150] sm:$0xff]
                  %512 = vst [vmem:[%s468 + $0xa8] sm:$0xff] %v511
                  %v513 = vld [vmem:[%s467 + $0x160] sm:$0xff]
                  %514 = vst [vmem:[%s468 + $0xb0] sm:$0xff] %v513
                  %v515 = vld [vmem:[%s467 + $0x170] sm:$0xff]
                  %516 = vst [vmem:[%s468 + $0xb8] sm:$0xff] %v515
                  %v517 = vld [vmem:[%s467 + $0x180] sm:$0xff]
                  %518 = vst [vmem:[%s468 + $0xc0] sm:$0xff] %v517
                  %v519 = vld [vmem:[%s467 + $0x190] sm:$0xff]
                  %520 = vst [vmem:[%s468 + $0xc8] sm:$0xff] %v519
                  %v521 = vld [vmem:[%s467 + $0x1a0] sm:$0xff]
                  %522 = vst [vmem:[%s468 + $0xd0] sm:$0xff] %v521
                  %v523 = vld [vmem:[%s467 + $0x1b0] sm:$0xff]
                  %524 = vst [vmem:[%s468 + $0xd8] sm:$0xff] %v523
                  %v525 = vld [vmem:[%s467 + $0x1c0] sm:$0xff]
                  %526 = vst [vmem:[%s468 + $0xe0] sm:$0xff] %v525
                  %v527 = vld [vmem:[%s467 + $0x1d0] sm:$0xff]
                  %528 = vst [vmem:[%s468 + $0xe8] sm:$0xff] %v527
                  %v529 = vld [vmem:[%s467 + $0x1e0] sm:$0xff]
                  %530 = vst [vmem:[%s468 + $0xf0] sm:$0xff] %v529
                  %v531 = vld [vmem:[%s467 + $0x1f0] sm:$0xff]
                  %532 = vst [vmem:[%s468 + $0xf8] sm:$0xff] %v531
                  %v533 = vld [vmem:[%s467 + $0x200] sm:$0xff]
                  %534 = vst [vmem:[%s468 + $0x100] sm:$0xff] %v533
                  %v535 = vld [vmem:[%s467 + $0x210] sm:$0xff]
                  %536 = vst [vmem:[%s468 + $0x108] sm:$0xff] %v535
                  %v537 = vld [vmem:[%s467 + $0x220] sm:$0xff]
                  %538 = vst [vmem:[%s468 + $0x110] sm:$0xff] %v537
                  %v539 = vld [vmem:[%s467 + $0x230] sm:$0xff]
                  %540 = vst [vmem:[%s468 + $0x118] sm:$0xff] %v539
                  %v541 = vld [vmem:[%s467 + $0x240] sm:$0xff]
                  %542 = vst [vmem:[%s468 + $0x120] sm:$0xff] %v541
                  %v543 = vld [vmem:[%s467 + $0x250] sm:$0xff]
                  %544 = vst [vmem:[%s468 + $0x128] sm:$0xff] %v543
                  %v545 = vld [vmem:[%s467 + $0x260] sm:$0xff]
                  %546 = vst [vmem:[%s468 + $0x130] sm:$0xff] %v545
                  %v547 = vld [vmem:[%s467 + $0x270] sm:$0xff]
                  %548 = vst [vmem:[%s468 + $0x138] sm:$0xff] %v547
                  %v549 = vld [vmem:[%s467 + $0x280] sm:$0xff]
                  %550 = vst [vmem:[%s468 + $0x140] sm:$0xff] %v549
                  %v551 = vld [vmem:[%s467 + $0x290] sm:$0xff]
                  %552 = vst [vmem:[%s468 + $0x148] sm:$0xff] %v551
                  %v553 = vld [vmem:[%s467 + $0x2a0] sm:$0xff]
                  %554 = vst [vmem:[%s468 + $0x150] sm:$0xff] %v553
                  %v555 = vld [vmem:[%s467 + $0x2b0] sm:$0xff]
                  %556 = vst [vmem:[%s468 + $0x158] sm:$0xff] %v555
                  %v557 = vld [vmem:[%s467 + $0x2c0] sm:$0xff]
                  %558 = vst [vmem:[%s468 + $0x160] sm:$0xff] %v557
                  %v559 = vld [vmem:[%s467 + $0x2d0] sm:$0xff]
                  %560 = vst [vmem:[%s468 + $0x168] sm:$0xff] %v559
                  %v561 = vld [vmem:[%s467 + $0x2e0] sm:$0xff]
                  %562 = vst [vmem:[%s468 + $0x170] sm:$0xff] %v561
                  %v563 = vld [vmem:[%s467 + $0x2f0] sm:$0xff]
                  %564 = vst [vmem:[%s468 + $0x178] sm:$0xff] %v563
                  %v565 = vld [vmem:[%s467 + $0x300] sm:$0xff]
                  %566 = vst [vmem:[%s468 + $0x180] sm:$0xff] %v565
                  %v567 = vld [vmem:[%s467 + $0x310] sm:$0xff]
                  %568 = vst [vmem:[%s468 + $0x188] sm:$0xff] %v567
                  %v569 = vld [vmem:[%s467 + $0x320] sm:$0xff]
                  %570 = vst [vmem:[%s468 + $0x190] sm:$0xff] %v569
                  %v571 = vld [vmem:[%s467 + $0x330] sm:$0xff]
                  %572 = vst [vmem:[%s468 + $0x198] sm:$0xff] %v571
                  %v573 = vld [vmem:[%s467 + $0x340] sm:$0xff]
                  %574 = vst [vmem:[%s468 + $0x1a0] sm:$0xff] %v573
                  %v575 = vld [vmem:[%s467 + $0x350] sm:$0xff]
                  %576 = vst [vmem:[%s468 + $0x1a8] sm:$0xff] %v575
                  %v577 = vld [vmem:[%s467 + $0x360] sm:$0xff]
                  %578 = vst [vmem:[%s468 + $0x1b0] sm:$0xff] %v577
                  %v579 = vld [vmem:[%s467 + $0x370] sm:$0xff]
                  %580 = vst [vmem:[%s468 + $0x1b8] sm:$0xff] %v579
                  %v581 = vld [vmem:[%s467 + $0x380] sm:$0xff]
                  %582 = vst [vmem:[%s468 + $0x1c0] sm:$0xff] %v581
                  %v583 = vld [vmem:[%s467 + $0x390] sm:$0xff]
                  %584 = vst [vmem:[%s468 + $0x1c8] sm:$0xff] %v583
                  %v585 = vld [vmem:[%s467 + $0x3a0] sm:$0xff]
                  %586 = vst [vmem:[%s468 + $0x1d0] sm:$0xff] %v585
                  %v587 = vld [vmem:[%s467 + $0x3b0] sm:$0xff]
                  %588 = vst [vmem:[%s468 + $0x1d8] sm:$0xff] %v587
                  %v589 = vld [vmem:[%s467 + $0x3c0] sm:$0xff]
                  %590 = vst [vmem:[%s468 + $0x1e0] sm:$0xff] %v589
                  %v591 = vld [vmem:[%s467 + $0x3d0] sm:$0xff]
                  %592 = vst [vmem:[%s468 + $0x1e8] sm:$0xff] %v591
                  %v593 = vld [vmem:[%s467 + $0x3e0] sm:$0xff]
                  %594 = vst [vmem:[%s468 + $0x1f0] sm:$0xff] %v593
                  %v595 = vld [vmem:[%s467 + $0x3f0] sm:$0xff]
                  %596 = vst [vmem:[%s468 + $0x1f8] sm:$0xff] %v595
                  %v597 = vld [vmem:[%s467 + $0x400] sm:$0xff]
                  %598 = vst [vmem:[%s468 + $0x200] sm:$0xff] %v597
                  %v599 = vld [vmem:[%s467 + $0x410] sm:$0xff]
                  %600 = vst [vmem:[%s468 + $0x208] sm:$0xff] %v599
                  %v601 = vld [vmem:[%s467 + $0x420] sm:$0xff]
                  %602 = vst [vmem:[%s468 + $0x210] sm:$0xff] %v601
                  %v603 = vld [vmem:[%s467 + $0x430] sm:$0xff]
                  %604 = vst [vmem:[%s468 + $0x218] sm:$0xff] %v603
                  %v605 = vld [vmem:[%s467 + $0x440] sm:$0xff]
                  %606 = vst [vmem:[%s468 + $0x220] sm:$0xff] %v605
                  %v607 = vld [vmem:[%s467 + $0x450] sm:$0xff]
                  %608 = vst [vmem:[%s468 + $0x228] sm:$0xff] %v607
                  %v609 = vld [vmem:[%s467 + $0x460] sm:$0xff]
                  %610 = vst [vmem:[%s468 + $0x230] sm:$0xff] %v609
                  %v611 = vld [vmem:[%s467 + $0x470] sm:$0xff]
                  %612 = vst [vmem:[%s468 + $0x238] sm:$0xff] %v611
                  %v613 = vld [vmem:[%s467 + $0x480] sm:$0xff]
                  %614 = vst [vmem:[%s468 + $0x240] sm:$0xff] %v613
                  %v615 = vld [vmem:[%s467 + $0x490] sm:$0xff]
                  %616 = vst [vmem:[%s468 + $0x248] sm:$0xff] %v615
                  %v617 = vld [vmem:[%s467 + $0x4a0] sm:$0xff]
                  %618 = vst [vmem:[%s468 + $0x250] sm:$0xff] %v617
                  %v619 = vld [vmem:[%s467 + $0x4b0] sm:$0xff]
                  %620 = vst [vmem:[%s468 + $0x258] sm:$0xff] %v619
                  %v621 = vld [vmem:[%s467 + $0x4c0] sm:$0xff]
                  %622 = vst [vmem:[%s468 + $0x260] sm:$0xff] %v621
                  %v623 = vld [vmem:[%s467 + $0x4d0] sm:$0xff]
                  %624 = vst [vmem:[%s468 + $0x268] sm:$0xff] %v623
                  %v625 = vld [vmem:[%s467 + $0x4e0] sm:$0xff]
                  %626 = vst [vmem:[%s468 + $0x270] sm:$0xff] %v625
                  %v627 = vld [vmem:[%s467 + $0x4f0] sm:$0xff]
                  %628 = vst [vmem:[%s468 + $0x278] sm:$0xff] %v627
                  %v629 = vld [vmem:[%s467 + $0x500] sm:$0xff]
                  %630 = vst [vmem:[%s468 + $0x280] sm:$0xff] %v629
                  %v631 = vld [vmem:[%s467 + $0x510] sm:$0xff]
                  %632 = vst [vmem:[%s468 + $0x288] sm:$0xff] %v631
                  %v633 = vld [vmem:[%s467 + $0x520] sm:$0xff]
                  %634 = vst [vmem:[%s468 + $0x290] sm:$0xff] %v633
                  %v635 = vld [vmem:[%s467 + $0x530] sm:$0xff]
                  %636 = vst [vmem:[%s468 + $0x298] sm:$0xff] %v635
                  %v637 = vld [vmem:[%s467 + $0x540] sm:$0xff]
                  %638 = vst [vmem:[%s468 + $0x2a0] sm:$0xff] %v637
                  %v639 = vld [vmem:[%s467 + $0x550] sm:$0xff]
                  %640 = vst [vmem:[%s468 + $0x2a8] sm:$0xff] %v639
                  %v641 = vld [vmem:[%s467 + $0x560] sm:$0xff]
                  %642 = vst [vmem:[%s468 + $0x2b0] sm:$0xff] %v641
                  %v643 = vld [vmem:[%s467 + $0x570] sm:$0xff]
                  %644 = vst [vmem:[%s468 + $0x2b8] sm:$0xff] %v643
                  %v645 = vld [vmem:[%s467 + $0x580] sm:$0xff]
                  %646 = vst [vmem:[%s468 + $0x2c0] sm:$0xff] %v645
                  %v647 = vld [vmem:[%s467 + $0x590] sm:$0xff]
                  %648 = vst [vmem:[%s468 + $0x2c8] sm:$0xff] %v647
                  %v649 = vld [vmem:[%s467 + $0x5a0] sm:$0xff]
                  %650 = vst [vmem:[%s468 + $0x2d0] sm:$0xff] %v649
                  %v651 = vld [vmem:[%s467 + $0x5b0] sm:$0xff]
                  %652 = vst [vmem:[%s468 + $0x2d8] sm:$0xff] %v651
                  %v653 = vld [vmem:[%s467 + $0x5c0] sm:$0xff]
                  %654 = vst [vmem:[%s468 + $0x2e0] sm:$0xff] %v653
                  %v655 = vld [vmem:[%s467 + $0x5d0] sm:$0xff]
                  %656 = vst [vmem:[%s468 + $0x2e8] sm:$0xff] %v655
                  %v657 = vld [vmem:[%s467 + $0x5e0] sm:$0xff]
                  %658 = vst [vmem:[%s468 + $0x2f0] sm:$0xff] %v657
                  %v659 = vld [vmem:[%s467 + $0x5f0] sm:$0xff]
                  %660 = vst [vmem:[%s468 + $0x2f8] sm:$0xff] %v659
                  %v661 = vld [vmem:[%s467 + $0x600] sm:$0xff]
                  %662 = vst [vmem:[%s468 + $0x300] sm:$0xff] %v661
                  %v663 = vld [vmem:[%s467 + $0x610] sm:$0xff]
                  %664 = vst [vmem:[%s468 + $0x308] sm:$0xff] %v663
                  %v665 = vld [vmem:[%s467 + $0x620] sm:$0xff]
                  %666 = vst [vmem:[%s468 + $0x310] sm:$0xff] %v665
                  %v667 = vld [vmem:[%s467 + $0x630] sm:$0xff]
                  %668 = vst [vmem:[%s468 + $0x318] sm:$0xff] %v667
                  %v669 = vld [vmem:[%s467 + $0x640] sm:$0xff]
                  %670 = vst [vmem:[%s468 + $0x320] sm:$0xff] %v669
                  %v671 = vld [vmem:[%s467 + $0x650] sm:$0xff]
                  %672 = vst [vmem:[%s468 + $0x328] sm:$0xff] %v671
                  %v673 = vld [vmem:[%s467 + $0x660] sm:$0xff]
                  %674 = vst [vmem:[%s468 + $0x330] sm:$0xff] %v673
                  %v675 = vld [vmem:[%s467 + $0x670] sm:$0xff]
                  %676 = vst [vmem:[%s468 + $0x338] sm:$0xff] %v675
                  %v677 = vld [vmem:[%s467 + $0x680] sm:$0xff]
                  %678 = vst [vmem:[%s468 + $0x340] sm:$0xff] %v677
                  %v679 = vld [vmem:[%s467 + $0x690] sm:$0xff]
                  %680 = vst [vmem:[%s468 + $0x348] sm:$0xff] %v679
                  %v681 = vld [vmem:[%s467 + $0x6a0] sm:$0xff]
                  %682 = vst [vmem:[%s468 + $0x350] sm:$0xff] %v681
                  %v683 = vld [vmem:[%s467 + $0x6b0] sm:$0xff]
                  %684 = vst [vmem:[%s468 + $0x358] sm:$0xff] %v683
                  %v685 = vld [vmem:[%s467 + $0x6c0] sm:$0xff]
                  %686 = vst [vmem:[%s468 + $0x360] sm:$0xff] %v685
                  %v687 = vld [vmem:[%s467 + $0x6d0] sm:$0xff]
                  %688 = vst [vmem:[%s468 + $0x368] sm:$0xff] %v687
                  %v689 = vld [vmem:[%s467 + $0x6e0] sm:$0xff]
                  %690 = vst [vmem:[%s468 + $0x370] sm:$0xff] %v689
                  %v691 = vld [vmem:[%s467 + $0x6f0] sm:$0xff]
                  %692 = vst [vmem:[%s468 + $0x378] sm:$0xff] %v691
                  %v693 = vld [vmem:[%s467 + $0x700] sm:$0xff]
                  %694 = vst [vmem:[%s468 + $0x380] sm:$0xff] %v693
                  %v695 = vld [vmem:[%s467 + $0x710] sm:$0xff]
                  %696 = vst [vmem:[%s468 + $0x388] sm:$0xff] %v695
                  %v697 = vld [vmem:[%s467 + $0x720] sm:$0xff]
                  %698 = vst [vmem:[%s468 + $0x390] sm:$0xff] %v697
                  %v699 = vld [vmem:[%s467 + $0x730] sm:$0xff]
                  %700 = vst [vmem:[%s468 + $0x398] sm:$0xff] %v699
                  %v701 = vld [vmem:[%s467 + $0x740] sm:$0xff]
                  %702 = vst [vmem:[%s468 + $0x3a0] sm:$0xff] %v701
                  %v703 = vld [vmem:[%s467 + $0x750] sm:$0xff]
                  %704 = vst [vmem:[%s468 + $0x3a8] sm:$0xff] %v703
                  %v705 = vld [vmem:[%s467 + $0x760] sm:$0xff]
                  %706 = vst [vmem:[%s468 + $0x3b0] sm:$0xff] %v705
                  %v707 = vld [vmem:[%s467 + $0x770] sm:$0xff]
                  %708 = vst [vmem:[%s468 + $0x3b8] sm:$0xff] %v707
                  %v709 = vld [vmem:[%s467 + $0x780] sm:$0xff]
                  %710 = vst [vmem:[%s468 + $0x3c0] sm:$0xff] %v709
                  %v711 = vld [vmem:[%s467 + $0x790] sm:$0xff]
                  %712 = vst [vmem:[%s468 + $0x3c8] sm:$0xff] %v711
                  %v713 = vld [vmem:[%s467 + $0x7a0] sm:$0xff]
                  %714 = vst [vmem:[%s468 + $0x3d0] sm:$0xff] %v713
                  %v715 = vld [vmem:[%s467 + $0x7b0] sm:$0xff]
                  %716 = vst [vmem:[%s468 + $0x3d8] sm:$0xff] %v715
                  %v717 = vld [vmem:[%s467 + $0x7c0] sm:$0xff]
                  %718 = vst [vmem:[%s468 + $0x3e0] sm:$0xff] %v717
                  %v719 = vld [vmem:[%s467 + $0x7d0] sm:$0xff]
                  %720 = vst [vmem:[%s468 + $0x3e8] sm:$0xff] %v719
                  %v721 = vld [vmem:[%s467 + $0x7e0] sm:$0xff]
                  %722 = vst [vmem:[%s468 + $0x3f0] sm:$0xff] %v721
                  %v723 = vld [vmem:[%s467 + $0x7f0] sm:$0xff]
                  %724 = vst [vmem:[%s468 + $0x3f8] sm:$0xff] %v723
                  %v725 = vld [vmem:[%s467 + $0x800] sm:$0xff]
                  %726 = vst [vmem:[%s468 + $0x400] sm:$0xff] %v725
                  %v727 = vld [vmem:[%s467 + $0x810] sm:$0xff]
                  %728 = vst [vmem:[%s468 + $0x408] sm:$0xff] %v727
                  %v729 = vld [vmem:[%s467 + $0x820] sm:$0xff]
                  %730 = vst [vmem:[%s468 + $0x410] sm:$0xff] %v729
                  %v731 = vld [vmem:[%s467 + $0x830] sm:$0xff]
                  %732 = vst [vmem:[%s468 + $0x418] sm:$0xff] %v731
                  %v733 = vld [vmem:[%s467 + $0x840] sm:$0xff]
                  %734 = vst [vmem:[%s468 + $0x420] sm:$0xff] %v733
                  %v735 = vld [vmem:[%s467 + $0x850] sm:$0xff]
                  %736 = vst [vmem:[%s468 + $0x428] sm:$0xff] %v735
                  %v737 = vld [vmem:[%s467 + $0x860] sm:$0xff]
                  %738 = vst [vmem:[%s468 + $0x430] sm:$0xff] %v737
                  %v739 = vld [vmem:[%s467 + $0x870] sm:$0xff]
                  %740 = vst [vmem:[%s468 + $0x438] sm:$0xff] %v739
                  %v741 = vld [vmem:[%s467 + $0x880] sm:$0xff]
                  %742 = vst [vmem:[%s468 + $0x440] sm:$0xff] %v741
                  %v743 = vld [vmem:[%s467 + $0x890] sm:$0xff]
                  %744 = vst [vmem:[%s468 + $0x448] sm:$0xff] %v743
                  %v745 = vld [vmem:[%s467 + $0x8a0] sm:$0xff]
                  %746 = vst [vmem:[%s468 + $0x450] sm:$0xff] %v745
                  %v747 = vld [vmem:[%s467 + $0x8b0] sm:$0xff]
                  %748 = vst [vmem:[%s468 + $0x458] sm:$0xff] %v747
                  %v749 = vld [vmem:[%s467 + $0x8c0] sm:$0xff]
                  %750 = vst [vmem:[%s468 + $0x460] sm:$0xff] %v749
                  %v751 = vld [vmem:[%s467 + $0x8d0] sm:$0xff]
                  %752 = vst [vmem:[%s468 + $0x468] sm:$0xff] %v751
                  %v753 = vld [vmem:[%s467 + $0x8e0] sm:$0xff]
                  %754 = vst [vmem:[%s468 + $0x470] sm:$0xff] %v753
                  %v755 = vld [vmem:[%s467 + $0x8f0] sm:$0xff]
                  %756 = vst [vmem:[%s468 + $0x478] sm:$0xff] %v755
                $region56: #{anime_cnn_forward.4} parent=50 // loop_footer
                  %s466 = sadd.s32 1, %s462
                $region57: #{anime_cnn_forward.4} parent=50 // loop_footer_branch
                  %461 = sbr.rel target = $region53
                $region58: #{anime_cnn_forward.4} parent=50 // loop_exit
                  _
              $region51: #{anime_cnn_forward.4} parent=35 // pred_fallthru
                _
              // Predicated region
              $region59: #{anime_cnn_forward.4} parent=35 // pred_check
                _
              $region60: #{anime_cnn_forward.4} parent=35 // pred_check_branch
                %758 = sbr.rel target = $region62
              $region61: #{anime_cnn_forward.4} parent=35 // pred_region
                _
              $region62: #{anime_cnn_forward.4} parent=35 // pred_fallthru
                _
            $region36: #{anime_cnn_forward.4} parent=31 // pred_fallthru
              _
            // Predicated region
            $region37: #{anime_cnn_forward.4} parent=31 // pred_check
              _
            $region38: #{anime_cnn_forward.4} parent=31 // pred_check_branch
              %160 = sbr.rel target = $region40
            $region39: #{anime_cnn_forward.4} parent=31 // pred_region
              %s162 = ssub.s32 256, 1
              loop: start=0, step=1, limit=1
              $region41: #{anime_cnn_forward.4} parent=39 // loop_pre_header
                _
              $region42: #{anime_cnn_forward.4} parent=39 // loop_header
                %s164 = sphi 0, %s168
                %p165 = scmp.ge.s32.totalorder %s164, 1
                %s169 = sphi %s154, %s154
                %s170 = sphi %s150, %s150
              $region43: #{anime_cnn_forward.4} parent=39 // loop_header_branch
                %167 = sbr.rel (%p165) target = $region47
              $region44: #{anime_cnn_forward.4} parent=39 // loop_body
                %v171 = vld [vmem:[%s169] sm:%s162]
                %172 = vst [vmem:[%s170] sm:%s162] %v171
                %v173 = vld [vmem:[%s169 + $0x10] sm:%s162]
                %174 = vst [vmem:[%s170 + $0x8] sm:%s162] %v173
                %v175 = vld [vmem:[%s169 + $0x20] sm:%s162]
                %176 = vst [vmem:[%s170 + $0x10] sm:%s162] %v175
                %v177 = vld [vmem:[%s169 + $0x30] sm:%s162]
                %178 = vst [vmem:[%s170 + $0x18] sm:%s162] %v177
                %v179 = vld [vmem:[%s169 + $0x40] sm:%s162]
                %180 = vst [vmem:[%s170 + $0x20] sm:%s162] %v179
                %v181 = vld [vmem:[%s169 + $0x50] sm:%s162]
                %182 = vst [vmem:[%s170 + $0x28] sm:%s162] %v181
                %v183 = vld [vmem:[%s169 + $0x60] sm:%s162]
                %184 = vst [vmem:[%s170 + $0x30] sm:%s162] %v183
                %v185 = vld [vmem:[%s169 + $0x70] sm:%s162]
                %186 = vst [vmem:[%s170 + $0x38] sm:%s162] %v185
                %v187 = vld [vmem:[%s169 + $0x80] sm:%s162]
                %188 = vst [vmem:[%s170 + $0x40] sm:%s162] %v187
                %v189 = vld [vmem:[%s169 + $0x90] sm:%s162]
                %190 = vst [vmem:[%s170 + $0x48] sm:%s162] %v189
                %v191 = vld [vmem:[%s169 + $0xa0] sm:%s162]
                %192 = vst [vmem:[%s170 + $0x50] sm:%s162] %v191
                %v193 = vld [vmem:[%s169 + $0xb0] sm:%s162]
                %194 = vst [vmem:[%s170 + $0x58] sm:%s162] %v193
                %v195 = vld [vmem:[%s169 + $0xc0] sm:%s162]
                %196 = vst [vmem:[%s170 + $0x60] sm:%s162] %v195
                %v197 = vld [vmem:[%s169 + $0xd0] sm:%s162]
                %198 = vst [vmem:[%s170 + $0x68] sm:%s162] %v197
                %v199 = vld [vmem:[%s169 + $0xe0] sm:%s162]
                %200 = vst [vmem:[%s170 + $0x70] sm:%s162] %v199
                %v201 = vld [vmem:[%s169 + $0xf0] sm:%s162]
                %202 = vst [vmem:[%s170 + $0x78] sm:%s162] %v201
                %v203 = vld [vmem:[%s169 + $0x100] sm:%s162]
                %204 = vst [vmem:[%s170 + $0x80] sm:%s162] %v203
                %v205 = vld [vmem:[%s169 + $0x110] sm:%s162]
                %206 = vst [vmem:[%s170 + $0x88] sm:%s162] %v205
                %v207 = vld [vmem:[%s169 + $0x120] sm:%s162]
                %208 = vst [vmem:[%s170 + $0x90] sm:%s162] %v207
                %v209 = vld [vmem:[%s169 + $0x130] sm:%s162]
                %210 = vst [vmem:[%s170 + $0x98] sm:%s162] %v209
                %v211 = vld [vmem:[%s169 + $0x140] sm:%s162]
                %212 = vst [vmem:[%s170 + $0xa0] sm:%s162] %v211
                %v213 = vld [vmem:[%s169 + $0x150] sm:%s162]
                %214 = vst [vmem:[%s170 + $0xa8] sm:%s162] %v213
                %v215 = vld [vmem:[%s169 + $0x160] sm:%s162]
                %216 = vst [vmem:[%s170 + $0xb0] sm:%s162] %v215
                %v217 = vld [vmem:[%s169 + $0x170] sm:%s162]
                %218 = vst [vmem:[%s170 + $0xb8] sm:%s162] %v217
                %v219 = vld [vmem:[%s169 + $0x180] sm:%s162]
                %220 = vst [vmem:[%s170 + $0xc0] sm:%s162] %v219
                %v221 = vld [vmem:[%s169 + $0x190] sm:%s162]
                %222 = vst [vmem:[%s170 + $0xc8] sm:%s162] %v221
                %v223 = vld [vmem:[%s169 + $0x1a0] sm:%s162]
                %224 = vst [vmem:[%s170 + $0xd0] sm:%s162] %v223
                %v225 = vld [vmem:[%s169 + $0x1b0] sm:%s162]
                %226 = vst [vmem:[%s170 + $0xd8] sm:%s162] %v225
                %v227 = vld [vmem:[%s169 + $0x1c0] sm:%s162]
                %228 = vst [vmem:[%s170 + $0xe0] sm:%s162] %v227
                %v229 = vld [vmem:[%s169 + $0x1d0] sm:%s162]
                %230 = vst [vmem:[%s170 + $0xe8] sm:%s162] %v229
                %v231 = vld [vmem:[%s169 + $0x1e0] sm:%s162]
                %232 = vst [vmem:[%s170 + $0xf0] sm:%s162] %v231
                %v233 = vld [vmem:[%s169 + $0x1f0] sm:%s162]
                %234 = vst [vmem:[%s170 + $0xf8] sm:%s162] %v233
                %v235 = vld [vmem:[%s169 + $0x200] sm:%s162]
                %236 = vst [vmem:[%s170 + $0x100] sm:%s162] %v235
                %v237 = vld [vmem:[%s169 + $0x210] sm:%s162]
                %238 = vst [vmem:[%s170 + $0x108] sm:%s162] %v237
                %v239 = vld [vmem:[%s169 + $0x220] sm:%s162]
                %240 = vst [vmem:[%s170 + $0x110] sm:%s162] %v239
                %v241 = vld [vmem:[%s169 + $0x230] sm:%s162]
                %242 = vst [vmem:[%s170 + $0x118] sm:%s162] %v241
                %v243 = vld [vmem:[%s169 + $0x240] sm:%s162]
                %244 = vst [vmem:[%s170 + $0x120] sm:%s162] %v243
                %v245 = vld [vmem:[%s169 + $0x250] sm:%s162]
                %246 = vst [vmem:[%s170 + $0x128] sm:%s162] %v245
                %v247 = vld [vmem:[%s169 + $0x260] sm:%s162]
                %248 = vst [vmem:[%s170 + $0x130] sm:%s162] %v247
                %v249 = vld [vmem:[%s169 + $0x270] sm:%s162]
                %250 = vst [vmem:[%s170 + $0x138] sm:%s162] %v249
                %v251 = vld [vmem:[%s169 + $0x280] sm:%s162]
                %252 = vst [vmem:[%s170 + $0x140] sm:%s162] %v251
                %v253 = vld [vmem:[%s169 + $0x290] sm:%s162]
                %254 = vst [vmem:[%s170 + $0x148] sm:%s162] %v253
                %v255 = vld [vmem:[%s169 + $0x2a0] sm:%s162]
                %256 = vst [vmem:[%s170 + $0x150] sm:%s162] %v255
                %v257 = vld [vmem:[%s169 + $0x2b0] sm:%s162]
                %258 = vst [vmem:[%s170 + $0x158] sm:%s162] %v257
                %v259 = vld [vmem:[%s169 + $0x2c0] sm:%s162]
                %260 = vst [vmem:[%s170 + $0x160] sm:%s162] %v259
                %v261 = vld [vmem:[%s169 + $0x2d0] sm:%s162]
                %262 = vst [vmem:[%s170 + $0x168] sm:%s162] %v261
                %v263 = vld [vmem:[%s169 + $0x2e0] sm:%s162]
                %264 = vst [vmem:[%s170 + $0x170] sm:%s162] %v263
                %v265 = vld [vmem:[%s169 + $0x2f0] sm:%s162]
                %266 = vst [vmem:[%s170 + $0x178] sm:%s162] %v265
                %v267 = vld [vmem:[%s169 + $0x300] sm:%s162]
                %268 = vst [vmem:[%s170 + $0x180] sm:%s162] %v267
                %v269 = vld [vmem:[%s169 + $0x310] sm:%s162]
                %270 = vst [vmem:[%s170 + $0x188] sm:%s162] %v269
                %v271 = vld [vmem:[%s169 + $0x320] sm:%s162]
                %272 = vst [vmem:[%s170 + $0x190] sm:%s162] %v271
                %v273 = vld [vmem:[%s169 + $0x330] sm:%s162]
                %274 = vst [vmem:[%s170 + $0x198] sm:%s162] %v273
                %v275 = vld [vmem:[%s169 + $0x340] sm:%s162]
                %276 = vst [vmem:[%s170 + $0x1a0] sm:%s162] %v275
                %v277 = vld [vmem:[%s169 + $0x350] sm:%s162]
                %278 = vst [vmem:[%s170 + $0x1a8] sm:%s162] %v277
                %v279 = vld [vmem:[%s169 + $0x360] sm:%s162]
                %280 = vst [vmem:[%s170 + $0x1b0] sm:%s162] %v279
                %v281 = vld [vmem:[%s169 + $0x370] sm:%s162]
                %282 = vst [vmem:[%s170 + $0x1b8] sm:%s162] %v281
                %v283 = vld [vmem:[%s169 + $0x380] sm:%s162]
                %284 = vst [vmem:[%s170 + $0x1c0] sm:%s162] %v283
                %v285 = vld [vmem:[%s169 + $0x390] sm:%s162]
                %286 = vst [vmem:[%s170 + $0x1c8] sm:%s162] %v285
                %v287 = vld [vmem:[%s169 + $0x3a0] sm:%s162]
                %288 = vst [vmem:[%s170 + $0x1d0] sm:%s162] %v287
                %v289 = vld [vmem:[%s169 + $0x3b0] sm:%s162]
                %290 = vst [vmem:[%s170 + $0x1d8] sm:%s162] %v289
                %v291 = vld [vmem:[%s169 + $0x3c0] sm:%s162]
                %292 = vst [vmem:[%s170 + $0x1e0] sm:%s162] %v291
                %v293 = vld [vmem:[%s169 + $0x3d0] sm:%s162]
                %294 = vst [vmem:[%s170 + $0x1e8] sm:%s162] %v293
                %v295 = vld [vmem:[%s169 + $0x3e0] sm:%s162]
                %296 = vst [vmem:[%s170 + $0x1f0] sm:%s162] %v295
                %v297 = vld [vmem:[%s169 + $0x3f0] sm:%s162]
                %298 = vst [vmem:[%s170 + $0x1f8] sm:%s162] %v297
                %v299 = vld [vmem:[%s169 + $0x400] sm:%s162]
                %300 = vst [vmem:[%s170 + $0x200] sm:%s162] %v299
                %v301 = vld [vmem:[%s169 + $0x410] sm:%s162]
                %302 = vst [vmem:[%s170 + $0x208] sm:%s162] %v301
                %v303 = vld [vmem:[%s169 + $0x420] sm:%s162]
                %304 = vst [vmem:[%s170 + $0x210] sm:%s162] %v303
                %v305 = vld [vmem:[%s169 + $0x430] sm:%s162]
                %306 = vst [vmem:[%s170 + $0x218] sm:%s162] %v305
                %v307 = vld [vmem:[%s169 + $0x440] sm:%s162]
                %308 = vst [vmem:[%s170 + $0x220] sm:%s162] %v307
                %v309 = vld [vmem:[%s169 + $0x450] sm:%s162]
                %310 = vst [vmem:[%s170 + $0x228] sm:%s162] %v309
                %v311 = vld [vmem:[%s169 + $0x460] sm:%s162]
                %312 = vst [vmem:[%s170 + $0x230] sm:%s162] %v311
                %v313 = vld [vmem:[%s169 + $0x470] sm:%s162]
                %314 = vst [vmem:[%s170 + $0x238] sm:%s162] %v313
                %v315 = vld [vmem:[%s169 + $0x480] sm:%s162]
                %316 = vst [vmem:[%s170 + $0x240] sm:%s162] %v315
                %v317 = vld [vmem:[%s169 + $0x490] sm:%s162]
                %318 = vst [vmem:[%s170 + $0x248] sm:%s162] %v317
                %v319 = vld [vmem:[%s169 + $0x4a0] sm:%s162]
                %320 = vst [vmem:[%s170 + $0x250] sm:%s162] %v319
                %v321 = vld [vmem:[%s169 + $0x4b0] sm:%s162]
                %322 = vst [vmem:[%s170 + $0x258] sm:%s162] %v321
                %v323 = vld [vmem:[%s169 + $0x4c0] sm:%s162]
                %324 = vst [vmem:[%s170 + $0x260] sm:%s162] %v323
                %v325 = vld [vmem:[%s169 + $0x4d0] sm:%s162]
                %326 = vst [vmem:[%s170 + $0x268] sm:%s162] %v325
                %v327 = vld [vmem:[%s169 + $0x4e0] sm:%s162]
                %328 = vst [vmem:[%s170 + $0x270] sm:%s162] %v327
                %v329 = vld [vmem:[%s169 + $0x4f0] sm:%s162]
                %330 = vst [vmem:[%s170 + $0x278] sm:%s162] %v329
                %v331 = vld [vmem:[%s169 + $0x500] sm:%s162]
                %332 = vst [vmem:[%s170 + $0x280] sm:%s162] %v331
                %v333 = vld [vmem:[%s169 + $0x510] sm:%s162]
                %334 = vst [vmem:[%s170 + $0x288] sm:%s162] %v333
                %v335 = vld [vmem:[%s169 + $0x520] sm:%s162]
                %336 = vst [vmem:[%s170 + $0x290] sm:%s162] %v335
                %v337 = vld [vmem:[%s169 + $0x530] sm:%s162]
                %338 = vst [vmem:[%s170 + $0x298] sm:%s162] %v337
                %v339 = vld [vmem:[%s169 + $0x540] sm:%s162]
                %340 = vst [vmem:[%s170 + $0x2a0] sm:%s162] %v339
                %v341 = vld [vmem:[%s169 + $0x550] sm:%s162]
                %342 = vst [vmem:[%s170 + $0x2a8] sm:%s162] %v341
                %v343 = vld [vmem:[%s169 + $0x560] sm:%s162]
                %344 = vst [vmem:[%s170 + $0x2b0] sm:%s162] %v343
                %v345 = vld [vmem:[%s169 + $0x570] sm:%s162]
                %346 = vst [vmem:[%s170 + $0x2b8] sm:%s162] %v345
                %v347 = vld [vmem:[%s169 + $0x580] sm:%s162]
                %348 = vst [vmem:[%s170 + $0x2c0] sm:%s162] %v347
                %v349 = vld [vmem:[%s169 + $0x590] sm:%s162]
                %350 = vst [vmem:[%s170 + $0x2c8] sm:%s162] %v349
                %v351 = vld [vmem:[%s169 + $0x5a0] sm:%s162]
                %352 = vst [vmem:[%s170 + $0x2d0] sm:%s162] %v351
                %v353 = vld [vmem:[%s169 + $0x5b0] sm:%s162]
                %354 = vst [vmem:[%s170 + $0x2d8] sm:%s162] %v353
                %v355 = vld [vmem:[%s169 + $0x5c0] sm:%s162]
                %356 = vst [vmem:[%s170 + $0x2e0] sm:%s162] %v355
                %v357 = vld [vmem:[%s169 + $0x5d0] sm:%s162]
                %358 = vst [vmem:[%s170 + $0x2e8] sm:%s162] %v357
                %v359 = vld [vmem:[%s169 + $0x5e0] sm:%s162]
                %360 = vst [vmem:[%s170 + $0x2f0] sm:%s162] %v359
                %v361 = vld [vmem:[%s169 + $0x5f0] sm:%s162]
                %362 = vst [vmem:[%s170 + $0x2f8] sm:%s162] %v361
                %v363 = vld [vmem:[%s169 + $0x600] sm:%s162]
                %364 = vst [vmem:[%s170 + $0x300] sm:%s162] %v363
                %v365 = vld [vmem:[%s169 + $0x610] sm:%s162]
                %366 = vst [vmem:[%s170 + $0x308] sm:%s162] %v365
                %v367 = vld [vmem:[%s169 + $0x620] sm:%s162]
                %368 = vst [vmem:[%s170 + $0x310] sm:%s162] %v367
                %v369 = vld [vmem:[%s169 + $0x630] sm:%s162]
                %370 = vst [vmem:[%s170 + $0x318] sm:%s162] %v369
                %v371 = vld [vmem:[%s169 + $0x640] sm:%s162]
                %372 = vst [vmem:[%s170 + $0x320] sm:%s162] %v371
                %v373 = vld [vmem:[%s169 + $0x650] sm:%s162]
                %374 = vst [vmem:[%s170 + $0x328] sm:%s162] %v373
                %v375 = vld [vmem:[%s169 + $0x660] sm:%s162]
                %376 = vst [vmem:[%s170 + $0x330] sm:%s162] %v375
                %v377 = vld [vmem:[%s169 + $0x670] sm:%s162]
                %378 = vst [vmem:[%s170 + $0x338] sm:%s162] %v377
                %v379 = vld [vmem:[%s169 + $0x680] sm:%s162]
                %380 = vst [vmem:[%s170 + $0x340] sm:%s162] %v379
                %v381 = vld [vmem:[%s169 + $0x690] sm:%s162]
                %382 = vst [vmem:[%s170 + $0x348] sm:%s162] %v381
                %v383 = vld [vmem:[%s169 + $0x6a0] sm:%s162]
                %384 = vst [vmem:[%s170 + $0x350] sm:%s162] %v383
                %v385 = vld [vmem:[%s169 + $0x6b0] sm:%s162]
                %386 = vst [vmem:[%s170 + $0x358] sm:%s162] %v385
                %v387 = vld [vmem:[%s169 + $0x6c0] sm:%s162]
                %388 = vst [vmem:[%s170 + $0x360] sm:%s162] %v387
                %v389 = vld [vmem:[%s169 + $0x6d0] sm:%s162]
                %390 = vst [vmem:[%s170 + $0x368] sm:%s162] %v389
                %v391 = vld [vmem:[%s169 + $0x6e0] sm:%s162]
                %392 = vst [vmem:[%s170 + $0x370] sm:%s162] %v391
                %v393 = vld [vmem:[%s169 + $0x6f0] sm:%s162]
                %394 = vst [vmem:[%s170 + $0x378] sm:%s162] %v393
                %v395 = vld [vmem:[%s169 + $0x700] sm:%s162]
                %396 = vst [vmem:[%s170 + $0x380] sm:%s162] %v395
                %v397 = vld [vmem:[%s169 + $0x710] sm:%s162]
                %398 = vst [vmem:[%s170 + $0x388] sm:%s162] %v397
                %v399 = vld [vmem:[%s169 + $0x720] sm:%s162]
                %400 = vst [vmem:[%s170 + $0x390] sm:%s162] %v399
                %v401 = vld [vmem:[%s169 + $0x730] sm:%s162]
                %402 = vst [vmem:[%s170 + $0x398] sm:%s162] %v401
                %v403 = vld [vmem:[%s169 + $0x740] sm:%s162]
                %404 = vst [vmem:[%s170 + $0x3a0] sm:%s162] %v403
                %v405 = vld [vmem:[%s169 + $0x750] sm:%s162]
                %406 = vst [vmem:[%s170 + $0x3a8] sm:%s162] %v405
                %v407 = vld [vmem:[%s169 + $0x760] sm:%s162]
                %408 = vst [vmem:[%s170 + $0x3b0] sm:%s162] %v407
                %v409 = vld [vmem:[%s169 + $0x770] sm:%s162]
                %410 = vst [vmem:[%s170 + $0x3b8] sm:%s162] %v409
                %v411 = vld [vmem:[%s169 + $0x780] sm:%s162]
                %412 = vst [vmem:[%s170 + $0x3c0] sm:%s162] %v411
                %v413 = vld [vmem:[%s169 + $0x790] sm:%s162]
                %414 = vst [vmem:[%s170 + $0x3c8] sm:%s162] %v413
                %v415 = vld [vmem:[%s169 + $0x7a0] sm:%s162]
                %416 = vst [vmem:[%s170 + $0x3d0] sm:%s162] %v415
                %v417 = vld [vmem:[%s169 + $0x7b0] sm:%s162]
                %418 = vst [vmem:[%s170 + $0x3d8] sm:%s162] %v417
                %v419 = vld [vmem:[%s169 + $0x7c0] sm:%s162]
                %420 = vst [vmem:[%s170 + $0x3e0] sm:%s162] %v419
                %v421 = vld [vmem:[%s169 + $0x7d0] sm:%s162]
                %422 = vst [vmem:[%s170 + $0x3e8] sm:%s162] %v421
                %v423 = vld [vmem:[%s169 + $0x7e0] sm:%s162]
                %424 = vst [vmem:[%s170 + $0x3f0] sm:%s162] %v423
                %v425 = vld [vmem:[%s169 + $0x7f0] sm:%s162]
                %426 = vst [vmem:[%s170 + $0x3f8] sm:%s162] %v425
                %v427 = vld [vmem:[%s169 + $0x800] sm:%s162]
                %428 = vst [vmem:[%s170 + $0x400] sm:%s162] %v427
                %v429 = vld [vmem:[%s169 + $0x810] sm:%s162]
                %430 = vst [vmem:[%s170 + $0x408] sm:%s162] %v429
                %v431 = vld [vmem:[%s169 + $0x820] sm:%s162]
                %432 = vst [vmem:[%s170 + $0x410] sm:%s162] %v431
                %v433 = vld [vmem:[%s169 + $0x830] sm:%s162]
                %434 = vst [vmem:[%s170 + $0x418] sm:%s162] %v433
                %v435 = vld [vmem:[%s169 + $0x840] sm:%s162]
                %436 = vst [vmem:[%s170 + $0x420] sm:%s162] %v435
                %v437 = vld [vmem:[%s169 + $0x850] sm:%s162]
                %438 = vst [vmem:[%s170 + $0x428] sm:%s162] %v437
                %v439 = vld [vmem:[%s169 + $0x860] sm:%s162]
                %440 = vst [vmem:[%s170 + $0x430] sm:%s162] %v439
                %v441 = vld [vmem:[%s169 + $0x870] sm:%s162]
                %442 = vst [vmem:[%s170 + $0x438] sm:%s162] %v441
                %v443 = vld [vmem:[%s169 + $0x880] sm:%s162]
                %444 = vst [vmem:[%s170 + $0x440] sm:%s162] %v443
                %v445 = vld [vmem:[%s169 + $0x890] sm:%s162]
                %446 = vst [vmem:[%s170 + $0x448] sm:%s162] %v445
                %v447 = vld [vmem:[%s169 + $0x8a0] sm:%s162]
                %448 = vst [vmem:[%s170 + $0x450] sm:%s162] %v447
                %v449 = vld [vmem:[%s169 + $0x8b0] sm:%s162]
                %450 = vst [vmem:[%s170 + $0x458] sm:%s162] %v449
                %v451 = vld [vmem:[%s169 + $0x8c0] sm:%s162]
                %452 = vst [vmem:[%s170 + $0x460] sm:%s162] %v451
                %v453 = vld [vmem:[%s169 + $0x8d0] sm:%s162]
                %454 = vst [vmem:[%s170 + $0x468] sm:%s162] %v453
                %v455 = vld [vmem:[%s169 + $0x8e0] sm:%s162]
                %456 = vst [vmem:[%s170 + $0x470] sm:%s162] %v455
                %v457 = vld [vmem:[%s169 + $0x8f0] sm:%s162]
                %458 = vst [vmem:[%s170 + $0x478] sm:%s162] %v457
              $region45: #{anime_cnn_forward.4} parent=39 // loop_footer
                %s168 = sadd.s32 1, %s164
              $region46: #{anime_cnn_forward.4} parent=39 // loop_footer_branch
                %163 = sbr.rel target = $region42
              $region47: #{anime_cnn_forward.4} parent=39 // loop_exit
                _
            $region40: #{anime_cnn_forward.4} parent=31 // pred_fallthru
              _
          $region32: #{anime_cnn_forward.4} parent=27 // pred_fallthru
            _
          %759 = vnop
        $region28: #{anime_cnn_forward.4} parent=23 // pred_fallthru
          _
      $region24: #{anime_cnn_forward.4} parent=5 // pred_fallthru
        _
      %p760 = scmp.le.s32.totalorder 1, %s9
      %p761 = scmp.lt.s32.totalorder %s9, 5
      %p762 = pnand %p760, %p761
      %p763 = pneg %p762
      // Predicated region
      $region63: #{anime_cnn_forward.4} parent=5 // pred_check
        _
      $region64: #{anime_cnn_forward.4} parent=5 // pred_check_branch
        %765 = sbr.rel (%p762) target = $region66
      $region65: #{anime_cnn_forward.4} parent=5 // pred_region
        %s766 = ssub.s32 %s9, 1
        %s767 = sand.u32 %s36, 1
        %s768 = sand.u32 %s36, 1
        %s769 = smul.addr %s768, 1152
        %s770 = scalar_lea.vmem [#allocation2], %s769
        // Predicated region
        $region67: #{anime_cnn_forward.4} parent=65 // pred_check
          %p771 = pneg %p49
        $region68: #{anime_cnn_forward.4} parent=65 // pred_check_branch
          %773 = sbr.rel (%p771) target = $region70
        $region69: #{anime_cnn_forward.4} parent=65 // pred_region
          _
        $region70: #{anime_cnn_forward.4} parent=65 // pred_fallthru
          _
        %s774 = sand.u32 %s36, 1
        %s775 = sand.u32 %s36, 1
        %s776 = smul.addr %s775, 1152
        %s777 = scalar_lea.vmem [#allocation2], %s776
        %p778 = pneg %p49
        %p779 = pneg %p46
        %p780 = pneg %p70
        %p781 = pneg %p67
        %p782 = pneg %p91
        %p783 = pneg %p88
        %p784 = pneg %p119
        %p785 = pneg %p116
        %s786 = sand.u32 %s106, 1
        %s787 = sand.u32 %s106, 1
        %s788 = smul.addr %s787, 64
        %s789 = scalar_lea.vmem [#allocation3], %s788
        %v790 = vld [vmem:[%s1] sm:$0xff]
        %v791 = vld [vmem:[%s1 + $0x8] sm:$0xff]
        %v792 = vld [vmem:[%s1 + $0x10] sm:$0xff]
        %v793 = vld [vmem:[%s1 + $0x18] sm:$0xff]
        %v794 = vld [vmem:[%s1 + $0x20] sm:$0xff]
        %v795 = vld [vmem:[%s1 + $0x28] sm:$0xff]
        %v796 = vld [vmem:[%s1 + $0x30] sm:$0xff]
        %v797 = vld [vmem:[%s1 + $0x38] sm:$0xff]
        %v798 = vld [vmem:[%s1 + $0x40] sm:$0xff]
        %v799 = vld [vmem:[%s1 + $0x48] sm:$0xff]
        %v800 = vld [vmem:[%s1 + $0x50] sm:$0xff]
        %v801 = vld [vmem:[%s1 + $0x58] sm:$0xff]
        %v802 = vld [vmem:[%s1 + $0x60] sm:$0xff]
        %v803 = vld [vmem:[%s1 + $0x68] sm:$0xff]
        %v804 = vld [vmem:[%s1 + $0x70] sm:$0xff]
        %v805 = vld [vmem:[%s1 + $0x78] sm:$0xff]
        %v806 = vld [vmem:[%s1 + $0x80] sm:$0xff]
        %v807 = vld [vmem:[%s1 + $0x88] sm:$0xff]
        %v808 = vld [vmem:[%s1 + $0x90] sm:$0xff]
        %v809 = vld [vmem:[%s1 + $0x98] sm:$0xff]
        %v810 = vld [vmem:[%s1 + $0xa0] sm:$0xff]
        %v811 = vld [vmem:[%s1 + $0xa8] sm:$0xff]
        %v812 = vld [vmem:[%s1 + $0xb0] sm:$0xff]
        %v813 = vld [vmem:[%s1 + $0xb8] sm:$0xff]
        %v814 = vld [vmem:[%s770] sm:$0xff]
        %v815 = vld [vmem:[%s770 + $0x8] sm:$0xff]
        %v816 = vld [vmem:[%s770 + $0x10] sm:$0xff]
        %v817 = vld [vmem:[%s770 + $0x18] sm:$0xff]
        %v818 = vld [vmem:[%s770 + $0x20] sm:$0xff]
        %v819 = vld [vmem:[%s770 + $0x28] sm:$0xff]
        %v820 = vld [vmem:[%s770 + $0x30] sm:$0xff]
        %v821 = vld [vmem:[%s770 + $0x38] sm:$0xff]
        %v822 = vld [vmem:[%s770 + $0x40] sm:$0xff]
        %v823 = vld [vmem:[%s770 + $0x48] sm:$0xff]
        %v824 = vld [vmem:[%s770 + $0x50] sm:$0xff]
        %v825 = vld [vmem:[%s770 + $0x58] sm:$0xff]
        %v826 = vld [vmem:[%s770 + $0x60] sm:$0xff]
        %v827 = vld [vmem:[%s770 + $0x68] sm:$0xff]
        %v828 = vld [vmem:[%s770 + $0x70] sm:$0xff]
        %v829 = vld [vmem:[%s770 + $0x78] sm:$0xff]
        %v830 = vld [vmem:[%s770 + $0x80] sm:$0xff]
        %v831 = vld [vmem:[%s770 + $0x88] sm:$0xff]
        %v832 = vld [vmem:[%s770 + $0x90] sm:$0xff]
        %v833 = vld [vmem:[%s770 + $0x98] sm:$0xff]
        %v834 = vld [vmem:[%s770 + $0xa0] sm:$0xff]
        %v835 = vld [vmem:[%s770 + $0xa8] sm:$0xff]
        %v836 = vld [vmem:[%s770 + $0xb0] sm:$0xff]
        %v837 = vld [vmem:[%s770 + $0xb8] sm:$0xff]
        %v838 = vld [vmem:[%s770 + $0xc0] sm:$0xff]
        %v839 = vld [vmem:[%s770 + $0xc8] sm:$0xff]
        %v840 = vld [vmem:[%s770 + $0xd0] sm:$0xff]
        %v841 = vld [vmem:[%s770 + $0xd8] sm:$0xff]
        %v842 = vld [vmem:[%s770 + $0xe0] sm:$0xff]
        %v843 = vld [vmem:[%s770 + $0xe8] sm:$0xff]
        %v844 = vld [vmem:[%s770 + $0xf0] sm:$0xff]
        %v845 = vld [vmem:[%s770 + $0xf8] sm:$0xff]
        %v846 = vld [vmem:[%s770 + $0x100] sm:$0xff]
        %v847 = vld [vmem:[%s770 + $0x108] sm:$0xff]
        %v848 = vld [vmem:[%s770 + $0x110] sm:$0xff]
        %v849 = vld [vmem:[%s770 + $0x118] sm:$0xff]
        %vm850 = vcmask 261120
        %v852 = vsel %vm850, %v792, 0
        %v855 = vsel %vm850, %v795, 0
        %v858 = vsel %vm850, %v798, 0
        %v861 = vsel %vm850, %v801, 0
        %v864 = vsel %vm850, %v804, 0
        %v867 = vsel %vm850, %v807, 0
        %v870 = vsel %vm850, %v810, 0
        %v873 = vsel %vm850, %v813, 0
        %875 = vmatprep.subr.mxu0 0.0
        %876 = vmatpush1.msra.mxu0 %v829
        %877 = vmatprep.subr.mxu0 0.0
        %878 = vmatpush1.msra.mxu0 %v828
        %879 = vmatprep.subr.mxu0 0.0
        %880 = vmatpush1.msra.mxu0 %v827
        %881 = vmatprep.subr.mxu0 0.0
        %882 = vmatpush1.msra.mxu0 %v826
        %883 = vmatprep.subr.mxu0 0.0
        %884 = vmatpush1.msra.mxu0 %v825
        %885 = vmatprep.subr.mxu0 0.0
        %886 = vmatpush1.msra.mxu0 %v824
        %887 = vmatprep.subr.mxu0 0.0
        %888 = vmatpush1.msra.mxu0 %v823
        %889 = vmatprep.subr.mxu0 0.0
        %890 = vmatpush1.msra.mxu0 %v822
        %891 = vmatprep.subr.mxu0 0.0
        %892 = vmatpush1.msra.mxu0 %v821
        %893 = vmatprep.subr.mxu0 0.0
        %894 = vmatpush1.msra.mxu0 %v820
        %895 = vmatprep.subr.mxu0 0.0
        %896 = vmatpush1.msra.mxu0 %v819
        %897 = vmatprep.subr.mxu0 0.0
        %898 = vmatpush1.msra.mxu0 %v818
        %899 = vmatprep.subr.mxu0 0.0
        %900 = vmatpush1.msra.mxu0 %v817
        %901 = vmatprep.subr.mxu0 0.0
        %902 = vmatpush1.msra.mxu0 %v816
        %903 = vmatprep.subr.mxu0 0.0
        %904 = vmatpush1.msra.mxu0 %v815
        %905 = vmatprep.subr.mxu0 0.0
        %906 = vmatpush1.msra.mxu0 %v814
        %907 = vmatprep.subr.mxu0 0.0
        %908 = vmatpush2.msra.mxu0 %v845
        %909 = vmatprep.subr.mxu0 0.0
        %910 = vmatpush2.msra.mxu0 %v844
        %911 = vmatprep.subr.mxu0 0.0
        %912 = vmatpush2.msra.mxu0 %v843
        %913 = vmatprep.subr.mxu0 0.0
        %914 = vmatpush2.msra.mxu0 %v842
        %915 = vmatprep.subr.mxu0 0.0
        %916 = vmatpush2.msra.mxu0 %v841
        %917 = vmatprep.subr.mxu0 0.0
        %918 = vmatpush2.msra.mxu0 %v840
        %919 = vmatprep.subr.mxu0 0.0
        %920 = vmatpush2.msra.mxu0 %v839
        %921 = vmatprep.subr.mxu0 0.0
        %922 = vmatpush2.msra.mxu0 %v838
        %923 = vmatprep.subr.mxu0 0.0
        %924 = vmatpush2.msra.mxu0 %v837
        %925 = vmatprep.subr.mxu0 0.0
        %926 = vmatpush2.msra.mxu0 %v836
        %927 = vmatprep.subr.mxu0 0.0
        %928 = vmatpush2.msra.mxu0 %v835
        %929 = vmatprep.subr.mxu0 0.0
        %930 = vmatpush2.msra.mxu0 %v834
        %931 = vmatprep.subr.mxu0 0.0
        %932 = vmatpush2.msra.mxu0 %v833
        %933 = vmatprep.subr.mxu0 0.0
        %934 = vmatpush2.msra.mxu0 %v832
        %935 = vmatprep.subr.mxu0 0.0
        %936 = vmatpush2.msra.mxu0 %v831
        %937 = vmatprep.subr.mxu0 0.0
        %938 = vmatpush2.msra.mxu0 %v830
        %939 = vmatprep.mubr.f32.mxu0 %v791
        %940 = vmatmul.mubr.f32.gmra.mxu0 %v790
        %v941 = vpop.f32.mrf.mxu0
        %v942 = vadd.f32 0.0, %v941
        %v943 = vpop.f32.mrf.mxu0
        %944 = vmatprep.mubr.f32.mxu0 %v794
        %945 = vmatmul.mubr.f32.gmra.mxu0 %v793
        %v946 = vpop.f32.mrf.mxu0
        %v947 = vadd.f32 0.0, %v946
        %v948 = vpop.f32.mrf.mxu0
        %949 = vmatprep.mubr.f32.mxu0 %v797
        %950 = vmatmul.mubr.f32.gmra.mxu0 %v796
        %v951 = vpop.f32.mrf.mxu0
        %v952 = vadd.f32 0.0, %v951
        %v953 = vpop.f32.mrf.mxu0
        %954 = vmatprep.mubr.f32.mxu0 %v800
        %955 = vmatmul.mubr.f32.gmra.mxu0 %v799
        %v956 = vpop.f32.mrf.mxu0
        %v957 = vadd.f32 0.0, %v956
        %v958 = vpop.f32.mrf.mxu0
        %959 = vmatprep.mubr.f32.mxu0 %v803
        %960 = vmatmul.mubr.f32.gmra.mxu0 %v802
        %v961 = vpop.f32.mrf.mxu0
        %v962 = vadd.f32 0.0, %v961
        %v963 = vpop.f32.mrf.mxu0
        %964 = vmatprep.mubr.f32.mxu0 %v806
        %965 = vmatmul.mubr.f32.gmra.mxu0 %v805
        %v966 = vpop.f32.mrf.mxu0
        %v967 = vadd.f32 0.0, %v966
        %v968 = vpop.f32.mrf.mxu0
        %969 = vmatprep.mubr.f32.mxu0 %v809
        %970 = vmatmul.mubr.f32.gmra.mxu0 %v808
        %v971 = vpop.f32.mrf.mxu0
        %v972 = vadd.f32 0.0, %v971
        %v973 = vpop.f32.mrf.mxu0
        %974 = vmatprep.mubr.f32.mxu0 %v812
        %975 = vmatmul.mubr.f32.gmra.mxu0 %v811
        %v976 = vpop.f32.mrf.mxu0
        %v977 = vadd.f32 0.0, %v976
        %v978 = vpop.f32.mrf.mxu0
        %979 = vdwg.mxu0
        %980 = vmatprep.subr.mxu0 0.0
        %981 = vmatpush1.msra.mxu0 0.0
        %982 = vmatprep.subr.mxu0 0.0
        %983 = vmatpush1.msra.mxu0 0.0
        %984 = vmatprep.subr.mxu0 0.0
        %985 = vmatpush1.msra.mxu0 0.0
        %986 = vmatprep.subr.mxu0 0.0
        %987 = vmatpush1.msra.mxu0 0.0
        %988 = vmatprep.subr.mxu0 0.0
        %989 = vmatpush1.msra.mxu0 0.0
        %990 = vmatprep.subr.mxu0 0.0
        %991 = vmatpush1.msra.mxu0 0.0
        %992 = vmatprep.subr.mxu0 0.0
        %993 = vmatpush1.msra.mxu0 0.0
        %994 = vmatprep.subr.mxu0 0.0
        %995 = vmatpush1.msra.mxu0 0.0
        %996 = vmatprep.subr.mxu0 0.0
        %997 = vmatpush1.msra.mxu0 0.0
        %998 = vmatprep.subr.mxu0 0.0
        %999 = vmatpush1.msra.mxu0 0.0
        %1000 = vmatprep.subr.mxu0 0.0
        %1001 = vmatpush1.msra.mxu0 0.0
        %1002 = vmatprep.subr.mxu0 0.0
        %1003 = vmatpush1.msra.mxu0 0.0
        %1004 = vmatprep.subr.mxu0 0.0
        %1005 = vmatpush1.msra.mxu0 %v849
        %1006 = vmatprep.subr.mxu0 0.0
        %1007 = vmatpush1.msra.mxu0 %v848
        %1008 = vmatprep.subr.mxu0 0.0
        %1009 = vmatpush1.msra.mxu0 %v847
        %1010 = vmatprep.subr.mxu0 0.0
        %1011 = vmatpush1.msra.mxu0 %v846
        %1012 = vmatprep.subr.mxu0 0.0
        %1013 = vmatpush2.msra.mxu0 0.0
        %1014 = vmatprep.subr.mxu0 0.0
        %1015 = vmatpush2.msra.mxu0 0.0
        %1016 = vmatprep.subr.mxu0 0.0
        %1017 = vmatpush2.msra.mxu0 0.0
        %1018 = vmatprep.subr.mxu0 0.0
        %1019 = vmatpush2.msra.mxu0 0.0
        %1020 = vmatprep.subr.mxu0 0.0
        %1021 = vmatpush2.msra.mxu0 0.0
        %1022 = vmatprep.subr.mxu0 0.0
        %1023 = vmatpush2.msra.mxu0 0.0
        %1024 = vmatprep.subr.mxu0 0.0
        %1025 = vmatpush2.msra.mxu0 0.0
        %1026 = vmatprep.subr.mxu0 0.0
        %1027 = vmatpush2.msra.mxu0 0.0
        %1028 = vmatprep.subr.mxu0 0.0
        %1029 = vmatpush2.msra.mxu0 0.0
        %1030 = vmatprep.subr.mxu0 0.0
        %1031 = vmatpush2.msra.mxu0 0.0
        %1032 = vmatprep.subr.mxu0 0.0
        %1033 = vmatpush2.msra.mxu0 0.0
        %1034 = vmatprep.subr.mxu0 0.0
        %1035 = vmatpush2.msra.mxu0 0.0
        %1036 = vmatprep.subr.mxu0 0.0
        %1037 = vmatpush2.msra.mxu0 0.0
        %1038 = vmatprep.subr.mxu0 0.0
        %1039 = vmatpush2.msra.mxu0 0.0
        %1040 = vmatprep.subr.mxu0 0.0
        %1041 = vmatpush2.msra.mxu0 0.0
        %1042 = vmatprep.subr.mxu0 0.0
        %1043 = vmatpush2.msra.mxu0 0.0
        %1044 = vmatprep.mubr.f32.mxu0 0.0
        %1045 = vmatmul.mubr.f32.gmra.mxu0 %v852
        %v1046 = vpop.f32.mrf.mxu0
        %v1047 = vadd.f32 %v942, %v1046
        %v1048 = vpop.f32.mrf.mxu0
        %1049 = vmatprep.mubr.f32.mxu0 0.0
        %1050 = vmatmul.mubr.f32.gmra.mxu0 %v855
        %v1051 = vpop.f32.mrf.mxu0
        %v1052 = vadd.f32 %v947, %v1051
        %v1053 = vpop.f32.mrf.mxu0
        %1054 = vmatprep.mubr.f32.mxu0 0.0
        %1055 = vmatmul.mubr.f32.gmra.mxu0 %v858
        %v1056 = vpop.f32.mrf.mxu0
        %v1057 = vadd.f32 %v952, %v1056
        %v1058 = vpop.f32.mrf.mxu0
        %1059 = vmatprep.mubr.f32.mxu0 0.0
        %1060 = vmatmul.mubr.f32.gmra.mxu0 %v861
        %v1061 = vpop.f32.mrf.mxu0
        %v1062 = vadd.f32 %v957, %v1061
        %v1063 = vpop.f32.mrf.mxu0
        %1064 = vmatprep.mubr.f32.mxu0 0.0
        %1065 = vmatmul.mubr.f32.gmra.mxu0 %v864
        %v1066 = vpop.f32.mrf.mxu0
        %v1067 = vadd.f32 %v962, %v1066
        %v1068 = vpop.f32.mrf.mxu0
        %1069 = vmatprep.mubr.f32.mxu0 0.0
        %1070 = vmatmul.mubr.f32.gmra.mxu0 %v867
        %v1071 = vpop.f32.mrf.mxu0
        %v1072 = vadd.f32 %v967, %v1071
        %v1073 = vpop.f32.mrf.mxu0
        %1074 = vmatprep.mubr.f32.mxu0 0.0
        %1075 = vmatmul.mubr.f32.gmra.mxu0 %v870
        %v1076 = vpop.f32.mrf.mxu0
        %v1077 = vadd.f32 %v972, %v1076
        %v1078 = vpop.f32.mrf.mxu0
        %1079 = vmatprep.mubr.f32.mxu0 0.0
        %1080 = vmatmul.mubr.f32.gmra.mxu0 %v873
        %v1081 = vpop.f32.mrf.mxu0
        %v1082 = vadd.f32 %v977, %v1081
        %v1083 = vpop.f32.mrf.mxu0
        %1084 = vdwg.mxu0
        %s1085 = scalar_lea.vmem %s770, 288 [#allocation2]
        %v1086 = vld [vmem:[%s1085] sm:$0xff]
        %v1087 = vld [vmem:[%s1085 + $0x8] sm:$0xff]
        %v1088 = vld [vmem:[%s1085 + $0x10] sm:$0xff]
        %v1089 = vld [vmem:[%s1085 + $0x18] sm:$0xff]
        %v1090 = vld [vmem:[%s1085 + $0x20] sm:$0xff]
        %v1091 = vld [vmem:[%s1085 + $0x28] sm:$0xff]
        %v1092 = vld [vmem:[%s1085 + $0x30] sm:$0xff]
        %v1093 = vld [vmem:[%s1085 + $0x38] sm:$0xff]
        %v1094 = vld [vmem:[%s1085 + $0x40] sm:$0xff]
        %v1095 = vld [vmem:[%s1085 + $0x48] sm:$0xff]
        %v1096 = vld [vmem:[%s1085 + $0x50] sm:$0xff]
        %v1097 = vld [vmem:[%s1085 + $0x58] sm:$0xff]
        %v1098 = vld [vmem:[%s1085 + $0x60] sm:$0xff]
        %v1099 = vld [vmem:[%s1085 + $0x68] sm:$0xff]
        %v1100 = vld [vmem:[%s1085 + $0x70] sm:$0xff]
        %v1101 = vld [vmem:[%s1085 + $0x78] sm:$0xff]
        %v1102 = vld [vmem:[%s1085 + $0x80] sm:$0xff]
        %v1103 = vld [vmem:[%s1085 + $0x88] sm:$0xff]
        %v1104 = vld [vmem:[%s1085 + $0x90] sm:$0xff]
        %v1105 = vld [vmem:[%s1085 + $0x98] sm:$0xff]
        %v1106 = vld [vmem:[%s1085 + $0xa0] sm:$0xff]
        %v1107 = vld [vmem:[%s1085 + $0xa8] sm:$0xff]
        %v1108 = vld [vmem:[%s1085 + $0xb0] sm:$0xff]
        %v1109 = vld [vmem:[%s1085 + $0xb8] sm:$0xff]
        %v1110 = vld [vmem:[%s1085 + $0xc0] sm:$0xff]
        %v1111 = vld [vmem:[%s1085 + $0xc8] sm:$0xff]
        %v1112 = vld [vmem:[%s1085 + $0xd0] sm:$0xff]
        %v1113 = vld [vmem:[%s1085 + $0xd8] sm:$0xff]
        %v1114 = vld [vmem:[%s1085 + $0xe0] sm:$0xff]
        %v1115 = vld [vmem:[%s1085 + $0xe8] sm:$0xff]
        %v1116 = vld [vmem:[%s1085 + $0xf0] sm:$0xff]
        %v1117 = vld [vmem:[%s1085 + $0xf8] sm:$0xff]
        %v1118 = vld [vmem:[%s1085 + $0x100] sm:$0xff]
        %v1119 = vld [vmem:[%s1085 + $0x108] sm:$0xff]
        %v1120 = vld [vmem:[%s1085 + $0x110] sm:$0xff]
        %v1121 = vld [vmem:[%s1085 + $0x118] sm:$0xff]
        %1122 = vmatprep.subr.mxu0 0.0
        %1123 = vmatpush1.msra.mxu0 %v1101
        %1124 = vmatprep.subr.mxu0 0.0
        %1125 = vmatpush1.msra.mxu0 %v1100
        %1126 = vmatprep.subr.mxu0 0.0
        %1127 = vmatpush1.msra.mxu0 %v1099
        %1128 = vmatprep.subr.mxu0 0.0
        %1129 = vmatpush1.msra.mxu0 %v1098
        %1130 = vmatprep.subr.mxu0 0.0
        %1131 = vmatpush1.msra.mxu0 %v1097
        %1132 = vmatprep.subr.mxu0 0.0
        %1133 = vmatpush1.msra.mxu0 %v1096
        %1134 = vmatprep.subr.mxu0 0.0
        %1135 = vmatpush1.msra.mxu0 %v1095
        %1136 = vmatprep.subr.mxu0 0.0
        %1137 = vmatpush1.msra.mxu0 %v1094
        %1138 = vmatprep.subr.mxu0 0.0
        %1139 = vmatpush1.msra.mxu0 %v1093
        %1140 = vmatprep.subr.mxu0 0.0
        %1141 = vmatpush1.msra.mxu0 %v1092
        %1142 = vmatprep.subr.mxu0 0.0
        %1143 = vmatpush1.msra.mxu0 %v1091
        %1144 = vmatprep.subr.mxu0 0.0
        %1145 = vmatpush1.msra.mxu0 %v1090
        %1146 = vmatprep.subr.mxu0 0.0
        %1147 = vmatpush1.msra.mxu0 %v1089
        %1148 = vmatprep.subr.mxu0 0.0
        %1149 = vmatpush1.msra.mxu0 %v1088
        %1150 = vmatprep.subr.mxu0 0.0
        %1151 = vmatpush1.msra.mxu0 %v1087
        %1152 = vmatprep.subr.mxu0 0.0
        %1153 = vmatpush1.msra.mxu0 %v1086
        %1154 = vmatprep.subr.mxu0 0.0
        %1155 = vmatpush2.msra.mxu0 %v1117
        %1156 = vmatprep.subr.mxu0 0.0
        %1157 = vmatpush2.msra.mxu0 %v1116
        %1158 = vmatprep.subr.mxu0 0.0
        %1159 = vmatpush2.msra.mxu0 %v1115
        %1160 = vmatprep.subr.mxu0 0.0
        %1161 = vmatpush2.msra.mxu0 %v1114
        %1162 = vmatprep.subr.mxu0 0.0
        %1163 = vmatpush2.msra.mxu0 %v1113
        %1164 = vmatprep.subr.mxu0 0.0
        %1165 = vmatpush2.msra.mxu0 %v1112
        %1166 = vmatprep.subr.mxu0 0.0
        %1167 = vmatpush2.msra.mxu0 %v1111
        %1168 = vmatprep.subr.mxu0 0.0
        %1169 = vmatpush2.msra.mxu0 %v1110
        %1170 = vmatprep.subr.mxu0 0.0
        %1171 = vmatpush2.msra.mxu0 %v1109
        %1172 = vmatprep.subr.mxu0 0.0
        %1173 = vmatpush2.msra.mxu0 %v1108
        %1174 = vmatprep.subr.mxu0 0.0
        %1175 = vmatpush2.msra.mxu0 %v1107
        %1176 = vmatprep.subr.mxu0 0.0
        %1177 = vmatpush2.msra.mxu0 %v1106
        %1178 = vmatprep.subr.mxu0 0.0
        %1179 = vmatpush2.msra.mxu0 %v1105
        %1180 = vmatprep.subr.mxu0 0.0
        %1181 = vmatpush2.msra.mxu0 %v1104
        %1182 = vmatprep.subr.mxu0 0.0
        %1183 = vmatpush2.msra.mxu0 %v1103
        %1184 = vmatprep.subr.mxu0 0.0
        %1185 = vmatpush2.msra.mxu0 %v1102
        %1186 = vmatprep.mubr.f32.mxu0 %v791
        %1187 = vmatmul.mubr.f32.gmra.mxu0 %v790
        %v1188 = vpop.f32.mrf.mxu0
        %v1189 = vadd.f32 0.0, %v1188
        %v1190 = vpop.f32.mrf.mxu0
        %1191 = vmatprep.mubr.f32.mxu0 %v794
        %1192 = vmatmul.mubr.f32.gmra.mxu0 %v793
        %v1193 = vpop.f32.mrf.mxu0
        %v1194 = vadd.f32 0.0, %v1193
        %v1195 = vpop.f32.mrf.mxu0
        %1196 = vmatprep.mubr.f32.mxu0 %v797
        %1197 = vmatmul.mubr.f32.gmra.mxu0 %v796
        %v1198 = vpop.f32.mrf.mxu0
        %v1199 = vadd.f32 0.0, %v1198
        %v1200 = vpop.f32.mrf.mxu0
        %1201 = vmatprep.mubr.f32.mxu0 %v800
        %1202 = vmatmul.mubr.f32.gmra.mxu0 %v799
        %v1203 = vpop.f32.mrf.mxu0
        %v1204 = vadd.f32 0.0, %v1203
        %v1205 = vpop.f32.mrf.mxu0
        %1206 = vmatprep.mubr.f32.mxu0 %v803
        %1207 = vmatmul.mubr.f32.gmra.mxu0 %v802
        %v1208 = vpop.f32.mrf.mxu0
        %v1209 = vadd.f32 0.0, %v1208
        %v1210 = vpop.f32.mrf.mxu0
        %1211 = vmatprep.mubr.f32.mxu0 %v806
        %1212 = vmatmul.mubr.f32.gmra.mxu0 %v805
        %v1213 = vpop.f32.mrf.mxu0
        %v1214 = vadd.f32 0.0, %v1213
        %v1215 = vpop.f32.mrf.mxu0
        %1216 = vmatprep.mubr.f32.mxu0 %v809
        %1217 = vmatmul.mubr.f32.gmra.mxu0 %v808
        %v1218 = vpop.f32.mrf.mxu0
        %v1219 = vadd.f32 0.0, %v1218
        %v1220 = vpop.f32.mrf.mxu0
        %1221 = vmatprep.mubr.f32.mxu0 %v812
        %1222 = vmatmul.mubr.f32.gmra.mxu0 %v811
        %v1223 = vpop.f32.mrf.mxu0
        %v1224 = vadd.f32 0.0, %v1223
        %v1225 = vpop.f32.mrf.mxu0
        %1226 = vdwg.mxu0
        %1227 = vmatprep.subr.mxu0 0.0
        %1228 = vmatpush1.msra.mxu0 0.0
        %1229 = vmatprep.subr.mxu0 0.0
        %1230 = vmatpush1.msra.mxu0 0.0
        %1231 = vmatprep.subr.mxu0 0.0
        %1232 = vmatpush1.msra.mxu0 0.0
        %1233 = vmatprep.subr.mxu0 0.0
        %1234 = vmatpush1.msra.mxu0 0.0
        %1235 = vmatprep.subr.mxu0 0.0
        %1236 = vmatpush1.msra.mxu0 0.0
        %1237 = vmatprep.subr.mxu0 0.0
        %1238 = vmatpush1.msra.mxu0 0.0
        %1239 = vmatprep.subr.mxu0 0.0
        %1240 = vmatpush1.msra.mxu0 0.0
        %1241 = vmatprep.subr.mxu0 0.0
        %1242 = vmatpush1.msra.mxu0 0.0
        %1243 = vmatprep.subr.mxu0 0.0
        %1244 = vmatpush1.msra.mxu0 0.0
        %1245 = vmatprep.subr.mxu0 0.0
        %1246 = vmatpush1.msra.mxu0 0.0
        %1247 = vmatprep.subr.mxu0 0.0
        %1248 = vmatpush1.msra.mxu0 0.0
        %1249 = vmatprep.subr.mxu0 0.0
        %1250 = vmatpush1.msra.mxu0 0.0
        %1251 = vmatprep.subr.mxu0 0.0
        %1252 = vmatpush1.msra.mxu0 %v1121
        %1253 = vmatprep.subr.mxu0 0.0
        %1254 = vmatpush1.msra.mxu0 %v1120
        %1255 = vmatprep.subr.mxu0 0.0
        %1256 = vmatpush1.msra.mxu0 %v1119
        %1257 = vmatprep.subr.mxu0 0.0
        %1258 = vmatpush1.msra.mxu0 %v1118
        %1259 = vmatprep.subr.mxu0 0.0
        %1260 = vmatpush2.msra.mxu0 0.0
        %1261 = vmatprep.subr.mxu0 0.0
        %1262 = vmatpush2.msra.mxu0 0.0
        %1263 = vmatprep.subr.mxu0 0.0
        %1264 = vmatpush2.msra.mxu0 0.0
        %1265 = vmatprep.subr.mxu0 0.0
        %1266 = vmatpush2.msra.mxu0 0.0
        %1267 = vmatprep.subr.mxu0 0.0
        %1268 = vmatpush2.msra.mxu0 0.0
        %1269 = vmatprep.subr.mxu0 0.0
        %1270 = vmatpush2.msra.mxu0 0.0
        %1271 = vmatprep.subr.mxu0 0.0
        %1272 = vmatpush2.msra.mxu0 0.0
        %1273 = vmatprep.subr.mxu0 0.0
        %1274 = vmatpush2.msra.mxu0 0.0
        %1275 = vmatprep.subr.mxu0 0.0
        %1276 = vmatpush2.msra.mxu0 0.0
        %1277 = vmatprep.subr.mxu0 0.0
        %1278 = vmatpush2.msra.mxu0 0.0
        %1279 = vmatprep.subr.mxu0 0.0
        %1280 = vmatpush2.msra.mxu0 0.0
        %1281 = vmatprep.subr.mxu0 0.0
        %1282 = vmatpush2.msra.mxu0 0.0
        %1283 = vmatprep.subr.mxu0 0.0
        %1284 = vmatpush2.msra.mxu0 0.0
        %1285 = vmatprep.subr.mxu0 0.0
        %1286 = vmatpush2.msra.mxu0 0.0
        %1287 = vmatprep.subr.mxu0 0.0
        %1288 = vmatpush2.msra.mxu0 0.0
        %1289 = vmatprep.subr.mxu0 0.0
        %1290 = vmatpush2.msra.mxu0 0.0
        %1291 = vmatprep.mubr.f32.mxu0 0.0
        %1292 = vmatmul.mubr.f32.gmra.mxu0 %v852
        %v1293 = vpop.f32.mrf.mxu0
        %v1294 = vadd.f32 %v1189, %v1293
        %v1295 = vpop.f32.mrf.mxu0
        %1296 = vmatprep.mubr.f32.mxu0 0.0
        %1297 = vmatmul.mubr.f32.gmra.mxu0 %v855
        %v1298 = vpop.f32.mrf.mxu0
        %v1299 = vadd.f32 %v1194, %v1298
        %v1300 = vpop.f32.mrf.mxu0
        %1301 = vmatprep.mubr.f32.mxu0 0.0
        %1302 = vmatmul.mubr.f32.gmra.mxu0 %v858
        %v1303 = vpop.f32.mrf.mxu0
        %v1304 = vadd.f32 %v1199, %v1303
        %v1305 = vpop.f32.mrf.mxu0
        %1306 = vmatprep.mubr.f32.mxu0 0.0
        %1307 = vmatmul.mubr.f32.gmra.mxu0 %v861
        %v1308 = vpop.f32.mrf.mxu0
        %v1309 = vadd.f32 %v1204, %v1308
        %v1310 = vpop.f32.mrf.mxu0
        %1311 = vmatprep.mubr.f32.mxu0 0.0
        %1312 = vmatmul.mubr.f32.gmra.mxu0 %v864
        %v1313 = vpop.f32.mrf.mxu0
        %v1314 = vadd.f32 %v1209, %v1313
        %v1315 = vpop.f32.mrf.mxu0
        %1316 = vmatprep.mubr.f32.mxu0 0.0
        %1317 = vmatmul.mubr.f32.gmra.mxu0 %v867
        %v1318 = vpop.f32.mrf.mxu0
        %v1319 = vadd.f32 %v1214, %v1318
        %v1320 = vpop.f32.mrf.mxu0
        %1321 = vmatprep.mubr.f32.mxu0 0.0
        %1322 = vmatmul.mubr.f32.gmra.mxu0 %v870
        %v1323 = vpop.f32.mrf.mxu0
        %v1324 = vadd.f32 %v1219, %v1323
        %v1325 = vpop.f32.mrf.mxu0
        %1326 = vmatprep.mubr.f32.mxu0 0.0
        %1327 = vmatmul.mubr.f32.gmra.mxu0 %v873
        %v1328 = vpop.f32.mrf.mxu0
        %v1329 = vadd.f32 %v1224, %v1328
        %v1330 = vpop.f32.mrf.mxu0
        %1331 = vdwg.mxu0
        %v1332 = vmax.f32 %v1047, %v1294
        %v1333 = vmax.f32 %v1052, %v1299
        %v1334 = vmax.f32 %v1057, %v1304
        %v1335 = vmax.f32 %v1062, %v1309
        %v1336 = vmax.f32 %v1067, %v1314
        %v1337 = vmax.f32 %v1072, %v1319
        %v1338 = vmax.f32 %v1077, %v1324
        %v1339 = vmax.f32 %v1082, %v1329
        %s1340 = scalar_lea.vmem %s770, 576 [#allocation2]
        %v1341 = vld [vmem:[%s1340] sm:$0xff]
        %v1342 = vld [vmem:[%s1340 + $0x8] sm:$0xff]
        %v1343 = vld [vmem:[%s1340 + $0x10] sm:$0xff]
        %v1344 = vld [vmem:[%s1340 + $0x18] sm:$0xff]
        %v1345 = vld [vmem:[%s1340 + $0x20] sm:$0xff]
        %v1346 = vld [vmem:[%s1340 + $0x28] sm:$0xff]
        %v1347 = vld [vmem:[%s1340 + $0x30] sm:$0xff]
        %v1348 = vld [vmem:[%s1340 + $0x38] sm:$0xff]
        %v1349 = vld [vmem:[%s1340 + $0x40] sm:$0xff]
        %v1350 = vld [vmem:[%s1340 + $0x48] sm:$0xff]
        %v1351 = vld [vmem:[%s1340 + $0x50] sm:$0xff]
        %v1352 = vld [vmem:[%s1340 + $0x58] sm:$0xff]
        %v1353 = vld [vmem:[%s1340 + $0x60] sm:$0xff]
        %v1354 = vld [vmem:[%s1340 + $0x68] sm:$0xff]
        %v1355 = vld [vmem:[%s1340 + $0x70] sm:$0xff]
        %v1356 = vld [vmem:[%s1340 + $0x78] sm:$0xff]
        %v1357 = vld [vmem:[%s1340 + $0x80] sm:$0xff]
        %v1358 = vld [vmem:[%s1340 + $0x88] sm:$0xff]
        %v1359 = vld [vmem:[%s1340 + $0x90] sm:$0xff]
        %v1360 = vld [vmem:[%s1340 + $0x98] sm:$0xff]
        %v1361 = vld [vmem:[%s1340 + $0xa0] sm:$0xff]
        %v1362 = vld [vmem:[%s1340 + $0xa8] sm:$0xff]
        %v1363 = vld [vmem:[%s1340 + $0xb0] sm:$0xff]
        %v1364 = vld [vmem:[%s1340 + $0xb8] sm:$0xff]
        %v1365 = vld [vmem:[%s1340 + $0xc0] sm:$0xff]
        %v1366 = vld [vmem:[%s1340 + $0xc8] sm:$0xff]
        %v1367 = vld [vmem:[%s1340 + $0xd0] sm:$0xff]
        %v1368 = vld [vmem:[%s1340 + $0xd8] sm:$0xff]
        %v1369 = vld [vmem:[%s1340 + $0xe0] sm:$0xff]
        %v1370 = vld [vmem:[%s1340 + $0xe8] sm:$0xff]
        %v1371 = vld [vmem:[%s1340 + $0xf0] sm:$0xff]
        %v1372 = vld [vmem:[%s1340 + $0xf8] sm:$0xff]
        %v1373 = vld [vmem:[%s1340 + $0x100] sm:$0xff]
        %v1374 = vld [vmem:[%s1340 + $0x108] sm:$0xff]
        %v1375 = vld [vmem:[%s1340 + $0x110] sm:$0xff]
        %v1376 = vld [vmem:[%s1340 + $0x118] sm:$0xff]
        %1377 = vmatprep.subr.mxu0 0.0
        %1378 = vmatpush1.msra.mxu0 %v1356
        %1379 = vmatprep.subr.mxu0 0.0
        %1380 = vmatpush1.msra.mxu0 %v1355
        %1381 = vmatprep.subr.mxu0 0.0
        %1382 = vmatpush1.msra.mxu0 %v1354
        %1383 = vmatprep.subr.mxu0 0.0
        %1384 = vmatpush1.msra.mxu0 %v1353
        %1385 = vmatprep.subr.mxu0 0.0
        %1386 = vmatpush1.msra.mxu0 %v1352
        %1387 = vmatprep.subr.mxu0 0.0
        %1388 = vmatpush1.msra.mxu0 %v1351
        %1389 = vmatprep.subr.mxu0 0.0
        %1390 = vmatpush1.msra.mxu0 %v1350
        %1391 = vmatprep.subr.mxu0 0.0
        %1392 = vmatpush1.msra.mxu0 %v1349
        %1393 = vmatprep.subr.mxu0 0.0
        %1394 = vmatpush1.msra.mxu0 %v1348
        %1395 = vmatprep.subr.mxu0 0.0
        %1396 = vmatpush1.msra.mxu0 %v1347
        %1397 = vmatprep.subr.mxu0 0.0
        %1398 = vmatpush1.msra.mxu0 %v1346
        %1399 = vmatprep.subr.mxu0 0.0
        %1400 = vmatpush1.msra.mxu0 %v1345
        %1401 = vmatprep.subr.mxu0 0.0
        %1402 = vmatpush1.msra.mxu0 %v1344
        %1403 = vmatprep.subr.mxu0 0.0
        %1404 = vmatpush1.msra.mxu0 %v1343
        %1405 = vmatprep.subr.mxu0 0.0
        %1406 = vmatpush1.msra.mxu0 %v1342
        %1407 = vmatprep.subr.mxu0 0.0
        %1408 = vmatpush1.msra.mxu0 %v1341
        %1409 = vmatprep.subr.mxu0 0.0
        %1410 = vmatpush2.msra.mxu0 %v1372
        %1411 = vmatprep.subr.mxu0 0.0
        %1412 = vmatpush2.msra.mxu0 %v1371
        %1413 = vmatprep.subr.mxu0 0.0
        %1414 = vmatpush2.msra.mxu0 %v1370
        %1415 = vmatprep.subr.mxu0 0.0
        %1416 = vmatpush2.msra.mxu0 %v1369
        %1417 = vmatprep.subr.mxu0 0.0
        %1418 = vmatpush2.msra.mxu0 %v1368
        %1419 = vmatprep.subr.mxu0 0.0
        %1420 = vmatpush2.msra.mxu0 %v1367
        %1421 = vmatprep.subr.mxu0 0.0
        %1422 = vmatpush2.msra.mxu0 %v1366
        %1423 = vmatprep.subr.mxu0 0.0
        %1424 = vmatpush2.msra.mxu0 %v1365
        %1425 = vmatprep.subr.mxu0 0.0
        %1426 = vmatpush2.msra.mxu0 %v1364
        %1427 = vmatprep.subr.mxu0 0.0
        %1428 = vmatpush2.msra.mxu0 %v1363
        %1429 = vmatprep.subr.mxu0 0.0
        %1430 = vmatpush2.msra.mxu0 %v1362
        %1431 = vmatprep.subr.mxu0 0.0
        %1432 = vmatpush2.msra.mxu0 %v1361
        %1433 = vmatprep.subr.mxu0 0.0
        %1434 = vmatpush2.msra.mxu0 %v1360
        %1435 = vmatprep.subr.mxu0 0.0
        %1436 = vmatpush2.msra.mxu0 %v1359
        %1437 = vmatprep.subr.mxu0 0.0
        %1438 = vmatpush2.msra.mxu0 %v1358
        %1439 = vmatprep.subr.mxu0 0.0
        %1440 = vmatpush2.msra.mxu0 %v1357
        %1441 = vmatprep.mubr.f32.mxu0 %v791
        %1442 = vmatmul.mubr.f32.gmra.mxu0 %v790
        %v1443 = vpop.f32.mrf.mxu0
        %v1444 = vadd.f32 0.0, %v1443
        %v1445 = vpop.f32.mrf.mxu0
        %1446 = vmatprep.mubr.f32.mxu0 %v794
        %1447 = vmatmul.mubr.f32.gmra.mxu0 %v793
        %v1448 = vpop.f32.mrf.mxu0
        %v1449 = vadd.f32 0.0, %v1448
        %v1450 = vpop.f32.mrf.mxu0
        %1451 = vmatprep.mubr.f32.mxu0 %v797
        %1452 = vmatmul.mubr.f32.gmra.mxu0 %v796
        %v1453 = vpop.f32.mrf.mxu0
        %v1454 = vadd.f32 0.0, %v1453
        %v1455 = vpop.f32.mrf.mxu0
        %1456 = vmatprep.mubr.f32.mxu0 %v800
        %1457 = vmatmul.mubr.f32.gmra.mxu0 %v799
        %v1458 = vpop.f32.mrf.mxu0
        %v1459 = vadd.f32 0.0, %v1458
        %v1460 = vpop.f32.mrf.mxu0
        %1461 = vmatprep.mubr.f32.mxu0 %v803
        %1462 = vmatmul.mubr.f32.gmra.mxu0 %v802
        %v1463 = vpop.f32.mrf.mxu0
        %v1464 = vadd.f32 0.0, %v1463
        %v1465 = vpop.f32.mrf.mxu0
        %1466 = vmatprep.mubr.f32.mxu0 %v806
        %1467 = vmatmul.mubr.f32.gmra.mxu0 %v805
        %v1468 = vpop.f32.mrf.mxu0
        %v1469 = vadd.f32 0.0, %v1468
        %v1470 = vpop.f32.mrf.mxu0
        %1471 = vmatprep.mubr.f32.mxu0 %v809
        %1472 = vmatmul.mubr.f32.gmra.mxu0 %v808
        %v1473 = vpop.f32.mrf.mxu0
        %v1474 = vadd.f32 0.0, %v1473
        %v1475 = vpop.f32.mrf.mxu0
        %1476 = vmatprep.mubr.f32.mxu0 %v812
        %1477 = vmatmul.mubr.f32.gmra.mxu0 %v811
        %v1478 = vpop.f32.mrf.mxu0
        %v1479 = vadd.f32 0.0, %v1478
        %v1480 = vpop.f32.mrf.mxu0
        %1481 = vdwg.mxu0
        %1482 = vmatprep.subr.mxu0 0.0
        %1483 = vmatpush1.msra.mxu0 0.0
        %1484 = vmatprep.subr.mxu0 0.0
        %1485 = vmatpush1.msra.mxu0 0.0
        %1486 = vmatprep.subr.mxu0 0.0
        %1487 = vmatpush1.msra.mxu0 0.0
        %1488 = vmatprep.subr.mxu0 0.0
        %1489 = vmatpush1.msra.mxu0 0.0
        %1490 = vmatprep.subr.mxu0 0.0
        %1491 = vmatpush1.msra.mxu0 0.0
        %1492 = vmatprep.subr.mxu0 0.0
        %1493 = vmatpush1.msra.mxu0 0.0
        %1494 = vmatprep.subr.mxu0 0.0
        %1495 = vmatpush1.msra.mxu0 0.0
        %1496 = vmatprep.subr.mxu0 0.0
        %1497 = vmatpush1.msra.mxu0 0.0
        %1498 = vmatprep.subr.mxu0 0.0
        %1499 = vmatpush1.msra.mxu0 0.0
        %1500 = vmatprep.subr.mxu0 0.0
        %1501 = vmatpush1.msra.mxu0 0.0
        %1502 = vmatprep.subr.mxu0 0.0
        %1503 = vmatpush1.msra.mxu0 0.0
        %1504 = vmatprep.subr.mxu0 0.0
        %1505 = vmatpush1.msra.mxu0 0.0
        %1506 = vmatprep.subr.mxu0 0.0
        %1507 = vmatpush1.msra.mxu0 %v1376
        %1508 = vmatprep.subr.mxu0 0.0
        %1509 = vmatpush1.msra.mxu0 %v1375
        %1510 = vmatprep.subr.mxu0 0.0
        %1511 = vmatpush1.msra.mxu0 %v1374
        %1512 = vmatprep.subr.mxu0 0.0
        %1513 = vmatpush1.msra.mxu0 %v1373
        %1514 = vmatprep.subr.mxu0 0.0
        %1515 = vmatpush2.msra.mxu0 0.0
        %1516 = vmatprep.subr.mxu0 0.0
        %1517 = vmatpush2.msra.mxu0 0.0
        %1518 = vmatprep.subr.mxu0 0.0
        %1519 = vmatpush2.msra.mxu0 0.0
        %1520 = vmatprep.subr.mxu0 0.0
        %1521 = vmatpush2.msra.mxu0 0.0
        %1522 = vmatprep.subr.mxu0 0.0
        %1523 = vmatpush2.msra.mxu0 0.0
        %1524 = vmatprep.subr.mxu0 0.0
        %1525 = vmatpush2.msra.mxu0 0.0
        %1526 = vmatprep.subr.mxu0 0.0
        %1527 = vmatpush2.msra.mxu0 0.0
        %1528 = vmatprep.subr.mxu0 0.0
        %1529 = vmatpush2.msra.mxu0 0.0
        %1530 = vmatprep.subr.mxu0 0.0
        %1531 = vmatpush2.msra.mxu0 0.0
        %1532 = vmatprep.subr.mxu0 0.0
        %1533 = vmatpush2.msra.mxu0 0.0
        %1534 = vmatprep.subr.mxu0 0.0
        %1535 = vmatpush2.msra.mxu0 0.0
        %1536 = vmatprep.subr.mxu0 0.0
        %1537 = vmatpush2.msra.mxu0 0.0
        %1538 = vmatprep.subr.mxu0 0.0
        %1539 = vmatpush2.msra.mxu0 0.0
        %1540 = vmatprep.subr.mxu0 0.0
        %1541 = vmatpush2.msra.mxu0 0.0
        %1542 = vmatprep.subr.mxu0 0.0
        %1543 = vmatpush2.msra.mxu0 0.0
        %1544 = vmatprep.subr.mxu0 0.0
        %1545 = vmatpush2.msra.mxu0 0.0
        %1546 = vmatprep.mubr.f32.mxu0 0.0
        %1547 = vmatmul.mubr.f32.gmra.mxu0 %v852
        %v1548 = vpop.f32.mrf.mxu0
        %v1549 = vadd.f32 %v1444, %v1548
        %v1550 = vpop.f32.mrf.mxu0
        %1551 = vmatprep.mubr.f32.mxu0 0.0
        %1552 = vmatmul.mubr.f32.gmra.mxu0 %v855
        %v1553 = vpop.f32.mrf.mxu0
        %v1554 = vadd.f32 %v1449, %v1553
        %v1555 = vpop.f32.mrf.mxu0
        %1556 = vmatprep.mubr.f32.mxu0 0.0
        %1557 = vmatmul.mubr.f32.gmra.mxu0 %v858
        %v1558 = vpop.f32.mrf.mxu0
        %v1559 = vadd.f32 %v1454, %v1558
        %v1560 = vpop.f32.mrf.mxu0
        %1561 = vmatprep.mubr.f32.mxu0 0.0
        %1562 = vmatmul.mubr.f32.gmra.mxu0 %v861
        %v1563 = vpop.f32.mrf.mxu0
        %v1564 = vadd.f32 %v1459, %v1563
        %v1565 = vpop.f32.mrf.mxu0
        %1566 = vmatprep.mubr.f32.mxu0 0.0
        %1567 = vmatmul.mubr.f32.gmra.mxu0 %v864
        %v1568 = vpop.f32.mrf.mxu0
        %v1569 = vadd.f32 %v1464, %v1568
        %v1570 = vpop.f32.mrf.mxu0
        %1571 = vmatprep.mubr.f32.mxu0 0.0
        %1572 = vmatmul.mubr.f32.gmra.mxu0 %v867
        %v1573 = vpop.f32.mrf.mxu0
        %v1574 = vadd.f32 %v1469, %v1573
        %v1575 = vpop.f32.mrf.mxu0
        %1576 = vmatprep.mubr.f32.mxu0 0.0
        %1577 = vmatmul.mubr.f32.gmra.mxu0 %v870
        %v1578 = vpop.f32.mrf.mxu0
        %v1579 = vadd.f32 %v1474, %v1578
        %v1580 = vpop.f32.mrf.mxu0
        %1581 = vmatprep.mubr.f32.mxu0 0.0
        %1582 = vmatmul.mubr.f32.gmra.mxu0 %v873
        %v1583 = vpop.f32.mrf.mxu0
        %v1584 = vadd.f32 %v1479, %v1583
        %v1585 = vpop.f32.mrf.mxu0
        %1586 = vdwg.mxu0
        %v1587 = vmax.f32 %v1332, %v1549
        %v1588 = vmax.f32 %v1333, %v1554
        %v1589 = vmax.f32 %v1334, %v1559
        %v1590 = vmax.f32 %v1335, %v1564
        %v1591 = vmax.f32 %v1336, %v1569
        %v1592 = vmax.f32 %v1337, %v1574
        %v1593 = vmax.f32 %v1338, %v1579
        %v1594 = vmax.f32 %v1339, %v1584
        %s1595 = scalar_lea.vmem %s770, 864 [#allocation2]
        %v1596 = vld [vmem:[%s1595] sm:$0xff]
        %v1597 = vld [vmem:[%s1595 + $0x8] sm:$0xff]
        %v1598 = vld [vmem:[%s1595 + $0x10] sm:$0xff]
        %v1599 = vld [vmem:[%s1595 + $0x18] sm:$0xff]
        %v1600 = vld [vmem:[%s1595 + $0x20] sm:$0xff]
        %v1601 = vld [vmem:[%s1595 + $0x28] sm:$0xff]
        %v1602 = vld [vmem:[%s1595 + $0x30] sm:$0xff]
        %v1603 = vld [vmem:[%s1595 + $0x38] sm:$0xff]
        %v1604 = vld [vmem:[%s1595 + $0x40] sm:$0xff]
        %v1605 = vld [vmem:[%s1595 + $0x48] sm:$0xff]
        %v1606 = vld [vmem:[%s1595 + $0x50] sm:$0xff]
        %v1607 = vld [vmem:[%s1595 + $0x58] sm:$0xff]
        %v1608 = vld [vmem:[%s1595 + $0x60] sm:$0xff]
        %v1609 = vld [vmem:[%s1595 + $0x68] sm:$0xff]
        %v1610 = vld [vmem:[%s1595 + $0x70] sm:$0xff]
        %v1611 = vld [vmem:[%s1595 + $0x78] sm:$0xff]
        %v1612 = vld [vmem:[%s1595 + $0x80] sm:$0xff]
        %v1613 = vld [vmem:[%s1595 + $0x88] sm:$0xff]
        %v1614 = vld [vmem:[%s1595 + $0x90] sm:$0xff]
        %v1615 = vld [vmem:[%s1595 + $0x98] sm:$0xff]
        %v1616 = vld [vmem:[%s1595 + $0xa0] sm:$0xff]
        %v1617 = vld [vmem:[%s1595 + $0xa8] sm:$0xff]
        %v1618 = vld [vmem:[%s1595 + $0xb0] sm:$0xff]
        %v1619 = vld [vmem:[%s1595 + $0xb8] sm:$0xff]
        %v1620 = vld [vmem:[%s1595 + $0xc0] sm:$0xff]
        %v1621 = vld [vmem:[%s1595 + $0xc8] sm:$0xff]
        %v1622 = vld [vmem:[%s1595 + $0xd0] sm:$0xff]
        %v1623 = vld [vmem:[%s1595 + $0xd8] sm:$0xff]
        %v1624 = vld [vmem:[%s1595 + $0xe0] sm:$0xff]
        %v1625 = vld [vmem:[%s1595 + $0xe8] sm:$0xff]
        %v1626 = vld [vmem:[%s1595 + $0xf0] sm:$0xff]
        %v1627 = vld [vmem:[%s1595 + $0xf8] sm:$0xff]
        %v1628 = vld [vmem:[%s1595 + $0x100] sm:$0xff]
        %v1629 = vld [vmem:[%s1595 + $0x108] sm:$0xff]
        %v1630 = vld [vmem:[%s1595 + $0x110] sm:$0xff]
        %v1631 = vld [vmem:[%s1595 + $0x118] sm:$0xff]
        %1632 = vmatprep.subr.mxu0 0.0
        %1633 = vmatpush1.msra.mxu0 %v1611
        %1634 = vmatprep.subr.mxu0 0.0
        %1635 = vmatpush1.msra.mxu0 %v1610
        %1636 = vmatprep.subr.mxu0 0.0
        %1637 = vmatpush1.msra.mxu0 %v1609
        %1638 = vmatprep.subr.mxu0 0.0
        %1639 = vmatpush1.msra.mxu0 %v1608
        %1640 = vmatprep.subr.mxu0 0.0
        %1641 = vmatpush1.msra.mxu0 %v1607
        %1642 = vmatprep.subr.mxu0 0.0
        %1643 = vmatpush1.msra.mxu0 %v1606
        %1644 = vmatprep.subr.mxu0 0.0
        %1645 = vmatpush1.msra.mxu0 %v1605
        %1646 = vmatprep.subr.mxu0 0.0
        %1647 = vmatpush1.msra.mxu0 %v1604
        %1648 = vmatprep.subr.mxu0 0.0
        %1649 = vmatpush1.msra.mxu0 %v1603
        %1650 = vmatprep.subr.mxu0 0.0
        %1651 = vmatpush1.msra.mxu0 %v1602
        %1652 = vmatprep.subr.mxu0 0.0
        %1653 = vmatpush1.msra.mxu0 %v1601
        %1654 = vmatprep.subr.mxu0 0.0
        %1655 = vmatpush1.msra.mxu0 %v1600
        %1656 = vmatprep.subr.mxu0 0.0
        %1657 = vmatpush1.msra.mxu0 %v1599
        %1658 = vmatprep.subr.mxu0 0.0
        %1659 = vmatpush1.msra.mxu0 %v1598
        %1660 = vmatprep.subr.mxu0 0.0
        %1661 = vmatpush1.msra.mxu0 %v1597
        %1662 = vmatprep.subr.mxu0 0.0
        %1663 = vmatpush1.msra.mxu0 %v1596
        %1664 = vmatprep.subr.mxu0 0.0
        %1665 = vmatpush2.msra.mxu0 %v1627
        %1666 = vmatprep.subr.mxu0 0.0
        %1667 = vmatpush2.msra.mxu0 %v1626
        %1668 = vmatprep.subr.mxu0 0.0
        %1669 = vmatpush2.msra.mxu0 %v1625
        %1670 = vmatprep.subr.mxu0 0.0
        %1671 = vmatpush2.msra.mxu0 %v1624
        %1672 = vmatprep.subr.mxu0 0.0
        %1673 = vmatpush2.msra.mxu0 %v1623
        %1674 = vmatprep.subr.mxu0 0.0
        %1675 = vmatpush2.msra.mxu0 %v1622
        %1676 = vmatprep.subr.mxu0 0.0
        %1677 = vmatpush2.msra.mxu0 %v1621
        %1678 = vmatprep.subr.mxu0 0.0
        %1679 = vmatpush2.msra.mxu0 %v1620
        %1680 = vmatprep.subr.mxu0 0.0
        %1681 = vmatpush2.msra.mxu0 %v1619
        %1682 = vmatprep.subr.mxu0 0.0
        %1683 = vmatpush2.msra.mxu0 %v1618
        %1684 = vmatprep.subr.mxu0 0.0
        %1685 = vmatpush2.msra.mxu0 %v1617
        %1686 = vmatprep.subr.mxu0 0.0
        %1687 = vmatpush2.msra.mxu0 %v1616
        %1688 = vmatprep.subr.mxu0 0.0
        %1689 = vmatpush2.msra.mxu0 %v1615
        %1690 = vmatprep.subr.mxu0 0.0
        %1691 = vmatpush2.msra.mxu0 %v1614
        %1692 = vmatprep.subr.mxu0 0.0
        %1693 = vmatpush2.msra.mxu0 %v1613
        %1694 = vmatprep.subr.mxu0 0.0
        %1695 = vmatpush2.msra.mxu0 %v1612
        %1696 = vmatprep.mubr.f32.mxu0 %v791
        %1697 = vmatmul.mubr.f32.gmra.mxu0 %v790
        %v1698 = vpop.f32.mrf.mxu0
        %v1699 = vadd.f32 0.0, %v1698
        %v1700 = vpop.f32.mrf.mxu0
        %1701 = vmatprep.mubr.f32.mxu0 %v794
        %1702 = vmatmul.mubr.f32.gmra.mxu0 %v793
        %v1703 = vpop.f32.mrf.mxu0
        %v1704 = vadd.f32 0.0, %v1703
        %v1705 = vpop.f32.mrf.mxu0
        %1706 = vmatprep.mubr.f32.mxu0 %v797
        %1707 = vmatmul.mubr.f32.gmra.mxu0 %v796
        %v1708 = vpop.f32.mrf.mxu0
        %v1709 = vadd.f32 0.0, %v1708
        %v1710 = vpop.f32.mrf.mxu0
        %1711 = vmatprep.mubr.f32.mxu0 %v800
        %1712 = vmatmul.mubr.f32.gmra.mxu0 %v799
        %v1713 = vpop.f32.mrf.mxu0
        %v1714 = vadd.f32 0.0, %v1713
        %v1715 = vpop.f32.mrf.mxu0
        %1716 = vmatprep.mubr.f32.mxu0 %v803
        %1717 = vmatmul.mubr.f32.gmra.mxu0 %v802
        %v1718 = vpop.f32.mrf.mxu0
        %v1719 = vadd.f32 0.0, %v1718
        %v1720 = vpop.f32.mrf.mxu0
        %1721 = vmatprep.mubr.f32.mxu0 %v806
        %1722 = vmatmul.mubr.f32.gmra.mxu0 %v805
        %v1723 = vpop.f32.mrf.mxu0
        %v1724 = vadd.f32 0.0, %v1723
        %v1725 = vpop.f32.mrf.mxu0
        %1726 = vmatprep.mubr.f32.mxu0 %v809
        %1727 = vmatmul.mubr.f32.gmra.mxu0 %v808
        %v1728 = vpop.f32.mrf.mxu0
        %v1729 = vadd.f32 0.0, %v1728
        %v1730 = vpop.f32.mrf.mxu0
        %1731 = vmatprep.mubr.f32.mxu0 %v812
        %1732 = vmatmul.mubr.f32.gmra.mxu0 %v811
        %v1733 = vpop.f32.mrf.mxu0
        %v1734 = vadd.f32 0.0, %v1733
        %v1735 = vpop.f32.mrf.mxu0
        %1736 = vdwg.mxu0
        %1737 = vmatprep.subr.mxu0 0.0
        %1738 = vmatpush1.msra.mxu0 0.0
        %1739 = vmatprep.subr.mxu0 0.0
        %1740 = vmatpush1.msra.mxu0 0.0
        %1741 = vmatprep.subr.mxu0 0.0
        %1742 = vmatpush1.msra.mxu0 0.0
        %1743 = vmatprep.subr.mxu0 0.0
        %1744 = vmatpush1.msra.mxu0 0.0
        %1745 = vmatprep.subr.mxu0 0.0
        %1746 = vmatpush1.msra.mxu0 0.0
        %1747 = vmatprep.subr.mxu0 0.0
        %1748 = vmatpush1.msra.mxu0 0.0
        %1749 = vmatprep.subr.mxu0 0.0
        %1750 = vmatpush1.msra.mxu0 0.0
        %1751 = vmatprep.subr.mxu0 0.0
        %1752 = vmatpush1.msra.mxu0 0.0
        %1753 = vmatprep.subr.mxu0 0.0
        %1754 = vmatpush1.msra.mxu0 0.0
        %1755 = vmatprep.subr.mxu0 0.0
        %1756 = vmatpush1.msra.mxu0 0.0
        %1757 = vmatprep.subr.mxu0 0.0
        %1758 = vmatpush1.msra.mxu0 0.0
        %1759 = vmatprep.subr.mxu0 0.0
        %1760 = vmatpush1.msra.mxu0 0.0
        %1761 = vmatprep.subr.mxu0 0.0
        %1762 = vmatpush1.msra.mxu0 %v1631
        %1763 = vmatprep.subr.mxu0 0.0
        %1764 = vmatpush1.msra.mxu0 %v1630
        %1765 = vmatprep.subr.mxu0 0.0
        %1766 = vmatpush1.msra.mxu0 %v1629
        %1767 = vmatprep.subr.mxu0 0.0
        %1768 = vmatpush1.msra.mxu0 %v1628
        %1769 = vmatprep.subr.mxu0 0.0
        %1770 = vmatpush2.msra.mxu0 0.0
        %1771 = vmatprep.subr.mxu0 0.0
        %1772 = vmatpush2.msra.mxu0 0.0
        %1773 = vmatprep.subr.mxu0 0.0
        %1774 = vmatpush2.msra.mxu0 0.0
        %1775 = vmatprep.subr.mxu0 0.0
        %1776 = vmatpush2.msra.mxu0 0.0
        %1777 = vmatprep.subr.mxu0 0.0
        %1778 = vmatpush2.msra.mxu0 0.0
        %1779 = vmatprep.subr.mxu0 0.0
        %1780 = vmatpush2.msra.mxu0 0.0
        %1781 = vmatprep.subr.mxu0 0.0
        %1782 = vmatpush2.msra.mxu0 0.0
        %1783 = vmatprep.subr.mxu0 0.0
        %1784 = vmatpush2.msra.mxu0 0.0
        %1785 = vmatprep.subr.mxu0 0.0
        %1786 = vmatpush2.msra.mxu0 0.0
        %1787 = vmatprep.subr.mxu0 0.0
        %1788 = vmatpush2.msra.mxu0 0.0
        %1789 = vmatprep.subr.mxu0 0.0
        %1790 = vmatpush2.msra.mxu0 0.0
        %1791 = vmatprep.subr.mxu0 0.0
        %1792 = vmatpush2.msra.mxu0 0.0
        %1793 = vmatprep.subr.mxu0 0.0
        %1794 = vmatpush2.msra.mxu0 0.0
        %1795 = vmatprep.subr.mxu0 0.0
        %1796 = vmatpush2.msra.mxu0 0.0
        %1797 = vmatprep.subr.mxu0 0.0
        %1798 = vmatpush2.msra.mxu0 0.0
        %1799 = vmatprep.subr.mxu0 0.0
        %1800 = vmatpush2.msra.mxu0 0.0
        %1801 = vmatprep.mubr.f32.mxu0 0.0
        %1802 = vmatmul.mubr.f32.gmra.mxu0 %v852
        %v1803 = vpop.f32.mrf.mxu0
        %v1804 = vadd.f32 %v1699, %v1803
        %v1805 = vpop.f32.mrf.mxu0
        %1806 = vmatprep.mubr.f32.mxu0 0.0
        %1807 = vmatmul.mubr.f32.gmra.mxu0 %v855
        %v1808 = vpop.f32.mrf.mxu0
        %v1809 = vadd.f32 %v1704, %v1808
        %v1810 = vpop.f32.mrf.mxu0
        %1811 = vmatprep.mubr.f32.mxu0 0.0
        %1812 = vmatmul.mubr.f32.gmra.mxu0 %v858
        %v1813 = vpop.f32.mrf.mxu0
        %v1814 = vadd.f32 %v1709, %v1813
        %v1815 = vpop.f32.mrf.mxu0
        %1816 = vmatprep.mubr.f32.mxu0 0.0
        %1817 = vmatmul.mubr.f32.gmra.mxu0 %v861
        %v1818 = vpop.f32.mrf.mxu0
        %v1819 = vadd.f32 %v1714, %v1818
        %v1820 = vpop.f32.mrf.mxu0
        %1821 = vmatprep.mubr.f32.mxu0 0.0
        %1822 = vmatmul.mubr.f32.gmra.mxu0 %v864
        %v1823 = vpop.f32.mrf.mxu0
        %v1824 = vadd.f32 %v1719, %v1823
        %v1825 = vpop.f32.mrf.mxu0
        %1826 = vmatprep.mubr.f32.mxu0 0.0
        %1827 = vmatmul.mubr.f32.gmra.mxu0 %v867
        %v1828 = vpop.f32.mrf.mxu0
        %v1829 = vadd.f32 %v1724, %v1828
        %v1830 = vpop.f32.mrf.mxu0
        %1831 = vmatprep.mubr.f32.mxu0 0.0
        %1832 = vmatmul.mubr.f32.gmra.mxu0 %v870
        %v1833 = vpop.f32.mrf.mxu0
        %v1834 = vadd.f32 %v1729, %v1833
        %v1835 = vpop.f32.mrf.mxu0
        %1836 = vmatprep.mubr.f32.mxu0 0.0
        %1837 = vmatmul.mubr.f32.gmra.mxu0 %v873
        %v1838 = vpop.f32.mrf.mxu0
        %v1839 = vadd.f32 %v1734, %v1838
        %v1840 = vpop.f32.mrf.mxu0
        %1841 = vdwg.mxu0
        %v1842 = vmax.f32 %v1587, %v1804
        %v1843 = vmax.f32 %v1588, %v1809
        %v1844 = vmax.f32 %v1589, %v1814
        %v1845 = vmax.f32 %v1590, %v1819
        %v1846 = vmax.f32 %v1591, %v1824
        %v1847 = vmax.f32 %v1592, %v1829
        %v1848 = vmax.f32 %v1593, %v1834
        %v1849 = vmax.f32 %v1594, %v1839
        %v1850 = vld [vmem:[%s2] sm:$0xff]
        %v1851 = vld [vmem:[%s2 + $0x8] sm:$0xff]
        %v1852 = vld [vmem:[%s2 + $0x10] sm:$0xff]
        %v1853 = vld [vmem:[%s2 + $0x18] sm:$0xff]
        %v1854 = vld [vmem:[%s2 + $0x20] sm:$0xff]
        %v1855 = vld [vmem:[%s2 + $0x28] sm:$0xff]
        %v1856 = vld [vmem:[%s2 + $0x30] sm:$0xff]
        %v1857 = vld [vmem:[%s2 + $0x38] sm:$0xff]
        %1859 = vset.pattern.permute.xlu0 0
        %1860 = vperm.xlu0 %1859, %v1850
        %v1861 = vpop.permute.xlu0 %1860
        %1864 = vset.pattern.permute.xlu0 0
        %1865 = vperm.xlu0 %1864, %v1851
        %v1866 = vpop.permute.xlu0 %1865
        %1869 = vset.pattern.permute.xlu0 0
        %1870 = vperm.xlu0 %1869, %v1852
        %v1871 = vpop.permute.xlu0 %1870
        %1874 = vset.pattern.permute.xlu0 0
        %1875 = vperm.xlu0 %1874, %v1853
        %v1876 = vpop.permute.xlu0 %1875
        %1879 = vset.pattern.permute.xlu0 0
        %1880 = vperm.xlu0 %1879, %v1854
        %v1881 = vpop.permute.xlu0 %1880
        %1884 = vset.pattern.permute.xlu0 0
        %1885 = vperm.xlu0 %1884, %v1855
        %v1886 = vpop.permute.xlu0 %1885
        %1889 = vset.pattern.permute.xlu0 0
        %1890 = vperm.xlu0 %1889, %v1856
        %v1891 = vpop.permute.xlu0 %1890
        %1894 = vset.pattern.permute.xlu0 0
        %1895 = vperm.xlu0 %1894, %v1857
        %v1896 = vpop.permute.xlu0 %1895
        %v1898 = vadd.f32 %v1842, %v1861
        %v1899 = vadd.f32 %v1843, %v1866
        %v1900 = vadd.f32 %v1844, %v1871
        %v1901 = vadd.f32 %v1845, %v1876
        %v1902 = vadd.f32 %v1846, %v1881
        %v1903 = vadd.f32 %v1847, %v1886
        %v1904 = vadd.f32 %v1848, %v1891
        %v1905 = vadd.f32 %v1849, %v1896
        %vm1906 = vcmp.gt.f32.partialorder %v1898, 0.0
        %vm1907 = vcmp.gt.f32.partialorder %v1899, 0.0
        %vm1908 = vcmp.gt.f32.partialorder %v1900, 0.0
        %vm1909 = vcmp.gt.f32.partialorder %v1901, 0.0
        %vm1910 = vcmp.gt.f32.partialorder %v1902, 0.0
        %vm1911 = vcmp.gt.f32.partialorder %v1903, 0.0
        %vm1912 = vcmp.gt.f32.partialorder %v1904, 0.0
        %vm1913 = vcmp.gt.f32.partialorder %v1905, 0.0
        %v1914 = vmul.f32 %v1898, 0.01
        %v1915 = vmul.f32 %v1899, 0.01
        %v1916 = vmul.f32 %v1900, 0.01
        %v1917 = vmul.f32 %v1901, 0.01
        %v1918 = vmul.f32 %v1902, 0.01
        %v1919 = vmul.f32 %v1903, 0.01
        %v1920 = vmul.f32 %v1904, 0.01
        %v1921 = vmul.f32 %v1905, 0.01
        %v1922 = vsel %vm1906, %v1898, %v1914
        %v1923 = vsel %vm1907, %v1899, %v1915
        %v1924 = vsel %vm1908, %v1900, %v1916
        %v1925 = vsel %vm1909, %v1901, %v1917
        %v1926 = vsel %vm1910, %v1902, %v1918
        %v1927 = vsel %vm1911, %v1903, %v1919
        %v1928 = vsel %vm1912, %v1904, %v1920
        %v1929 = vsel %vm1913, %v1905, %v1921
        %1930 = vst [vmem:[%s789] sm:$0xff] %v1922
        %1931 = vst [vmem:[%s789 + $0x8] sm:$0xff] %v1923
        %1932 = vst [vmem:[%s789 + $0x10] sm:$0xff] %v1924
        %1933 = vst [vmem:[%s789 + $0x18] sm:$0xff] %v1925
        %1934 = vst [vmem:[%s789 + $0x20] sm:$0xff] %v1926
        %1935 = vst [vmem:[%s789 + $0x28] sm:$0xff] %v1927
        %1936 = vst [vmem:[%s789 + $0x30] sm:$0xff] %v1928
        %1937 = vst [vmem:[%s789 + $0x38] sm:$0xff] %v1929
        %s1938 = sand.u32 %s106, 1
        %s1939 = sand.u32 %s106, 1
        %s1940 = smul.addr %s1939, 64
        %s1941 = scalar_lea.vmem [#allocation3], %s1940
        // Predicated region
        $region71: #{anime_cnn_forward.4} parent=65 // pred_check
          %p1942 = pneg %p116
        $region72: #{anime_cnn_forward.4} parent=65 // pred_check_branch
          %1944 = sbr.rel (%p1942) target = $region74
        $region73: #{anime_cnn_forward.4} parent=65 // pred_region
          %s1945 = smul.addr %s18, 16
          %s1946 = sadd.s32 %s19, %s1945
          %s1947 = smul.addr %s1946, 8
          %s1948 = scalar_lea.vmem %s3, %s1947
          // Predicated region
          $region75: #{anime_cnn_forward.4} parent=73 // pred_check
            _
          $region76: #{anime_cnn_forward.4} parent=73 // pred_check_branch
            %1950 = sbr.rel (0) target = $region78
          $region77: #{anime_cnn_forward.4} parent=73 // pred_region
            // Predicated region
            $region79: #{anime_cnn_forward.4} parent=77 // pred_check
              _
            $region80: #{anime_cnn_forward.4} parent=77 // pred_check_branch
              %1952 = sbr.rel (0) target = $region82
            $region81: #{anime_cnn_forward.4} parent=77 // pred_region
              // Predicated region
              $region94: #{anime_cnn_forward.4} parent=81 // pred_check
                _
              $region95: #{anime_cnn_forward.4} parent=81 // pred_check_branch
                %1982 = sbr.rel (0) target = $region97
              $region96: #{anime_cnn_forward.4} parent=81 // pred_region
                loop: start=0, step=1, limit=1
                $region98: #{anime_cnn_forward.4} parent=96 // loop_pre_header
                  _
                $region99: #{anime_cnn_forward.4} parent=96 // loop_header
                  %s1984 = sphi 0, %s1988
                  %p1985 = scmp.ge.s32.totalorder %s1984, 1
                  %s1989 = sphi %s1941, %s1941
                  %s1990 = sphi %s1948, %s1948
                $region100: #{anime_cnn_forward.4} parent=96 // loop_header_branch
                  %1987 = sbr.rel (%p1985) target = $region104
                $region101: #{anime_cnn_forward.4} parent=96 // loop_body
                  %v1991 = vld [vmem:[%s1989] sm:$0xff]
                  %1992 = vst [vmem:[%s1990] sm:$0xff] %v1991
                  %v1993 = vld [vmem:[%s1989 + $0x8] sm:$0xff]
                  %1994 = vst [vmem:[%s1990 + $0x10] sm:$0xff] %v1993
                  %v1995 = vld [vmem:[%s1989 + $0x10] sm:$0xff]
                  %1996 = vst [vmem:[%s1990 + $0x20] sm:$0xff] %v1995
                  %v1997 = vld [vmem:[%s1989 + $0x18] sm:$0xff]
                  %1998 = vst [vmem:[%s1990 + $0x30] sm:$0xff] %v1997
                  %v1999 = vld [vmem:[%s1989 + $0x20] sm:$0xff]
                  %2000 = vst [vmem:[%s1990 + $0x40] sm:$0xff] %v1999
                  %v2001 = vld [vmem:[%s1989 + $0x28] sm:$0xff]
                  %2002 = vst [vmem:[%s1990 + $0x50] sm:$0xff] %v2001
                  %v2003 = vld [vmem:[%s1989 + $0x30] sm:$0xff]
                  %2004 = vst [vmem:[%s1990 + $0x60] sm:$0xff] %v2003
                  %v2005 = vld [vmem:[%s1989 + $0x38] sm:$0xff]
                  %2006 = vst [vmem:[%s1990 + $0x70] sm:$0xff] %v2005
                $region102: #{anime_cnn_forward.4} parent=96 // loop_footer
                  %s1988 = sadd.s32 1, %s1984
                $region103: #{anime_cnn_forward.4} parent=96 // loop_footer_branch
                  %1983 = sbr.rel target = $region99
                $region104: #{anime_cnn_forward.4} parent=96 // loop_exit
                  _
              $region97: #{anime_cnn_forward.4} parent=81 // pred_fallthru
                _
              // Predicated region
              $region105: #{anime_cnn_forward.4} parent=81 // pred_check
                _
              $region106: #{anime_cnn_forward.4} parent=81 // pred_check_branch
                %2008 = sbr.rel target = $region108
              $region107: #{anime_cnn_forward.4} parent=81 // pred_region
                _
              $region108: #{anime_cnn_forward.4} parent=81 // pred_fallthru
                _
            $region82: #{anime_cnn_forward.4} parent=77 // pred_fallthru
              _
            // Predicated region
            $region83: #{anime_cnn_forward.4} parent=77 // pred_check
              _
            $region84: #{anime_cnn_forward.4} parent=77 // pred_check_branch
              %1954 = sbr.rel target = $region86
            $region85: #{anime_cnn_forward.4} parent=77 // pred_region
              %s1956 = ssub.s32 256, 1
              loop: start=0, step=1, limit=1
              $region87: #{anime_cnn_forward.4} parent=85 // loop_pre_header
                _
              $region88: #{anime_cnn_forward.4} parent=85 // loop_header
                %s1958 = sphi 0, %s1962
                %p1959 = scmp.ge.s32.totalorder %s1958, 1
                %s1963 = sphi %s1941, %s1941
                %s1964 = sphi %s1948, %s1948
              $region89: #{anime_cnn_forward.4} parent=85 // loop_header_branch
                %1961 = sbr.rel (%p1959) target = $region93
              $region90: #{anime_cnn_forward.4} parent=85 // loop_body
                %v1965 = vld [vmem:[%s1963] sm:%s1956]
                %1966 = vst [vmem:[%s1964] sm:%s1956] %v1965
                %v1967 = vld [vmem:[%s1963 + $0x8] sm:%s1956]
                %1968 = vst [vmem:[%s1964 + $0x10] sm:%s1956] %v1967
                %v1969 = vld [vmem:[%s1963 + $0x10] sm:%s1956]
                %1970 = vst [vmem:[%s1964 + $0x20] sm:%s1956] %v1969
                %v1971 = vld [vmem:[%s1963 + $0x18] sm:%s1956]
                %1972 = vst [vmem:[%s1964 + $0x30] sm:%s1956] %v1971
                %v1973 = vld [vmem:[%s1963 + $0x20] sm:%s1956]
                %1974 = vst [vmem:[%s1964 + $0x40] sm:%s1956] %v1973
                %v1975 = vld [vmem:[%s1963 + $0x28] sm:%s1956]
                %1976 = vst [vmem:[%s1964 + $0x50] sm:%s1956] %v1975
                %v1977 = vld [vmem:[%s1963 + $0x30] sm:%s1956]
                %1978 = vst [vmem:[%s1964 + $0x60] sm:%s1956] %v1977
                %v1979 = vld [vmem:[%s1963 + $0x38] sm:%s1956]
                %1980 = vst [vmem:[%s1964 + $0x70] sm:%s1956] %v1979
              $region91: #{anime_cnn_forward.4} parent=85 // loop_footer
                %s1962 = sadd.s32 1, %s1958
              $region92: #{anime_cnn_forward.4} parent=85 // loop_footer_branch
                %1957 = sbr.rel target = $region88
              $region93: #{anime_cnn_forward.4} parent=85 // loop_exit
                _
            $region86: #{anime_cnn_forward.4} parent=77 // pred_fallthru
              _
          $region78: #{anime_cnn_forward.4} parent=73 // pred_fallthru
            _
          %2009 = vnop
        $region74: #{anime_cnn_forward.4} parent=65 // pred_fallthru
          _
      $region66: #{anime_cnn_forward.4} parent=5 // pred_fallthru
        _
      %p2010 = scmp.le.s32.totalorder 2, %s9
      // Predicated region
      $region109: #{anime_cnn_forward.4} parent=5 // pred_check
        %p2011 = pneg %p2010
      $region110: #{anime_cnn_forward.4} parent=5 // pred_check_branch
        %2013 = sbr.rel (%p2011) target = $region112
      $region111: #{anime_cnn_forward.4} parent=5 // pred_region
        %s2014 = ssub.s32 %s9, 2
        // Predicated region
        $region113: #{anime_cnn_forward.4} parent=111 // pred_check
          %p2015 = pneg %p122
        $region114: #{anime_cnn_forward.4} parent=111 // pred_check_branch
          %2017 = sbr.rel (%p2015) target = $region116
        $region115: #{anime_cnn_forward.4} parent=111 // pred_region
          %s2018 = sand.u32 %s107, 1
          %s2019 = sand.u32 %s107, 1
          %s2020 = smul.addr %s2019, 64
          %s2021 = scalar_lea.vmem [#allocation3], %s2020
        $region116: #{anime_cnn_forward.4} parent=111 // pred_fallthru
          _
      $region112: #{anime_cnn_forward.4} parent=5 // pred_fallthru
        _
    $region6: #{anime_cnn_forward.4} parent=1 // loop_footer
      %s13 = sadd.s32 1, %s9
    $region7: #{anime_cnn_forward.4} parent=1 // loop_footer_branch
      %8 = sbr.rel target = $region3
    $region8: #{anime_cnn_forward.4} parent=1 // loop_exit
      _

// kernel: anime_cnn_forward.5
$region0: #{anime_cnn_forward.5}
  #allocation0 [shape = 'u32[]', space=smem, size = 0x4, offset = 0x4, fixed_abs, tag = 'smem constant byte address 0x4 - core index']
  #allocation1 [shape = 'u32[144,128]{1,0:T(1,128)}', space=vmem, size = 0x12000, scoped, tag = 'internal scratch']
  #allocation2 [shape = 'f32[2,128]{1,0:T(2,128)}', space=vmem, size = 0x400, scoped, tag = 'scratch operand']
  %s0 = inlined_call_operand.vmem [shape: f32[2,16384], index: 0, kind: input, shape index: {}]
  %s1 = inlined_call_operand.vmem [shape: f32[128,16384], index: 1, kind: input, shape index: {}]
  %s2 = inlined_call_operand.vmem [shape: f32[1,128], index: 2, kind: input, shape index: {}]
  %s3 = inlined_call_operand.vmem [shape: f32[2,128], index: 3, kind: input, shape index: {}]
  %s4 = inlined_call_operand.vmem [shape: f32[1,2], index: 4, kind: input, shape index: {}]
  %s5 = inlined_call_operand.hbm [shape: f32[2,2], index: 5, kind: output, shape index: {}]
  %s6 = sld [smem:[#allocation0]]
  $region84: #{anime_cnn_forward.5} parent=0
    _
  %s8 = ssub.s32 1, %s6
  %s9 = scalar_select 0, %s8, %s6
  $region1: #{anime_cnn_forward.5} parent=0
    #allocation3 [shape = 'u8[8388608]{0}', space=vmem, size = 0x800000, scoped, tag = 'input window, operand 1']
    #allocation4 [shape = 'u8[1024]{0}', space=vmem, size = 0x400, scoped, tag = 'output window, operand 0, single buffered']
    #allocation5 [shape = 's32[2]{0}', space=sflag, size = 0x8, scoped, tag = 'scoped memory for anime_cnn_forward.5']
    %10 = vsyncpa [#allocation5], 0
    loop: start=0, step=1, limit=4
    $region2: #{anime_cnn_forward.5} parent=1 // loop_pre_header
      _
    $region3: #{anime_cnn_forward.5} parent=1 // loop_header
      %s12 = sphi 0, %s16
      %p13 = scmp.ge.s32.totalorder %s12, 4
      %s22 = sphi 0, %s24
      %s25 = sphi 0, %s22
      %s26 = sphi 0, %s25
      %s42 = sphi 0, %s26
      %s48 = sphi 0, %s50
      %s51 = sphi 0, %s48
      %s52 = sphi 0, %s51
      %s68 = sphi 0, %s52
      %s72 = sphi 0, %s72
      %s74 = sphi 0, %s72
      %s75 = sphi 0, %s74
      %s89 = sphi 0, %s75
      %s93 = sphi 0, %s93
      %s95 = sphi 0, %s93
      %s96 = sphi 0, %s95
      %s110 = sphi 0, %s96
      %s114 = sphi 0, %s114
      %s116 = sphi 0, %s114
      %s117 = sphi 0, %s116
      %s131 = sphi 0, %s117
      %s135 = sphi 0, %s135
      %s137 = sphi 0, %s135
      %s138 = sphi 0, %s137
      %s152 = sphi 0, %s138
    $region4: #{anime_cnn_forward.5} parent=1 // loop_header_branch
      %15 = sbr.rel (%p13) target = $region8
    $region5: #{anime_cnn_forward.5} parent=1 // loop_body
      %s17 = ssub.s32 %s12, 1
      %s18 = ssub.s32 %s12, 2
      %s19 = sadd.s32 %s12, 1
      %s20 = ssub.s32 %s12, %s19
      %p21 = scmp.eq.s32.totalorder %s20, 0
      %s23 = sadd.s32 %s22, 1
      %s24 = scalar_select %p21, %s22, %s23
      %p27 = pneg %p21
      %p28 = scmp.eq.s32.totalorder %s12, 1
      %p29 = por %p27, %p28
      %p30 = scmp.ne.s32.totalorder %s22, %s25
      %p31 = scmp.eq.s32.totalorder %s12, 0
      %p32 = por %p30, %p31
      %p33 = scmp.ne.s32.totalorder %s22, %s25
      %p34 = scmp.eq.s32.totalorder %s17, 1
      %p35 = por %p33, %p34
      %p36 = scmp.ne.s32.totalorder %s25, %s26
      %p37 = scmp.eq.s32.totalorder %s17, 0
      %p38 = por %p36, %p37
      %p39 = scmp.ne.s32.totalorder %s25, %s26
      %p40 = scmp.eq.s32.totalorder %s18, 1
      %p41 = por %p39, %p40
      %p43 = scmp.ne.s32.totalorder %s26, %s42
      %p44 = scmp.eq.s32.totalorder %s18, 0
      %p45 = por %p43, %p44
      %s46 = ssub.s32 %s12, %s19
      %p47 = scmp.eq.s32.totalorder %s46, 0
      %s49 = sadd.s32 %s48, 1
      %s50 = scalar_select %p47, %s48, %s49
      %p53 = pneg %p47
      %p54 = scmp.eq.s32.totalorder %s12, 1
      %p55 = por %p53, %p54
      %p56 = scmp.ne.s32.totalorder %s48, %s51
      %p57 = scmp.eq.s32.totalorder %s12, 0
      %p58 = por %p56, %p57
      %p59 = scmp.ne.s32.totalorder %s48, %s51
      %p60 = scmp.eq.s32.totalorder %s17, 1
      %p61 = por %p59, %p60
      %p62 = scmp.ne.s32.totalorder %s51, %s52
      %p63 = scmp.eq.s32.totalorder %s17, 0
      %p64 = por %p62, %p63
      %p65 = scmp.ne.s32.totalorder %s51, %s52
      %p66 = scmp.eq.s32.totalorder %s18, 1
      %p67 = por %p65, %p66
      %p69 = scmp.ne.s32.totalorder %s52, %s68
      %p70 = scmp.eq.s32.totalorder %s18, 0
      %p71 = por %p69, %p70
      %s73 = sadd.s32 %s72, 1
      %p76 = scmp.eq.s32.totalorder %s12, 1
      %p77 = scmp.ne.s32.totalorder %s72, %s74
      %p78 = scmp.eq.s32.totalorder %s12, 0
      %p79 = por %p77, %p78
      %p80 = scmp.ne.s32.totalorder %s72, %s74
      %p81 = scmp.eq.s32.totalorder %s17, 1
      %p82 = por %p80, %p81
      %p83 = scmp.ne.s32.totalorder %s74, %s75
      %p84 = scmp.eq.s32.totalorder %s17, 0
      %p85 = por %p83, %p84
      %p86 = scmp.ne.s32.totalorder %s74, %s75
      %p87 = scmp.eq.s32.totalorder %s18, 1
      %p88 = por %p86, %p87
      %p90 = scmp.ne.s32.totalorder %s75, %s89
      %p91 = scmp.eq.s32.totalorder %s18, 0
      %p92 = por %p90, %p91
      %s94 = sadd.s32 %s93, 1
      %p97 = scmp.eq.s32.totalorder %s12, 1
      %p98 = scmp.ne.s32.totalorder %s93, %s95
      %p99 = scmp.eq.s32.totalorder %s12, 0
      %p100 = por %p98, %p99
      %p101 = scmp.ne.s32.totalorder %s93, %s95
      %p102 = scmp.eq.s32.totalorder %s17, 1
      %p103 = por %p101, %p102
      %p104 = scmp.ne.s32.totalorder %s95, %s96
      %p105 = scmp.eq.s32.totalorder %s17, 0
      %p106 = por %p104, %p105
      %p107 = scmp.ne.s32.totalorder %s95, %s96
      %p108 = scmp.eq.s32.totalorder %s18, 1
      %p109 = por %p107, %p108
      %p111 = scmp.ne.s32.totalorder %s96, %s110
      %p112 = scmp.eq.s32.totalorder %s18, 0
      %p113 = por %p111, %p112
      %s115 = sadd.s32 %s114, 1
      %p118 = scmp.eq.s32.totalorder %s12, 1
      %p119 = scmp.ne.s32.totalorder %s114, %s116
      %p120 = scmp.eq.s32.totalorder %s12, 0
      %p121 = por %p119, %p120
      %p122 = scmp.ne.s32.totalorder %s114, %s116
      %p123 = scmp.eq.s32.totalorder %s17, 1
      %p124 = por %p122, %p123
      %p125 = scmp.ne.s32.totalorder %s116, %s117
      %p126 = scmp.eq.s32.totalorder %s17, 0
      %p127 = por %p125, %p126
      %p128 = scmp.ne.s32.totalorder %s116, %s117
      %p129 = scmp.eq.s32.totalorder %s18, 1
      %p130 = por %p128, %p129
      %p132 = scmp.ne.s32.totalorder %s117, %s131
      %p133 = scmp.eq.s32.totalorder %s18, 0
      %p134 = por %p132, %p133
      %s136 = sadd.s32 %s135, 1
      %p139 = scmp.eq.s32.totalorder %s12, 1
      %p140 = scmp.ne.s32.totalorder %s135, %s137
      %p141 = scmp.eq.s32.totalorder %s12, 0
      %p142 = por %p140, %p141
      %p143 = scmp.ne.s32.totalorder %s135, %s137
      %p144 = scmp.eq.s32.totalorder %s17, 1
      %p145 = por %p143, %p144
      %p146 = scmp.ne.s32.totalorder %s137, %s138
      %p147 = scmp.eq.s32.totalorder %s17, 0
      %p148 = por %p146, %p147
      %p149 = scmp.ne.s32.totalorder %s137, %s138
      %p150 = scmp.eq.s32.totalorder %s18, 1
      %p151 = por %p149, %p150
      %p153 = scmp.ne.s32.totalorder %s138, %s152
      %p154 = scmp.eq.s32.totalorder %s18, 0
      %p155 = por %p153, %p154
      %p156 = scmp.le.s32.totalorder 1, %s12
      %p157 = scmp.lt.s32.totalorder %s12, 3
      %p158 = pnand %p156, %p157
      %p159 = pneg %p158
      // Predicated region
      $region9: #{anime_cnn_forward.5} parent=5 // pred_check
        _
      $region10: #{anime_cnn_forward.5} parent=5 // pred_check_branch
        %161 = sbr.rel (%p158) target = $region12
      $region11: #{anime_cnn_forward.5} parent=5 // pred_region
        %s162 = ssub.s32 %s12, 1
        // Predicated region
        $region13: #{anime_cnn_forward.5} parent=11 // pred_check
          %p163 = pneg %p85
        $region14: #{anime_cnn_forward.5} parent=11 // pred_check_branch
          %165 = sbr.rel (%p163) target = $region16
        $region15: #{anime_cnn_forward.5} parent=11 // pred_region
          _
        $region16: #{anime_cnn_forward.5} parent=11 // pred_fallthru
          _
        // Predicated region
        $region17: #{anime_cnn_forward.5} parent=11 // pred_check
          %p166 = pneg %p106
        $region18: #{anime_cnn_forward.5} parent=11 // pred_check_branch
          %168 = sbr.rel (%p166) target = $region20
        $region19: #{anime_cnn_forward.5} parent=11 // pred_region
          _
        $region20: #{anime_cnn_forward.5} parent=11 // pred_fallthru
          _
        // Predicated region
        $region21: #{anime_cnn_forward.5} parent=11 // pred_check
          %p169 = pneg %p127
        $region22: #{anime_cnn_forward.5} parent=11 // pred_check_branch
          %171 = sbr.rel (%p169) target = $region24
        $region23: #{anime_cnn_forward.5} parent=11 // pred_region
          _
        $region24: #{anime_cnn_forward.5} parent=11 // pred_fallthru
          _
      $region12: #{anime_cnn_forward.5} parent=5 // pred_fallthru
        _
      %p172 = scmp.lt.s32.totalorder %s12, 2
      // Predicated region
      $region25: #{anime_cnn_forward.5} parent=5 // pred_check
        %p173 = pneg %p172
      $region26: #{anime_cnn_forward.5} parent=5 // pred_check_branch
        %175 = sbr.rel (%p173) target = $region28
      $region27: #{anime_cnn_forward.5} parent=5 // pred_region
        // Predicated region
        $region29: #{anime_cnn_forward.5} parent=27 // pred_check
          %p176 = pneg %p32
        $region30: #{anime_cnn_forward.5} parent=27 // pred_check_branch
          %178 = sbr.rel (%p176) target = $region32
        $region31: #{anime_cnn_forward.5} parent=27 // pred_region
          %s179 = smul.u32 64, %s12
          %p180 = scmp.lt.s32.totalorder %s179, 127
          %s181 = scalar_select %p180, %s179, 127
          %s182 = smul.addr %s181, 2
          %s183 = scalar_lea.vmem %s0, %s182
          %s184 = smul.u32 64, %s12
        $region32: #{anime_cnn_forward.5} parent=27 // pred_fallthru
          _
        // Predicated region
        $region33: #{anime_cnn_forward.5} parent=27 // pred_check
          %p185 = pneg %p58
        $region34: #{anime_cnn_forward.5} parent=27 // pred_check_branch
          %187 = sbr.rel (%p185) target = $region36
        $region35: #{anime_cnn_forward.5} parent=27 // pred_region
          %s188 = sand.u32 %s48, 1
          %s189 = sand.u32 %s48, 1
          %s190 = smul.addr %s189, 8192
          %s191 = scalar_lea.vmem [#allocation3], %s190
          %s192 = smul.u32 64, %s12
          %s193 = smul.addr %s192, 8
          %s194 = scalar_lea.vmem %s1, %s193
          // Predicated region
          $region37: #{anime_cnn_forward.5} parent=35 // pred_check
            _
          $region38: #{anime_cnn_forward.5} parent=35 // pred_check_branch
            %196 = sbr.rel (0) target = $region40
          $region39: #{anime_cnn_forward.5} parent=35 // pred_region
            // Predicated region
            $region41: #{anime_cnn_forward.5} parent=39 // pred_check
              _
            $region42: #{anime_cnn_forward.5} parent=39 // pred_check_branch
              %198 = sbr.rel (0) target = $region44
            $region43: #{anime_cnn_forward.5} parent=39 // pred_region
              loop: start=0, step=1, limit=1
              $region45: #{anime_cnn_forward.5} parent=43 // loop_pre_header
                _
              $region46: #{anime_cnn_forward.5} parent=43 // loop_header
                %s200 = sphi 0, %s204
                %p201 = scmp.ge.s32.totalorder %s200, 1
                %s205 = sphi %s194, %s194
                %s206 = sphi %s191, %s191
              $region47: #{anime_cnn_forward.5} parent=43 // loop_header_branch
                %203 = sbr.rel (%p201) target = $region51
              $region48: #{anime_cnn_forward.5} parent=43 // loop_body
                %v207 = vld [vmem:[%s205] sm:$0xff]
                %208 = vst [vmem:[%s206] sm:$0xff] %v207
                %v209 = vld [vmem:[%s205 + $0x8] sm:$0xff]
                %210 = vst [vmem:[%s206 + $0x8] sm:$0xff] %v209
                %v211 = vld [vmem:[%s205 + $0x10] sm:$0xff]
                %212 = vst [vmem:[%s206 + $0x10] sm:$0xff] %v211
                %v213 = vld [vmem:[%s205 + $0x18] sm:$0xff]
                %214 = vst [vmem:[%s206 + $0x18] sm:$0xff] %v213
                %v215 = vld [vmem:[%s205 + $0x20] sm:$0xff]
                %216 = vst [vmem:[%s206 + $0x20] sm:$0xff] %v215
                %v217 = vld [vmem:[%s205 + $0x28] sm:$0xff]
                %218 = vst [vmem:[%s206 + $0x28] sm:$0xff] %v217
                %v219 = vld [vmem:[%s205 + $0x30] sm:$0xff]
                %220 = vst [vmem:[%s206 + $0x30] sm:$0xff] %v219
                %v221 = vld [vmem:[%s205 + $0x38] sm:$0xff]
                %222 = vst [vmem:[%s206 + $0x38] sm:$0xff] %v221
                %v223 = vld [vmem:[%s205 + $0x40] sm:$0xff]
                %224 = vst [vmem:[%s206 + $0x40] sm:$0xff] %v223
                %v225 = vld [vmem:[%s205 + $0x48] sm:$0xff]
                %226 = vst [vmem:[%s206 + $0x48] sm:$0xff] %v225
                %v227 = vld [vmem:[%s205 + $0x50] sm:$0xff]
                %228 = vst [vmem:[%s206 + $0x50] sm:$0xff] %v227
                %v229 = vld [vmem:[%s205 + $0x58] sm:$0xff]
                %230 = vst [vmem:[%s206 + $0x58] sm:$0xff] %v229
                %v231 = vld [vmem:[%s205 + $0x60] sm:$0xff]
                %232 = vst [vmem:[%s206 + $0x60] sm:$0xff] %v231
                %v233 = vld [vmem:[%s205 + $0x68] sm:$0xff]
                %234 = vst [vmem:[%s206 + $0x68] sm:$0xff] %v233
                %v235 = vld [vmem:[%s205 + $0x70] sm:$0xff]
                %236 = vst [vmem:[%s206 + $0x70] sm:$0xff] %v235
                %v237 = vld [vmem:[%s205 + $0x78] sm:$0xff]
                %238 = vst [vmem:[%s206 + $0x78] sm:$0xff] %v237
                %v239 = vld [vmem:[%s205 + $0x80] sm:$0xff]
                %240 = vst [vmem:[%s206 + $0x80] sm:$0xff] %v239
                %v241 = vld [vmem:[%s205 + $0x88] sm:$0xff]
                %242 = vst [vmem:[%s206 + $0x88] sm:$0xff] %v241
                %v243 = vld [vmem:[%s205 + $0x90] sm:$0xff]
                %244 = vst [vmem:[%s206 + $0x90] sm:$0xff] %v243
                %v245 = vld [vmem:[%s205 + $0x98] sm:$0xff]
                %246 = vst [vmem:[%s206 + $0x98] sm:$0xff] %v245
                %v247 = vld [vmem:[%s205 + $0xa0] sm:$0xff]
                %248 = vst [vmem:[%s206 + $0xa0] sm:$0xff] %v247
                %v249 = vld [vmem:[%s205 + $0xa8] sm:$0xff]
                %250 = vst [vmem:[%s206 + $0xa8] sm:$0xff] %v249
                %v251 = vld [vmem:[%s205 + $0xb0] sm:$0xff]
                %252 = vst [vmem:[%s206 + $0xb0] sm:$0xff] %v251
                %v253 = vld [vmem:[%s205 + $0xb8] sm:$0xff]
                %254 = vst [vmem:[%s206 + $0xb8] sm:$0xff] %v253
                %v255 = vld [vmem:[%s205 + $0xc0] sm:$0xff]
                %256 = vst [vmem:[%s206 + $0xc0] sm:$0xff] %v255
                %v257 = vld [vmem:[%s205 + $0xc8] sm:$0xff]
                %258 = vst [vmem:[%s206 + $0xc8] sm:$0xff] %v257
                %v259 = vld [vmem:[%s205 + $0xd0] sm:$0xff]
                %260 = vst [vmem:[%s206 + $0xd0] sm:$0xff] %v259
                %v261 = vld [vmem:[%s205 + $0xd8] sm:$0xff]
                %262 = vst [vmem:[%s206 + $0xd8] sm:$0xff] %v261
                %v263 = vld [vmem:[%s205 + $0xe0] sm:$0xff]
                %264 = vst [vmem:[%s206 + $0xe0] sm:$0xff] %v263
                %v265 = vld [vmem:[%s205 + $0xe8] sm:$0xff]
                %266 = vst [vmem:[%s206 + $0xe8] sm:$0xff] %v265
                %v267 = vld [vmem:[%s205 + $0xf0] sm:$0xff]
                %268 = vst [vmem:[%s206 + $0xf0] sm:$0xff] %v267
                %v269 = vld [vmem:[%s205 + $0xf8] sm:$0xff]
                %270 = vst [vmem:[%s206 + $0xf8] sm:$0xff] %v269
                %v271 = vld [vmem:[%s205 + $0x100] sm:$0xff]
                %272 = vst [vmem:[%s206 + $0x100] sm:$0xff] %v271
                %v273 = vld [vmem:[%s205 + $0x108] sm:$0xff]
                %274 = vst [vmem:[%s206 + $0x108] sm:$0xff] %v273
                %v275 = vld [vmem:[%s205 + $0x110] sm:$0xff]
                %276 = vst [vmem:[%s206 + $0x110] sm:$0xff] %v275
                %v277 = vld [vmem:[%s205 + $0x118] sm:$0xff]
                %278 = vst [vmem:[%s206 + $0x118] sm:$0xff] %v277
                %v279 = vld [vmem:[%s205 + $0x120] sm:$0xff]
                %280 = vst [vmem:[%s206 + $0x120] sm:$0xff] %v279
                %v281 = vld [vmem:[%s205 + $0x128] sm:$0xff]
                %282 = vst [vmem:[%s206 + $0x128] sm:$0xff] %v281
                %v283 = vld [vmem:[%s205 + $0x130] sm:$0xff]
                %284 = vst [vmem:[%s206 + $0x130] sm:$0xff] %v283
                %v285 = vld [vmem:[%s205 + $0x138] sm:$0xff]
                %286 = vst [vmem:[%s206 + $0x138] sm:$0xff] %v285
                %v287 = vld [vmem:[%s205 + $0x140] sm:$0xff]
                %288 = vst [vmem:[%s206 + $0x140] sm:$0xff] %v287
                %v289 = vld [vmem:[%s205 + $0x148] sm:$0xff]
                %290 = vst [vmem:[%s206 + $0x148] sm:$0xff] %v289
                %v291 = vld [vmem:[%s205 + $0x150] sm:$0xff]
                %292 = vst [vmem:[%s206 + $0x150] sm:$0xff] %v291
                %v293 = vld [vmem:[%s205 + $0x158] sm:$0xff]
                %294 = vst [vmem:[%s206 + $0x158] sm:$0xff] %v293
                %v295 = vld [vmem:[%s205 + $0x160] sm:$0xff]
                %296 = vst [vmem:[%s206 + $0x160] sm:$0xff] %v295
                %v297 = vld [vmem:[%s205 + $0x168] sm:$0xff]
                %298 = vst [vmem:[%s206 + $0x168] sm:$0xff] %v297
                %v299 = vld [vmem:[%s205 + $0x170] sm:$0xff]
                %300 = vst [vmem:[%s206 + $0x170] sm:$0xff] %v299
                %v301 = vld [vmem:[%s205 + $0x178] sm:$0xff]
                %302 = vst [vmem:[%s206 + $0x178] sm:$0xff] %v301
                %v303 = vld [vmem:[%s205 + $0x180] sm:$0xff]
                %304 = vst [vmem:[%s206 + $0x180] sm:$0xff] %v303
                %v305 = vld [vmem:[%s205 + $0x188] sm:$0xff]
                %306 = vst [vmem:[%s206 + $0x188] sm:$0xff] %v305
                %v307 = vld [vmem:[%s205 + $0x190] sm:$0xff]
                %308 = vst [vmem:[%s206 + $0x190] sm:$0xff] %v307
                %v309 = vld [vmem:[%s205 + $0x198] sm:$0xff]
                %310 = vst [vmem:[%s206 + $0x198] sm:$0xff] %v309
                %v311 = vld [vmem:[%s205 + $0x1a0] sm:$0xff]
                %312 = vst [vmem:[%s206 + $0x1a0] sm:$0xff] %v311
                %v313 = vld [vmem:[%s205 + $0x1a8] sm:$0xff]
                %314 = vst [vmem:[%s206 + $0x1a8] sm:$0xff] %v313
                %v315 = vld [vmem:[%s205 + $0x1b0] sm:$0xff]
                %316 = vst [vmem:[%s206 + $0x1b0] sm:$0xff] %v315
                %v317 = vld [vmem:[%s205 + $0x1b8] sm:$0xff]
                %318 = vst [vmem:[%s206 + $0x1b8] sm:$0xff] %v317
                %v319 = vld [vmem:[%s205 + $0x1c0] sm:$0xff]
                %320 = vst [vmem:[%s206 + $0x1c0] sm:$0xff] %v319
                %v321 = vld [vmem:[%s205 + $0x1c8] sm:$0xff]
                %322 = vst [vmem:[%s206 + $0x1c8] sm:$0xff] %v321
                %v323 = vld [vmem:[%s205 + $0x1d0] sm:$0xff]
                %324 = vst [vmem:[%s206 + $0x1d0] sm:$0xff] %v323
                %v325 = vld [vmem:[%s205 + $0x1d8] sm:$0xff]
                %326 = vst [vmem:[%s206 + $0x1d8] sm:$0xff] %v325
                %v327 = vld [vmem:[%s205 + $0x1e0] sm:$0xff]
                %328 = vst [vmem:[%s206 + $0x1e0] sm:$0xff] %v327
                %v329 = vld [vmem:[%s205 + $0x1e8] sm:$0xff]
                %330 = vst [vmem:[%s206 + $0x1e8] sm:$0xff] %v329
                %v331 = vld [vmem:[%s205 + $0x1f0] sm:$0xff]
                %332 = vst [vmem:[%s206 + $0x1f0] sm:$0xff] %v331
                %v333 = vld [vmem:[%s205 + $0x1f8] sm:$0xff]
                %334 = vst [vmem:[%s206 + $0x1f8] sm:$0xff] %v333
                %v335 = vld [vmem:[%s205 + $0x400] sm:$0xff]
                %336 = vst [vmem:[%s206 + $0x200] sm:$0xff] %v335
                %v337 = vld [vmem:[%s205 + $0x408] sm:$0xff]
                %338 = vst [vmem:[%s206 + $0x208] sm:$0xff] %v337
                %v339 = vld [vmem:[%s205 + $0x410] sm:$0xff]
                %340 = vst [vmem:[%s206 + $0x210] sm:$0xff] %v339
                %v341 = vld [vmem:[%s205 + $0x418] sm:$0xff]
                %342 = vst [vmem:[%s206 + $0x218] sm:$0xff] %v341
                %v343 = vld [vmem:[%s205 + $0x420] sm:$0xff]
                %344 = vst [vmem:[%s206 + $0x220] sm:$0xff] %v343
                %v345 = vld [vmem:[%s205 + $0x428] sm:$0xff]
                %346 = vst [vmem:[%s206 + $0x228] sm:$0xff] %v345
                %v347 = vld [vmem:[%s205 + $0x430] sm:$0xff]
                %348 = vst [vmem:[%s206 + $0x230] sm:$0xff] %v347
                %v349 = vld [vmem:[%s205 + $0x438] sm:$0xff]
                %350 = vst [vmem:[%s206 + $0x238] sm:$0xff] %v349
                %v351 = vld [vmem:[%s205 + $0x440] sm:$0xff]
                %352 = vst [vmem:[%s206 + $0x240] sm:$0xff] %v351
                %v353 = vld [vmem:[%s205 + $0x448] sm:$0xff]
                %354 = vst [vmem:[%s206 + $0x248] sm:$0xff] %v353
                %v355 = vld [vmem:[%s205 + $0x450] sm:$0xff]
                %356 = vst [vmem:[%s206 + $0x250] sm:$0xff] %v355
                %v357 = vld [vmem:[%s205 + $0x458] sm:$0xff]
                %358 = vst [vmem:[%s206 + $0x258] sm:$0xff] %v357
                %v359 = vld [vmem:[%s205 + $0x460] sm:$0xff]
                %360 = vst [vmem:[%s206 + $0x260] sm:$0xff] %v359
                %v361 = vld [vmem:[%s205 + $0x468] sm:$0xff]
                %362 = vst [vmem:[%s206 + $0x268] sm:$0xff] %v361
                %v363 = vld [vmem:[%s205 + $0x470] sm:$0xff]
                %364 = vst [vmem:[%s206 + $0x270] sm:$0xff] %v363
                %v365 = vld [vmem:[%s205 + $0x478] sm:$0xff]
                %366 = vst [vmem:[%s206 + $0x278] sm:$0xff] %v365
                %v367 = vld [vmem:[%s205 + $0x480] sm:$0xff]
                %368 = vst [vmem:[%s206 + $0x280] sm:$0xff] %v367
                %v369 = vld [vmem:[%s205 + $0x488] sm:$0xff]
                %370 = vst [vmem:[%s206 + $0x288] sm:$0xff] %v369
                %v371 = vld [vmem:[%s205 + $0x490] sm:$0xff]
                %372 = vst [vmem:[%s206 + $0x290] sm:$0xff] %v371
                %v373 = vld [vmem:[%s205 + $0x498] sm:$0xff]
                %374 = vst [vmem:[%s206 + $0x298] sm:$0xff] %v373
                %v375 = vld [vmem:[%s205 + $0x4a0] sm:$0xff]
                %376 = vst [vmem:[%s206 + $0x2a0] sm:$0xff] %v375
                %v377 = vld [vmem:[%s205 + $0x4a8] sm:$0xff]
                %378 = vst [vmem:[%s206 + $0x2a8] sm:$0xff] %v377
                %v379 = vld [vmem:[%s205 + $0x4b0] sm:$0xff]
                %380 = vst [vmem:[%s206 + $0x2b0] sm:$0xff] %v379
                %v381 = vld [vmem:[%s205 + $0x4b8] sm:$0xff]
                %382 = vst [vmem:[%s206 + $0x2b8] sm:$0xff] %v381
                %v383 = vld [vmem:[%s205 + $0x4c0] sm:$0xff]
                %384 = vst [vmem:[%s206 + $0x2c0] sm:$0xff] %v383
                %v385 = vld [vmem:[%s205 + $0x4c8] sm:$0xff]
                %386 = vst [vmem:[%s206 + $0x2c8] sm:$0xff] %v385
                %v387 = vld [vmem:[%s205 + $0x4d0] sm:$0xff]
                %388 = vst [vmem:[%s206 + $0x2d0] sm:$0xff] %v387
                %v389 = vld [vmem:[%s205 + $0x4d8] sm:$0xff]
                %390 = vst [vmem:[%s206 + $0x2d8] sm:$0xff] %v389
                %v391 = vld [vmem:[%s205 + $0x4e0] sm:$0xff]
                %392 = vst [vmem:[%s206 + $0x2e0] sm:$0xff] %v391
                %v393 = vld [vmem:[%s205 + $0x4e8] sm:$0xff]
                %394 = vst [vmem:[%s206 + $0x2e8] sm:$0xff] %v393
                %v395 = vld [vmem:[%s205 + $0x4f0] sm:$0xff]
                %396 = vst [vmem:[%s206 + $0x2f0] sm:$0xff] %v395
                %v397 = vld [vmem:[%s205 + $0x4f8] sm:$0xff]
                %398 = vst [vmem:[%s206 + $0x2f8] sm:$0xff] %v397
                %v399 = vld [vmem:[%s205 + $0x500] sm:$0xff]
                %400 = vst [vmem:[%s206 + $0x300] sm:$0xff] %v399
                %v401 = vld [vmem:[%s205 + $0x508] sm:$0xff]
                %402 = vst [vmem:[%s206 + $0x308] sm:$0xff] %v401
                %v403 = vld [vmem:[%s205 + $0x510] sm:$0xff]
                %404 = vst [vmem:[%s206 + $0x310] sm:$0xff] %v403
                %v405 = vld [vmem:[%s205 + $0x518] sm:$0xff]
                %406 = vst [vmem:[%s206 + $0x318] sm:$0xff] %v405
                %v407 = vld [vmem:[%s205 + $0x520] sm:$0xff]
                %408 = vst [vmem:[%s206 + $0x320] sm:$0xff] %v407
                %v409 = vld [vmem:[%s205 + $0x528] sm:$0xff]
                %410 = vst [vmem:[%s206 + $0x328] sm:$0xff] %v409
                %v411 = vld [vmem:[%s205 + $0x530] sm:$0xff]
                %412 = vst [vmem:[%s206 + $0x330] sm:$0xff] %v411
                %v413 = vld [vmem:[%s205 + $0x538] sm:$0xff]
                %414 = vst [vmem:[%s206 + $0x338] sm:$0xff] %v413
                %v415 = vld [vmem:[%s205 + $0x540] sm:$0xff]
                %416 = vst [vmem:[%s206 + $0x340] sm:$0xff] %v415
                %v417 = vld [vmem:[%s205 + $0x548] sm:$0xff]
                %418 = vst [vmem:[%s206 + $0x348] sm:$0xff] %v417
                %v419 = vld [vmem:[%s205 + $0x550] sm:$0xff]
                %420 = vst [vmem:[%s206 + $0x350] sm:$0xff] %v419
                %v421 = vld [vmem:[%s205 + $0x558] sm:$0xff]
                %422 = vst [vmem:[%s206 + $0x358] sm:$0xff] %v421
                %v423 = vld [vmem:[%s205 + $0x560] sm:$0xff]
                %424 = vst [vmem:[%s206 + $0x360] sm:$0xff] %v423
                %v425 = vld [vmem:[%s205 + $0x568] sm:$0xff]
                %426 = vst [vmem:[%s206 + $0x368] sm:$0xff] %v425
                %v427 = vld [vmem:[%s205 + $0x570] sm:$0xff]
                %428 = vst [vmem:[%s206 + $0x370] sm:$0xff] %v427
                %v429 = vld [vmem:[%s205 + $0x578] sm:$0xff]
                %430 = vst [vmem:[%s206 + $0x378] sm:$0xff] %v429
                %v431 = vld [vmem:[%s205 + $0x580] sm:$0xff]
                %432 = vst [vmem:[%s206 + $0x380] sm:$0xff] %v431
                %v433 = vld [vmem:[%s205 + $0x588] sm:$0xff]
                %434 = vst [vmem:[%s206 + $0x388] sm:$0xff] %v433
                %v435 = vld [vmem:[%s205 + $0x590] sm:$0xff]
                %436 = vst [vmem:[%s206 + $0x390] sm:$0xff] %v435
                %v437 = vld [vmem:[%s205 + $0x598] sm:$0xff]
                %438 = vst [vmem:[%s206 + $0x398] sm:$0xff] %v437
                %v439 = vld [vmem:[%s205 + $0x5a0] sm:$0xff]
                %440 = vst [vmem:[%s206 + $0x3a0] sm:$0xff] %v439
                %v441 = vld [vmem:[%s205 + $0x5a8] sm:$0xff]
                %442 = vst [vmem:[%s206 + $0x3a8] sm:$0xff] %v441
                %v443 = vld [vmem:[%s205 + $0x5b0] sm:$0xff]
                %444 = vst [vmem:[%s206 + $0x3b0] sm:$0xff] %v443
                %v445 = vld [vmem:[%s205 + $0x5b8] sm:$0xff]
                %446 = vst [vmem:[%s206 + $0x3b8] sm:$0xff] %v445
                %v447 = vld [vmem:[%s205 + $0x5c0] sm:$0xff]
                %448 = vst [vmem:[%s206 + $0x3c0] sm:$0xff] %v447
                %v449 = vld [vmem:[%s205 + $0x5c8] sm:$0xff]
                %450 = vst [vmem:[%s206 + $0x3c8] sm:$0xff] %v449
                %v451 = vld [vmem:[%s205 + $0x5d0] sm:$0xff]
                %452 = vst [vmem:[%s206 + $0x3d0] sm:$0xff] %v451
                %v453 = vld [vmem:[%s205 + $0x5d8] sm:$0xff]
                %454 = vst [vmem:[%s206 + $0x3d8] sm:$0xff] %v453
                %v455 = vld [vmem:[%s205 + $0x5e0] sm:$0xff]
                %456 = vst [vmem:[%s206 + $0x3e0] sm:$0xff] %v455
                %v457 = vld [vmem:[%s205 + $0x5e8] sm:$0xff]
                %458 = vst [vmem:[%s206 + $0x3e8] sm:$0xff] %v457
                %v459 = vld [vmem:[%s205 + $0x5f0] sm:$0xff]
                %460 = vst [vmem:[%s206 + $0x3f0] sm:$0xff] %v459
                %v461 = vld [vmem:[%s205 + $0x5f8] sm:$0xff]
                %462 = vst [vmem:[%s206 + $0x3f8] sm:$0xff] %v461
                %v463 = vld [vmem:[%s205 + $0x800] sm:$0xff]
                %464 = vst [vmem:[%s206 + $0x400] sm:$0xff] %v463
                %v465 = vld [vmem:[%s205 + $0x808] sm:$0xff]
                %466 = vst [vmem:[%s206 + $0x408] sm:$0xff] %v465
                %v467 = vld [vmem:[%s205 + $0x810] sm:$0xff]
                %468 = vst [vmem:[%s206 + $0x410] sm:$0xff] %v467
                %v469 = vld [vmem:[%s205 + $0x818] sm:$0xff]
                %470 = vst [vmem:[%s206 + $0x418] sm:$0xff] %v469
                %v471 = vld [vmem:[%s205 + $0x820] sm:$0xff]
                %472 = vst [vmem:[%s206 + $0x420] sm:$0xff] %v471
                %v473 = vld [vmem:[%s205 + $0x828] sm:$0xff]
                %474 = vst [vmem:[%s206 + $0x428] sm:$0xff] %v473
                %v475 = vld [vmem:[%s205 + $0x830] sm:$0xff]
                %476 = vst [vmem:[%s206 + $0x430] sm:$0xff] %v475
                %v477 = vld [vmem:[%s205 + $0x838] sm:$0xff]
                %478 = vst [vmem:[%s206 + $0x438] sm:$0xff] %v477
                %v479 = vld [vmem:[%s205 + $0x840] sm:$0xff]
                %480 = vst [vmem:[%s206 + $0x440] sm:$0xff] %v479
                %v481 = vld [vmem:[%s205 + $0x848] sm:$0xff]
                %482 = vst [vmem:[%s206 + $0x448] sm:$0xff] %v481
                %v483 = vld [vmem:[%s205 + $0x850] sm:$0xff]
                %484 = vst [vmem:[%s206 + $0x450] sm:$0xff] %v483
                %v485 = vld [vmem:[%s205 + $0x858] sm:$0xff]
                %486 = vst [vmem:[%s206 + $0x458] sm:$0xff] %v485
                %v487 = vld [vmem:[%s205 + $0x860] sm:$0xff]
                %488 = vst [vmem:[%s206 + $0x460] sm:$0xff] %v487
                %v489 = vld [vmem:[%s205 + $0x868] sm:$0xff]
                %490 = vst [vmem:[%s206 + $0x468] sm:$0xff] %v489
                %v491 = vld [vmem:[%s205 + $0x870] sm:$0xff]
                %492 = vst [vmem:[%s206 + $0x470] sm:$0xff] %v491
                %v493 = vld [vmem:[%s205 + $0x878] sm:$0xff]
                %494 = vst [vmem:[%s206 + $0x478] sm:$0xff] %v493
                %v495 = vld [vmem:[%s205 + $0x880] sm:$0xff]
                %496 = vst [vmem:[%s206 + $0x480] sm:$0xff] %v495
                %v497 = vld [vmem:[%s205 + $0x888] sm:$0xff]
                %498 = vst [vmem:[%s206 + $0x488] sm:$0xff] %v497
                %v499 = vld [vmem:[%s205 + $0x890] sm:$0xff]
                %500 = vst [vmem:[%s206 + $0x490] sm:$0xff] %v499
                %v501 = vld [vmem:[%s205 + $0x898] sm:$0xff]
                %502 = vst [vmem:[%s206 + $0x498] sm:$0xff] %v501
                %v503 = vld [vmem:[%s205 + $0x8a0] sm:$0xff]
                %504 = vst [vmem:[%s206 + $0x4a0] sm:$0xff] %v503
                %v505 = vld [vmem:[%s205 + $0x8a8] sm:$0xff]
                %506 = vst [vmem:[%s206 + $0x4a8] sm:$0xff] %v505
                %v507 = vld [vmem:[%s205 + $0x8b0] sm:$0xff]
                %508 = vst [vmem:[%s206 + $0x4b0] sm:$0xff] %v507
                %v509 = vld [vmem:[%s205 + $0x8b8] sm:$0xff]
                %510 = vst [vmem:[%s206 + $0x4b8] sm:$0xff] %v509
                %v511 = vld [vmem:[%s205 + $0x8c0] sm:$0xff]
                %512 = vst [vmem:[%s206 + $0x4c0] sm:$0xff] %v511
                %v513 = vld [vmem:[%s205 + $0x8c8] sm:$0xff]
                %514 = vst [vmem:[%s206 + $0x4c8] sm:$0xff] %v513
                %v515 = vld [vmem:[%s205 + $0x8d0] sm:$0xff]
                %516 = vst [vmem:[%s206 + $0x4d0] sm:$0xff] %v515
                %v517 = vld [vmem:[%s205 + $0x8d8] sm:$0xff]
                %518 = vst [vmem:[%s206 + $0x4d8] sm:$0xff] %v517
                %v519 = vld [vmem:[%s205 + $0x8e0] sm:$0xff]
                %520 = vst [vmem:[%s206 + $0x4e0] sm:$0xff] %v519
                %v521 = vld [vmem:[%s205 + $0x8e8] sm:$0xff]
                %522 = vst [vmem:[%s206 + $0x4e8] sm:$0xff] %v521
                %v523 = vld [vmem:[%s205 + $0x8f0] sm:$0xff]
                %524 = vst [vmem:[%s206 + $0x4f0] sm:$0xff] %v523
                %v525 = vld [vmem:[%s205 + $0x8f8] sm:$0xff]
                %526 = vst [vmem:[%s206 + $0x4f8] sm:$0xff] %v525
                %v527 = vld [vmem:[%s205 + $0x900] sm:$0xff]
                %528 = vst [vmem:[%s206 + $0x500] sm:$0xff] %v527
                %v529 = vld [vmem:[%s205 + $0x908] sm:$0xff]
                %530 = vst [vmem:[%s206 + $0x508] sm:$0xff] %v529
                %v531 = vld [vmem:[%s205 + $0x910] sm:$0xff]
                %532 = vst [vmem:[%s206 + $0x510] sm:$0xff] %v531
                %v533 = vld [vmem:[%s205 + $0x918] sm:$0xff]
                %534 = vst [vmem:[%s206 + $0x518] sm:$0xff] %v533
                %v535 = vld [vmem:[%s205 + $0x920] sm:$0xff]
                %536 = vst [vmem:[%s206 + $0x520] sm:$0xff] %v535
                %v537 = vld [vmem:[%s205 + $0x928] sm:$0xff]
                %538 = vst [vmem:[%s206 + $0x528] sm:$0xff] %v537
                %v539 = vld [vmem:[%s205 + $0x930] sm:$0xff]
                %540 = vst [vmem:[%s206 + $0x530] sm:$0xff] %v539
                %v541 = vld [vmem:[%s205 + $0x938] sm:$0xff]
                %542 = vst [vmem:[%s206 + $0x538] sm:$0xff] %v541
                %v543 = vld [vmem:[%s205 + $0x940] sm:$0xff]
                %544 = vst [vmem:[%s206 + $0x540] sm:$0xff] %v543
                %v545 = vld [vmem:[%s205 + $0x948] sm:$0xff]
                %546 = vst [vmem:[%s206 + $0x548] sm:$0xff] %v545
                %v547 = vld [vmem:[%s205 + $0x950] sm:$0xff]
                %548 = vst [vmem:[%s206 + $0x550] sm:$0xff] %v547
                %v549 = vld [vmem:[%s205 + $0x958] sm:$0xff]
                %550 = vst [vmem:[%s206 + $0x558] sm:$0xff] %v549
                %v551 = vld [vmem:[%s205 + $0x960] sm:$0xff]
                %552 = vst [vmem:[%s206 + $0x560] sm:$0xff] %v551
                %v553 = vld [vmem:[%s205 + $0x968] sm:$0xff]
                %554 = vst [vmem:[%s206 + $0x568] sm:$0xff] %v553
                %v555 = vld [vmem:[%s205 + $0x970] sm:$0xff]
                %556 = vst [vmem:[%s206 + $0x570] sm:$0xff] %v555
                %v557 = vld [vmem:[%s205 + $0x978] sm:$0xff]
                %558 = vst [vmem:[%s206 + $0x578] sm:$0xff] %v557
                %v559 = vld [vmem:[%s205 + $0x980] sm:$0xff]
                %560 = vst [vmem:[%s206 + $0x580] sm:$0xff] %v559
                %v561 = vld [vmem:[%s205 + $0x988] sm:$0xff]
                %562 = vst [vmem:[%s206 + $0x588] sm:$0xff] %v561
                %v563 = vld [vmem:[%s205 + $0x990] sm:$0xff]
                %564 = vst [vmem:[%s206 + $0x590] sm:$0xff] %v563
                %v565 = vld [vmem:[%s205 + $0x998] sm:$0xff]
                %566 = vst [vmem:[%s206 + $0x598] sm:$0xff] %v565
                %v567 = vld [vmem:[%s205 + $0x9a0] sm:$0xff]
                %568 = vst [vmem:[%s206 + $0x5a0] sm:$0xff] %v567
                %v569 = vld [vmem:[%s205 + $0x9a8] sm:$0xff]
                %570 = vst [vmem:[%s206 + $0x5a8] sm:$0xff] %v569
                %v571 = vld [vmem:[%s205 + $0x9b0] sm:$0xff]
                %572 = vst [vmem:[%s206 + $0x5b0] sm:$0xff] %v571
                %v573 = vld [vmem:[%s205 + $0x9b8] sm:$0xff]
                %574 = vst [vmem:[%s206 + $0x5b8] sm:$0xff] %v573
                %v575 = vld [vmem:[%s205 + $0x9c0] sm:$0xff]
                %576 = vst [vmem:[%s206 + $0x5c0] sm:$0xff] %v575
                %v577 = vld [vmem:[%s205 + $0x9c8] sm:$0xff]
                %578 = vst [vmem:[%s206 + $0x5c8] sm:$0xff] %v577
                %v579 = vld [vmem:[%s205 + $0x9d0] sm:$0xff]
                %580 = vst [vmem:[%s206 + $0x5d0] sm:$0xff] %v579
                %v581 = vld [vmem:[%s205 + $0x9d8] sm:$0xff]
                %582 = vst [vmem:[%s206 + $0x5d8] sm:$0xff] %v581
                %v583 = vld [vmem:[%s205 + $0x9e0] sm:$0xff]
                %584 = vst [vmem:[%s206 + $0x5e0] sm:$0xff] %v583
                %v585 = vld [vmem:[%s205 + $0x9e8] sm:$0xff]
                %586 = vst [vmem:[%s206 + $0x5e8] sm:$0xff] %v585
                %v587 = vld [vmem:[%s205 + $0x9f0] sm:$0xff]
                %588 = vst [vmem:[%s206 + $0x5f0] sm:$0xff] %v587
                %v589 = vld [vmem:[%s205 + $0x9f8] sm:$0xff]
                %590 = vst [vmem:[%s206 + $0x5f8] sm:$0xff] %v589
                %v591 = vld [vmem:[%s205 + $0xc00] sm:$0xff]
                %592 = vst [vmem:[%s206 + $0x600] sm:$0xff] %v591
                %v593 = vld [vmem:[%s205 + $0xc08] sm:$0xff]
                %594 = vst [vmem:[%s206 + $0x608] sm:$0xff] %v593
                %v595 = vld [vmem:[%s205 + $0xc10] sm:$0xff]
                %596 = vst [vmem:[%s206 + $0x610] sm:$0xff] %v595
                %v597 = vld [vmem:[%s205 + $0xc18] sm:$0xff]
                %598 = vst [vmem:[%s206 + $0x618] sm:$0xff] %v597
                %v599 = vld [vmem:[%s205 + $0xc20] sm:$0xff]
                %600 = vst [vmem:[%s206 + $0x620] sm:$0xff] %v599
                %v601 = vld [vmem:[%s205 + $0xc28] sm:$0xff]
                %602 = vst [vmem:[%s206 + $0x628] sm:$0xff] %v601
                %v603 = vld [vmem:[%s205 + $0xc30] sm:$0xff]
                %604 = vst [vmem:[%s206 + $0x630] sm:$0xff] %v603
                %v605 = vld [vmem:[%s205 + $0xc38] sm:$0xff]
                %606 = vst [vmem:[%s206 + $0x638] sm:$0xff] %v605
                %v607 = vld [vmem:[%s205 + $0xc40] sm:$0xff]
                %608 = vst [vmem:[%s206 + $0x640] sm:$0xff] %v607
                %v609 = vld [vmem:[%s205 + $0xc48] sm:$0xff]
                %610 = vst [vmem:[%s206 + $0x648] sm:$0xff] %v609
                %v611 = vld [vmem:[%s205 + $0xc50] sm:$0xff]
                %612 = vst [vmem:[%s206 + $0x650] sm:$0xff] %v611
                %v613 = vld [vmem:[%s205 + $0xc58] sm:$0xff]
                %614 = vst [vmem:[%s206 + $0x658] sm:$0xff] %v613
                %v615 = vld [vmem:[%s205 + $0xc60] sm:$0xff]
                %616 = vst [vmem:[%s206 + $0x660] sm:$0xff] %v615
                %v617 = vld [vmem:[%s205 + $0xc68] sm:$0xff]
                %618 = vst [vmem:[%s206 + $0x668] sm:$0xff] %v617
                %v619 = vld [vmem:[%s205 + $0xc70] sm:$0xff]
                %620 = vst [vmem:[%s206 + $0x670] sm:$0xff] %v619
                %v621 = vld [vmem:[%s205 + $0xc78] sm:$0xff]
                %622 = vst [vmem:[%s206 + $0x678] sm:$0xff] %v621
                %v623 = vld [vmem:[%s205 + $0xc80] sm:$0xff]
                %624 = vst [vmem:[%s206 + $0x680] sm:$0xff] %v623
                %v625 = vld [vmem:[%s205 + $0xc88] sm:$0xff]
                %626 = vst [vmem:[%s206 + $0x688] sm:$0xff] %v625
                %v627 = vld [vmem:[%s205 + $0xc90] sm:$0xff]
                %628 = vst [vmem:[%s206 + $0x690] sm:$0xff] %v627
                %v629 = vld [vmem:[%s205 + $0xc98] sm:$0xff]
                %630 = vst [vmem:[%s206 + $0x698] sm:$0xff] %v629
                %v631 = vld [vmem:[%s205 + $0xca0] sm:$0xff]
                %632 = vst [vmem:[%s206 + $0x6a0] sm:$0xff] %v631
                %v633 = vld [vmem:[%s205 + $0xca8] sm:$0xff]
                %634 = vst [vmem:[%s206 + $0x6a8] sm:$0xff] %v633
                %v635 = vld [vmem:[%s205 + $0xcb0] sm:$0xff]
                %636 = vst [vmem:[%s206 + $0x6b0] sm:$0xff] %v635
                %v637 = vld [vmem:[%s205 + $0xcb8] sm:$0xff]
                %638 = vst [vmem:[%s206 + $0x6b8] sm:$0xff] %v637
                %v639 = vld [vmem:[%s205 + $0xcc0] sm:$0xff]
                %640 = vst [vmem:[%s206 + $0x6c0] sm:$0xff] %v639
                %v641 = vld [vmem:[%s205 + $0xcc8] sm:$0xff]
                %642 = vst [vmem:[%s206 + $0x6c8] sm:$0xff] %v641
                %v643 = vld [vmem:[%s205 + $0xcd0] sm:$0xff]
                %644 = vst [vmem:[%s206 + $0x6d0] sm:$0xff] %v643
                %v645 = vld [vmem:[%s205 + $0xcd8] sm:$0xff]
                %646 = vst [vmem:[%s206 + $0x6d8] sm:$0xff] %v645
                %v647 = vld [vmem:[%s205 + $0xce0] sm:$0xff]
                %648 = vst [vmem:[%s206 + $0x6e0] sm:$0xff] %v647
                %v649 = vld [vmem:[%s205 + $0xce8] sm:$0xff]
                %650 = vst [vmem:[%s206 + $0x6e8] sm:$0xff] %v649
                %v651 = vld [vmem:[%s205 + $0xcf0] sm:$0xff]
                %652 = vst [vmem:[%s206 + $0x6f0] sm:$0xff] %v651
                %v653 = vld [vmem:[%s205 + $0xcf8] sm:$0xff]
                %654 = vst [vmem:[%s206 + $0x6f8] sm:$0xff] %v653
                %v655 = vld [vmem:[%s205 + $0xd00] sm:$0xff]
                %656 = vst [vmem:[%s206 + $0x700] sm:$0xff] %v655
                %v657 = vld [vmem:[%s205 + $0xd08] sm:$0xff]
                %658 = vst [vmem:[%s206 + $0x708] sm:$0xff] %v657
                %v659 = vld [vmem:[%s205 + $0xd10] sm:$0xff]
                %660 = vst [vmem:[%s206 + $0x710] sm:$0xff] %v659
                %v661 = vld [vmem:[%s205 + $0xd18] sm:$0xff]
                %662 = vst [vmem:[%s206 + $0x718] sm:$0xff] %v661
                %v663 = vld [vmem:[%s205 + $0xd20] sm:$0xff]
                %664 = vst [vmem:[%s206 + $0x720] sm:$0xff] %v663
                %v665 = vld [vmem:[%s205 + $0xd28] sm:$0xff]
                %666 = vst [vmem:[%s206 + $0x728] sm:$0xff] %v665
                %v667 = vld [vmem:[%s205 + $0xd30] sm:$0xff]
                %668 = vst [vmem:[%s206 + $0x730] sm:$0xff] %v667
                %v669 = vld [vmem:[%s205 + $0xd38] sm:$0xff]
                %670 = vst [vmem:[%s206 + $0x738] sm:$0xff] %v669
                %v671 = vld [vmem:[%s205 + $0xd40] sm:$0xff]
                %672 = vst [vmem:[%s206 + $0x740] sm:$0xff] %v671
                %v673 = vld [vmem:[%s205 + $0xd48] sm:$0xff]
                %674 = vst [vmem:[%s206 + $0x748] sm:$0xff] %v673
                %v675 = vld [vmem:[%s205 + $0xd50] sm:$0xff]
                %676 = vst [vmem:[%s206 + $0x750] sm:$0xff] %v675
                %v677 = vld [vmem:[%s205 + $0xd58] sm:$0xff]
                %678 = vst [vmem:[%s206 + $0x758] sm:$0xff] %v677
                %v679 = vld [vmem:[%s205 + $0xd60] sm:$0xff]
                %680 = vst [vmem:[%s206 + $0x760] sm:$0xff] %v679
                %v681 = vld [vmem:[%s205 + $0xd68] sm:$0xff]
                %682 = vst [vmem:[%s206 + $0x768] sm:$0xff] %v681
                %v683 = vld [vmem:[%s205 + $0xd70] sm:$0xff]
                %684 = vst [vmem:[%s206 + $0x770] sm:$0xff] %v683
                %v685 = vld [vmem:[%s205 + $0xd78] sm:$0xff]
                %686 = vst [vmem:[%s206 + $0x778] sm:$0xff] %v685
                %v687 = vld [vmem:[%s205 + $0xd80] sm:$0xff]
                %688 = vst [vmem:[%s206 + $0x780] sm:$0xff] %v687
                %v689 = vld [vmem:[%s205 + $0xd88] sm:$0xff]
                %690 = vst [vmem:[%s206 + $0x788] sm:$0xff] %v689
                %v691 = vld [vmem:[%s205 + $0xd90] sm:$0xff]
                %692 = vst [vmem:[%s206 + $0x790] sm:$0xff] %v691
                %v693 = vld [vmem:[%s205 + $0xd98] sm:$0xff]
                %694 = vst [vmem:[%s206 + $0x798] sm:$0xff] %v693
                %v695 = vld [vmem:[%s205 + $0xda0] sm:$0xff]
                %696 = vst [vmem:[%s206 + $0x7a0] sm:$0xff] %v695
                %v697 = vld [vmem:[%s205 + $0xda8] sm:$0xff]
                %698 = vst [vmem:[%s206 + $0x7a8] sm:$0xff] %v697
                %v699 = vld [vmem:[%s205 + $0xdb0] sm:$0xff]
                %700 = vst [vmem:[%s206 + $0x7b0] sm:$0xff] %v699
                %v701 = vld [vmem:[%s205 + $0xdb8] sm:$0xff]
                %702 = vst [vmem:[%s206 + $0x7b8] sm:$0xff] %v701
                %v703 = vld [vmem:[%s205 + $0xdc0] sm:$0xff]
                %704 = vst [vmem:[%s206 + $0x7c0] sm:$0xff] %v703
                %v705 = vld [vmem:[%s205 + $0xdc8] sm:$0xff]
                %706 = vst [vmem:[%s206 + $0x7c8] sm:$0xff] %v705
                %v707 = vld [vmem:[%s205 + $0xdd0] sm:$0xff]
                %708 = vst [vmem:[%s206 + $0x7d0] sm:$0xff] %v707
                %v709 = vld [vmem:[%s205 + $0xdd8] sm:$0xff]
                %710 = vst [vmem:[%s206 + $0x7d8] sm:$0xff] %v709
                %v711 = vld [vmem:[%s205 + $0xde0] sm:$0xff]
                %712 = vst [vmem:[%s206 + $0x7e0] sm:$0xff] %v711
                %v713 = vld [vmem:[%s205 + $0xde8] sm:$0xff]
                %714 = vst [vmem:[%s206 + $0x7e8] sm:$0xff] %v713
                %v715 = vld [vmem:[%s205 + $0xdf0] sm:$0xff]
                %716 = vst [vmem:[%s206 + $0x7f0] sm:$0xff] %v715
                %v717 = vld [vmem:[%s205 + $0xdf8] sm:$0xff]
                %718 = vst [vmem:[%s206 + $0x7f8] sm:$0xff] %v717
                %v719 = vld [vmem:[%s205 + $0x1000] sm:$0xff]
                %720 = vst [vmem:[%s206 + $0x800] sm:$0xff] %v719
                %v721 = vld [vmem:[%s205 + $0x1008] sm:$0xff]
                %722 = vst [vmem:[%s206 + $0x808] sm:$0xff] %v721
                %v723 = vld [vmem:[%s205 + $0x1010] sm:$0xff]
                %724 = vst [vmem:[%s206 + $0x810] sm:$0xff] %v723
                %v725 = vld [vmem:[%s205 + $0x1018] sm:$0xff]
                %726 = vst [vmem:[%s206 + $0x818] sm:$0xff] %v725
                %v727 = vld [vmem:[%s205 + $0x1020] sm:$0xff]
                %728 = vst [vmem:[%s206 + $0x820] sm:$0xff] %v727
                %v729 = vld [vmem:[%s205 + $0x1028] sm:$0xff]
                %730 = vst [vmem:[%s206 + $0x828] sm:$0xff] %v729
                %v731 = vld [vmem:[%s205 + $0x1030] sm:$0xff]
                %732 = vst [vmem:[%s206 + $0x830] sm:$0xff] %v731
                %v733 = vld [vmem:[%s205 + $0x1038] sm:$0xff]
                %734 = vst [vmem:[%s206 + $0x838] sm:$0xff] %v733
                %v735 = vld [vmem:[%s205 + $0x1040] sm:$0xff]
                %736 = vst [vmem:[%s206 + $0x840] sm:$0xff] %v735
                %v737 = vld [vmem:[%s205 + $0x1048] sm:$0xff]
                %738 = vst [vmem:[%s206 + $0x848] sm:$0xff] %v737
                %v739 = vld [vmem:[%s205 + $0x1050] sm:$0xff]
                %740 = vst [vmem:[%s206 + $0x850] sm:$0xff] %v739
                %v741 = vld [vmem:[%s205 + $0x1058] sm:$0xff]
                %742 = vst [vmem:[%s206 + $0x858] sm:$0xff] %v741
                %v743 = vld [vmem:[%s205 + $0x1060] sm:$0xff]
                %744 = vst [vmem:[%s206 + $0x860] sm:$0xff] %v743
                %v745 = vld [vmem:[%s205 + $0x1068] sm:$0xff]
                %746 = vst [vmem:[%s206 + $0x868] sm:$0xff] %v745
                %v747 = vld [vmem:[%s205 + $0x1070] sm:$0xff]
                %748 = vst [vmem:[%s206 + $0x870] sm:$0xff] %v747
                %v749 = vld [vmem:[%s205 + $0x1078] sm:$0xff]
                %750 = vst [vmem:[%s206 + $0x878] sm:$0xff] %v749
                %v751 = vld [vmem:[%s205 + $0x1080] sm:$0xff]
                %752 = vst [vmem:[%s206 + $0x880] sm:$0xff] %v751
                %v753 = vld [vmem:[%s205 + $0x1088] sm:$0xff]
                %754 = vst [vmem:[%s206 + $0x888] sm:$0xff] %v753
                %v755 = vld [vmem:[%s205 + $0x1090] sm:$0xff]
                %756 = vst [vmem:[%s206 + $0x890] sm:$0xff] %v755
                %v757 = vld [vmem:[%s205 + $0x1098] sm:$0xff]
                %758 = vst [vmem:[%s206 + $0x898] sm:$0xff] %v757
                %v759 = vld [vmem:[%s205 + $0x10a0] sm:$0xff]
                %760 = vst [vmem:[%s206 + $0x8a0] sm:$0xff] %v759
                %v761 = vld [vmem:[%s205 + $0x10a8] sm:$0xff]
                %762 = vst [vmem:[%s206 + $0x8a8] sm:$0xff] %v761
                %v763 = vld [vmem:[%s205 + $0x10b0] sm:$0xff]
                %764 = vst [vmem:[%s206 + $0x8b0] sm:$0xff] %v763
                %v765 = vld [vmem:[%s205 + $0x10b8] sm:$0xff]
                %766 = vst [vmem:[%s206 + $0x8b8] sm:$0xff] %v765
                %v767 = vld [vmem:[%s205 + $0x10c0] sm:$0xff]
                %768 = vst [vmem:[%s206 + $0x8c0] sm:$0xff] %v767
                %v769 = vld [vmem:[%s205 + $0x10c8] sm:$0xff]
                %770 = vst [vmem:[%s206 + $0x8c8] sm:$0xff] %v769
                %v771 = vld [vmem:[%s205 + $0x10d0] sm:$0xff]
                %772 = vst [vmem:[%s206 + $0x8d0] sm:$0xff] %v771
                %v773 = vld [vmem:[%s205 + $0x10d8] sm:$0xff]
                %774 = vst [vmem:[%s206 + $0x8d8] sm:$0xff] %v773
                %v775 = vld [vmem:[%s205 + $0x10e0] sm:$0xff]
                %776 = vst [vmem:[%s206 + $0x8e0] sm:$0xff] %v775
                %v777 = vld [vmem:[%s205 + $0x10e8] sm:$0xff]
                %778 = vst [vmem:[%s206 + $0x8e8] sm:$0xff] %v777
                %v779 = vld [vmem:[%s205 + $0x10f0] sm:$0xff]
                %780 = vst [vmem:[%s206 + $0x8f0] sm:$0xff] %v779
                %v781 = vld [vmem:[%s205 + $0x10f8] sm:$0xff]
                %782 = vst [vmem:[%s206 + $0x8f8] sm:$0xff] %v781
                %v783 = vld [vmem:[%s205 + $0x1100] sm:$0xff]
                %784 = vst [vmem:[%s206 + $0x900] sm:$0xff] %v783
                %v785 = vld [vmem:[%s205 + $0x1108] sm:$0xff]
                %786 = vst [vmem:[%s206 + $0x908] sm:$0xff] %v785
                %v787 = vld [vmem:[%s205 + $0x1110] sm:$0xff]
                %788 = vst [vmem:[%s206 + $0x910] sm:$0xff] %v787
                %v789 = vld [vmem:[%s205 + $0x1118] sm:$0xff]
                %790 = vst [vmem:[%s206 + $0x918] sm:$0xff] %v789
                %v791 = vld [vmem:[%s205 + $0x1120] sm:$0xff]
                %792 = vst [vmem:[%s206 + $0x920] sm:$0xff] %v791
                %v793 = vld [vmem:[%s205 + $0x1128] sm:$0xff]
                %794 = vst [vmem:[%s206 + $0x928] sm:$0xff] %v793
                %v795 = vld [vmem:[%s205 + $0x1130] sm:$0xff]
                %796 = vst [vmem:[%s206 + $0x930] sm:$0xff] %v795
                %v797 = vld [vmem:[%s205 + $0x1138] sm:$0xff]
                %798 = vst [vmem:[%s206 + $0x938] sm:$0xff] %v797
                %v799 = vld [vmem:[%s205 + $0x1140] sm:$0xff]
                %800 = vst [vmem:[%s206 + $0x940] sm:$0xff] %v799
                %v801 = vld [vmem:[%s205 + $0x1148] sm:$0xff]
                %802 = vst [vmem:[%s206 + $0x948] sm:$0xff] %v801
                %v803 = vld [vmem:[%s205 + $0x1150] sm:$0xff]
                %804 = vst [vmem:[%s206 + $0x950] sm:$0xff] %v803
                %v805 = vld [vmem:[%s205 + $0x1158] sm:$0xff]
                %806 = vst [vmem:[%s206 + $0x958] sm:$0xff] %v805
                %v807 = vld [vmem:[%s205 + $0x1160] sm:$0xff]
                %808 = vst [vmem:[%s206 + $0x960] sm:$0xff] %v807
                %v809 = vld [vmem:[%s205 + $0x1168] sm:$0xff]
                %810 = vst [vmem:[%s206 + $0x968] sm:$0xff] %v809
                %v811 = vld [vmem:[%s205 + $0x1170] sm:$0xff]
                %812 = vst [vmem:[%s206 + $0x970] sm:$0xff] %v811
                %v813 = vld [vmem:[%s205 + $0x1178] sm:$0xff]
                %814 = vst [vmem:[%s206 + $0x978] sm:$0xff] %v813
                %v815 = vld [vmem:[%s205 + $0x1180] sm:$0xff]
                %816 = vst [vmem:[%s206 + $0x980] sm:$0xff] %v815
                %v817 = vld [vmem:[%s205 + $0x1188] sm:$0xff]
                %818 = vst [vmem:[%s206 + $0x988] sm:$0xff] %v817
                %v819 = vld [vmem:[%s205 + $0x1190] sm:$0xff]
                %820 = vst [vmem:[%s206 + $0x990] sm:$0xff] %v819
                %v821 = vld [vmem:[%s205 + $0x1198] sm:$0xff]
                %822 = vst [vmem:[%s206 + $0x998] sm:$0xff] %v821
                %v823 = vld [vmem:[%s205 + $0x11a0] sm:$0xff]
                %824 = vst [vmem:[%s206 + $0x9a0] sm:$0xff] %v823
                %v825 = vld [vmem:[%s205 + $0x11a8] sm:$0xff]
                %826 = vst [vmem:[%s206 + $0x9a8] sm:$0xff] %v825
                %v827 = vld [vmem:[%s205 + $0x11b0] sm:$0xff]
                %828 = vst [vmem:[%s206 + $0x9b0] sm:$0xff] %v827
                %v829 = vld [vmem:[%s205 + $0x11b8] sm:$0xff]
                %830 = vst [vmem:[%s206 + $0x9b8] sm:$0xff] %v829
                %v831 = vld [vmem:[%s205 + $0x11c0] sm:$0xff]
                %832 = vst [vmem:[%s206 + $0x9c0] sm:$0xff] %v831
                %v833 = vld [vmem:[%s205 + $0x11c8] sm:$0xff]
                %834 = vst [vmem:[%s206 + $0x9c8] sm:$0xff] %v833
                %v835 = vld [vmem:[%s205 + $0x11d0] sm:$0xff]
                %836 = vst [vmem:[%s206 + $0x9d0] sm:$0xff] %v835
                %v837 = vld [vmem:[%s205 + $0x11d8] sm:$0xff]
                %838 = vst [vmem:[%s206 + $0x9d8] sm:$0xff] %v837
                %v839 = vld [vmem:[%s205 + $0x11e0] sm:$0xff]
                %840 = vst [vmem:[%s206 + $0x9e0] sm:$0xff] %v839
                %v841 = vld [vmem:[%s205 + $0x11e8] sm:$0xff]
                %842 = vst [vmem:[%s206 + $0x9e8] sm:$0xff] %v841
                %v843 = vld [vmem:[%s205 + $0x11f0] sm:$0xff]
                %844 = vst [vmem:[%s206 + $0x9f0] sm:$0xff] %v843
                %v845 = vld [vmem:[%s205 + $0x11f8] sm:$0xff]
                %846 = vst [vmem:[%s206 + $0x9f8] sm:$0xff] %v845
                %v847 = vld [vmem:[%s205 + $0x1400] sm:$0xff]
                %848 = vst [vmem:[%s206 + $0xa00] sm:$0xff] %v847
                %v849 = vld [vmem:[%s205 + $0x1408] sm:$0xff]
                %850 = vst [vmem:[%s206 + $0xa08] sm:$0xff] %v849
                %v851 = vld [vmem:[%s205 + $0x1410] sm:$0xff]
                %852 = vst [vmem:[%s206 + $0xa10] sm:$0xff] %v851
                %v853 = vld [vmem:[%s205 + $0x1418] sm:$0xff]
                %854 = vst [vmem:[%s206 + $0xa18] sm:$0xff] %v853
                %v855 = vld [vmem:[%s205 + $0x1420] sm:$0xff]
                %856 = vst [vmem:[%s206 + $0xa20] sm:$0xff] %v855
                %v857 = vld [vmem:[%s205 + $0x1428] sm:$0xff]
                %858 = vst [vmem:[%s206 + $0xa28] sm:$0xff] %v857
                %v859 = vld [vmem:[%s205 + $0x1430] sm:$0xff]
                %860 = vst [vmem:[%s206 + $0xa30] sm:$0xff] %v859
                %v861 = vld [vmem:[%s205 + $0x1438] sm:$0xff]
                %862 = vst [vmem:[%s206 + $0xa38] sm:$0xff] %v861
                %v863 = vld [vmem:[%s205 + $0x1440] sm:$0xff]
                %864 = vst [vmem:[%s206 + $0xa40] sm:$0xff] %v863
                %v865 = vld [vmem:[%s205 + $0x1448] sm:$0xff]
                %866 = vst [vmem:[%s206 + $0xa48] sm:$0xff] %v865
                %v867 = vld [vmem:[%s205 + $0x1450] sm:$0xff]
                %868 = vst [vmem:[%s206 + $0xa50] sm:$0xff] %v867
                %v869 = vld [vmem:[%s205 + $0x1458] sm:$0xff]
                %870 = vst [vmem:[%s206 + $0xa58] sm:$0xff] %v869
                %v871 = vld [vmem:[%s205 + $0x1460] sm:$0xff]
                %872 = vst [vmem:[%s206 + $0xa60] sm:$0xff] %v871
                %v873 = vld [vmem:[%s205 + $0x1468] sm:$0xff]
                %874 = vst [vmem:[%s206 + $0xa68] sm:$0xff] %v873
                %v875 = vld [vmem:[%s205 + $0x1470] sm:$0xff]
                %876 = vst [vmem:[%s206 + $0xa70] sm:$0xff] %v875
                %v877 = vld [vmem:[%s205 + $0x1478] sm:$0xff]
                %878 = vst [vmem:[%s206 + $0xa78] sm:$0xff] %v877
                %v879 = vld [vmem:[%s205 + $0x1480] sm:$0xff]
                %880 = vst [vmem:[%s206 + $0xa80] sm:$0xff] %v879
                %v881 = vld [vmem:[%s205 + $0x1488] sm:$0xff]
                %882 = vst [vmem:[%s206 + $0xa88] sm:$0xff] %v881
                %v883 = vld [vmem:[%s205 + $0x1490] sm:$0xff]
                %884 = vst [vmem:[%s206 + $0xa90] sm:$0xff] %v883
                %v885 = vld [vmem:[%s205 + $0x1498] sm:$0xff]
                %886 = vst [vmem:[%s206 + $0xa98] sm:$0xff] %v885
                %v887 = vld [vmem:[%s205 + $0x14a0] sm:$0xff]
                %888 = vst [vmem:[%s206 + $0xaa0] sm:$0xff] %v887
                %v889 = vld [vmem:[%s205 + $0x14a8] sm:$0xff]
                %890 = vst [vmem:[%s206 + $0xaa8] sm:$0xff] %v889
                %v891 = vld [vmem:[%s205 + $0x14b0] sm:$0xff]
                %892 = vst [vmem:[%s206 + $0xab0] sm:$0xff] %v891
                %v893 = vld [vmem:[%s205 + $0x14b8] sm:$0xff]
                %894 = vst [vmem:[%s206 + $0xab8] sm:$0xff] %v893
                %v895 = vld [vmem:[%s205 + $0x14c0] sm:$0xff]
                %896 = vst [vmem:[%s206 + $0xac0] sm:$0xff] %v895
                %v897 = vld [vmem:[%s205 + $0x14c8] sm:$0xff]
                %898 = vst [vmem:[%s206 + $0xac8] sm:$0xff] %v897
                %v899 = vld [vmem:[%s205 + $0x14d0] sm:$0xff]
                %900 = vst [vmem:[%s206 + $0xad0] sm:$0xff] %v899
                %v901 = vld [vmem:[%s205 + $0x14d8] sm:$0xff]
                %902 = vst [vmem:[%s206 + $0xad8] sm:$0xff] %v901
                %v903 = vld [vmem:[%s205 + $0x14e0] sm:$0xff]
                %904 = vst [vmem:[%s206 + $0xae0] sm:$0xff] %v903
                %v905 = vld [vmem:[%s205 + $0x14e8] sm:$0xff]
                %906 = vst [vmem:[%s206 + $0xae8] sm:$0xff] %v905
                %v907 = vld [vmem:[%s205 + $0x14f0] sm:$0xff]
                %908 = vst [vmem:[%s206 + $0xaf0] sm:$0xff] %v907
                %v909 = vld [vmem:[%s205 + $0x14f8] sm:$0xff]
                %910 = vst [vmem:[%s206 + $0xaf8] sm:$0xff] %v909
                %v911 = vld [vmem:[%s205 + $0x1500] sm:$0xff]
                %912 = vst [vmem:[%s206 + $0xb00] sm:$0xff] %v911
                %v913 = vld [vmem:[%s205 + $0x1508] sm:$0xff]
                %914 = vst [vmem:[%s206 + $0xb08] sm:$0xff] %v913
                %v915 = vld [vmem:[%s205 + $0x1510] sm:$0xff]
                %916 = vst [vmem:[%s206 + $0xb10] sm:$0xff] %v915
                %v917 = vld [vmem:[%s205 + $0x1518] sm:$0xff]
                %918 = vst [vmem:[%s206 + $0xb18] sm:$0xff] %v917
                %v919 = vld [vmem:[%s205 + $0x1520] sm:$0xff]
                %920 = vst [vmem:[%s206 + $0xb20] sm:$0xff] %v919
                %v921 = vld [vmem:[%s205 + $0x1528] sm:$0xff]
                %922 = vst [vmem:[%s206 + $0xb28] sm:$0xff] %v921
                %v923 = vld [vmem:[%s205 + $0x1530] sm:$0xff]
                %924 = vst [vmem:[%s206 + $0xb30] sm:$0xff] %v923
                %v925 = vld [vmem:[%s205 + $0x1538] sm:$0xff]
                %926 = vst [vmem:[%s206 + $0xb38] sm:$0xff] %v925
                %v927 = vld [vmem:[%s205 + $0x1540] sm:$0xff]
                %928 = vst [vmem:[%s206 + $0xb40] sm:$0xff] %v927
                %v929 = vld [vmem:[%s205 + $0x1548] sm:$0xff]
                %930 = vst [vmem:[%s206 + $0xb48] sm:$0xff] %v929
                %v931 = vld [vmem:[%s205 + $0x1550] sm:$0xff]
                %932 = vst [vmem:[%s206 + $0xb50] sm:$0xff] %v931
                %v933 = vld [vmem:[%s205 + $0x1558] sm:$0xff]
                %934 = vst [vmem:[%s206 + $0xb58] sm:$0xff] %v933
                %v935 = vld [vmem:[%s205 + $0x1560] sm:$0xff]
                %936 = vst [vmem:[%s206 + $0xb60] sm:$0xff] %v935
                %v937 = vld [vmem:[%s205 + $0x1568] sm:$0xff]
                %938 = vst [vmem:[%s206 + $0xb68] sm:$0xff] %v937
                %v939 = vld [vmem:[%s205 + $0x1570] sm:$0xff]
                %940 = vst [vmem:[%s206 + $0xb70] sm:$0xff] %v939
                %v941 = vld [vmem:[%s205 + $0x1578] sm:$0xff]
                %942 = vst [vmem:[%s206 + $0xb78] sm:$0xff] %v941
                %v943 = vld [vmem:[%s205 + $0x1580] sm:$0xff]
                %944 = vst [vmem:[%s206 + $0xb80] sm:$0xff] %v943
                %v945 = vld [vmem:[%s205 + $0x1588] sm:$0xff]
                %946 = vst [vmem:[%s206 + $0xb88] sm:$0xff] %v945
                %v947 = vld [vmem:[%s205 + $0x1590] sm:$0xff]
                %948 = vst [vmem:[%s206 + $0xb90] sm:$0xff] %v947
                %v949 = vld [vmem:[%s205 + $0x1598] sm:$0xff]
                %950 = vst [vmem:[%s206 + $0xb98] sm:$0xff] %v949
                %v951 = vld [vmem:[%s205 + $0x15a0] sm:$0xff]
                %952 = vst [vmem:[%s206 + $0xba0] sm:$0xff] %v951
                %v953 = vld [vmem:[%s205 + $0x15a8] sm:$0xff]
                %954 = vst [vmem:[%s206 + $0xba8] sm:$0xff] %v953
                %v955 = vld [vmem:[%s205 + $0x15b0] sm:$0xff]
                %956 = vst [vmem:[%s206 + $0xbb0] sm:$0xff] %v955
                %v957 = vld [vmem:[%s205 + $0x15b8] sm:$0xff]
                %958 = vst [vmem:[%s206 + $0xbb8] sm:$0xff] %v957
                %v959 = vld [vmem:[%s205 + $0x15c0] sm:$0xff]
                %960 = vst [vmem:[%s206 + $0xbc0] sm:$0xff] %v959
                %v961 = vld [vmem:[%s205 + $0x15c8] sm:$0xff]
                %962 = vst [vmem:[%s206 + $0xbc8] sm:$0xff] %v961
                %v963 = vld [vmem:[%s205 + $0x15d0] sm:$0xff]
                %964 = vst [vmem:[%s206 + $0xbd0] sm:$0xff] %v963
                %v965 = vld [vmem:[%s205 + $0x15d8] sm:$0xff]
                %966 = vst [vmem:[%s206 + $0xbd8] sm:$0xff] %v965
                %v967 = vld [vmem:[%s205 + $0x15e0] sm:$0xff]
                %968 = vst [vmem:[%s206 + $0xbe0] sm:$0xff] %v967
                %v969 = vld [vmem:[%s205 + $0x15e8] sm:$0xff]
                %970 = vst [vmem:[%s206 + $0xbe8] sm:$0xff] %v969
                %v971 = vld [vmem:[%s205 + $0x15f0] sm:$0xff]
                %972 = vst [vmem:[%s206 + $0xbf0] sm:$0xff] %v971
                %v973 = vld [vmem:[%s205 + $0x15f8] sm:$0xff]
                %974 = vst [vmem:[%s206 + $0xbf8] sm:$0xff] %v973
                %v975 = vld [vmem:[%s205 + $0x1800] sm:$0xff]
                %976 = vst [vmem:[%s206 + $0xc00] sm:$0xff] %v975
                %v977 = vld [vmem:[%s205 + $0x1808] sm:$0xff]
                %978 = vst [vmem:[%s206 + $0xc08] sm:$0xff] %v977
                %v979 = vld [vmem:[%s205 + $0x1810] sm:$0xff]
                %980 = vst [vmem:[%s206 + $0xc10] sm:$0xff] %v979
                %v981 = vld [vmem:[%s205 + $0x1818] sm:$0xff]
                %982 = vst [vmem:[%s206 + $0xc18] sm:$0xff] %v981
                %v983 = vld [vmem:[%s205 + $0x1820] sm:$0xff]
                %984 = vst [vmem:[%s206 + $0xc20] sm:$0xff] %v983
                %v985 = vld [vmem:[%s205 + $0x1828] sm:$0xff]
                %986 = vst [vmem:[%s206 + $0xc28] sm:$0xff] %v985
                %v987 = vld [vmem:[%s205 + $0x1830] sm:$0xff]
                %988 = vst [vmem:[%s206 + $0xc30] sm:$0xff] %v987
                %v989 = vld [vmem:[%s205 + $0x1838] sm:$0xff]
                %990 = vst [vmem:[%s206 + $0xc38] sm:$0xff] %v989
                %v991 = vld [vmem:[%s205 + $0x1840] sm:$0xff]
                %992 = vst [vmem:[%s206 + $0xc40] sm:$0xff] %v991
                %v993 = vld [vmem:[%s205 + $0x1848] sm:$0xff]
                %994 = vst [vmem:[%s206 + $0xc48] sm:$0xff] %v993
                %v995 = vld [vmem:[%s205 + $0x1850] sm:$0xff]
                %996 = vst [vmem:[%s206 + $0xc50] sm:$0xff] %v995
                %v997 = vld [vmem:[%s205 + $0x1858] sm:$0xff]
                %998 = vst [vmem:[%s206 + $0xc58] sm:$0xff] %v997
                %v999 = vld [vmem:[%s205 + $0x1860] sm:$0xff]
                %1000 = vst [vmem:[%s206 + $0xc60] sm:$0xff] %v999
                %v1001 = vld [vmem:[%s205 + $0x1868] sm:$0xff]
                %1002 = vst [vmem:[%s206 + $0xc68] sm:$0xff] %v1001
                %v1003 = vld [vmem:[%s205 + $0x1870] sm:$0xff]
                %1004 = vst [vmem:[%s206 + $0xc70] sm:$0xff] %v1003
                %v1005 = vld [vmem:[%s205 + $0x1878] sm:$0xff]
                %1006 = vst [vmem:[%s206 + $0xc78] sm:$0xff] %v1005
                %v1007 = vld [vmem:[%s205 + $0x1880] sm:$0xff]
                %1008 = vst [vmem:[%s206 + $0xc80] sm:$0xff] %v1007
                %v1009 = vld [vmem:[%s205 + $0x1888] sm:$0xff]
                %1010 = vst [vmem:[%s206 + $0xc88] sm:$0xff] %v1009
                %v1011 = vld [vmem:[%s205 + $0x1890] sm:$0xff]
                %1012 = vst [vmem:[%s206 + $0xc90] sm:$0xff] %v1011
                %v1013 = vld [vmem:[%s205 + $0x1898] sm:$0xff]
                %1014 = vst [vmem:[%s206 + $0xc98] sm:$0xff] %v1013
                %v1015 = vld [vmem:[%s205 + $0x18a0] sm:$0xff]
                %1016 = vst [vmem:[%s206 + $0xca0] sm:$0xff] %v1015
                %v1017 = vld [vmem:[%s205 + $0x18a8] sm:$0xff]
                %1018 = vst [vmem:[%s206 + $0xca8] sm:$0xff] %v1017
                %v1019 = vld [vmem:[%s205 + $0x18b0] sm:$0xff]
                %1020 = vst [vmem:[%s206 + $0xcb0] sm:$0xff] %v1019
                %v1021 = vld [vmem:[%s205 + $0x18b8] sm:$0xff]
                %1022 = vst [vmem:[%s206 + $0xcb8] sm:$0xff] %v1021
                %v1023 = vld [vmem:[%s205 + $0x18c0] sm:$0xff]
                %1024 = vst [vmem:[%s206 + $0xcc0] sm:$0xff] %v1023
                %v1025 = vld [vmem:[%s205 + $0x18c8] sm:$0xff]
                %1026 = vst [vmem:[%s206 + $0xcc8] sm:$0xff] %v1025
                %v1027 = vld [vmem:[%s205 + $0x18d0] sm:$0xff]
                %1028 = vst [vmem:[%s206 + $0xcd0] sm:$0xff] %v1027
                %v1029 = vld [vmem:[%s205 + $0x18d8] sm:$0xff]
                %1030 = vst [vmem:[%s206 + $0xcd8] sm:$0xff] %v1029
                %v1031 = vld [vmem:[%s205 + $0x18e0] sm:$0xff]
                %1032 = vst [vmem:[%s206 + $0xce0] sm:$0xff] %v1031
                %v1033 = vld [vmem:[%s205 + $0x18e8] sm:$0xff]
                %1034 = vst [vmem:[%s206 + $0xce8] sm:$0xff] %v1033
                %v1035 = vld [vmem:[%s205 + $0x18f0] sm:$0xff]
                %1036 = vst [vmem:[%s206 + $0xcf0] sm:$0xff] %v1035
                %v1037 = vld [vmem:[%s205 + $0x18f8] sm:$0xff]
                %1038 = vst [vmem:[%s206 + $0xcf8] sm:$0xff] %v1037
                %v1039 = vld [vmem:[%s205 + $0x1900] sm:$0xff]
                %1040 = vst [vmem:[%s206 + $0xd00] sm:$0xff] %v1039
                %v1041 = vld [vmem:[%s205 + $0x1908] sm:$0xff]
                %1042 = vst [vmem:[%s206 + $0xd08] sm:$0xff] %v1041
                %v1043 = vld [vmem:[%s205 + $0x1910] sm:$0xff]
                %1044 = vst [vmem:[%s206 + $0xd10] sm:$0xff] %v1043
                %v1045 = vld [vmem:[%s205 + $0x1918] sm:$0xff]
                %1046 = vst [vmem:[%s206 + $0xd18] sm:$0xff] %v1045
                %v1047 = vld [vmem:[%s205 + $0x1920] sm:$0xff]
                %1048 = vst [vmem:[%s206 + $0xd20] sm:$0xff] %v1047
                %v1049 = vld [vmem:[%s205 + $0x1928] sm:$0xff]
                %1050 = vst [vmem:[%s206 + $0xd28] sm:$0xff] %v1049
                %v1051 = vld [vmem:[%s205 + $0x1930] sm:$0xff]
                %1052 = vst [vmem:[%s206 + $0xd30] sm:$0xff] %v1051
                %v1053 = vld [vmem:[%s205 + $0x1938] sm:$0xff]
                %1054 = vst [vmem:[%s206 + $0xd38] sm:$0xff] %v1053
                %v1055 = vld [vmem:[%s205 + $0x1940] sm:$0xff]
                %1056 = vst [vmem:[%s206 + $0xd40] sm:$0xff] %v1055
                %v1057 = vld [vmem:[%s205 + $0x1948] sm:$0xff]
                %1058 = vst [vmem:[%s206 + $0xd48] sm:$0xff] %v1057
                %v1059 = vld [vmem:[%s205 + $0x1950] sm:$0xff]
                %1060 = vst [vmem:[%s206 + $0xd50] sm:$0xff] %v1059
                %v1061 = vld [vmem:[%s205 + $0x1958] sm:$0xff]
                %1062 = vst [vmem:[%s206 + $0xd58] sm:$0xff] %v1061
                %v1063 = vld [vmem:[%s205 + $0x1960] sm:$0xff]
                %1064 = vst [vmem:[%s206 + $0xd60] sm:$0xff] %v1063
                %v1065 = vld [vmem:[%s205 + $0x1968] sm:$0xff]
                %1066 = vst [vmem:[%s206 + $0xd68] sm:$0xff] %v1065
                %v1067 = vld [vmem:[%s205 + $0x1970] sm:$0xff]
                %1068 = vst [vmem:[%s206 + $0xd70] sm:$0xff] %v1067
                %v1069 = vld [vmem:[%s205 + $0x1978] sm:$0xff]
                %1070 = vst [vmem:[%s206 + $0xd78] sm:$0xff] %v1069
                %v1071 = vld [vmem:[%s205 + $0x1980] sm:$0xff]
                %1072 = vst [vmem:[%s206 + $0xd80] sm:$0xff] %v1071
                %v1073 = vld [vmem:[%s205 + $0x1988] sm:$0xff]
                %1074 = vst [vmem:[%s206 + $0xd88] sm:$0xff] %v1073
                %v1075 = vld [vmem:[%s205 + $0x1990] sm:$0xff]
                %1076 = vst [vmem:[%s206 + $0xd90] sm:$0xff] %v1075
                %v1077 = vld [vmem:[%s205 + $0x1998] sm:$0xff]
                %1078 = vst [vmem:[%s206 + $0xd98] sm:$0xff] %v1077
                %v1079 = vld [vmem:[%s205 + $0x19a0] sm:$0xff]
                %1080 = vst [vmem:[%s206 + $0xda0] sm:$0xff] %v1079
                %v1081 = vld [vmem:[%s205 + $0x19a8] sm:$0xff]
                %1082 = vst [vmem:[%s206 + $0xda8] sm:$0xff] %v1081
                %v1083 = vld [vmem:[%s205 + $0x19b0] sm:$0xff]
                %1084 = vst [vmem:[%s206 + $0xdb0] sm:$0xff] %v1083
                %v1085 = vld [vmem:[%s205 + $0x19b8] sm:$0xff]
                %1086 = vst [vmem:[%s206 + $0xdb8] sm:$0xff] %v1085
                %v1087 = vld [vmem:[%s205 + $0x19c0] sm:$0xff]
                %1088 = vst [vmem:[%s206 + $0xdc0] sm:$0xff] %v1087
                %v1089 = vld [vmem:[%s205 + $0x19c8] sm:$0xff]
                %1090 = vst [vmem:[%s206 + $0xdc8] sm:$0xff] %v1089
                %v1091 = vld [vmem:[%s205 + $0x19d0] sm:$0xff]
                %1092 = vst [vmem:[%s206 + $0xdd0] sm:$0xff] %v1091
                %v1093 = vld [vmem:[%s205 + $0x19d8] sm:$0xff]
                %1094 = vst [vmem:[%s206 + $0xdd8] sm:$0xff] %v1093
                %v1095 = vld [vmem:[%s205 + $0x19e0] sm:$0xff]
                %1096 = vst [vmem:[%s206 + $0xde0] sm:$0xff] %v1095
                %v1097 = vld [vmem:[%s205 + $0x19e8] sm:$0xff]
                %1098 = vst [vmem:[%s206 + $0xde8] sm:$0xff] %v1097
                %v1099 = vld [vmem:[%s205 + $0x19f0] sm:$0xff]
                %1100 = vst [vmem:[%s206 + $0xdf0] sm:$0xff] %v1099
                %v1101 = vld [vmem:[%s205 + $0x19f8] sm:$0xff]
                %1102 = vst [vmem:[%s206 + $0xdf8] sm:$0xff] %v1101
                %v1103 = vld [vmem:[%s205 + $0x1c00] sm:$0xff]
                %1104 = vst [vmem:[%s206 + $0xe00] sm:$0xff] %v1103
                %v1105 = vld [vmem:[%s205 + $0x1c08] sm:$0xff]
                %1106 = vst [vmem:[%s206 + $0xe08] sm:$0xff] %v1105
                %v1107 = vld [vmem:[%s205 + $0x1c10] sm:$0xff]
                %1108 = vst [vmem:[%s206 + $0xe10] sm:$0xff] %v1107
                %v1109 = vld [vmem:[%s205 + $0x1c18] sm:$0xff]
                %1110 = vst [vmem:[%s206 + $0xe18] sm:$0xff] %v1109
                %v1111 = vld [vmem:[%s205 + $0x1c20] sm:$0xff]
                %1112 = vst [vmem:[%s206 + $0xe20] sm:$0xff] %v1111
                %v1113 = vld [vmem:[%s205 + $0x1c28] sm:$0xff]
                %1114 = vst [vmem:[%s206 + $0xe28] sm:$0xff] %v1113
                %v1115 = vld [vmem:[%s205 + $0x1c30] sm:$0xff]
                %1116 = vst [vmem:[%s206 + $0xe30] sm:$0xff] %v1115
                %v1117 = vld [vmem:[%s205 + $0x1c38] sm:$0xff]
                %1118 = vst [vmem:[%s206 + $0xe38] sm:$0xff] %v1117
                %v1119 = vld [vmem:[%s205 + $0x1c40] sm:$0xff]
                %1120 = vst [vmem:[%s206 + $0xe40] sm:$0xff] %v1119
                %v1121 = vld [vmem:[%s205 + $0x1c48] sm:$0xff]
                %1122 = vst [vmem:[%s206 + $0xe48] sm:$0xff] %v1121
                %v1123 = vld [vmem:[%s205 + $0x1c50] sm:$0xff]
                %1124 = vst [vmem:[%s206 + $0xe50] sm:$0xff] %v1123
                %v1125 = vld [vmem:[%s205 + $0x1c58] sm:$0xff]
                %1126 = vst [vmem:[%s206 + $0xe58] sm:$0xff] %v1125
                %v1127 = vld [vmem:[%s205 + $0x1c60] sm:$0xff]
                %1128 = vst [vmem:[%s206 + $0xe60] sm:$0xff] %v1127
                %v1129 = vld [vmem:[%s205 + $0x1c68] sm:$0xff]
                %1130 = vst [vmem:[%s206 + $0xe68] sm:$0xff] %v1129
                %v1131 = vld [vmem:[%s205 + $0x1c70] sm:$0xff]
                %1132 = vst [vmem:[%s206 + $0xe70] sm:$0xff] %v1131
                %v1133 = vld [vmem:[%s205 + $0x1c78] sm:$0xff]
                %1134 = vst [vmem:[%s206 + $0xe78] sm:$0xff] %v1133
                %v1135 = vld [vmem:[%s205 + $0x1c80] sm:$0xff]
                %1136 = vst [vmem:[%s206 + $0xe80] sm:$0xff] %v1135
                %v1137 = vld [vmem:[%s205 + $0x1c88] sm:$0xff]
                %1138 = vst [vmem:[%s206 + $0xe88] sm:$0xff] %v1137
                %v1139 = vld [vmem:[%s205 + $0x1c90] sm:$0xff]
                %1140 = vst [vmem:[%s206 + $0xe90] sm:$0xff] %v1139
                %v1141 = vld [vmem:[%s205 + $0x1c98] sm:$0xff]
                %1142 = vst [vmem:[%s206 + $0xe98] sm:$0xff] %v1141
                %v1143 = vld [vmem:[%s205 + $0x1ca0] sm:$0xff]
                %1144 = vst [vmem:[%s206 + $0xea0] sm:$0xff] %v1143
                %v1145 = vld [vmem:[%s205 + $0x1ca8] sm:$0xff]
                %1146 = vst [vmem:[%s206 + $0xea8] sm:$0xff] %v1145
                %v1147 = vld [vmem:[%s205 + $0x1cb0] sm:$0xff]
                %1148 = vst [vmem:[%s206 + $0xeb0] sm:$0xff] %v1147
                %v1149 = vld [vmem:[%s205 + $0x1cb8] sm:$0xff]
                %1150 = vst [vmem:[%s206 + $0xeb8] sm:$0xff] %v1149
                %v1151 = vld [vmem:[%s205 + $0x1cc0] sm:$0xff]
                %1152 = vst [vmem:[%s206 + $0xec0] sm:$0xff] %v1151
                %v1153 = vld [vmem:[%s205 + $0x1cc8] sm:$0xff]
                %1154 = vst [vmem:[%s206 + $0xec8] sm:$0xff] %v1153
                %v1155 = vld [vmem:[%s205 + $0x1cd0] sm:$0xff]
                %1156 = vst [vmem:[%s206 + $0xed0] sm:$0xff] %v1155
                %v1157 = vld [vmem:[%s205 + $0x1cd8] sm:$0xff]
                %1158 = vst [vmem:[%s206 + $0xed8] sm:$0xff] %v1157
                %v1159 = vld [vmem:[%s205 + $0x1ce0] sm:$0xff]
                %1160 = vst [vmem:[%s206 + $0xee0] sm:$0xff] %v1159
                %v1161 = vld [vmem:[%s205 + $0x1ce8] sm:$0xff]
                %1162 = vst [vmem:[%s206 + $0xee8] sm:$0xff] %v1161
                %v1163 = vld [vmem:[%s205 + $0x1cf0] sm:$0xff]
                %1164 = vst [vmem:[%s206 + $0xef0] sm:$0xff] %v1163
                %v1165 = vld [vmem:[%s205 + $0x1cf8] sm:$0xff]
                %1166 = vst [vmem:[%s206 + $0xef8] sm:$0xff] %v1165
                %v1167 = vld [vmem:[%s205 + $0x1d00] sm:$0xff]
                %1168 = vst [vmem:[%s206 + $0xf00] sm:$0xff] %v1167
                %v1169 = vld [vmem:[%s205 + $0x1d08] sm:$0xff]
                %1170 = vst [vmem:[%s206 + $0xf08] sm:$0xff] %v1169
                %v1171 = vld [vmem:[%s205 + $0x1d10] sm:$0xff]
                %1172 = vst [vmem:[%s206 + $0xf10] sm:$0xff] %v1171
                %v1173 = vld [vmem:[%s205 + $0x1d18] sm:$0xff]
                %1174 = vst [vmem:[%s206 + $0xf18] sm:$0xff] %v1173
                %v1175 = vld [vmem:[%s205 + $0x1d20] sm:$0xff]
                %1176 = vst [vmem:[%s206 + $0xf20] sm:$0xff] %v1175
                %v1177 = vld [vmem:[%s205 + $0x1d28] sm:$0xff]
                %1178 = vst [vmem:[%s206 + $0xf28] sm:$0xff] %v1177
                %v1179 = vld [vmem:[%s205 + $0x1d30] sm:$0xff]
                %1180 = vst [vmem:[%s206 + $0xf30] sm:$0xff] %v1179
                %v1181 = vld [vmem:[%s205 + $0x1d38] sm:$0xff]
                %1182 = vst [vmem:[%s206 + $0xf38] sm:$0xff] %v1181
                %v1183 = vld [vmem:[%s205 + $0x1d40] sm:$0xff]
                %1184 = vst [vmem:[%s206 + $0xf40] sm:$0xff] %v1183
                %v1185 = vld [vmem:[%s205 + $0x1d48] sm:$0xff]
                %1186 = vst [vmem:[%s206 + $0xf48] sm:$0xff] %v1185
                %v1187 = vld [vmem:[%s205 + $0x1d50] sm:$0xff]
                %1188 = vst [vmem:[%s206 + $0xf50] sm:$0xff] %v1187
                %v1189 = vld [vmem:[%s205 + $0x1d58] sm:$0xff]
                %1190 = vst [vmem:[%s206 + $0xf58] sm:$0xff] %v1189
                %v1191 = vld [vmem:[%s205 + $0x1d60] sm:$0xff]
                %1192 = vst [vmem:[%s206 + $0xf60] sm:$0xff] %v1191
                %v1193 = vld [vmem:[%s205 + $0x1d68] sm:$0xff]
                %1194 = vst [vmem:[%s206 + $0xf68] sm:$0xff] %v1193
                %v1195 = vld [vmem:[%s205 + $0x1d70] sm:$0xff]
                %1196 = vst [vmem:[%s206 + $0xf70] sm:$0xff] %v1195
                %v1197 = vld [vmem:[%s205 + $0x1d78] sm:$0xff]
                %1198 = vst [vmem:[%s206 + $0xf78] sm:$0xff] %v1197
                %v1199 = vld [vmem:[%s205 + $0x1d80] sm:$0xff]
                %1200 = vst [vmem:[%s206 + $0xf80] sm:$0xff] %v1199
                %v1201 = vld [vmem:[%s205 + $0x1d88] sm:$0xff]
                %1202 = vst [vmem:[%s206 + $0xf88] sm:$0xff] %v1201
                %v1203 = vld [vmem:[%s205 + $0x1d90] sm:$0xff]
                %1204 = vst [vmem:[%s206 + $0xf90] sm:$0xff] %v1203
                %v1205 = vld [vmem:[%s205 + $0x1d98] sm:$0xff]
                %1206 = vst [vmem:[%s206 + $0xf98] sm:$0xff] %v1205
                %v1207 = vld [vmem:[%s205 + $0x1da0] sm:$0xff]
                %1208 = vst [vmem:[%s206 + $0xfa0] sm:$0xff] %v1207
                %v1209 = vld [vmem:[%s205 + $0x1da8] sm:$0xff]
                %1210 = vst [vmem:[%s206 + $0xfa8] sm:$0xff] %v1209
                %v1211 = vld [vmem:[%s205 + $0x1db0] sm:$0xff]
                %1212 = vst [vmem:[%s206 + $0xfb0] sm:$0xff] %v1211
                %v1213 = vld [vmem:[%s205 + $0x1db8] sm:$0xff]
                %1214 = vst [vmem:[%s206 + $0xfb8] sm:$0xff] %v1213
                %v1215 = vld [vmem:[%s205 + $0x1dc0] sm:$0xff]
                %1216 = vst [vmem:[%s206 + $0xfc0] sm:$0xff] %v1215
                %v1217 = vld [vmem:[%s205 + $0x1dc8] sm:$0xff]
                %1218 = vst [vmem:[%s206 + $0xfc8] sm:$0xff] %v1217
                %v1219 = vld [vmem:[%s205 + $0x1dd0] sm:$0xff]
                %1220 = vst [vmem:[%s206 + $0xfd0] sm:$0xff] %v1219
                %v1221 = vld [vmem:[%s205 + $0x1dd8] sm:$0xff]
                %1222 = vst [vmem:[%s206 + $0xfd8] sm:$0xff] %v1221
                %v1223 = vld [vmem:[%s205 + $0x1de0] sm:$0xff]
                %1224 = vst [vmem:[%s206 + $0xfe0] sm:$0xff] %v1223
                %v1225 = vld [vmem:[%s205 + $0x1de8] sm:$0xff]
                %1226 = vst [vmem:[%s206 + $0xfe8] sm:$0xff] %v1225
                %v1227 = vld [vmem:[%s205 + $0x1df0] sm:$0xff]
                %1228 = vst [vmem:[%s206 + $0xff0] sm:$0xff] %v1227
                %v1229 = vld [vmem:[%s205 + $0x1df8] sm:$0xff]
                %1230 = vst [vmem:[%s206 + $0xff8] sm:$0xff] %v1229
                %v1231 = vld [vmem:[%s205 + $0x2000] sm:$0xff]
                %1232 = vst [vmem:[%s206 + $0x1000] sm:$0xff] %v1231
                %v1233 = vld [vmem:[%s205 + $0x2008] sm:$0xff]
                %1234 = vst [vmem:[%s206 + $0x1008] sm:$0xff] %v1233
                %v1235 = vld [vmem:[%s205 + $0x2010] sm:$0xff]
                %1236 = vst [vmem:[%s206 + $0x1010] sm:$0xff] %v1235
                %v1237 = vld [vmem:[%s205 + $0x2018] sm:$0xff]
                %1238 = vst [vmem:[%s206 + $0x1018] sm:$0xff] %v1237
                %v1239 = vld [vmem:[%s205 + $0x2020] sm:$0xff]
                %1240 = vst [vmem:[%s206 + $0x1020] sm:$0xff] %v1239
                %v1241 = vld [vmem:[%s205 + $0x2028] sm:$0xff]
                %1242 = vst [vmem:[%s206 + $0x1028] sm:$0xff] %v1241
                %v1243 = vld [vmem:[%s205 + $0x2030] sm:$0xff]
                %1244 = vst [vmem:[%s206 + $0x1030] sm:$0xff] %v1243
                %v1245 = vld [vmem:[%s205 + $0x2038] sm:$0xff]
                %1246 = vst [vmem:[%s206 + $0x1038] sm:$0xff] %v1245
                %v1247 = vld [vmem:[%s205 + $0x2040] sm:$0xff]
                %1248 = vst [vmem:[%s206 + $0x1040] sm:$0xff] %v1247
                %v1249 = vld [vmem:[%s205 + $0x2048] sm:$0xff]
                %1250 = vst [vmem:[%s206 + $0x1048] sm:$0xff] %v1249
                %v1251 = vld [vmem:[%s205 + $0x2050] sm:$0xff]
                %1252 = vst [vmem:[%s206 + $0x1050] sm:$0xff] %v1251
                %v1253 = vld [vmem:[%s205 + $0x2058] sm:$0xff]
                %1254 = vst [vmem:[%s206 + $0x1058] sm:$0xff] %v1253
                %v1255 = vld [vmem:[%s205 + $0x2060] sm:$0xff]
                %1256 = vst [vmem:[%s206 + $0x1060] sm:$0xff] %v1255
                %v1257 = vld [vmem:[%s205 + $0x2068] sm:$0xff]
                %1258 = vst [vmem:[%s206 + $0x1068] sm:$0xff] %v1257
                %v1259 = vld [vmem:[%s205 + $0x2070] sm:$0xff]
                %1260 = vst [vmem:[%s206 + $0x1070] sm:$0xff] %v1259
                %v1261 = vld [vmem:[%s205 + $0x2078] sm:$0xff]
                %1262 = vst [vmem:[%s206 + $0x1078] sm:$0xff] %v1261
                %v1263 = vld [vmem:[%s205 + $0x2080] sm:$0xff]
                %1264 = vst [vmem:[%s206 + $0x1080] sm:$0xff] %v1263
                %v1265 = vld [vmem:[%s205 + $0x2088] sm:$0xff]
                %1266 = vst [vmem:[%s206 + $0x1088] sm:$0xff] %v1265
                %v1267 = vld [vmem:[%s205 + $0x2090] sm:$0xff]
                %1268 = vst [vmem:[%s206 + $0x1090] sm:$0xff] %v1267
                %v1269 = vld [vmem:[%s205 + $0x2098] sm:$0xff]
                %1270 = vst [vmem:[%s206 + $0x1098] sm:$0xff] %v1269
                %v1271 = vld [vmem:[%s205 + $0x20a0] sm:$0xff]
                %1272 = vst [vmem:[%s206 + $0x10a0] sm:$0xff] %v1271
                %v1273 = vld [vmem:[%s205 + $0x20a8] sm:$0xff]
                %1274 = vst [vmem:[%s206 + $0x10a8] sm:$0xff] %v1273
                %v1275 = vld [vmem:[%s205 + $0x20b0] sm:$0xff]
                %1276 = vst [vmem:[%s206 + $0x10b0] sm:$0xff] %v1275
                %v1277 = vld [vmem:[%s205 + $0x20b8] sm:$0xff]
                %1278 = vst [vmem:[%s206 + $0x10b8] sm:$0xff] %v1277
                %v1279 = vld [vmem:[%s205 + $0x20c0] sm:$0xff]
                %1280 = vst [vmem:[%s206 + $0x10c0] sm:$0xff] %v1279
                %v1281 = vld [vmem:[%s205 + $0x20c8] sm:$0xff]
                %1282 = vst [vmem:[%s206 + $0x10c8] sm:$0xff] %v1281
                %v1283 = vld [vmem:[%s205 + $0x20d0] sm:$0xff]
                %1284 = vst [vmem:[%s206 + $0x10d0] sm:$0xff] %v1283
                %v1285 = vld [vmem:[%s205 + $0x20d8] sm:$0xff]
                %1286 = vst [vmem:[%s206 + $0x10d8] sm:$0xff] %v1285
                %v1287 = vld [vmem:[%s205 + $0x20e0] sm:$0xff]
                %1288 = vst [vmem:[%s206 + $0x10e0] sm:$0xff] %v1287
                %v1289 = vld [vmem:[%s205 + $0x20e8] sm:$0xff]
                %1290 = vst [vmem:[%s206 + $0x10e8] sm:$0xff] %v1289
                %v1291 = vld [vmem:[%s205 + $0x20f0] sm:$0xff]
                %1292 = vst [vmem:[%s206 + $0x10f0] sm:$0xff] %v1291
                %v1293 = vld [vmem:[%s205 + $0x20f8] sm:$0xff]
                %1294 = vst [vmem:[%s206 + $0x10f8] sm:$0xff] %v1293
                %v1295 = vld [vmem:[%s205 + $0x2100] sm:$0xff]
                %1296 = vst [vmem:[%s206 + $0x1100] sm:$0xff] %v1295
                %v1297 = vld [vmem:[%s205 + $0x2108] sm:$0xff]
                %1298 = vst [vmem:[%s206 + $0x1108] sm:$0xff] %v1297
                %v1299 = vld [vmem:[%s205 + $0x2110] sm:$0xff]
                %1300 = vst [vmem:[%s206 + $0x1110] sm:$0xff] %v1299
                %v1301 = vld [vmem:[%s205 + $0x2118] sm:$0xff]
                %1302 = vst [vmem:[%s206 + $0x1118] sm:$0xff] %v1301
                %v1303 = vld [vmem:[%s205 + $0x2120] sm:$0xff]
                %1304 = vst [vmem:[%s206 + $0x1120] sm:$0xff] %v1303
                %v1305 = vld [vmem:[%s205 + $0x2128] sm:$0xff]
                %1306 = vst [vmem:[%s206 + $0x1128] sm:$0xff] %v1305
                %v1307 = vld [vmem:[%s205 + $0x2130] sm:$0xff]
                %1308 = vst [vmem:[%s206 + $0x1130] sm:$0xff] %v1307
                %v1309 = vld [vmem:[%s205 + $0x2138] sm:$0xff]
                %1310 = vst [vmem:[%s206 + $0x1138] sm:$0xff] %v1309
                %v1311 = vld [vmem:[%s205 + $0x2140] sm:$0xff]
                %1312 = vst [vmem:[%s206 + $0x1140] sm:$0xff] %v1311
                %v1313 = vld [vmem:[%s205 + $0x2148] sm:$0xff]
                %1314 = vst [vmem:[%s206 + $0x1148] sm:$0xff] %v1313
                %v1315 = vld [vmem:[%s205 + $0x2150] sm:$0xff]
                %1316 = vst [vmem:[%s206 + $0x1150] sm:$0xff] %v1315
                %v1317 = vld [vmem:[%s205 + $0x2158] sm:$0xff]
                %1318 = vst [vmem:[%s206 + $0x1158] sm:$0xff] %v1317
                %v1319 = vld [vmem:[%s205 + $0x2160] sm:$0xff]
                %1320 = vst [vmem:[%s206 + $0x1160] sm:$0xff] %v1319
                %v1321 = vld [vmem:[%s205 + $0x2168] sm:$0xff]
                %1322 = vst [vmem:[%s206 + $0x1168] sm:$0xff] %v1321
                %v1323 = vld [vmem:[%s205 + $0x2170] sm:$0xff]
                %1324 = vst [vmem:[%s206 + $0x1170] sm:$0xff] %v1323
                %v1325 = vld [vmem:[%s205 + $0x2178] sm:$0xff]
                %1326 = vst [vmem:[%s206 + $0x1178] sm:$0xff] %v1325
                %v1327 = vld [vmem:[%s205 + $0x2180] sm:$0xff]
                %1328 = vst [vmem:[%s206 + $0x1180] sm:$0xff] %v1327
                %v1329 = vld [vmem:[%s205 + $0x2188] sm:$0xff]
                %1330 = vst [vmem:[%s206 + $0x1188] sm:$0xff] %v1329
                %v1331 = vld [vmem:[%s205 + $0x2190] sm:$0xff]
                %1332 = vst [vmem:[%s206 + $0x1190] sm:$0xff] %v1331
                %v1333 = vld [vmem:[%s205 + $0x2198] sm:$0xff]
                %1334 = vst [vmem:[%s206 + $0x1198] sm:$0xff] %v1333
                %v1335 = vld [vmem:[%s205 + $0x21a0] sm:$0xff]
                %1336 = vst [vmem:[%s206 + $0x11a0] sm:$0xff] %v1335
                %v1337 = vld [vmem:[%s205 + $0x21a8] sm:$0xff]
                %1338 = vst [vmem:[%s206 + $0x11a8] sm:$0xff] %v1337
                %v1339 = vld [vmem:[%s205 + $0x21b0] sm:$0xff]
                %1340 = vst [vmem:[%s206 + $0x11b0] sm:$0xff] %v1339
                %v1341 = vld [vmem:[%s205 + $0x21b8] sm:$0xff]
                %1342 = vst [vmem:[%s206 + $0x11b8] sm:$0xff] %v1341
                %v1343 = vld [vmem:[%s205 + $0x21c0] sm:$0xff]
                %1344 = vst [vmem:[%s206 + $0x11c0] sm:$0xff] %v1343
                %v1345 = vld [vmem:[%s205 + $0x21c8] sm:$0xff]
                %1346 = vst [vmem:[%s206 + $0x11c8] sm:$0xff] %v1345
                %v1347 = vld [vmem:[%s205 + $0x21d0] sm:$0xff]
                %1348 = vst [vmem:[%s206 + $0x11d0] sm:$0xff] %v1347
                %v1349 = vld [vmem:[%s205 + $0x21d8] sm:$0xff]
                %1350 = vst [vmem:[%s206 + $0x11d8] sm:$0xff] %v1349
                %v1351 = vld [vmem:[%s205 + $0x21e0] sm:$0xff]
                %1352 = vst [vmem:[%s206 + $0x11e0] sm:$0xff] %v1351
                %v1353 = vld [vmem:[%s205 + $0x21e8] sm:$0xff]
                %1354 = vst [vmem:[%s206 + $0x11e8] sm:$0xff] %v1353
                %v1355 = vld [vmem:[%s205 + $0x21f0] sm:$0xff]
                %1356 = vst [vmem:[%s206 + $0x11f0] sm:$0xff] %v1355
                %v1357 = vld [vmem:[%s205 + $0x21f8] sm:$0xff]
                %1358 = vst [vmem:[%s206 + $0x11f8] sm:$0xff] %v1357
                %v1359 = vld [vmem:[%s205 + $0x2400] sm:$0xff]
                %1360 = vst [vmem:[%s206 + $0x1200] sm:$0xff] %v1359
                %v1361 = vld [vmem:[%s205 + $0x2408] sm:$0xff]
                %1362 = vst [vmem:[%s206 + $0x1208] sm:$0xff] %v1361
                %v1363 = vld [vmem:[%s205 + $0x2410] sm:$0xff]
                %1364 = vst [vmem:[%s206 + $0x1210] sm:$0xff] %v1363
                %v1365 = vld [vmem:[%s205 + $0x2418] sm:$0xff]
                %1366 = vst [vmem:[%s206 + $0x1218] sm:$0xff] %v1365
                %v1367 = vld [vmem:[%s205 + $0x2420] sm:$0xff]
                %1368 = vst [vmem:[%s206 + $0x1220] sm:$0xff] %v1367
                %v1369 = vld [vmem:[%s205 + $0x2428] sm:$0xff]
                %1370 = vst [vmem:[%s206 + $0x1228] sm:$0xff] %v1369
                %v1371 = vld [vmem:[%s205 + $0x2430] sm:$0xff]
                %1372 = vst [vmem:[%s206 + $0x1230] sm:$0xff] %v1371
                %v1373 = vld [vmem:[%s205 + $0x2438] sm:$0xff]
                %1374 = vst [vmem:[%s206 + $0x1238] sm:$0xff] %v1373
                %v1375 = vld [vmem:[%s205 + $0x2440] sm:$0xff]
                %1376 = vst [vmem:[%s206 + $0x1240] sm:$0xff] %v1375
                %v1377 = vld [vmem:[%s205 + $0x2448] sm:$0xff]
                %1378 = vst [vmem:[%s206 + $0x1248] sm:$0xff] %v1377
                %v1379 = vld [vmem:[%s205 + $0x2450] sm:$0xff]
                %1380 = vst [vmem:[%s206 + $0x1250] sm:$0xff] %v1379
                %v1381 = vld [vmem:[%s205 + $0x2458] sm:$0xff]
                %1382 = vst [vmem:[%s206 + $0x1258] sm:$0xff] %v1381
                %v1383 = vld [vmem:[%s205 + $0x2460] sm:$0xff]
                %1384 = vst [vmem:[%s206 + $0x1260] sm:$0xff] %v1383
                %v1385 = vld [vmem:[%s205 + $0x2468] sm:$0xff]
                %1386 = vst [vmem:[%s206 + $0x1268] sm:$0xff] %v1385
                %v1387 = vld [vmem:[%s205 + $0x2470] sm:$0xff]
                %1388 = vst [vmem:[%s206 + $0x1270] sm:$0xff] %v1387
                %v1389 = vld [vmem:[%s205 + $0x2478] sm:$0xff]
                %1390 = vst [vmem:[%s206 + $0x1278] sm:$0xff] %v1389
                %v1391 = vld [vmem:[%s205 + $0x2480] sm:$0xff]
                %1392 = vst [vmem:[%s206 + $0x1280] sm:$0xff] %v1391
                %v1393 = vld [vmem:[%s205 + $0x2488] sm:$0xff]
                %1394 = vst [vmem:[%s206 + $0x1288] sm:$0xff] %v1393
                %v1395 = vld [vmem:[%s205 + $0x2490] sm:$0xff]
                %1396 = vst [vmem:[%s206 + $0x1290] sm:$0xff] %v1395
                %v1397 = vld [vmem:[%s205 + $0x2498] sm:$0xff]
                %1398 = vst [vmem:[%s206 + $0x1298] sm:$0xff] %v1397
                %v1399 = vld [vmem:[%s205 + $0x24a0] sm:$0xff]
                %1400 = vst [vmem:[%s206 + $0x12a0] sm:$0xff] %v1399
                %v1401 = vld [vmem:[%s205 + $0x24a8] sm:$0xff]
                %1402 = vst [vmem:[%s206 + $0x12a8] sm:$0xff] %v1401
                %v1403 = vld [vmem:[%s205 + $0x24b0] sm:$0xff]
                %1404 = vst [vmem:[%s206 + $0x12b0] sm:$0xff] %v1403
                %v1405 = vld [vmem:[%s205 + $0x24b8] sm:$0xff]
                %1406 = vst [vmem:[%s206 + $0x12b8] sm:$0xff] %v1405
                %v1407 = vld [vmem:[%s205 + $0x24c0] sm:$0xff]
                %1408 = vst [vmem:[%s206 + $0x12c0] sm:$0xff] %v1407
                %v1409 = vld [vmem:[%s205 + $0x24c8] sm:$0xff]
                %1410 = vst [vmem:[%s206 + $0x12c8] sm:$0xff] %v1409
                %v1411 = vld [vmem:[%s205 + $0x24d0] sm:$0xff]
                %1412 = vst [vmem:[%s206 + $0x12d0] sm:$0xff] %v1411
                %v1413 = vld [vmem:[%s205 + $0x24d8] sm:$0xff]
                %1414 = vst [vmem:[%s206 + $0x12d8] sm:$0xff] %v1413
                %v1415 = vld [vmem:[%s205 + $0x24e0] sm:$0xff]
                %1416 = vst [vmem:[%s206 + $0x12e0] sm:$0xff] %v1415
                %v1417 = vld [vmem:[%s205 + $0x24e8] sm:$0xff]
                %1418 = vst [vmem:[%s206 + $0x12e8] sm:$0xff] %v1417
                %v1419 = vld [vmem:[%s205 + $0x24f0] sm:$0xff]
                %1420 = vst [vmem:[%s206 + $0x12f0] sm:$0xff] %v1419
                %v1421 = vld [vmem:[%s205 + $0x24f8] sm:$0xff]
                %1422 = vst [vmem:[%s206 + $0x12f8] sm:$0xff] %v1421
                %v1423 = vld [vmem:[%s205 + $0x2500] sm:$0xff]
                %1424 = vst [vmem:[%s206 + $0x1300] sm:$0xff] %v1423
                %v1425 = vld [vmem:[%s205 + $0x2508] sm:$0xff]
                %1426 = vst [vmem:[%s206 + $0x1308] sm:$0xff] %v1425
                %v1427 = vld [vmem:[%s205 + $0x2510] sm:$0xff]
                %1428 = vst [vmem:[%s206 + $0x1310] sm:$0xff] %v1427
                %v1429 = vld [vmem:[%s205 + $0x2518] sm:$0xff]
                %1430 = vst [vmem:[%s206 + $0x1318] sm:$0xff] %v1429
                %v1431 = vld [vmem:[%s205 + $0x2520] sm:$0xff]
                %1432 = vst [vmem:[%s206 + $0x1320] sm:$0xff] %v1431
                %v1433 = vld [vmem:[%s205 + $0x2528] sm:$0xff]
                %1434 = vst [vmem:[%s206 + $0x1328] sm:$0xff] %v1433
                %v1435 = vld [vmem:[%s205 + $0x2530] sm:$0xff]
                %1436 = vst [vmem:[%s206 + $0x1330] sm:$0xff] %v1435
                %v1437 = vld [vmem:[%s205 + $0x2538] sm:$0xff]
                %1438 = vst [vmem:[%s206 + $0x1338] sm:$0xff] %v1437
                %v1439 = vld [vmem:[%s205 + $0x2540] sm:$0xff]
                %1440 = vst [vmem:[%s206 + $0x1340] sm:$0xff] %v1439
                %v1441 = vld [vmem:[%s205 + $0x2548] sm:$0xff]
                %1442 = vst [vmem:[%s206 + $0x1348] sm:$0xff] %v1441
                %v1443 = vld [vmem:[%s205 + $0x2550] sm:$0xff]
                %1444 = vst [vmem:[%s206 + $0x1350] sm:$0xff] %v1443
                %v1445 = vld [vmem:[%s205 + $0x2558] sm:$0xff]
                %1446 = vst [vmem:[%s206 + $0x1358] sm:$0xff] %v1445
                %v1447 = vld [vmem:[%s205 + $0x2560] sm:$0xff]
                %1448 = vst [vmem:[%s206 + $0x1360] sm:$0xff] %v1447
                %v1449 = vld [vmem:[%s205 + $0x2568] sm:$0xff]
                %1450 = vst [vmem:[%s206 + $0x1368] sm:$0xff] %v1449
                %v1451 = vld [vmem:[%s205 + $0x2570] sm:$0xff]
                %1452 = vst [vmem:[%s206 + $0x1370] sm:$0xff] %v1451
                %v1453 = vld [vmem:[%s205 + $0x2578] sm:$0xff]
                %1454 = vst [vmem:[%s206 + $0x1378] sm:$0xff] %v1453
                %v1455 = vld [vmem:[%s205 + $0x2580] sm:$0xff]
                %1456 = vst [vmem:[%s206 + $0x1380] sm:$0xff] %v1455
                %v1457 = vld [vmem:[%s205 + $0x2588] sm:$0xff]
                %1458 = vst [vmem:[%s206 + $0x1388] sm:$0xff] %v1457
                %v1459 = vld [vmem:[%s205 + $0x2590] sm:$0xff]
                %1460 = vst [vmem:[%s206 + $0x1390] sm:$0xff] %v1459
                %v1461 = vld [vmem:[%s205 + $0x2598] sm:$0xff]
                %1462 = vst [vmem:[%s206 + $0x1398] sm:$0xff] %v1461
                %v1463 = vld [vmem:[%s205 + $0x25a0] sm:$0xff]
                %1464 = vst [vmem:[%s206 + $0x13a0] sm:$0xff] %v1463
                %v1465 = vld [vmem:[%s205 + $0x25a8] sm:$0xff]
                %1466 = vst [vmem:[%s206 + $0x13a8] sm:$0xff] %v1465
                %v1467 = vld [vmem:[%s205 + $0x25b0] sm:$0xff]
                %1468 = vst [vmem:[%s206 + $0x13b0] sm:$0xff] %v1467
                %v1469 = vld [vmem:[%s205 + $0x25b8] sm:$0xff]
                %1470 = vst [vmem:[%s206 + $0x13b8] sm:$0xff] %v1469
                %v1471 = vld [vmem:[%s205 + $0x25c0] sm:$0xff]
                %1472 = vst [vmem:[%s206 + $0x13c0] sm:$0xff] %v1471
                %v1473 = vld [vmem:[%s205 + $0x25c8] sm:$0xff]
                %1474 = vst [vmem:[%s206 + $0x13c8] sm:$0xff] %v1473
                %v1475 = vld [vmem:[%s205 + $0x25d0] sm:$0xff]
                %1476 = vst [vmem:[%s206 + $0x13d0] sm:$0xff] %v1475
                %v1477 = vld [vmem:[%s205 + $0x25d8] sm:$0xff]
                %1478 = vst [vmem:[%s206 + $0x13d8] sm:$0xff] %v1477
                %v1479 = vld [vmem:[%s205 + $0x25e0] sm:$0xff]
                %1480 = vst [vmem:[%s206 + $0x13e0] sm:$0xff] %v1479
                %v1481 = vld [vmem:[%s205 + $0x25e8] sm:$0xff]
                %1482 = vst [vmem:[%s206 + $0x13e8] sm:$0xff] %v1481
                %v1483 = vld [vmem:[%s205 + $0x25f0] sm:$0xff]
                %1484 = vst [vmem:[%s206 + $0x13f0] sm:$0xff] %v1483
                %v1485 = vld [vmem:[%s205 + $0x25f8] sm:$0xff]
                %1486 = vst [vmem:[%s206 + $0x13f8] sm:$0xff] %v1485
                %v1487 = vld [vmem:[%s205 + $0x2800] sm:$0xff]
                %1488 = vst [vmem:[%s206 + $0x1400] sm:$0xff] %v1487
                %v1489 = vld [vmem:[%s205 + $0x2808] sm:$0xff]
                %1490 = vst [vmem:[%s206 + $0x1408] sm:$0xff] %v1489
                %v1491 = vld [vmem:[%s205 + $0x2810] sm:$0xff]
                %1492 = vst [vmem:[%s206 + $0x1410] sm:$0xff] %v1491
                %v1493 = vld [vmem:[%s205 + $0x2818] sm:$0xff]
                %1494 = vst [vmem:[%s206 + $0x1418] sm:$0xff] %v1493
                %v1495 = vld [vmem:[%s205 + $0x2820] sm:$0xff]
                %1496 = vst [vmem:[%s206 + $0x1420] sm:$0xff] %v1495
                %v1497 = vld [vmem:[%s205 + $0x2828] sm:$0xff]
                %1498 = vst [vmem:[%s206 + $0x1428] sm:$0xff] %v1497
                %v1499 = vld [vmem:[%s205 + $0x2830] sm:$0xff]
                %1500 = vst [vmem:[%s206 + $0x1430] sm:$0xff] %v1499
                %v1501 = vld [vmem:[%s205 + $0x2838] sm:$0xff]
                %1502 = vst [vmem:[%s206 + $0x1438] sm:$0xff] %v1501
                %v1503 = vld [vmem:[%s205 + $0x2840] sm:$0xff]
                %1504 = vst [vmem:[%s206 + $0x1440] sm:$0xff] %v1503
                %v1505 = vld [vmem:[%s205 + $0x2848] sm:$0xff]
                %1506 = vst [vmem:[%s206 + $0x1448] sm:$0xff] %v1505
                %v1507 = vld [vmem:[%s205 + $0x2850] sm:$0xff]
                %1508 = vst [vmem:[%s206 + $0x1450] sm:$0xff] %v1507
                %v1509 = vld [vmem:[%s205 + $0x2858] sm:$0xff]
                %1510 = vst [vmem:[%s206 + $0x1458] sm:$0xff] %v1509
                %v1511 = vld [vmem:[%s205 + $0x2860] sm:$0xff]
                %1512 = vst [vmem:[%s206 + $0x1460] sm:$0xff] %v1511
                %v1513 = vld [vmem:[%s205 + $0x2868] sm:$0xff]
                %1514 = vst [vmem:[%s206 + $0x1468] sm:$0xff] %v1513
                %v1515 = vld [vmem:[%s205 + $0x2870] sm:$0xff]
                %1516 = vst [vmem:[%s206 + $0x1470] sm:$0xff] %v1515
                %v1517 = vld [vmem:[%s205 + $0x2878] sm:$0xff]
                %1518 = vst [vmem:[%s206 + $0x1478] sm:$0xff] %v1517
                %v1519 = vld [vmem:[%s205 + $0x2880] sm:$0xff]
                %1520 = vst [vmem:[%s206 + $0x1480] sm:$0xff] %v1519
                %v1521 = vld [vmem:[%s205 + $0x2888] sm:$0xff]
                %1522 = vst [vmem:[%s206 + $0x1488] sm:$0xff] %v1521
                %v1523 = vld [vmem:[%s205 + $0x2890] sm:$0xff]
                %1524 = vst [vmem:[%s206 + $0x1490] sm:$0xff] %v1523
                %v1525 = vld [vmem:[%s205 + $0x2898] sm:$0xff]
                %1526 = vst [vmem:[%s206 + $0x1498] sm:$0xff] %v1525
                %v1527 = vld [vmem:[%s205 + $0x28a0] sm:$0xff]
                %1528 = vst [vmem:[%s206 + $0x14a0] sm:$0xff] %v1527
                %v1529 = vld [vmem:[%s205 + $0x28a8] sm:$0xff]
                %1530 = vst [vmem:[%s206 + $0x14a8] sm:$0xff] %v1529
                %v1531 = vld [vmem:[%s205 + $0x28b0] sm:$0xff]
                %1532 = vst [vmem:[%s206 + $0x14b0] sm:$0xff] %v1531
                %v1533 = vld [vmem:[%s205 + $0x28b8] sm:$0xff]
                %1534 = vst [vmem:[%s206 + $0x14b8] sm:$0xff] %v1533
                %v1535 = vld [vmem:[%s205 + $0x28c0] sm:$0xff]
                %1536 = vst [vmem:[%s206 + $0x14c0] sm:$0xff] %v1535
                %v1537 = vld [vmem:[%s205 + $0x28c8] sm:$0xff]
                %1538 = vst [vmem:[%s206 + $0x14c8] sm:$0xff] %v1537
                %v1539 = vld [vmem:[%s205 + $0x28d0] sm:$0xff]
                %1540 = vst [vmem:[%s206 + $0x14d0] sm:$0xff] %v1539
                %v1541 = vld [vmem:[%s205 + $0x28d8] sm:$0xff]
                %1542 = vst [vmem:[%s206 + $0x14d8] sm:$0xff] %v1541
                %v1543 = vld [vmem:[%s205 + $0x28e0] sm:$0xff]
                %1544 = vst [vmem:[%s206 + $0x14e0] sm:$0xff] %v1543
                %v1545 = vld [vmem:[%s205 + $0x28e8] sm:$0xff]
                %1546 = vst [vmem:[%s206 + $0x14e8] sm:$0xff] %v1545
                %v1547 = vld [vmem:[%s205 + $0x28f0] sm:$0xff]
                %1548 = vst [vmem:[%s206 + $0x14f0] sm:$0xff] %v1547
                %v1549 = vld [vmem:[%s205 + $0x28f8] sm:$0xff]
                %1550 = vst [vmem:[%s206 + $0x14f8] sm:$0xff] %v1549
                %v1551 = vld [vmem:[%s205 + $0x2900] sm:$0xff]
                %1552 = vst [vmem:[%s206 + $0x1500] sm:$0xff] %v1551
                %v1553 = vld [vmem:[%s205 + $0x2908] sm:$0xff]
                %1554 = vst [vmem:[%s206 + $0x1508] sm:$0xff] %v1553
                %v1555 = vld [vmem:[%s205 + $0x2910] sm:$0xff]
                %1556 = vst [vmem:[%s206 + $0x1510] sm:$0xff] %v1555
                %v1557 = vld [vmem:[%s205 + $0x2918] sm:$0xff]
                %1558 = vst [vmem:[%s206 + $0x1518] sm:$0xff] %v1557
                %v1559 = vld [vmem:[%s205 + $0x2920] sm:$0xff]
                %1560 = vst [vmem:[%s206 + $0x1520] sm:$0xff] %v1559
                %v1561 = vld [vmem:[%s205 + $0x2928] sm:$0xff]
                %1562 = vst [vmem:[%s206 + $0x1528] sm:$0xff] %v1561
                %v1563 = vld [vmem:[%s205 + $0x2930] sm:$0xff]
                %1564 = vst [vmem:[%s206 + $0x1530] sm:$0xff] %v1563
                %v1565 = vld [vmem:[%s205 + $0x2938] sm:$0xff]
                %1566 = vst [vmem:[%s206 + $0x1538] sm:$0xff] %v1565
                %v1567 = vld [vmem:[%s205 + $0x2940] sm:$0xff]
                %1568 = vst [vmem:[%s206 + $0x1540] sm:$0xff] %v1567
                %v1569 = vld [vmem:[%s205 + $0x2948] sm:$0xff]
                %1570 = vst [vmem:[%s206 + $0x1548] sm:$0xff] %v1569
                %v1571 = vld [vmem:[%s205 + $0x2950] sm:$0xff]
                %1572 = vst [vmem:[%s206 + $0x1550] sm:$0xff] %v1571
                %v1573 = vld [vmem:[%s205 + $0x2958] sm:$0xff]
                %1574 = vst [vmem:[%s206 + $0x1558] sm:$0xff] %v1573
                %v1575 = vld [vmem:[%s205 + $0x2960] sm:$0xff]
                %1576 = vst [vmem:[%s206 + $0x1560] sm:$0xff] %v1575
                %v1577 = vld [vmem:[%s205 + $0x2968] sm:$0xff]
                %1578 = vst [vmem:[%s206 + $0x1568] sm:$0xff] %v1577
                %v1579 = vld [vmem:[%s205 + $0x2970] sm:$0xff]
                %1580 = vst [vmem:[%s206 + $0x1570] sm:$0xff] %v1579
                %v1581 = vld [vmem:[%s205 + $0x2978] sm:$0xff]
                %1582 = vst [vmem:[%s206 + $0x1578] sm:$0xff] %v1581
                %v1583 = vld [vmem:[%s205 + $0x2980] sm:$0xff]
                %1584 = vst [vmem:[%s206 + $0x1580] sm:$0xff] %v1583
                %v1585 = vld [vmem:[%s205 + $0x2988] sm:$0xff]
                %1586 = vst [vmem:[%s206 + $0x1588] sm:$0xff] %v1585
                %v1587 = vld [vmem:[%s205 + $0x2990] sm:$0xff]
                %1588 = vst [vmem:[%s206 + $0x1590] sm:$0xff] %v1587
                %v1589 = vld [vmem:[%s205 + $0x2998] sm:$0xff]
                %1590 = vst [vmem:[%s206 + $0x1598] sm:$0xff] %v1589
                %v1591 = vld [vmem:[%s205 + $0x29a0] sm:$0xff]
                %1592 = vst [vmem:[%s206 + $0x15a0] sm:$0xff] %v1591
                %v1593 = vld [vmem:[%s205 + $0x29a8] sm:$0xff]
                %1594 = vst [vmem:[%s206 + $0x15a8] sm:$0xff] %v1593
                %v1595 = vld [vmem:[%s205 + $0x29b0] sm:$0xff]
                %1596 = vst [vmem:[%s206 + $0x15b0] sm:$0xff] %v1595
                %v1597 = vld [vmem:[%s205 + $0x29b8] sm:$0xff]
                %1598 = vst [vmem:[%s206 + $0x15b8] sm:$0xff] %v1597
                %v1599 = vld [vmem:[%s205 + $0x29c0] sm:$0xff]
                %1600 = vst [vmem:[%s206 + $0x15c0] sm:$0xff] %v1599
                %v1601 = vld [vmem:[%s205 + $0x29c8] sm:$0xff]
                %1602 = vst [vmem:[%s206 + $0x15c8] sm:$0xff] %v1601
                %v1603 = vld [vmem:[%s205 + $0x29d0] sm:$0xff]
                %1604 = vst [vmem:[%s206 + $0x15d0] sm:$0xff] %v1603
                %v1605 = vld [vmem:[%s205 + $0x29d8] sm:$0xff]
                %1606 = vst [vmem:[%s206 + $0x15d8] sm:$0xff] %v1605
                %v1607 = vld [vmem:[%s205 + $0x29e0] sm:$0xff]
                %1608 = vst [vmem:[%s206 + $0x15e0] sm:$0xff] %v1607
                %v1609 = vld [vmem:[%s205 + $0x29e8] sm:$0xff]
                %1610 = vst [vmem:[%s206 + $0x15e8] sm:$0xff] %v1609
                %v1611 = vld [vmem:[%s205 + $0x29f0] sm:$0xff]
                %1612 = vst [vmem:[%s206 + $0x15f0] sm:$0xff] %v1611
                %v1613 = vld [vmem:[%s205 + $0x29f8] sm:$0xff]
                %1614 = vst [vmem:[%s206 + $0x15f8] sm:$0xff] %v1613
                %v1615 = vld [vmem:[%s205 + $0x2c00] sm:$0xff]
                %1616 = vst [vmem:[%s206 + $0x1600] sm:$0xff] %v1615
                %v1617 = vld [vmem:[%s205 + $0x2c08] sm:$0xff]
                %1618 = vst [vmem:[%s206 + $0x1608] sm:$0xff] %v1617
                %v1619 = vld [vmem:[%s205 + $0x2c10] sm:$0xff]
                %1620 = vst [vmem:[%s206 + $0x1610] sm:$0xff] %v1619
                %v1621 = vld [vmem:[%s205 + $0x2c18] sm:$0xff]
                %1622 = vst [vmem:[%s206 + $0x1618] sm:$0xff] %v1621
                %v1623 = vld [vmem:[%s205 + $0x2c20] sm:$0xff]
                %1624 = vst [vmem:[%s206 + $0x1620] sm:$0xff] %v1623
                %v1625 = vld [vmem:[%s205 + $0x2c28] sm:$0xff]
                %1626 = vst [vmem:[%s206 + $0x1628] sm:$0xff] %v1625
                %v1627 = vld [vmem:[%s205 + $0x2c30] sm:$0xff]
                %1628 = vst [vmem:[%s206 + $0x1630] sm:$0xff] %v1627
                %v1629 = vld [vmem:[%s205 + $0x2c38] sm:$0xff]
                %1630 = vst [vmem:[%s206 + $0x1638] sm:$0xff] %v1629
                %v1631 = vld [vmem:[%s205 + $0x2c40] sm:$0xff]
                %1632 = vst [vmem:[%s206 + $0x1640] sm:$0xff] %v1631
                %v1633 = vld [vmem:[%s205 + $0x2c48] sm:$0xff]
                %1634 = vst [vmem:[%s206 + $0x1648] sm:$0xff] %v1633
                %v1635 = vld [vmem:[%s205 + $0x2c50] sm:$0xff]
                %1636 = vst [vmem:[%s206 + $0x1650] sm:$0xff] %v1635
                %v1637 = vld [vmem:[%s205 + $0x2c58] sm:$0xff]
                %1638 = vst [vmem:[%s206 + $0x1658] sm:$0xff] %v1637
                %v1639 = vld [vmem:[%s205 + $0x2c60] sm:$0xff]
                %1640 = vst [vmem:[%s206 + $0x1660] sm:$0xff] %v1639
                %v1641 = vld [vmem:[%s205 + $0x2c68] sm:$0xff]
                %1642 = vst [vmem:[%s206 + $0x1668] sm:$0xff] %v1641
                %v1643 = vld [vmem:[%s205 + $0x2c70] sm:$0xff]
                %1644 = vst [vmem:[%s206 + $0x1670] sm:$0xff] %v1643
                %v1645 = vld [vmem:[%s205 + $0x2c78] sm:$0xff]
                %1646 = vst [vmem:[%s206 + $0x1678] sm:$0xff] %v1645
                %v1647 = vld [vmem:[%s205 + $0x2c80] sm:$0xff]
                %1648 = vst [vmem:[%s206 + $0x1680] sm:$0xff] %v1647
                %v1649 = vld [vmem:[%s205 + $0x2c88] sm:$0xff]
                %1650 = vst [vmem:[%s206 + $0x1688] sm:$0xff] %v1649
                %v1651 = vld [vmem:[%s205 + $0x2c90] sm:$0xff]
                %1652 = vst [vmem:[%s206 + $0x1690] sm:$0xff] %v1651
                %v1653 = vld [vmem:[%s205 + $0x2c98] sm:$0xff]
                %1654 = vst [vmem:[%s206 + $0x1698] sm:$0xff] %v1653
                %v1655 = vld [vmem:[%s205 + $0x2ca0] sm:$0xff]
                %1656 = vst [vmem:[%s206 + $0x16a0] sm:$0xff] %v1655
                %v1657 = vld [vmem:[%s205 + $0x2ca8] sm:$0xff]
                %1658 = vst [vmem:[%s206 + $0x16a8] sm:$0xff] %v1657
                %v1659 = vld [vmem:[%s205 + $0x2cb0] sm:$0xff]
                %1660 = vst [vmem:[%s206 + $0x16b0] sm:$0xff] %v1659
                %v1661 = vld [vmem:[%s205 + $0x2cb8] sm:$0xff]
                %1662 = vst [vmem:[%s206 + $0x16b8] sm:$0xff] %v1661
                %v1663 = vld [vmem:[%s205 + $0x2cc0] sm:$0xff]
                %1664 = vst [vmem:[%s206 + $0x16c0] sm:$0xff] %v1663
                %v1665 = vld [vmem:[%s205 + $0x2cc8] sm:$0xff]
                %1666 = vst [vmem:[%s206 + $0x16c8] sm:$0xff] %v1665
                %v1667 = vld [vmem:[%s205 + $0x2cd0] sm:$0xff]
                %1668 = vst [vmem:[%s206 + $0x16d0] sm:$0xff] %v1667
                %v1669 = vld [vmem:[%s205 + $0x2cd8] sm:$0xff]
                %1670 = vst [vmem:[%s206 + $0x16d8] sm:$0xff] %v1669
                %v1671 = vld [vmem:[%s205 + $0x2ce0] sm:$0xff]
                %1672 = vst [vmem:[%s206 + $0x16e0] sm:$0xff] %v1671
                %v1673 = vld [vmem:[%s205 + $0x2ce8] sm:$0xff]
                %1674 = vst [vmem:[%s206 + $0x16e8] sm:$0xff] %v1673
                %v1675 = vld [vmem:[%s205 + $0x2cf0] sm:$0xff]
                %1676 = vst [vmem:[%s206 + $0x16f0] sm:$0xff] %v1675
                %v1677 = vld [vmem:[%s205 + $0x2cf8] sm:$0xff]
                %1678 = vst [vmem:[%s206 + $0x16f8] sm:$0xff] %v1677
                %v1679 = vld [vmem:[%s205 + $0x2d00] sm:$0xff]
                %1680 = vst [vmem:[%s206 + $0x1700] sm:$0xff] %v1679
                %v1681 = vld [vmem:[%s205 + $0x2d08] sm:$0xff]
                %1682 = vst [vmem:[%s206 + $0x1708] sm:$0xff] %v1681
                %v1683 = vld [vmem:[%s205 + $0x2d10] sm:$0xff]
                %1684 = vst [vmem:[%s206 + $0x1710] sm:$0xff] %v1683
                %v1685 = vld [vmem:[%s205 + $0x2d18] sm:$0xff]
                %1686 = vst [vmem:[%s206 + $0x1718] sm:$0xff] %v1685
                %v1687 = vld [vmem:[%s205 + $0x2d20] sm:$0xff]
                %1688 = vst [vmem:[%s206 + $0x1720] sm:$0xff] %v1687
                %v1689 = vld [vmem:[%s205 + $0x2d28] sm:$0xff]
                %1690 = vst [vmem:[%s206 + $0x1728] sm:$0xff] %v1689
                %v1691 = vld [vmem:[%s205 + $0x2d30] sm:$0xff]
                %1692 = vst [vmem:[%s206 + $0x1730] sm:$0xff] %v1691
                %v1693 = vld [vmem:[%s205 + $0x2d38] sm:$0xff]
                %1694 = vst [vmem:[%s206 + $0x1738] sm:$0xff] %v1693
                %v1695 = vld [vmem:[%s205 + $0x2d40] sm:$0xff]
                %1696 = vst [vmem:[%s206 + $0x1740] sm:$0xff] %v1695
                %v1697 = vld [vmem:[%s205 + $0x2d48] sm:$0xff]
                %1698 = vst [vmem:[%s206 + $0x1748] sm:$0xff] %v1697
                %v1699 = vld [vmem:[%s205 + $0x2d50] sm:$0xff]
                %1700 = vst [vmem:[%s206 + $0x1750] sm:$0xff] %v1699
                %v1701 = vld [vmem:[%s205 + $0x2d58] sm:$0xff]
                %1702 = vst [vmem:[%s206 + $0x1758] sm:$0xff] %v1701
                %v1703 = vld [vmem:[%s205 + $0x2d60] sm:$0xff]
                %1704 = vst [vmem:[%s206 + $0x1760] sm:$0xff] %v1703
                %v1705 = vld [vmem:[%s205 + $0x2d68] sm:$0xff]
                %1706 = vst [vmem:[%s206 + $0x1768] sm:$0xff] %v1705
                %v1707 = vld [vmem:[%s205 + $0x2d70] sm:$0xff]
                %1708 = vst [vmem:[%s206 + $0x1770] sm:$0xff] %v1707
                %v1709 = vld [vmem:[%s205 + $0x2d78] sm:$0xff]
                %1710 = vst [vmem:[%s206 + $0x1778] sm:$0xff] %v1709
                %v1711 = vld [vmem:[%s205 + $0x2d80] sm:$0xff]
                %1712 = vst [vmem:[%s206 + $0x1780] sm:$0xff] %v1711
                %v1713 = vld [vmem:[%s205 + $0x2d88] sm:$0xff]
                %1714 = vst [vmem:[%s206 + $0x1788] sm:$0xff] %v1713
                %v1715 = vld [vmem:[%s205 + $0x2d90] sm:$0xff]
                %1716 = vst [vmem:[%s206 + $0x1790] sm:$0xff] %v1715
                %v1717 = vld [vmem:[%s205 + $0x2d98] sm:$0xff]
                %1718 = vst [vmem:[%s206 + $0x1798] sm:$0xff] %v1717
                %v1719 = vld [vmem:[%s205 + $0x2da0] sm:$0xff]
                %1720 = vst [vmem:[%s206 + $0x17a0] sm:$0xff] %v1719
                %v1721 = vld [vmem:[%s205 + $0x2da8] sm:$0xff]
                %1722 = vst [vmem:[%s206 + $0x17a8] sm:$0xff] %v1721
                %v1723 = vld [vmem:[%s205 + $0x2db0] sm:$0xff]
                %1724 = vst [vmem:[%s206 + $0x17b0] sm:$0xff] %v1723
                %v1725 = vld [vmem:[%s205 + $0x2db8] sm:$0xff]
                %1726 = vst [vmem:[%s206 + $0x17b8] sm:$0xff] %v1725
                %v1727 = vld [vmem:[%s205 + $0x2dc0] sm:$0xff]
                %1728 = vst [vmem:[%s206 + $0x17c0] sm:$0xff] %v1727
                %v1729 = vld [vmem:[%s205 + $0x2dc8] sm:$0xff]
                %1730 = vst [vmem:[%s206 + $0x17c8] sm:$0xff] %v1729
                %v1731 = vld [vmem:[%s205 + $0x2dd0] sm:$0xff]
                %1732 = vst [vmem:[%s206 + $0x17d0] sm:$0xff] %v1731
                %v1733 = vld [vmem:[%s205 + $0x2dd8] sm:$0xff]
                %1734 = vst [vmem:[%s206 + $0x17d8] sm:$0xff] %v1733
                %v1735 = vld [vmem:[%s205 + $0x2de0] sm:$0xff]
                %1736 = vst [vmem:[%s206 + $0x17e0] sm:$0xff] %v1735
                %v1737 = vld [vmem:[%s205 + $0x2de8] sm:$0xff]
                %1738 = vst [vmem:[%s206 + $0x17e8] sm:$0xff] %v1737
                %v1739 = vld [vmem:[%s205 + $0x2df0] sm:$0xff]
                %1740 = vst [vmem:[%s206 + $0x17f0] sm:$0xff] %v1739
                %v1741 = vld [vmem:[%s205 + $0x2df8] sm:$0xff]
                %1742 = vst [vmem:[%s206 + $0x17f8] sm:$0xff] %v1741
                %v1743 = vld [vmem:[%s205 + $0x3000] sm:$0xff]
                %1744 = vst [vmem:[%s206 + $0x1800] sm:$0xff] %v1743
                %v1745 = vld [vmem:[%s205 + $0x3008] sm:$0xff]
                %1746 = vst [vmem:[%s206 + $0x1808] sm:$0xff] %v1745
                %v1747 = vld [vmem:[%s205 + $0x3010] sm:$0xff]
                %1748 = vst [vmem:[%s206 + $0x1810] sm:$0xff] %v1747
                %v1749 = vld [vmem:[%s205 + $0x3018] sm:$0xff]
                %1750 = vst [vmem:[%s206 + $0x1818] sm:$0xff] %v1749
                %v1751 = vld [vmem:[%s205 + $0x3020] sm:$0xff]
                %1752 = vst [vmem:[%s206 + $0x1820] sm:$0xff] %v1751
                %v1753 = vld [vmem:[%s205 + $0x3028] sm:$0xff]
                %1754 = vst [vmem:[%s206 + $0x1828] sm:$0xff] %v1753
                %v1755 = vld [vmem:[%s205 + $0x3030] sm:$0xff]
                %1756 = vst [vmem:[%s206 + $0x1830] sm:$0xff] %v1755
                %v1757 = vld [vmem:[%s205 + $0x3038] sm:$0xff]
                %1758 = vst [vmem:[%s206 + $0x1838] sm:$0xff] %v1757
                %v1759 = vld [vmem:[%s205 + $0x3040] sm:$0xff]
                %1760 = vst [vmem:[%s206 + $0x1840] sm:$0xff] %v1759
                %v1761 = vld [vmem:[%s205 + $0x3048] sm:$0xff]
                %1762 = vst [vmem:[%s206 + $0x1848] sm:$0xff] %v1761
                %v1763 = vld [vmem:[%s205 + $0x3050] sm:$0xff]
                %1764 = vst [vmem:[%s206 + $0x1850] sm:$0xff] %v1763
                %v1765 = vld [vmem:[%s205 + $0x3058] sm:$0xff]
                %1766 = vst [vmem:[%s206 + $0x1858] sm:$0xff] %v1765
                %v1767 = vld [vmem:[%s205 + $0x3060] sm:$0xff]
                %1768 = vst [vmem:[%s206 + $0x1860] sm:$0xff] %v1767
                %v1769 = vld [vmem:[%s205 + $0x3068] sm:$0xff]
                %1770 = vst [vmem:[%s206 + $0x1868] sm:$0xff] %v1769
                %v1771 = vld [vmem:[%s205 + $0x3070] sm:$0xff]
                %1772 = vst [vmem:[%s206 + $0x1870] sm:$0xff] %v1771
                %v1773 = vld [vmem:[%s205 + $0x3078] sm:$0xff]
                %1774 = vst [vmem:[%s206 + $0x1878] sm:$0xff] %v1773
                %v1775 = vld [vmem:[%s205 + $0x3080] sm:$0xff]
                %1776 = vst [vmem:[%s206 + $0x1880] sm:$0xff] %v1775
                %v1777 = vld [vmem:[%s205 + $0x3088] sm:$0xff]
                %1778 = vst [vmem:[%s206 + $0x1888] sm:$0xff] %v1777
                %v1779 = vld [vmem:[%s205 + $0x3090] sm:$0xff]
                %1780 = vst [vmem:[%s206 + $0x1890] sm:$0xff] %v1779
                %v1781 = vld [vmem:[%s205 + $0x3098] sm:$0xff]
                %1782 = vst [vmem:[%s206 + $0x1898] sm:$0xff] %v1781
                %v1783 = vld [vmem:[%s205 + $0x30a0] sm:$0xff]
                %1784 = vst [vmem:[%s206 + $0x18a0] sm:$0xff] %v1783
                %v1785 = vld [vmem:[%s205 + $0x30a8] sm:$0xff]
                %1786 = vst [vmem:[%s206 + $0x18a8] sm:$0xff] %v1785
                %v1787 = vld [vmem:[%s205 + $0x30b0] sm:$0xff]
                %1788 = vst [vmem:[%s206 + $0x18b0] sm:$0xff] %v1787
                %v1789 = vld [vmem:[%s205 + $0x30b8] sm:$0xff]
                %1790 = vst [vmem:[%s206 + $0x18b8] sm:$0xff] %v1789
                %v1791 = vld [vmem:[%s205 + $0x30c0] sm:$0xff]
                %1792 = vst [vmem:[%s206 + $0x18c0] sm:$0xff] %v1791
                %v1793 = vld [vmem:[%s205 + $0x30c8] sm:$0xff]
                %1794 = vst [vmem:[%s206 + $0x18c8] sm:$0xff] %v1793
                %v1795 = vld [vmem:[%s205 + $0x30d0] sm:$0xff]
                %1796 = vst [vmem:[%s206 + $0x18d0] sm:$0xff] %v1795
                %v1797 = vld [vmem:[%s205 + $0x30d8] sm:$0xff]
                %1798 = vst [vmem:[%s206 + $0x18d8] sm:$0xff] %v1797
                %v1799 = vld [vmem:[%s205 + $0x30e0] sm:$0xff]
                %1800 = vst [vmem:[%s206 + $0x18e0] sm:$0xff] %v1799
                %v1801 = vld [vmem:[%s205 + $0x30e8] sm:$0xff]
                %1802 = vst [vmem:[%s206 + $0x18e8] sm:$0xff] %v1801
                %v1803 = vld [vmem:[%s205 + $0x30f0] sm:$0xff]
                %1804 = vst [vmem:[%s206 + $0x18f0] sm:$0xff] %v1803
                %v1805 = vld [vmem:[%s205 + $0x30f8] sm:$0xff]
                %1806 = vst [vmem:[%s206 + $0x18f8] sm:$0xff] %v1805
                %v1807 = vld [vmem:[%s205 + $0x3100] sm:$0xff]
                %1808 = vst [vmem:[%s206 + $0x1900] sm:$0xff] %v1807
                %v1809 = vld [vmem:[%s205 + $0x3108] sm:$0xff]
                %1810 = vst [vmem:[%s206 + $0x1908] sm:$0xff] %v1809
                %v1811 = vld [vmem:[%s205 + $0x3110] sm:$0xff]
                %1812 = vst [vmem:[%s206 + $0x1910] sm:$0xff] %v1811
                %v1813 = vld [vmem:[%s205 + $0x3118] sm:$0xff]
                %1814 = vst [vmem:[%s206 + $0x1918] sm:$0xff] %v1813
                %v1815 = vld [vmem:[%s205 + $0x3120] sm:$0xff]
                %1816 = vst [vmem:[%s206 + $0x1920] sm:$0xff] %v1815
                %v1817 = vld [vmem:[%s205 + $0x3128] sm:$0xff]
                %1818 = vst [vmem:[%s206 + $0x1928] sm:$0xff] %v1817
                %v1819 = vld [vmem:[%s205 + $0x3130] sm:$0xff]
                %1820 = vst [vmem:[%s206 + $0x1930] sm:$0xff] %v1819
                %v1821 = vld [vmem:[%s205 + $0x3138] sm:$0xff]
                %1822 = vst [vmem:[%s206 + $0x1938] sm:$0xff] %v1821
                %v1823 = vld [vmem:[%s205 + $0x3140] sm:$0xff]
                %1824 = vst [vmem:[%s206 + $0x1940] sm:$0xff] %v1823
                %v1825 = vld [vmem:[%s205 + $0x3148] sm:$0xff]
                %1826 = vst [vmem:[%s206 + $0x1948] sm:$0xff] %v1825
                %v1827 = vld [vmem:[%s205 + $0x3150] sm:$0xff]
                %1828 = vst [vmem:[%s206 + $0x1950] sm:$0xff] %v1827
                %v1829 = vld [vmem:[%s205 + $0x3158] sm:$0xff]
                %1830 = vst [vmem:[%s206 + $0x1958] sm:$0xff] %v1829
                %v1831 = vld [vmem:[%s205 + $0x3160] sm:$0xff]
                %1832 = vst [vmem:[%s206 + $0x1960] sm:$0xff] %v1831
                %v1833 = vld [vmem:[%s205 + $0x3168] sm:$0xff]
                %1834 = vst [vmem:[%s206 + $0x1968] sm:$0xff] %v1833
                %v1835 = vld [vmem:[%s205 + $0x3170] sm:$0xff]
                %1836 = vst [vmem:[%s206 + $0x1970] sm:$0xff] %v1835
                %v1837 = vld [vmem:[%s205 + $0x3178] sm:$0xff]
                %1838 = vst [vmem:[%s206 + $0x1978] sm:$0xff] %v1837
                %v1839 = vld [vmem:[%s205 + $0x3180] sm:$0xff]
                %1840 = vst [vmem:[%s206 + $0x1980] sm:$0xff] %v1839
                %v1841 = vld [vmem:[%s205 + $0x3188] sm:$0xff]
                %1842 = vst [vmem:[%s206 + $0x1988] sm:$0xff] %v1841
                %v1843 = vld [vmem:[%s205 + $0x3190] sm:$0xff]
                %1844 = vst [vmem:[%s206 + $0x1990] sm:$0xff] %v1843
                %v1845 = vld [vmem:[%s205 + $0x3198] sm:$0xff]
                %1846 = vst [vmem:[%s206 + $0x1998] sm:$0xff] %v1845
                %v1847 = vld [vmem:[%s205 + $0x31a0] sm:$0xff]
                %1848 = vst [vmem:[%s206 + $0x19a0] sm:$0xff] %v1847
                %v1849 = vld [vmem:[%s205 + $0x31a8] sm:$0xff]
                %1850 = vst [vmem:[%s206 + $0x19a8] sm:$0xff] %v1849
                %v1851 = vld [vmem:[%s205 + $0x31b0] sm:$0xff]
                %1852 = vst [vmem:[%s206 + $0x19b0] sm:$0xff] %v1851
                %v1853 = vld [vmem:[%s205 + $0x31b8] sm:$0xff]
                %1854 = vst [vmem:[%s206 + $0x19b8] sm:$0xff] %v1853
                %v1855 = vld [vmem:[%s205 + $0x31c0] sm:$0xff]
                %1856 = vst [vmem:[%s206 + $0x19c0] sm:$0xff] %v1855
                %v1857 = vld [vmem:[%s205 + $0x31c8] sm:$0xff]
                %1858 = vst [vmem:[%s206 + $0x19c8] sm:$0xff] %v1857
                %v1859 = vld [vmem:[%s205 + $0x31d0] sm:$0xff]
                %1860 = vst [vmem:[%s206 + $0x19d0] sm:$0xff] %v1859
                %v1861 = vld [vmem:[%s205 + $0x31d8] sm:$0xff]
                %1862 = vst [vmem:[%s206 + $0x19d8] sm:$0xff] %v1861
                %v1863 = vld [vmem:[%s205 + $0x31e0] sm:$0xff]
                %1864 = vst [vmem:[%s206 + $0x19e0] sm:$0xff] %v1863
                %v1865 = vld [vmem:[%s205 + $0x31e8] sm:$0xff]
                %1866 = vst [vmem:[%s206 + $0x19e8] sm:$0xff] %v1865
                %v1867 = vld [vmem:[%s205 + $0x31f0] sm:$0xff]
                %1868 = vst [vmem:[%s206 + $0x19f0] sm:$0xff] %v1867
                %v1869 = vld [vmem:[%s205 + $0x31f8] sm:$0xff]
                %1870 = vst [vmem:[%s206 + $0x19f8] sm:$0xff] %v1869
                %v1871 = vld [vmem:[%s205 + $0x3400] sm:$0xff]
                %1872 = vst [vmem:[%s206 + $0x1a00] sm:$0xff] %v1871
                %v1873 = vld [vmem:[%s205 + $0x3408] sm:$0xff]
                %1874 = vst [vmem:[%s206 + $0x1a08] sm:$0xff] %v1873
                %v1875 = vld [vmem:[%s205 + $0x3410] sm:$0xff]
                %1876 = vst [vmem:[%s206 + $0x1a10] sm:$0xff] %v1875
                %v1877 = vld [vmem:[%s205 + $0x3418] sm:$0xff]
                %1878 = vst [vmem:[%s206 + $0x1a18] sm:$0xff] %v1877
                %v1879 = vld [vmem:[%s205 + $0x3420] sm:$0xff]
                %1880 = vst [vmem:[%s206 + $0x1a20] sm:$0xff] %v1879
                %v1881 = vld [vmem:[%s205 + $0x3428] sm:$0xff]
                %1882 = vst [vmem:[%s206 + $0x1a28] sm:$0xff] %v1881
                %v1883 = vld [vmem:[%s205 + $0x3430] sm:$0xff]
                %1884 = vst [vmem:[%s206 + $0x1a30] sm:$0xff] %v1883
                %v1885 = vld [vmem:[%s205 + $0x3438] sm:$0xff]
                %1886 = vst [vmem:[%s206 + $0x1a38] sm:$0xff] %v1885
                %v1887 = vld [vmem:[%s205 + $0x3440] sm:$0xff]
                %1888 = vst [vmem:[%s206 + $0x1a40] sm:$0xff] %v1887
                %v1889 = vld [vmem:[%s205 + $0x3448] sm:$0xff]
                %1890 = vst [vmem:[%s206 + $0x1a48] sm:$0xff] %v1889
                %v1891 = vld [vmem:[%s205 + $0x3450] sm:$0xff]
                %1892 = vst [vmem:[%s206 + $0x1a50] sm:$0xff] %v1891
                %v1893 = vld [vmem:[%s205 + $0x3458] sm:$0xff]
                %1894 = vst [vmem:[%s206 + $0x1a58] sm:$0xff] %v1893
                %v1895 = vld [vmem:[%s205 + $0x3460] sm:$0xff]
                %1896 = vst [vmem:[%s206 + $0x1a60] sm:$0xff] %v1895
                %v1897 = vld [vmem:[%s205 + $0x3468] sm:$0xff]
                %1898 = vst [vmem:[%s206 + $0x1a68] sm:$0xff] %v1897
                %v1899 = vld [vmem:[%s205 + $0x3470] sm:$0xff]
                %1900 = vst [vmem:[%s206 + $0x1a70] sm:$0xff] %v1899
                %v1901 = vld [vmem:[%s205 + $0x3478] sm:$0xff]
                %1902 = vst [vmem:[%s206 + $0x1a78] sm:$0xff] %v1901
                %v1903 = vld [vmem:[%s205 + $0x3480] sm:$0xff]
                %1904 = vst [vmem:[%s206 + $0x1a80] sm:$0xff] %v1903
                %v1905 = vld [vmem:[%s205 + $0x3488] sm:$0xff]
                %1906 = vst [vmem:[%s206 + $0x1a88] sm:$0xff] %v1905
                %v1907 = vld [vmem:[%s205 + $0x3490] sm:$0xff]
                %1908 = vst [vmem:[%s206 + $0x1a90] sm:$0xff] %v1907
                %v1909 = vld [vmem:[%s205 + $0x3498] sm:$0xff]
                %1910 = vst [vmem:[%s206 + $0x1a98] sm:$0xff] %v1909
                %v1911 = vld [vmem:[%s205 + $0x34a0] sm:$0xff]
                %1912 = vst [vmem:[%s206 + $0x1aa0] sm:$0xff] %v1911
                %v1913 = vld [vmem:[%s205 + $0x34a8] sm:$0xff]
                %1914 = vst [vmem:[%s206 + $0x1aa8] sm:$0xff] %v1913
                %v1915 = vld [vmem:[%s205 + $0x34b0] sm:$0xff]
                %1916 = vst [vmem:[%s206 + $0x1ab0] sm:$0xff] %v1915
                %v1917 = vld [vmem:[%s205 + $0x34b8] sm:$0xff]
                %1918 = vst [vmem:[%s206 + $0x1ab8] sm:$0xff] %v1917
                %v1919 = vld [vmem:[%s205 + $0x34c0] sm:$0xff]
                %1920 = vst [vmem:[%s206 + $0x1ac0] sm:$0xff] %v1919
                %v1921 = vld [vmem:[%s205 + $0x34c8] sm:$0xff]
                %1922 = vst [vmem:[%s206 + $0x1ac8] sm:$0xff] %v1921
                %v1923 = vld [vmem:[%s205 + $0x34d0] sm:$0xff]
                %1924 = vst [vmem:[%s206 + $0x1ad0] sm:$0xff] %v1923
                %v1925 = vld [vmem:[%s205 + $0x34d8] sm:$0xff]
                %1926 = vst [vmem:[%s206 + $0x1ad8] sm:$0xff] %v1925
                %v1927 = vld [vmem:[%s205 + $0x34e0] sm:$0xff]
                %1928 = vst [vmem:[%s206 + $0x1ae0] sm:$0xff] %v1927
                %v1929 = vld [vmem:[%s205 + $0x34e8] sm:$0xff]
                %1930 = vst [vmem:[%s206 + $0x1ae8] sm:$0xff] %v1929
                %v1931 = vld [vmem:[%s205 + $0x34f0] sm:$0xff]
                %1932 = vst [vmem:[%s206 + $0x1af0] sm:$0xff] %v1931
                %v1933 = vld [vmem:[%s205 + $0x34f8] sm:$0xff]
                %1934 = vst [vmem:[%s206 + $0x1af8] sm:$0xff] %v1933
                %v1935 = vld [vmem:[%s205 + $0x3500] sm:$0xff]
                %1936 = vst [vmem:[%s206 + $0x1b00] sm:$0xff] %v1935
                %v1937 = vld [vmem:[%s205 + $0x3508] sm:$0xff]
                %1938 = vst [vmem:[%s206 + $0x1b08] sm:$0xff] %v1937
                %v1939 = vld [vmem:[%s205 + $0x3510] sm:$0xff]
                %1940 = vst [vmem:[%s206 + $0x1b10] sm:$0xff] %v1939
                %v1941 = vld [vmem:[%s205 + $0x3518] sm:$0xff]
                %1942 = vst [vmem:[%s206 + $0x1b18] sm:$0xff] %v1941
                %v1943 = vld [vmem:[%s205 + $0x3520] sm:$0xff]
                %1944 = vst [vmem:[%s206 + $0x1b20] sm:$0xff] %v1943
                %v1945 = vld [vmem:[%s205 + $0x3528] sm:$0xff]
                %1946 = vst [vmem:[%s206 + $0x1b28] sm:$0xff] %v1945
                %v1947 = vld [vmem:[%s205 + $0x3530] sm:$0xff]
                %1948 = vst [vmem:[%s206 + $0x1b30] sm:$0xff] %v1947
                %v1949 = vld [vmem:[%s205 + $0x3538] sm:$0xff]
                %1950 = vst [vmem:[%s206 + $0x1b38] sm:$0xff] %v1949
                %v1951 = vld [vmem:[%s205 + $0x3540] sm:$0xff]
                %1952 = vst [vmem:[%s206 + $0x1b40] sm:$0xff] %v1951
                %v1953 = vld [vmem:[%s205 + $0x3548] sm:$0xff]
                %1954 = vst [vmem:[%s206 + $0x1b48] sm:$0xff] %v1953
                %v1955 = vld [vmem:[%s205 + $0x3550] sm:$0xff]
                %1956 = vst [vmem:[%s206 + $0x1b50] sm:$0xff] %v1955
                %v1957 = vld [vmem:[%s205 + $0x3558] sm:$0xff]
                %1958 = vst [vmem:[%s206 + $0x1b58] sm:$0xff] %v1957
                %v1959 = vld [vmem:[%s205 + $0x3560] sm:$0xff]
                %1960 = vst [vmem:[%s206 + $0x1b60] sm:$0xff] %v1959
                %v1961 = vld [vmem:[%s205 + $0x3568] sm:$0xff]
                %1962 = vst [vmem:[%s206 + $0x1b68] sm:$0xff] %v1961
                %v1963 = vld [vmem:[%s205 + $0x3570] sm:$0xff]
                %1964 = vst [vmem:[%s206 + $0x1b70] sm:$0xff] %v1963
                %v1965 = vld [vmem:[%s205 + $0x3578] sm:$0xff]
                %1966 = vst [vmem:[%s206 + $0x1b78] sm:$0xff] %v1965
                %v1967 = vld [vmem:[%s205 + $0x3580] sm:$0xff]
                %1968 = vst [vmem:[%s206 + $0x1b80] sm:$0xff] %v1967
                %v1969 = vld [vmem:[%s205 + $0x3588] sm:$0xff]
                %1970 = vst [vmem:[%s206 + $0x1b88] sm:$0xff] %v1969
                %v1971 = vld [vmem:[%s205 + $0x3590] sm:$0xff]
                %1972 = vst [vmem:[%s206 + $0x1b90] sm:$0xff] %v1971
                %v1973 = vld [vmem:[%s205 + $0x3598] sm:$0xff]
                %1974 = vst [vmem:[%s206 + $0x1b98] sm:$0xff] %v1973
                %v1975 = vld [vmem:[%s205 + $0x35a0] sm:$0xff]
                %1976 = vst [vmem:[%s206 + $0x1ba0] sm:$0xff] %v1975
                %v1977 = vld [vmem:[%s205 + $0x35a8] sm:$0xff]
                %1978 = vst [vmem:[%s206 + $0x1ba8] sm:$0xff] %v1977
                %v1979 = vld [vmem:[%s205 + $0x35b0] sm:$0xff]
                %1980 = vst [vmem:[%s206 + $0x1bb0] sm:$0xff] %v1979
                %v1981 = vld [vmem:[%s205 + $0x35b8] sm:$0xff]
                %1982 = vst [vmem:[%s206 + $0x1bb8] sm:$0xff] %v1981
                %v1983 = vld [vmem:[%s205 + $0x35c0] sm:$0xff]
                %1984 = vst [vmem:[%s206 + $0x1bc0] sm:$0xff] %v1983
                %v1985 = vld [vmem:[%s205 + $0x35c8] sm:$0xff]
                %1986 = vst [vmem:[%s206 + $0x1bc8] sm:$0xff] %v1985
                %v1987 = vld [vmem:[%s205 + $0x35d0] sm:$0xff]
                %1988 = vst [vmem:[%s206 + $0x1bd0] sm:$0xff] %v1987
                %v1989 = vld [vmem:[%s205 + $0x35d8] sm:$0xff]
                %1990 = vst [vmem:[%s206 + $0x1bd8] sm:$0xff] %v1989
                %v1991 = vld [vmem:[%s205 + $0x35e0] sm:$0xff]
                %1992 = vst [vmem:[%s206 + $0x1be0] sm:$0xff] %v1991
                %v1993 = vld [vmem:[%s205 + $0x35e8] sm:$0xff]
                %1994 = vst [vmem:[%s206 + $0x1be8] sm:$0xff] %v1993
                %v1995 = vld [vmem:[%s205 + $0x35f0] sm:$0xff]
                %1996 = vst [vmem:[%s206 + $0x1bf0] sm:$0xff] %v1995
                %v1997 = vld [vmem:[%s205 + $0x35f8] sm:$0xff]
                %1998 = vst [vmem:[%s206 + $0x1bf8] sm:$0xff] %v1997
                %v1999 = vld [vmem:[%s205 + $0x3800] sm:$0xff]
                %2000 = vst [vmem:[%s206 + $0x1c00] sm:$0xff] %v1999
                %v2001 = vld [vmem:[%s205 + $0x3808] sm:$0xff]
                %2002 = vst [vmem:[%s206 + $0x1c08] sm:$0xff] %v2001
                %v2003 = vld [vmem:[%s205 + $0x3810] sm:$0xff]
                %2004 = vst [vmem:[%s206 + $0x1c10] sm:$0xff] %v2003
                %v2005 = vld [vmem:[%s205 + $0x3818] sm:$0xff]
                %2006 = vst [vmem:[%s206 + $0x1c18] sm:$0xff] %v2005
                %v2007 = vld [vmem:[%s205 + $0x3820] sm:$0xff]
                %2008 = vst [vmem:[%s206 + $0x1c20] sm:$0xff] %v2007
                %v2009 = vld [vmem:[%s205 + $0x3828] sm:$0xff]
                %2010 = vst [vmem:[%s206 + $0x1c28] sm:$0xff] %v2009
                %v2011 = vld [vmem:[%s205 + $0x3830] sm:$0xff]
                %2012 = vst [vmem:[%s206 + $0x1c30] sm:$0xff] %v2011
                %v2013 = vld [vmem:[%s205 + $0x3838] sm:$0xff]
                %2014 = vst [vmem:[%s206 + $0x1c38] sm:$0xff] %v2013
                %v2015 = vld [vmem:[%s205 + $0x3840] sm:$0xff]
                %2016 = vst [vmem:[%s206 + $0x1c40] sm:$0xff] %v2015
                %v2017 = vld [vmem:[%s205 + $0x3848] sm:$0xff]
                %2018 = vst [vmem:[%s206 + $0x1c48] sm:$0xff] %v2017
                %v2019 = vld [vmem:[%s205 + $0x3850] sm:$0xff]
                %2020 = vst [vmem:[%s206 + $0x1c50] sm:$0xff] %v2019
                %v2021 = vld [vmem:[%s205 + $0x3858] sm:$0xff]
                %2022 = vst [vmem:[%s206 + $0x1c58] sm:$0xff] %v2021
                %v2023 = vld [vmem:[%s205 + $0x3860] sm:$0xff]
                %2024 = vst [vmem:[%s206 + $0x1c60] sm:$0xff] %v2023
                %v2025 = vld [vmem:[%s205 + $0x3868] sm:$0xff]
                %2026 = vst [vmem:[%s206 + $0x1c68] sm:$0xff] %v2025
                %v2027 = vld [vmem:[%s205 + $0x3870] sm:$0xff]
                %2028 = vst [vmem:[%s206 + $0x1c70] sm:$0xff] %v2027
                %v2029 = vld [vmem:[%s205 + $0x3878] sm:$0xff]
                %2030 = vst [vmem:[%s206 + $0x1c78] sm:$0xff] %v2029
                %v2031 = vld [vmem:[%s205 + $0x3880] sm:$0xff]
                %2032 = vst [vmem:[%s206 + $0x1c80] sm:$0xff] %v2031
                %v2033 = vld [vmem:[%s205 + $0x3888] sm:$0xff]
                %2034 = vst [vmem:[%s206 + $0x1c88] sm:$0xff] %v2033
                %v2035 = vld [vmem:[%s205 + $0x3890] sm:$0xff]
                %2036 = vst [vmem:[%s206 + $0x1c90] sm:$0xff] %v2035
                %v2037 = vld [vmem:[%s205 + $0x3898] sm:$0xff]
                %2038 = vst [vmem:[%s206 + $0x1c98] sm:$0xff] %v2037
                %v2039 = vld [vmem:[%s205 + $0x38a0] sm:$0xff]
                %2040 = vst [vmem:[%s206 + $0x1ca0] sm:$0xff] %v2039
                %v2041 = vld [vmem:[%s205 + $0x38a8] sm:$0xff]
                %2042 = vst [vmem:[%s206 + $0x1ca8] sm:$0xff] %v2041
                %v2043 = vld [vmem:[%s205 + $0x38b0] sm:$0xff]
                %2044 = vst [vmem:[%s206 + $0x1cb0] sm:$0xff] %v2043
                %v2045 = vld [vmem:[%s205 + $0x38b8] sm:$0xff]
                %2046 = vst [vmem:[%s206 + $0x1cb8] sm:$0xff] %v2045
                %v2047 = vld [vmem:[%s205 + $0x38c0] sm:$0xff]
                %2048 = vst [vmem:[%s206 + $0x1cc0] sm:$0xff] %v2047
                %v2049 = vld [vmem:[%s205 + $0x38c8] sm:$0xff]
                %2050 = vst [vmem:[%s206 + $0x1cc8] sm:$0xff] %v2049
                %v2051 = vld [vmem:[%s205 + $0x38d0] sm:$0xff]
                %2052 = vst [vmem:[%s206 + $0x1cd0] sm:$0xff] %v2051
                %v2053 = vld [vmem:[%s205 + $0x38d8] sm:$0xff]
                %2054 = vst [vmem:[%s206 + $0x1cd8] sm:$0xff] %v2053
                %v2055 = vld [vmem:[%s205 + $0x38e0] sm:$0xff]
                %2056 = vst [vmem:[%s206 + $0x1ce0] sm:$0xff] %v2055
                %v2057 = vld [vmem:[%s205 + $0x38e8] sm:$0xff]
                %2058 = vst [vmem:[%s206 + $0x1ce8] sm:$0xff] %v2057
                %v2059 = vld [vmem:[%s205 + $0x38f0] sm:$0xff]
                %2060 = vst [vmem:[%s206 + $0x1cf0] sm:$0xff] %v2059
                %v2061 = vld [vmem:[%s205 + $0x38f8] sm:$0xff]
                %2062 = vst [vmem:[%s206 + $0x1cf8] sm:$0xff] %v2061
                %v2063 = vld [vmem:[%s205 + $0x3900] sm:$0xff]
                %2064 = vst [vmem:[%s206 + $0x1d00] sm:$0xff] %v2063
                %v2065 = vld [vmem:[%s205 + $0x3908] sm:$0xff]
                %2066 = vst [vmem:[%s206 + $0x1d08] sm:$0xff] %v2065
                %v2067 = vld [vmem:[%s205 + $0x3910] sm:$0xff]
                %2068 = vst [vmem:[%s206 + $0x1d10] sm:$0xff] %v2067
                %v2069 = vld [vmem:[%s205 + $0x3918] sm:$0xff]
                %2070 = vst [vmem:[%s206 + $0x1d18] sm:$0xff] %v2069
                %v2071 = vld [vmem:[%s205 + $0x3920] sm:$0xff]
                %2072 = vst [vmem:[%s206 + $0x1d20] sm:$0xff] %v2071
                %v2073 = vld [vmem:[%s205 + $0x3928] sm:$0xff]
                %2074 = vst [vmem:[%s206 + $0x1d28] sm:$0xff] %v2073
                %v2075 = vld [vmem:[%s205 + $0x3930] sm:$0xff]
                %2076 = vst [vmem:[%s206 + $0x1d30] sm:$0xff] %v2075
                %v2077 = vld [vmem:[%s205 + $0x3938] sm:$0xff]
                %2078 = vst [vmem:[%s206 + $0x1d38] sm:$0xff] %v2077
                %v2079 = vld [vmem:[%s205 + $0x3940] sm:$0xff]
                %2080 = vst [vmem:[%s206 + $0x1d40] sm:$0xff] %v2079
                %v2081 = vld [vmem:[%s205 + $0x3948] sm:$0xff]
                %2082 = vst [vmem:[%s206 + $0x1d48] sm:$0xff] %v2081
                %v2083 = vld [vmem:[%s205 + $0x3950] sm:$0xff]
                %2084 = vst [vmem:[%s206 + $0x1d50] sm:$0xff] %v2083
                %v2085 = vld [vmem:[%s205 + $0x3958] sm:$0xff]
                %2086 = vst [vmem:[%s206 + $0x1d58] sm:$0xff] %v2085
                %v2087 = vld [vmem:[%s205 + $0x3960] sm:$0xff]
                %2088 = vst [vmem:[%s206 + $0x1d60] sm:$0xff] %v2087
                %v2089 = vld [vmem:[%s205 + $0x3968] sm:$0xff]
                %2090 = vst [vmem:[%s206 + $0x1d68] sm:$0xff] %v2089
                %v2091 = vld [vmem:[%s205 + $0x3970] sm:$0xff]
                %2092 = vst [vmem:[%s206 + $0x1d70] sm:$0xff] %v2091
                %v2093 = vld [vmem:[%s205 + $0x3978] sm:$0xff]
                %2094 = vst [vmem:[%s206 + $0x1d78] sm:$0xff] %v2093
                %v2095 = vld [vmem:[%s205 + $0x3980] sm:$0xff]
                %2096 = vst [vmem:[%s206 + $0x1d80] sm:$0xff] %v2095
                %v2097 = vld [vmem:[%s205 + $0x3988] sm:$0xff]
                %2098 = vst [vmem:[%s206 + $0x1d88] sm:$0xff] %v2097
                %v2099 = vld [vmem:[%s205 + $0x3990] sm:$0xff]
                %2100 = vst [vmem:[%s206 + $0x1d90] sm:$0xff] %v2099
                %v2101 = vld [vmem:[%s205 + $0x3998] sm:$0xff]
                %2102 = vst [vmem:[%s206 + $0x1d98] sm:$0xff] %v2101
                %v2103 = vld [vmem:[%s205 + $0x39a0] sm:$0xff]
                %2104 = vst [vmem:[%s206 + $0x1da0] sm:$0xff] %v2103
                %v2105 = vld [vmem:[%s205 + $0x39a8] sm:$0xff]
                %2106 = vst [vmem:[%s206 + $0x1da8] sm:$0xff] %v2105
                %v2107 = vld [vmem:[%s205 + $0x39b0] sm:$0xff]
                %2108 = vst [vmem:[%s206 + $0x1db0] sm:$0xff] %v2107
                %v2109 = vld [vmem:[%s205 + $0x39b8] sm:$0xff]
                %2110 = vst [vmem:[%s206 + $0x1db8] sm:$0xff] %v2109
                %v2111 = vld [vmem:[%s205 + $0x39c0] sm:$0xff]
                %2112 = vst [vmem:[%s206 + $0x1dc0] sm:$0xff] %v2111
                %v2113 = vld [vmem:[%s205 + $0x39c8] sm:$0xff]
                %2114 = vst [vmem:[%s206 + $0x1dc8] sm:$0xff] %v2113
                %v2115 = vld [vmem:[%s205 + $0x39d0] sm:$0xff]
                %2116 = vst [vmem:[%s206 + $0x1dd0] sm:$0xff] %v2115
                %v2117 = vld [vmem:[%s205 + $0x39d8] sm:$0xff]
                %2118 = vst [vmem:[%s206 + $0x1dd8] sm:$0xff] %v2117
                %v2119 = vld [vmem:[%s205 + $0x39e0] sm:$0xff]
                %2120 = vst [vmem:[%s206 + $0x1de0] sm:$0xff] %v2119
                %v2121 = vld [vmem:[%s205 + $0x39e8] sm:$0xff]
                %2122 = vst [vmem:[%s206 + $0x1de8] sm:$0xff] %v2121
                %v2123 = vld [vmem:[%s205 + $0x39f0] sm:$0xff]
                %2124 = vst [vmem:[%s206 + $0x1df0] sm:$0xff] %v2123
                %v2125 = vld [vmem:[%s205 + $0x39f8] sm:$0xff]
                %2126 = vst [vmem:[%s206 + $0x1df8] sm:$0xff] %v2125
                %v2127 = vld [vmem:[%s205 + $0x3c00] sm:$0xff]
                %2128 = vst [vmem:[%s206 + $0x1e00] sm:$0xff] %v2127
                %v2129 = vld [vmem:[%s205 + $0x3c08] sm:$0xff]
                %2130 = vst [vmem:[%s206 + $0x1e08] sm:$0xff] %v2129
                %v2131 = vld [vmem:[%s205 + $0x3c10] sm:$0xff]
                %2132 = vst [vmem:[%s206 + $0x1e10] sm:$0xff] %v2131
                %v2133 = vld [vmem:[%s205 + $0x3c18] sm:$0xff]
                %2134 = vst [vmem:[%s206 + $0x1e18] sm:$0xff] %v2133
                %v2135 = vld [vmem:[%s205 + $0x3c20] sm:$0xff]
                %2136 = vst [vmem:[%s206 + $0x1e20] sm:$0xff] %v2135
                %v2137 = vld [vmem:[%s205 + $0x3c28] sm:$0xff]
                %2138 = vst [vmem:[%s206 + $0x1e28] sm:$0xff] %v2137
                %v2139 = vld [vmem:[%s205 + $0x3c30] sm:$0xff]
                %2140 = vst [vmem:[%s206 + $0x1e30] sm:$0xff] %v2139
                %v2141 = vld [vmem:[%s205 + $0x3c38] sm:$0xff]
                %2142 = vst [vmem:[%s206 + $0x1e38] sm:$0xff] %v2141
                %v2143 = vld [vmem:[%s205 + $0x3c40] sm:$0xff]
                %2144 = vst [vmem:[%s206 + $0x1e40] sm:$0xff] %v2143
                %v2145 = vld [vmem:[%s205 + $0x3c48] sm:$0xff]
                %2146 = vst [vmem:[%s206 + $0x1e48] sm:$0xff] %v2145
                %v2147 = vld [vmem:[%s205 + $0x3c50] sm:$0xff]
                %2148 = vst [vmem:[%s206 + $0x1e50] sm:$0xff] %v2147
                %v2149 = vld [vmem:[%s205 + $0x3c58] sm:$0xff]
                %2150 = vst [vmem:[%s206 + $0x1e58] sm:$0xff] %v2149
                %v2151 = vld [vmem:[%s205 + $0x3c60] sm:$0xff]
                %2152 = vst [vmem:[%s206 + $0x1e60] sm:$0xff] %v2151
                %v2153 = vld [vmem:[%s205 + $0x3c68] sm:$0xff]
                %2154 = vst [vmem:[%s206 + $0x1e68] sm:$0xff] %v2153
                %v2155 = vld [vmem:[%s205 + $0x3c70] sm:$0xff]
                %2156 = vst [vmem:[%s206 + $0x1e70] sm:$0xff] %v2155
                %v2157 = vld [vmem:[%s205 + $0x3c78] sm:$0xff]
                %2158 = vst [vmem:[%s206 + $0x1e78] sm:$0xff] %v2157
                %v2159 = vld [vmem:[%s205 + $0x3c80] sm:$0xff]
                %2160 = vst [vmem:[%s206 + $0x1e80] sm:$0xff] %v2159
                %v2161 = vld [vmem:[%s205 + $0x3c88] sm:$0xff]
                %2162 = vst [vmem:[%s206 + $0x1e88] sm:$0xff] %v2161
                %v2163 = vld [vmem:[%s205 + $0x3c90] sm:$0xff]
                %2164 = vst [vmem:[%s206 + $0x1e90] sm:$0xff] %v2163
                %v2165 = vld [vmem:[%s205 + $0x3c98] sm:$0xff]
                %2166 = vst [vmem:[%s206 + $0x1e98] sm:$0xff] %v2165
                %v2167 = vld [vmem:[%s205 + $0x3ca0] sm:$0xff]
                %2168 = vst [vmem:[%s206 + $0x1ea0] sm:$0xff] %v2167
                %v2169 = vld [vmem:[%s205 + $0x3ca8] sm:$0xff]
                %2170 = vst [vmem:[%s206 + $0x1ea8] sm:$0xff] %v2169
                %v2171 = vld [vmem:[%s205 + $0x3cb0] sm:$0xff]
                %2172 = vst [vmem:[%s206 + $0x1eb0] sm:$0xff] %v2171
                %v2173 = vld [vmem:[%s205 + $0x3cb8] sm:$0xff]
                %2174 = vst [vmem:[%s206 + $0x1eb8] sm:$0xff] %v2173
                %v2175 = vld [vmem:[%s205 + $0x3cc0] sm:$0xff]
                %2176 = vst [vmem:[%s206 + $0x1ec0] sm:$0xff] %v2175
                %v2177 = vld [vmem:[%s205 + $0x3cc8] sm:$0xff]
                %2178 = vst [vmem:[%s206 + $0x1ec8] sm:$0xff] %v2177
                %v2179 = vld [vmem:[%s205 + $0x3cd0] sm:$0xff]
                %2180 = vst [vmem:[%s206 + $0x1ed0] sm:$0xff] %v2179
                %v2181 = vld [vmem:[%s205 + $0x3cd8] sm:$0xff]
                %2182 = vst [vmem:[%s206 + $0x1ed8] sm:$0xff] %v2181
                %v2183 = vld [vmem:[%s205 + $0x3ce0] sm:$0xff]
                %2184 = vst [vmem:[%s206 + $0x1ee0] sm:$0xff] %v2183
                %v2185 = vld [vmem:[%s205 + $0x3ce8] sm:$0xff]
                %2186 = vst [vmem:[%s206 + $0x1ee8] sm:$0xff] %v2185
                %v2187 = vld [vmem:[%s205 + $0x3cf0] sm:$0xff]
                %2188 = vst [vmem:[%s206 + $0x1ef0] sm:$0xff] %v2187
                %v2189 = vld [vmem:[%s205 + $0x3cf8] sm:$0xff]
                %2190 = vst [vmem:[%s206 + $0x1ef8] sm:$0xff] %v2189
                %v2191 = vld [vmem:[%s205 + $0x3d00] sm:$0xff]
                %2192 = vst [vmem:[%s206 + $0x1f00] sm:$0xff] %v2191
                %v2193 = vld [vmem:[%s205 + $0x3d08] sm:$0xff]
                %2194 = vst [vmem:[%s206 + $0x1f08] sm:$0xff] %v2193
                %v2195 = vld [vmem:[%s205 + $0x3d10] sm:$0xff]
                %2196 = vst [vmem:[%s206 + $0x1f10] sm:$0xff] %v2195
                %v2197 = vld [vmem:[%s205 + $0x3d18] sm:$0xff]
                %2198 = vst [vmem:[%s206 + $0x1f18] sm:$0xff] %v2197
                %v2199 = vld [vmem:[%s205 + $0x3d20] sm:$0xff]
                %2200 = vst [vmem:[%s206 + $0x1f20] sm:$0xff] %v2199
                %v2201 = vld [vmem:[%s205 + $0x3d28] sm:$0xff]
                %2202 = vst [vmem:[%s206 + $0x1f28] sm:$0xff] %v2201
                %v2203 = vld [vmem:[%s205 + $0x3d30] sm:$0xff]
                %2204 = vst [vmem:[%s206 + $0x1f30] sm:$0xff] %v2203
                %v2205 = vld [vmem:[%s205 + $0x3d38] sm:$0xff]
                %2206 = vst [vmem:[%s206 + $0x1f38] sm:$0xff] %v2205
                %v2207 = vld [vmem:[%s205 + $0x3d40] sm:$0xff]
                %2208 = vst [vmem:[%s206 + $0x1f40] sm:$0xff] %v2207
                %v2209 = vld [vmem:[%s205 + $0x3d48] sm:$0xff]
                %2210 = vst [vmem:[%s206 + $0x1f48] sm:$0xff] %v2209
                %v2211 = vld [vmem:[%s205 + $0x3d50] sm:$0xff]
                %2212 = vst [vmem:[%s206 + $0x1f50] sm:$0xff] %v2211
                %v2213 = vld [vmem:[%s205 + $0x3d58] sm:$0xff]
                %2214 = vst [vmem:[%s206 + $0x1f58] sm:$0xff] %v2213
                %v2215 = vld [vmem:[%s205 + $0x3d60] sm:$0xff]
                %2216 = vst [vmem:[%s206 + $0x1f60] sm:$0xff] %v2215
                %v2217 = vld [vmem:[%s205 + $0x3d68] sm:$0xff]
                %2218 = vst [vmem:[%s206 + $0x1f68] sm:$0xff] %v2217
                %v2219 = vld [vmem:[%s205 + $0x3d70] sm:$0xff]
                %2220 = vst [vmem:[%s206 + $0x1f70] sm:$0xff] %v2219
                %v2221 = vld [vmem:[%s205 + $0x3d78] sm:$0xff]
                %2222 = vst [vmem:[%s206 + $0x1f78] sm:$0xff] %v2221
                %v2223 = vld [vmem:[%s205 + $0x3d80] sm:$0xff]
                %2224 = vst [vmem:[%s206 + $0x1f80] sm:$0xff] %v2223
                %v2225 = vld [vmem:[%s205 + $0x3d88] sm:$0xff]
                %2226 = vst [vmem:[%s206 + $0x1f88] sm:$0xff] %v2225
                %v2227 = vld [vmem:[%s205 + $0x3d90] sm:$0xff]
                %2228 = vst [vmem:[%s206 + $0x1f90] sm:$0xff] %v2227
                %v2229 = vld [vmem:[%s205 + $0x3d98] sm:$0xff]
                %2230 = vst [vmem:[%s206 + $0x1f98] sm:$0xff] %v2229
                %v2231 = vld [vmem:[%s205 + $0x3da0] sm:$0xff]
                %2232 = vst [vmem:[%s206 + $0x1fa0] sm:$0xff] %v2231
                %v2233 = vld [vmem:[%s205 + $0x3da8] sm:$0xff]
                %2234 = vst [vmem:[%s206 + $0x1fa8] sm:$0xff] %v2233
                %v2235 = vld [vmem:[%s205 + $0x3db0] sm:$0xff]
                %2236 = vst [vmem:[%s206 + $0x1fb0] sm:$0xff] %v2235
                %v2237 = vld [vmem:[%s205 + $0x3db8] sm:$0xff]
                %2238 = vst [vmem:[%s206 + $0x1fb8] sm:$0xff] %v2237
                %v2239 = vld [vmem:[%s205 + $0x3dc0] sm:$0xff]
                %2240 = vst [vmem:[%s206 + $0x1fc0] sm:$0xff] %v2239
                %v2241 = vld [vmem:[%s205 + $0x3dc8] sm:$0xff]
                %2242 = vst [vmem:[%s206 + $0x1fc8] sm:$0xff] %v2241
                %v2243 = vld [vmem:[%s205 + $0x3dd0] sm:$0xff]
                %2244 = vst [vmem:[%s206 + $0x1fd0] sm:$0xff] %v2243
                %v2245 = vld [vmem:[%s205 + $0x3dd8] sm:$0xff]
                %2246 = vst [vmem:[%s206 + $0x1fd8] sm:$0xff] %v2245
                %v2247 = vld [vmem:[%s205 + $0x3de0] sm:$0xff]
                %2248 = vst [vmem:[%s206 + $0x1fe0] sm:$0xff] %v2247
                %v2249 = vld [vmem:[%s205 + $0x3de8] sm:$0xff]
                %2250 = vst [vmem:[%s206 + $0x1fe8] sm:$0xff] %v2249
                %v2251 = vld [vmem:[%s205 + $0x3df0] sm:$0xff]
                %2252 = vst [vmem:[%s206 + $0x1ff0] sm:$0xff] %v2251
                %v2253 = vld [vmem:[%s205 + $0x3df8] sm:$0xff]
                %2254 = vst [vmem:[%s206 + $0x1ff8] sm:$0xff] %v2253
              $region49: #{anime_cnn_forward.5} parent=43 // loop_footer
                %s204 = sadd.s32 1, %s200
              $region50: #{anime_cnn_forward.5} parent=43 // loop_footer_branch
                %199 = sbr.rel target = $region46
              $region51: #{anime_cnn_forward.5} parent=43 // loop_exit
                _
            $region44: #{anime_cnn_forward.5} parent=39 // pred_fallthru
              _
            // Predicated region
            $region52: #{anime_cnn_forward.5} parent=39 // pred_check
              _
            $region53: #{anime_cnn_forward.5} parent=39 // pred_check_branch
              %2256 = sbr.rel target = $region55
            $region54: #{anime_cnn_forward.5} parent=39 // pred_region
              _
            $region55: #{anime_cnn_forward.5} parent=39 // pred_fallthru
              _
          $region40: #{anime_cnn_forward.5} parent=35 // pred_fallthru
            _
          %2257 = vnop
        $region36: #{anime_cnn_forward.5} parent=27 // pred_fallthru
          _
      $region28: #{anime_cnn_forward.5} parent=5 // pred_fallthru
        _
      %p2258 = scmp.le.s32.totalorder 1, %s12
      %p2259 = scmp.lt.s32.totalorder %s12, 3
      %p2260 = pnand %p2258, %p2259
      %p2261 = pneg %p2260
      // Predicated region
      $region56: #{anime_cnn_forward.5} parent=5 // pred_check
        _
      $region57: #{anime_cnn_forward.5} parent=5 // pred_check_branch
        %2263 = sbr.rel (%p2260) target = $region59
      $region58: #{anime_cnn_forward.5} parent=5 // pred_region
        %s2264 = ssub.s32 %s12, 1
        %s2265 = sand.u32 %s51, 1
        %s2266 = sand.u32 %s51, 1
        %s2267 = smul.addr %s2266, 8192
        %s2268 = scalar_lea.vmem [#allocation3], %s2267
        // Predicated region
        $region60: #{anime_cnn_forward.5} parent=58 // pred_check
          %p2269 = pneg %p64
        $region61: #{anime_cnn_forward.5} parent=58 // pred_check_branch
          %2271 = sbr.rel (%p2269) target = $region63
        $region62: #{anime_cnn_forward.5} parent=58 // pred_region
          _
        $region63: #{anime_cnn_forward.5} parent=58 // pred_fallthru
          _
        %s2272 = smul.u32 64, %s17
        %p2273 = scmp.lt.s32.totalorder %s2272, 127
        %s2274 = scalar_select %p2273, %s2272, 127
        %s2275 = smul.addr %s2274, 2
        %s2276 = scalar_lea.vmem %s0, %s2275
        %p2277 = pneg %p38
        %p2278 = pneg %p35
        %s2279 = sand.u32 %s51, 1
        %s2280 = sand.u32 %s51, 1
        %s2281 = smul.addr %s2280, 8192
        %s2282 = scalar_lea.vmem [#allocation3], %s2281
        %p2283 = pneg %p64
        %p2284 = pneg %p61
        %p2285 = pneg %p85
        %p2286 = pneg %p82
        %p2287 = pneg %p106
        %p2288 = pneg %p103
        %p2289 = pneg %p127
        %p2290 = pneg %p124
        %p2291 = pneg %p148
        %p2292 = pneg %p145
        %s2293 = smul.u32 64, %s17
        %p2294 = scmp.lt.s32.totalorder %s2293, 127
        %s2295 = scalar_select %p2294, %s2293, 127
        %s2296 = smul.addr %s2295, 2
        %s2297 = scalar_lea.vmem %s0, %s2296
        %s2298 = smul.u32 64, %s17
        %s2299 = smul.u32 64, %s17
        %p2300 = scmp.eq.s32.totalorder %s17, 0
        // Predicated region
        $region64: #{anime_cnn_forward.5} parent=58 // pred_check
          %p2301 = pneg %p2300
        $region65: #{anime_cnn_forward.5} parent=58 // pred_check_branch
          %2303 = sbr.rel (%p2301) target = $region67
        $region66: #{anime_cnn_forward.5} parent=58 // pred_region
          %2304 = vst [vmem:[#allocation2] sm:$0x3] 0.0
        $region67: #{anime_cnn_forward.5} parent=58 // pred_fallthru
          _
        %v2305 = vld [vmem:[#allocation2] sm:$0x3]
        %v2306 = vld [vmem:[%s2297] sm:$0xff]
        %v2307 = vld [vmem:[%s2297 + $0x8] sm:$0xff]
        %v2308 = vld [vmem:[%s2297 + $0x10] sm:$0xff]
        %v2309 = vld [vmem:[%s2297 + $0x18] sm:$0xff]
        %v2310 = vld [vmem:[%s2297 + $0x20] sm:$0xff]
        %v2311 = vld [vmem:[%s2297 + $0x28] sm:$0xff]
        %v2312 = vld [vmem:[%s2297 + $0x30] sm:$0xff]
        %v2313 = vld [vmem:[%s2297 + $0x38] sm:$0xff]
        %v2314 = vld [vmem:[%s2297 + $0x40] sm:$0xff]
        %v2315 = vld [vmem:[%s2297 + $0x48] sm:$0xff]
        %v2316 = vld [vmem:[%s2297 + $0x50] sm:$0xff]
        %v2317 = vld [vmem:[%s2297 + $0x58] sm:$0xff]
        %v2318 = vld [vmem:[%s2297 + $0x60] sm:$0xff]
        %v2319 = vld [vmem:[%s2297 + $0x68] sm:$0xff]
        %v2320 = vld [vmem:[%s2297 + $0x70] sm:$0xff]
        %v2321 = vld [vmem:[%s2297 + $0x78] sm:$0xff]
        %v2322 = vld [vmem:[%s2268] sm:$0xff]
        %v2323 = vld [vmem:[%s2268 + $0x8] sm:$0xff]
        %v2324 = vld [vmem:[%s2268 + $0x10] sm:$0xff]
        %v2325 = vld [vmem:[%s2268 + $0x18] sm:$0xff]
        %v2326 = vld [vmem:[%s2268 + $0x20] sm:$0xff]
        %v2327 = vld [vmem:[%s2268 + $0x28] sm:$0xff]
        %v2328 = vld [vmem:[%s2268 + $0x30] sm:$0xff]
        %v2329 = vld [vmem:[%s2268 + $0x38] sm:$0xff]
        %v2330 = vld [vmem:[%s2268 + $0x40] sm:$0xff]
        %v2331 = vld [vmem:[%s2268 + $0x48] sm:$0xff]
        %v2332 = vld [vmem:[%s2268 + $0x50] sm:$0xff]
        %v2333 = vld [vmem:[%s2268 + $0x58] sm:$0xff]
        %v2334 = vld [vmem:[%s2268 + $0x60] sm:$0xff]
        %v2335 = vld [vmem:[%s2268 + $0x68] sm:$0xff]
        %v2336 = vld [vmem:[%s2268 + $0x70] sm:$0xff]
        %v2337 = vld [vmem:[%s2268 + $0x78] sm:$0xff]
        %v2338 = vld [vmem:[%s2268 + $0x80] sm:$0xff]
        %v2339 = vld [vmem:[%s2268 + $0x88] sm:$0xff]
        %v2340 = vld [vmem:[%s2268 + $0x90] sm:$0xff]
        %v2341 = vld [vmem:[%s2268 + $0x98] sm:$0xff]
        %v2342 = vld [vmem:[%s2268 + $0xa0] sm:$0xff]
        %v2343 = vld [vmem:[%s2268 + $0xa8] sm:$0xff]
        %v2344 = vld [vmem:[%s2268 + $0xb0] sm:$0xff]
        %v2345 = vld [vmem:[%s2268 + $0xb8] sm:$0xff]
        %v2346 = vld [vmem:[%s2268 + $0xc0] sm:$0xff]
        %v2347 = vld [vmem:[%s2268 + $0xc8] sm:$0xff]
        %v2348 = vld [vmem:[%s2268 + $0xd0] sm:$0xff]
        %v2349 = vld [vmem:[%s2268 + $0xd8] sm:$0xff]
        %v2350 = vld [vmem:[%s2268 + $0xe0] sm:$0xff]
        %v2351 = vld [vmem:[%s2268 + $0xe8] sm:$0xff]
        %v2352 = vld [vmem:[%s2268 + $0xf0] sm:$0xff]
        %v2353 = vld [vmem:[%s2268 + $0xf8] sm:$0xff]
        %v2354 = vld [vmem:[%s2268 + $0x100] sm:$0xff]
        %v2355 = vld [vmem:[%s2268 + $0x108] sm:$0xff]
        %v2356 = vld [vmem:[%s2268 + $0x110] sm:$0xff]
        %v2357 = vld [vmem:[%s2268 + $0x118] sm:$0xff]
        %v2358 = vld [vmem:[%s2268 + $0x120] sm:$0xff]
        %v2359 = vld [vmem:[%s2268 + $0x128] sm:$0xff]
        %v2360 = vld [vmem:[%s2268 + $0x130] sm:$0xff]
        %v2361 = vld [vmem:[%s2268 + $0x138] sm:$0xff]
        %v2362 = vld [vmem:[%s2268 + $0x140] sm:$0xff]
        %v2363 = vld [vmem:[%s2268 + $0x148] sm:$0xff]
        %v2364 = vld [vmem:[%s2268 + $0x150] sm:$0xff]
        %v2365 = vld [vmem:[%s2268 + $0x158] sm:$0xff]
        %v2366 = vld [vmem:[%s2268 + $0x160] sm:$0xff]
        %v2367 = vld [vmem:[%s2268 + $0x168] sm:$0xff]
        %v2368 = vld [vmem:[%s2268 + $0x170] sm:$0xff]
        %v2369 = vld [vmem:[%s2268 + $0x178] sm:$0xff]
        %v2370 = vld [vmem:[%s2268 + $0x180] sm:$0xff]
        %v2371 = vld [vmem:[%s2268 + $0x188] sm:$0xff]
        %v2372 = vld [vmem:[%s2268 + $0x190] sm:$0xff]
        %v2373 = vld [vmem:[%s2268 + $0x198] sm:$0xff]
        %v2374 = vld [vmem:[%s2268 + $0x1a0] sm:$0xff]
        %v2375 = vld [vmem:[%s2268 + $0x1a8] sm:$0xff]
        %v2376 = vld [vmem:[%s2268 + $0x1b0] sm:$0xff]
        %v2377 = vld [vmem:[%s2268 + $0x1b8] sm:$0xff]
        %v2378 = vld [vmem:[%s2268 + $0x1c0] sm:$0xff]
        %v2379 = vld [vmem:[%s2268 + $0x1c8] sm:$0xff]
        %v2380 = vld [vmem:[%s2268 + $0x1d0] sm:$0xff]
        %v2381 = vld [vmem:[%s2268 + $0x1d8] sm:$0xff]
        %v2382 = vld [vmem:[%s2268 + $0x1e0] sm:$0xff]
        %v2383 = vld [vmem:[%s2268 + $0x1e8] sm:$0xff]
        %v2384 = vld [vmem:[%s2268 + $0x1f0] sm:$0xff]
        %v2385 = vld [vmem:[%s2268 + $0x1f8] sm:$0xff]
        %v2386 = vld [vmem:[%s2268 + $0x200] sm:$0xff]
        %v2387 = vld [vmem:[%s2268 + $0x208] sm:$0xff]
        %v2388 = vld [vmem:[%s2268 + $0x210] sm:$0xff]
        %v2389 = vld [vmem:[%s2268 + $0x218] sm:$0xff]
        %v2390 = vld [vmem:[%s2268 + $0x220] sm:$0xff]
        %v2391 = vld [vmem:[%s2268 + $0x228] sm:$0xff]
        %v2392 = vld [vmem:[%s2268 + $0x230] sm:$0xff]
        %v2393 = vld [vmem:[%s2268 + $0x238] sm:$0xff]
        %v2394 = vld [vmem:[%s2268 + $0x240] sm:$0xff]
        %v2395 = vld [vmem:[%s2268 + $0x248] sm:$0xff]
        %v2396 = vld [vmem:[%s2268 + $0x250] sm:$0xff]
        %v2397 = vld [vmem:[%s2268 + $0x258] sm:$0xff]
        %v2398 = vld [vmem:[%s2268 + $0x260] sm:$0xff]
        %v2399 = vld [vmem:[%s2268 + $0x268] sm:$0xff]
        %v2400 = vld [vmem:[%s2268 + $0x270] sm:$0xff]
        %v2401 = vld [vmem:[%s2268 + $0x278] sm:$0xff]
        %v2402 = vld [vmem:[%s2268 + $0x280] sm:$0xff]
        %v2403 = vld [vmem:[%s2268 + $0x288] sm:$0xff]
        %v2404 = vld [vmem:[%s2268 + $0x290] sm:$0xff]
        %v2405 = vld [vmem:[%s2268 + $0x298] sm:$0xff]
        %v2406 = vld [vmem:[%s2268 + $0x2a0] sm:$0xff]
        %v2407 = vld [vmem:[%s2268 + $0x2a8] sm:$0xff]
        %v2408 = vld [vmem:[%s2268 + $0x2b0] sm:$0xff]
        %v2409 = vld [vmem:[%s2268 + $0x2b8] sm:$0xff]
        %v2410 = vld [vmem:[%s2268 + $0x2c0] sm:$0xff]
        %v2411 = vld [vmem:[%s2268 + $0x2c8] sm:$0xff]
        %v2412 = vld [vmem:[%s2268 + $0x2d0] sm:$0xff]
        %v2413 = vld [vmem:[%s2268 + $0x2d8] sm:$0xff]
        %v2414 = vld [vmem:[%s2268 + $0x2e0] sm:$0xff]
        %v2415 = vld [vmem:[%s2268 + $0x2e8] sm:$0xff]
        %v2416 = vld [vmem:[%s2268 + $0x2f0] sm:$0xff]
        %v2417 = vld [vmem:[%s2268 + $0x2f8] sm:$0xff]
        %v2418 = vld [vmem:[%s2268 + $0x300] sm:$0xff]
        %v2419 = vld [vmem:[%s2268 + $0x308] sm:$0xff]
        %v2420 = vld [vmem:[%s2268 + $0x310] sm:$0xff]
        %v2421 = vld [vmem:[%s2268 + $0x318] sm:$0xff]
        %v2422 = vld [vmem:[%s2268 + $0x320] sm:$0xff]
        %v2423 = vld [vmem:[%s2268 + $0x328] sm:$0xff]
        %v2424 = vld [vmem:[%s2268 + $0x330] sm:$0xff]
        %v2425 = vld [vmem:[%s2268 + $0x338] sm:$0xff]
        %v2426 = vld [vmem:[%s2268 + $0x340] sm:$0xff]
        %v2427 = vld [vmem:[%s2268 + $0x348] sm:$0xff]
        %v2428 = vld [vmem:[%s2268 + $0x350] sm:$0xff]
        %v2429 = vld [vmem:[%s2268 + $0x358] sm:$0xff]
        %v2430 = vld [vmem:[%s2268 + $0x360] sm:$0xff]
        %v2431 = vld [vmem:[%s2268 + $0x368] sm:$0xff]
        %v2432 = vld [vmem:[%s2268 + $0x370] sm:$0xff]
        %v2433 = vld [vmem:[%s2268 + $0x378] sm:$0xff]
        %v2434 = vld [vmem:[%s2268 + $0x380] sm:$0xff]
        %v2435 = vld [vmem:[%s2268 + $0x388] sm:$0xff]
        %v2436 = vld [vmem:[%s2268 + $0x390] sm:$0xff]
        %v2437 = vld [vmem:[%s2268 + $0x398] sm:$0xff]
        %v2438 = vld [vmem:[%s2268 + $0x3a0] sm:$0xff]
        %v2439 = vld [vmem:[%s2268 + $0x3a8] sm:$0xff]
        %v2440 = vld [vmem:[%s2268 + $0x3b0] sm:$0xff]
        %v2441 = vld [vmem:[%s2268 + $0x3b8] sm:$0xff]
        %v2442 = vld [vmem:[%s2268 + $0x3c0] sm:$0xff]
        %v2443 = vld [vmem:[%s2268 + $0x3c8] sm:$0xff]
        %v2444 = vld [vmem:[%s2268 + $0x3d0] sm:$0xff]
        %v2445 = vld [vmem:[%s2268 + $0x3d8] sm:$0xff]
        %v2446 = vld [vmem:[%s2268 + $0x3e0] sm:$0xff]
        %v2447 = vld [vmem:[%s2268 + $0x3e8] sm:$0xff]
        %v2448 = vld [vmem:[%s2268 + $0x3f0] sm:$0xff]
        %v2449 = vld [vmem:[%s2268 + $0x3f8] sm:$0xff]
        %v2450 = vld [vmem:[%s2268 + $0x400] sm:$0xff]
        %v2451 = vld [vmem:[%s2268 + $0x408] sm:$0xff]
        %v2452 = vld [vmem:[%s2268 + $0x410] sm:$0xff]
        %v2453 = vld [vmem:[%s2268 + $0x418] sm:$0xff]
        %v2454 = vld [vmem:[%s2268 + $0x420] sm:$0xff]
        %v2455 = vld [vmem:[%s2268 + $0x428] sm:$0xff]
        %v2456 = vld [vmem:[%s2268 + $0x430] sm:$0xff]
        %v2457 = vld [vmem:[%s2268 + $0x438] sm:$0xff]
        %v2458 = vld [vmem:[%s2268 + $0x440] sm:$0xff]
        %v2459 = vld [vmem:[%s2268 + $0x448] sm:$0xff]
        %v2460 = vld [vmem:[%s2268 + $0x450] sm:$0xff]
        %v2461 = vld [vmem:[%s2268 + $0x458] sm:$0xff]
        %v2462 = vld [vmem:[%s2268 + $0x460] sm:$0xff]
        %v2463 = vld [vmem:[%s2268 + $0x468] sm:$0xff]
        %v2464 = vld [vmem:[%s2268 + $0x470] sm:$0xff]
        %v2465 = vld [vmem:[%s2268 + $0x478] sm:$0xff]
        %v2466 = vld [vmem:[%s2268 + $0x480] sm:$0xff]
        %v2467 = vld [vmem:[%s2268 + $0x488] sm:$0xff]
        %v2468 = vld [vmem:[%s2268 + $0x490] sm:$0xff]
        %v2469 = vld [vmem:[%s2268 + $0x498] sm:$0xff]
        %v2470 = vld [vmem:[%s2268 + $0x4a0] sm:$0xff]
        %v2471 = vld [vmem:[%s2268 + $0x4a8] sm:$0xff]
        %v2472 = vld [vmem:[%s2268 + $0x4b0] sm:$0xff]
        %v2473 = vld [vmem:[%s2268 + $0x4b8] sm:$0xff]
        %v2474 = vld [vmem:[%s2268 + $0x4c0] sm:$0xff]
        %v2475 = vld [vmem:[%s2268 + $0x4c8] sm:$0xff]
        %v2476 = vld [vmem:[%s2268 + $0x4d0] sm:$0xff]
        %v2477 = vld [vmem:[%s2268 + $0x4d8] sm:$0xff]
        %v2478 = vld [vmem:[%s2268 + $0x4e0] sm:$0xff]
        %v2479 = vld [vmem:[%s2268 + $0x4e8] sm:$0xff]
        %v2480 = vld [vmem:[%s2268 + $0x4f0] sm:$0xff]
        %v2481 = vld [vmem:[%s2268 + $0x4f8] sm:$0xff]
        %v2482 = vld [vmem:[%s2268 + $0x500] sm:$0xff]
        %v2483 = vld [vmem:[%s2268 + $0x508] sm:$0xff]
        %v2484 = vld [vmem:[%s2268 + $0x510] sm:$0xff]
        %v2485 = vld [vmem:[%s2268 + $0x518] sm:$0xff]
        %v2486 = vld [vmem:[%s2268 + $0x520] sm:$0xff]
        %v2487 = vld [vmem:[%s2268 + $0x528] sm:$0xff]
        %v2488 = vld [vmem:[%s2268 + $0x530] sm:$0xff]
        %v2489 = vld [vmem:[%s2268 + $0x538] sm:$0xff]
        %v2490 = vld [vmem:[%s2268 + $0x540] sm:$0xff]
        %v2491 = vld [vmem:[%s2268 + $0x548] sm:$0xff]
        %v2492 = vld [vmem:[%s2268 + $0x550] sm:$0xff]
        %v2493 = vld [vmem:[%s2268 + $0x558] sm:$0xff]
        %v2494 = vld [vmem:[%s2268 + $0x560] sm:$0xff]
        %v2495 = vld [vmem:[%s2268 + $0x568] sm:$0xff]
        %v2496 = vld [vmem:[%s2268 + $0x570] sm:$0xff]
        %v2497 = vld [vmem:[%s2268 + $0x578] sm:$0xff]
        %v2498 = vld [vmem:[%s2268 + $0x580] sm:$0xff]
        %v2499 = vld [vmem:[%s2268 + $0x588] sm:$0xff]
        %v2500 = vld [vmem:[%s2268 + $0x590] sm:$0xff]
        %v2501 = vld [vmem:[%s2268 + $0x598] sm:$0xff]
        %v2502 = vld [vmem:[%s2268 + $0x5a0] sm:$0xff]
        %v2503 = vld [vmem:[%s2268 + $0x5a8] sm:$0xff]
        %v2504 = vld [vmem:[%s2268 + $0x5b0] sm:$0xff]
        %v2505 = vld [vmem:[%s2268 + $0x5b8] sm:$0xff]
        %v2506 = vld [vmem:[%s2268 + $0x5c0] sm:$0xff]
        %v2507 = vld [vmem:[%s2268 + $0x5c8] sm:$0xff]
        %v2508 = vld [vmem:[%s2268 + $0x5d0] sm:$0xff]
        %v2509 = vld [vmem:[%s2268 + $0x5d8] sm:$0xff]
        %v2510 = vld [vmem:[%s2268 + $0x5e0] sm:$0xff]
        %v2511 = vld [vmem:[%s2268 + $0x5e8] sm:$0xff]
        %v2512 = vld [vmem:[%s2268 + $0x5f0] sm:$0xff]
        %v2513 = vld [vmem:[%s2268 + $0x5f8] sm:$0xff]
        %v2514 = vld [vmem:[%s2268 + $0x600] sm:$0xff]
        %v2515 = vld [vmem:[%s2268 + $0x608] sm:$0xff]
        %v2516 = vld [vmem:[%s2268 + $0x610] sm:$0xff]
        %v2517 = vld [vmem:[%s2268 + $0x618] sm:$0xff]
        %v2518 = vld [vmem:[%s2268 + $0x620] sm:$0xff]
        %v2519 = vld [vmem:[%s2268 + $0x628] sm:$0xff]
        %v2520 = vld [vmem:[%s2268 + $0x630] sm:$0xff]
        %v2521 = vld [vmem:[%s2268 + $0x638] sm:$0xff]
        %v2522 = vld [vmem:[%s2268 + $0x640] sm:$0xff]
        %v2523 = vld [vmem:[%s2268 + $0x648] sm:$0xff]
        %v2524 = vld [vmem:[%s2268 + $0x650] sm:$0xff]
        %v2525 = vld [vmem:[%s2268 + $0x658] sm:$0xff]
        %v2526 = vld [vmem:[%s2268 + $0x660] sm:$0xff]
        %v2527 = vld [vmem:[%s2268 + $0x668] sm:$0xff]
        %v2528 = vld [vmem:[%s2268 + $0x670] sm:$0xff]
        %v2529 = vld [vmem:[%s2268 + $0x678] sm:$0xff]
        %v2530 = vld [vmem:[%s2268 + $0x680] sm:$0xff]
        %v2531 = vld [vmem:[%s2268 + $0x688] sm:$0xff]
        %v2532 = vld [vmem:[%s2268 + $0x690] sm:$0xff]
        %v2533 = vld [vmem:[%s2268 + $0x698] sm:$0xff]
        %v2534 = vld [vmem:[%s2268 + $0x6a0] sm:$0xff]
        %v2535 = vld [vmem:[%s2268 + $0x6a8] sm:$0xff]
        %v2536 = vld [vmem:[%s2268 + $0x6b0] sm:$0xff]
        %v2537 = vld [vmem:[%s2268 + $0x6b8] sm:$0xff]
        %v2538 = vld [vmem:[%s2268 + $0x6c0] sm:$0xff]
        %v2539 = vld [vmem:[%s2268 + $0x6c8] sm:$0xff]
        %v2540 = vld [vmem:[%s2268 + $0x6d0] sm:$0xff]
        %v2541 = vld [vmem:[%s2268 + $0x6d8] sm:$0xff]
        %v2542 = vld [vmem:[%s2268 + $0x6e0] sm:$0xff]
        %v2543 = vld [vmem:[%s2268 + $0x6e8] sm:$0xff]
        %v2544 = vld [vmem:[%s2268 + $0x6f0] sm:$0xff]
        %v2545 = vld [vmem:[%s2268 + $0x6f8] sm:$0xff]
        %v2546 = vld [vmem:[%s2268 + $0x700] sm:$0xff]
        %v2547 = vld [vmem:[%s2268 + $0x708] sm:$0xff]
        %v2548 = vld [vmem:[%s2268 + $0x710] sm:$0xff]
        %v2549 = vld [vmem:[%s2268 + $0x718] sm:$0xff]
        %v2550 = vld [vmem:[%s2268 + $0x720] sm:$0xff]
        %v2551 = vld [vmem:[%s2268 + $0x728] sm:$0xff]
        %v2552 = vld [vmem:[%s2268 + $0x730] sm:$0xff]
        %v2553 = vld [vmem:[%s2268 + $0x738] sm:$0xff]
        %v2554 = vld [vmem:[%s2268 + $0x740] sm:$0xff]
        %v2555 = vld [vmem:[%s2268 + $0x748] sm:$0xff]
        %v2556 = vld [vmem:[%s2268 + $0x750] sm:$0xff]
        %v2557 = vld [vmem:[%s2268 + $0x758] sm:$0xff]
        %v2558 = vld [vmem:[%s2268 + $0x760] sm:$0xff]
        %v2559 = vld [vmem:[%s2268 + $0x768] sm:$0xff]
        %v2560 = vld [vmem:[%s2268 + $0x770] sm:$0xff]
        %v2561 = vld [vmem:[%s2268 + $0x778] sm:$0xff]
        %v2562 = vld [vmem:[%s2268 + $0x780] sm:$0xff]
        %v2563 = vld [vmem:[%s2268 + $0x788] sm:$0xff]
        %v2564 = vld [vmem:[%s2268 + $0x790] sm:$0xff]
        %v2565 = vld [vmem:[%s2268 + $0x798] sm:$0xff]
        %v2566 = vld [vmem:[%s2268 + $0x7a0] sm:$0xff]
        %v2567 = vld [vmem:[%s2268 + $0x7a8] sm:$0xff]
        %v2568 = vld [vmem:[%s2268 + $0x7b0] sm:$0xff]
        %v2569 = vld [vmem:[%s2268 + $0x7b8] sm:$0xff]
        %v2570 = vld [vmem:[%s2268 + $0x7c0] sm:$0xff]
        %v2571 = vld [vmem:[%s2268 + $0x7c8] sm:$0xff]
        %v2572 = vld [vmem:[%s2268 + $0x7d0] sm:$0xff]
        %v2573 = vld [vmem:[%s2268 + $0x7d8] sm:$0xff]
        %v2574 = vld [vmem:[%s2268 + $0x7e0] sm:$0xff]
        %v2575 = vld [vmem:[%s2268 + $0x7e8] sm:$0xff]
        %v2576 = vld [vmem:[%s2268 + $0x7f0] sm:$0xff]
        %v2577 = vld [vmem:[%s2268 + $0x7f8] sm:$0xff]
        %v2578 = vld [vmem:[%s2268 + $0x800] sm:$0xff]
        %v2579 = vld [vmem:[%s2268 + $0x808] sm:$0xff]
        %v2580 = vld [vmem:[%s2268 + $0x810] sm:$0xff]
        %v2581 = vld [vmem:[%s2268 + $0x818] sm:$0xff]
        %v2582 = vld [vmem:[%s2268 + $0x820] sm:$0xff]
        %v2583 = vld [vmem:[%s2268 + $0x828] sm:$0xff]
        %v2584 = vld [vmem:[%s2268 + $0x830] sm:$0xff]
        %v2585 = vld [vmem:[%s2268 + $0x838] sm:$0xff]
        %v2586 = vld [vmem:[%s2268 + $0x840] sm:$0xff]
        %v2587 = vld [vmem:[%s2268 + $0x848] sm:$0xff]
        %v2588 = vld [vmem:[%s2268 + $0x850] sm:$0xff]
        %v2589 = vld [vmem:[%s2268 + $0x858] sm:$0xff]
        %v2590 = vld [vmem:[%s2268 + $0x860] sm:$0xff]
        %v2591 = vld [vmem:[%s2268 + $0x868] sm:$0xff]
        %v2592 = vld [vmem:[%s2268 + $0x870] sm:$0xff]
        %v2593 = vld [vmem:[%s2268 + $0x878] sm:$0xff]
        %v2594 = vld [vmem:[%s2268 + $0x880] sm:$0xff]
        %v2595 = vld [vmem:[%s2268 + $0x888] sm:$0xff]
        %v2596 = vld [vmem:[%s2268 + $0x890] sm:$0xff]
        %v2597 = vld [vmem:[%s2268 + $0x898] sm:$0xff]
        %v2598 = vld [vmem:[%s2268 + $0x8a0] sm:$0xff]
        %v2599 = vld [vmem:[%s2268 + $0x8a8] sm:$0xff]
        %v2600 = vld [vmem:[%s2268 + $0x8b0] sm:$0xff]
        %v2601 = vld [vmem:[%s2268 + $0x8b8] sm:$0xff]
        %v2602 = vld [vmem:[%s2268 + $0x8c0] sm:$0xff]
        %v2603 = vld [vmem:[%s2268 + $0x8c8] sm:$0xff]
        %v2604 = vld [vmem:[%s2268 + $0x8d0] sm:$0xff]
        %v2605 = vld [vmem:[%s2268 + $0x8d8] sm:$0xff]
        %v2606 = vld [vmem:[%s2268 + $0x8e0] sm:$0xff]
        %v2607 = vld [vmem:[%s2268 + $0x8e8] sm:$0xff]
        %v2608 = vld [vmem:[%s2268 + $0x8f0] sm:$0xff]
        %v2609 = vld [vmem:[%s2268 + $0x8f8] sm:$0xff]
        %v2610 = vld [vmem:[%s2268 + $0x900] sm:$0xff]
        %v2611 = vld [vmem:[%s2268 + $0x908] sm:$0xff]
        %v2612 = vld [vmem:[%s2268 + $0x910] sm:$0xff]
        %v2613 = vld [vmem:[%s2268 + $0x918] sm:$0xff]
        %v2614 = vld [vmem:[%s2268 + $0x920] sm:$0xff]
        %v2615 = vld [vmem:[%s2268 + $0x928] sm:$0xff]
        %v2616 = vld [vmem:[%s2268 + $0x930] sm:$0xff]
        %v2617 = vld [vmem:[%s2268 + $0x938] sm:$0xff]
        %v2618 = vld [vmem:[%s2268 + $0x940] sm:$0xff]
        %v2619 = vld [vmem:[%s2268 + $0x948] sm:$0xff]
        %v2620 = vld [vmem:[%s2268 + $0x950] sm:$0xff]
        %v2621 = vld [vmem:[%s2268 + $0x958] sm:$0xff]
        %v2622 = vld [vmem:[%s2268 + $0x960] sm:$0xff]
        %v2623 = vld [vmem:[%s2268 + $0x968] sm:$0xff]
        %v2624 = vld [vmem:[%s2268 + $0x970] sm:$0xff]
        %v2625 = vld [vmem:[%s2268 + $0x978] sm:$0xff]
        %v2626 = vld [vmem:[%s2268 + $0x980] sm:$0xff]
        %v2627 = vld [vmem:[%s2268 + $0x988] sm:$0xff]
        %v2628 = vld [vmem:[%s2268 + $0x990] sm:$0xff]
        %v2629 = vld [vmem:[%s2268 + $0x998] sm:$0xff]
        %v2630 = vld [vmem:[%s2268 + $0x9a0] sm:$0xff]
        %v2631 = vld [vmem:[%s2268 + $0x9a8] sm:$0xff]
        %v2632 = vld [vmem:[%s2268 + $0x9b0] sm:$0xff]
        %v2633 = vld [vmem:[%s2268 + $0x9b8] sm:$0xff]
        %v2634 = vld [vmem:[%s2268 + $0x9c0] sm:$0xff]
        %v2635 = vld [vmem:[%s2268 + $0x9c8] sm:$0xff]
        %v2636 = vld [vmem:[%s2268 + $0x9d0] sm:$0xff]
        %v2637 = vld [vmem:[%s2268 + $0x9d8] sm:$0xff]
        %v2638 = vld [vmem:[%s2268 + $0x9e0] sm:$0xff]
        %v2639 = vld [vmem:[%s2268 + $0x9e8] sm:$0xff]
        %v2640 = vld [vmem:[%s2268 + $0x9f0] sm:$0xff]
        %v2641 = vld [vmem:[%s2268 + $0x9f8] sm:$0xff]
        %v2642 = vld [vmem:[%s2268 + $0xa00] sm:$0xff]
        %v2643 = vld [vmem:[%s2268 + $0xa08] sm:$0xff]
        %v2644 = vld [vmem:[%s2268 + $0xa10] sm:$0xff]
        %v2645 = vld [vmem:[%s2268 + $0xa18] sm:$0xff]
        %v2646 = vld [vmem:[%s2268 + $0xa20] sm:$0xff]
        %v2647 = vld [vmem:[%s2268 + $0xa28] sm:$0xff]
        %v2648 = vld [vmem:[%s2268 + $0xa30] sm:$0xff]
        %v2649 = vld [vmem:[%s2268 + $0xa38] sm:$0xff]
        %v2650 = vld [vmem:[%s2268 + $0xa40] sm:$0xff]
        %v2651 = vld [vmem:[%s2268 + $0xa48] sm:$0xff]
        %v2652 = vld [vmem:[%s2268 + $0xa50] sm:$0xff]
        %v2653 = vld [vmem:[%s2268 + $0xa58] sm:$0xff]
        %v2654 = vld [vmem:[%s2268 + $0xa60] sm:$0xff]
        %v2655 = vld [vmem:[%s2268 + $0xa68] sm:$0xff]
        %v2656 = vld [vmem:[%s2268 + $0xa70] sm:$0xff]
        %v2657 = vld [vmem:[%s2268 + $0xa78] sm:$0xff]
        %v2658 = vld [vmem:[%s2268 + $0xa80] sm:$0xff]
        %v2659 = vld [vmem:[%s2268 + $0xa88] sm:$0xff]
        %v2660 = vld [vmem:[%s2268 + $0xa90] sm:$0xff]
        %v2661 = vld [vmem:[%s2268 + $0xa98] sm:$0xff]
        %v2662 = vld [vmem:[%s2268 + $0xaa0] sm:$0xff]
        %v2663 = vld [vmem:[%s2268 + $0xaa8] sm:$0xff]
        %v2664 = vld [vmem:[%s2268 + $0xab0] sm:$0xff]
        %v2665 = vld [vmem:[%s2268 + $0xab8] sm:$0xff]
        %v2666 = vld [vmem:[%s2268 + $0xac0] sm:$0xff]
        %v2667 = vld [vmem:[%s2268 + $0xac8] sm:$0xff]
        %v2668 = vld [vmem:[%s2268 + $0xad0] sm:$0xff]
        %v2669 = vld [vmem:[%s2268 + $0xad8] sm:$0xff]
        %v2670 = vld [vmem:[%s2268 + $0xae0] sm:$0xff]
        %v2671 = vld [vmem:[%s2268 + $0xae8] sm:$0xff]
        %v2672 = vld [vmem:[%s2268 + $0xaf0] sm:$0xff]
        %v2673 = vld [vmem:[%s2268 + $0xaf8] sm:$0xff]
        %v2674 = vld [vmem:[%s2268 + $0xb00] sm:$0xff]
        %v2675 = vld [vmem:[%s2268 + $0xb08] sm:$0xff]
        %v2676 = vld [vmem:[%s2268 + $0xb10] sm:$0xff]
        %v2677 = vld [vmem:[%s2268 + $0xb18] sm:$0xff]
        %v2678 = vld [vmem:[%s2268 + $0xb20] sm:$0xff]
        %v2679 = vld [vmem:[%s2268 + $0xb28] sm:$0xff]
        %v2680 = vld [vmem:[%s2268 + $0xb30] sm:$0xff]
        %v2681 = vld [vmem:[%s2268 + $0xb38] sm:$0xff]
        %v2682 = vld [vmem:[%s2268 + $0xb40] sm:$0xff]
        %v2683 = vld [vmem:[%s2268 + $0xb48] sm:$0xff]
        %v2684 = vld [vmem:[%s2268 + $0xb50] sm:$0xff]
        %v2685 = vld [vmem:[%s2268 + $0xb58] sm:$0xff]
        %v2686 = vld [vmem:[%s2268 + $0xb60] sm:$0xff]
        %v2687 = vld [vmem:[%s2268 + $0xb68] sm:$0xff]
        %v2688 = vld [vmem:[%s2268 + $0xb70] sm:$0xff]
        %v2689 = vld [vmem:[%s2268 + $0xb78] sm:$0xff]
        %v2690 = vld [vmem:[%s2268 + $0xb80] sm:$0xff]
        %v2691 = vld [vmem:[%s2268 + $0xb88] sm:$0xff]
        %v2692 = vld [vmem:[%s2268 + $0xb90] sm:$0xff]
        %v2693 = vld [vmem:[%s2268 + $0xb98] sm:$0xff]
        %v2694 = vld [vmem:[%s2268 + $0xba0] sm:$0xff]
        %v2695 = vld [vmem:[%s2268 + $0xba8] sm:$0xff]
        %v2696 = vld [vmem:[%s2268 + $0xbb0] sm:$0xff]
        %v2697 = vld [vmem:[%s2268 + $0xbb8] sm:$0xff]
        %v2698 = vld [vmem:[%s2268 + $0xbc0] sm:$0xff]
        %v2699 = vld [vmem:[%s2268 + $0xbc8] sm:$0xff]
        %v2700 = vld [vmem:[%s2268 + $0xbd0] sm:$0xff]
        %v2701 = vld [vmem:[%s2268 + $0xbd8] sm:$0xff]
        %v2702 = vld [vmem:[%s2268 + $0xbe0] sm:$0xff]
        %v2703 = vld [vmem:[%s2268 + $0xbe8] sm:$0xff]
        %v2704 = vld [vmem:[%s2268 + $0xbf0] sm:$0xff]
        %v2705 = vld [vmem:[%s2268 + $0xbf8] sm:$0xff]
        %v2706 = vld [vmem:[%s2268 + $0xc00] sm:$0xff]
        %v2707 = vld [vmem:[%s2268 + $0xc08] sm:$0xff]
        %v2708 = vld [vmem:[%s2268 + $0xc10] sm:$0xff]
        %v2709 = vld [vmem:[%s2268 + $0xc18] sm:$0xff]
        %v2710 = vld [vmem:[%s2268 + $0xc20] sm:$0xff]
        %v2711 = vld [vmem:[%s2268 + $0xc28] sm:$0xff]
        %v2712 = vld [vmem:[%s2268 + $0xc30] sm:$0xff]
        %v2713 = vld [vmem:[%s2268 + $0xc38] sm:$0xff]
        %v2714 = vld [vmem:[%s2268 + $0xc40] sm:$0xff]
        %v2715 = vld [vmem:[%s2268 + $0xc48] sm:$0xff]
        %v2716 = vld [vmem:[%s2268 + $0xc50] sm:$0xff]
        %v2717 = vld [vmem:[%s2268 + $0xc58] sm:$0xff]
        %v2718 = vld [vmem:[%s2268 + $0xc60] sm:$0xff]
        %v2719 = vld [vmem:[%s2268 + $0xc68] sm:$0xff]
        %v2720 = vld [vmem:[%s2268 + $0xc70] sm:$0xff]
        %v2721 = vld [vmem:[%s2268 + $0xc78] sm:$0xff]
        %v2722 = vld [vmem:[%s2268 + $0xc80] sm:$0xff]
        %v2723 = vld [vmem:[%s2268 + $0xc88] sm:$0xff]
        %v2724 = vld [vmem:[%s2268 + $0xc90] sm:$0xff]
        %v2725 = vld [vmem:[%s2268 + $0xc98] sm:$0xff]
        %v2726 = vld [vmem:[%s2268 + $0xca0] sm:$0xff]
        %v2727 = vld [vmem:[%s2268 + $0xca8] sm:$0xff]
        %v2728 = vld [vmem:[%s2268 + $0xcb0] sm:$0xff]
        %v2729 = vld [vmem:[%s2268 + $0xcb8] sm:$0xff]
        %v2730 = vld [vmem:[%s2268 + $0xcc0] sm:$0xff]
        %v2731 = vld [vmem:[%s2268 + $0xcc8] sm:$0xff]
        %v2732 = vld [vmem:[%s2268 + $0xcd0] sm:$0xff]
        %v2733 = vld [vmem:[%s2268 + $0xcd8] sm:$0xff]
        %v2734 = vld [vmem:[%s2268 + $0xce0] sm:$0xff]
        %v2735 = vld [vmem:[%s2268 + $0xce8] sm:$0xff]
        %v2736 = vld [vmem:[%s2268 + $0xcf0] sm:$0xff]
        %v2737 = vld [vmem:[%s2268 + $0xcf8] sm:$0xff]
        %v2738 = vld [vmem:[%s2268 + $0xd00] sm:$0xff]
        %v2739 = vld [vmem:[%s2268 + $0xd08] sm:$0xff]
        %v2740 = vld [vmem:[%s2268 + $0xd10] sm:$0xff]
        %v2741 = vld [vmem:[%s2268 + $0xd18] sm:$0xff]
        %v2742 = vld [vmem:[%s2268 + $0xd20] sm:$0xff]
        %v2743 = vld [vmem:[%s2268 + $0xd28] sm:$0xff]
        %v2744 = vld [vmem:[%s2268 + $0xd30] sm:$0xff]
        %v2745 = vld [vmem:[%s2268 + $0xd38] sm:$0xff]
        %v2746 = vld [vmem:[%s2268 + $0xd40] sm:$0xff]
        %v2747 = vld [vmem:[%s2268 + $0xd48] sm:$0xff]
        %v2748 = vld [vmem:[%s2268 + $0xd50] sm:$0xff]
        %v2749 = vld [vmem:[%s2268 + $0xd58] sm:$0xff]
        %v2750 = vld [vmem:[%s2268 + $0xd60] sm:$0xff]
        %v2751 = vld [vmem:[%s2268 + $0xd68] sm:$0xff]
        %v2752 = vld [vmem:[%s2268 + $0xd70] sm:$0xff]
        %v2753 = vld [vmem:[%s2268 + $0xd78] sm:$0xff]
        %v2754 = vld [vmem:[%s2268 + $0xd80] sm:$0xff]
        %v2755 = vld [vmem:[%s2268 + $0xd88] sm:$0xff]
        %v2756 = vld [vmem:[%s2268 + $0xd90] sm:$0xff]
        %v2757 = vld [vmem:[%s2268 + $0xd98] sm:$0xff]
        %v2758 = vld [vmem:[%s2268 + $0xda0] sm:$0xff]
        %v2759 = vld [vmem:[%s2268 + $0xda8] sm:$0xff]
        %v2760 = vld [vmem:[%s2268 + $0xdb0] sm:$0xff]
        %v2761 = vld [vmem:[%s2268 + $0xdb8] sm:$0xff]
        %v2762 = vld [vmem:[%s2268 + $0xdc0] sm:$0xff]
        %v2763 = vld [vmem:[%s2268 + $0xdc8] sm:$0xff]
        %v2764 = vld [vmem:[%s2268 + $0xdd0] sm:$0xff]
        %v2765 = vld [vmem:[%s2268 + $0xdd8] sm:$0xff]
        %v2766 = vld [vmem:[%s2268 + $0xde0] sm:$0xff]
        %v2767 = vld [vmem:[%s2268 + $0xde8] sm:$0xff]
        %v2768 = vld [vmem:[%s2268 + $0xdf0] sm:$0xff]
        %v2769 = vld [vmem:[%s2268 + $0xdf8] sm:$0xff]
        %v2770 = vld [vmem:[%s2268 + $0xe00] sm:$0xff]
        %v2771 = vld [vmem:[%s2268 + $0xe08] sm:$0xff]
        %v2772 = vld [vmem:[%s2268 + $0xe10] sm:$0xff]
        %v2773 = vld [vmem:[%s2268 + $0xe18] sm:$0xff]
        %v2774 = vld [vmem:[%s2268 + $0xe20] sm:$0xff]
        %v2775 = vld [vmem:[%s2268 + $0xe28] sm:$0xff]
        %v2776 = vld [vmem:[%s2268 + $0xe30] sm:$0xff]
        %v2777 = vld [vmem:[%s2268 + $0xe38] sm:$0xff]
        %v2778 = vld [vmem:[%s2268 + $0xe40] sm:$0xff]
        %v2779 = vld [vmem:[%s2268 + $0xe48] sm:$0xff]
        %v2780 = vld [vmem:[%s2268 + $0xe50] sm:$0xff]
        %v2781 = vld [vmem:[%s2268 + $0xe58] sm:$0xff]
        %v2782 = vld [vmem:[%s2268 + $0xe60] sm:$0xff]
        %v2783 = vld [vmem:[%s2268 + $0xe68] sm:$0xff]
        %v2784 = vld [vmem:[%s2268 + $0xe70] sm:$0xff]
        %v2785 = vld [vmem:[%s2268 + $0xe78] sm:$0xff]
        %v2786 = vld [vmem:[%s2268 + $0xe80] sm:$0xff]
        %v2787 = vld [vmem:[%s2268 + $0xe88] sm:$0xff]
        %v2788 = vld [vmem:[%s2268 + $0xe90] sm:$0xff]
        %v2789 = vld [vmem:[%s2268 + $0xe98] sm:$0xff]
        %v2790 = vld [vmem:[%s2268 + $0xea0] sm:$0xff]
        %v2791 = vld [vmem:[%s2268 + $0xea8] sm:$0xff]
        %v2792 = vld [vmem:[%s2268 + $0xeb0] sm:$0xff]
        %v2793 = vld [vmem:[%s2268 + $0xeb8] sm:$0xff]
        %v2794 = vld [vmem:[%s2268 + $0xec0] sm:$0xff]
        %v2795 = vld [vmem:[%s2268 + $0xec8] sm:$0xff]
        %v2796 = vld [vmem:[%s2268 + $0xed0] sm:$0xff]
        %v2797 = vld [vmem:[%s2268 + $0xed8] sm:$0xff]
        %v2798 = vld [vmem:[%s2268 + $0xee0] sm:$0xff]
        %v2799 = vld [vmem:[%s2268 + $0xee8] sm:$0xff]
        %v2800 = vld [vmem:[%s2268 + $0xef0] sm:$0xff]
        %v2801 = vld [vmem:[%s2268 + $0xef8] sm:$0xff]
        %v2802 = vld [vmem:[%s2268 + $0xf00] sm:$0xff]
        %v2803 = vld [vmem:[%s2268 + $0xf08] sm:$0xff]
        %v2804 = vld [vmem:[%s2268 + $0xf10] sm:$0xff]
        %v2805 = vld [vmem:[%s2268 + $0xf18] sm:$0xff]
        %v2806 = vld [vmem:[%s2268 + $0xf20] sm:$0xff]
        %v2807 = vld [vmem:[%s2268 + $0xf28] sm:$0xff]
        %v2808 = vld [vmem:[%s2268 + $0xf30] sm:$0xff]
        %v2809 = vld [vmem:[%s2268 + $0xf38] sm:$0xff]
        %v2810 = vld [vmem:[%s2268 + $0xf40] sm:$0xff]
        %v2811 = vld [vmem:[%s2268 + $0xf48] sm:$0xff]
        %v2812 = vld [vmem:[%s2268 + $0xf50] sm:$0xff]
        %v2813 = vld [vmem:[%s2268 + $0xf58] sm:$0xff]
        %v2814 = vld [vmem:[%s2268 + $0xf60] sm:$0xff]
        %v2815 = vld [vmem:[%s2268 + $0xf68] sm:$0xff]
        %v2816 = vld [vmem:[%s2268 + $0xf70] sm:$0xff]
        %v2817 = vld [vmem:[%s2268 + $0xf78] sm:$0xff]
        %v2818 = vld [vmem:[%s2268 + $0xf80] sm:$0xff]
        %v2819 = vld [vmem:[%s2268 + $0xf88] sm:$0xff]
        %v2820 = vld [vmem:[%s2268 + $0xf90] sm:$0xff]
        %v2821 = vld [vmem:[%s2268 + $0xf98] sm:$0xff]
        %v2822 = vld [vmem:[%s2268 + $0xfa0] sm:$0xff]
        %v2823 = vld [vmem:[%s2268 + $0xfa8] sm:$0xff]
        %v2824 = vld [vmem:[%s2268 + $0xfb0] sm:$0xff]
        %v2825 = vld [vmem:[%s2268 + $0xfb8] sm:$0xff]
        %v2826 = vld [vmem:[%s2268 + $0xfc0] sm:$0xff]
        %v2827 = vld [vmem:[%s2268 + $0xfc8] sm:$0xff]
        %v2828 = vld [vmem:[%s2268 + $0xfd0] sm:$0xff]
        %v2829 = vld [vmem:[%s2268 + $0xfd8] sm:$0xff]
        %v2830 = vld [vmem:[%s2268 + $0xfe0] sm:$0xff]
        %v2831 = vld [vmem:[%s2268 + $0xfe8] sm:$0xff]
        %v2832 = vld [vmem:[%s2268 + $0xff0] sm:$0xff]
        %v2833 = vld [vmem:[%s2268 + $0xff8] sm:$0xff]
        %v2834 = vld [vmem:[%s2268 + $0x1000] sm:$0xff]
        %v2835 = vld [vmem:[%s2268 + $0x1008] sm:$0xff]
        %v2836 = vld [vmem:[%s2268 + $0x1010] sm:$0xff]
        %v2837 = vld [vmem:[%s2268 + $0x1018] sm:$0xff]
        %v2838 = vld [vmem:[%s2268 + $0x1020] sm:$0xff]
        %v2839 = vld [vmem:[%s2268 + $0x1028] sm:$0xff]
        %v2840 = vld [vmem:[%s2268 + $0x1030] sm:$0xff]
        %v2841 = vld [vmem:[%s2268 + $0x1038] sm:$0xff]
        %v2842 = vld [vmem:[%s2268 + $0x1040] sm:$0xff]
        %v2843 = vld [vmem:[%s2268 + $0x1048] sm:$0xff]
        %v2844 = vld [vmem:[%s2268 + $0x1050] sm:$0xff]
        %v2845 = vld [vmem:[%s2268 + $0x1058] sm:$0xff]
        %v2846 = vld [vmem:[%s2268 + $0x1060] sm:$0xff]
        %v2847 = vld [vmem:[%s2268 + $0x1068] sm:$0xff]
        %v2848 = vld [vmem:[%s2268 + $0x1070] sm:$0xff]
        %v2849 = vld [vmem:[%s2268 + $0x1078] sm:$0xff]
        %v2850 = vld [vmem:[%s2268 + $0x1080] sm:$0xff]
        %v2851 = vld [vmem:[%s2268 + $0x1088] sm:$0xff]
        %v2852 = vld [vmem:[%s2268 + $0x1090] sm:$0xff]
        %v2853 = vld [vmem:[%s2268 + $0x1098] sm:$0xff]
        %v2854 = vld [vmem:[%s2268 + $0x10a0] sm:$0xff]
        %v2855 = vld [vmem:[%s2268 + $0x10a8] sm:$0xff]
        %v2856 = vld [vmem:[%s2268 + $0x10b0] sm:$0xff]
        %v2857 = vld [vmem:[%s2268 + $0x10b8] sm:$0xff]
        %v2858 = vld [vmem:[%s2268 + $0x10c0] sm:$0xff]
        %v2859 = vld [vmem:[%s2268 + $0x10c8] sm:$0xff]
        %v2860 = vld [vmem:[%s2268 + $0x10d0] sm:$0xff]
        %v2861 = vld [vmem:[%s2268 + $0x10d8] sm:$0xff]
        %v2862 = vld [vmem:[%s2268 + $0x10e0] sm:$0xff]
        %v2863 = vld [vmem:[%s2268 + $0x10e8] sm:$0xff]
        %v2864 = vld [vmem:[%s2268 + $0x10f0] sm:$0xff]
        %v2865 = vld [vmem:[%s2268 + $0x10f8] sm:$0xff]
        %v2866 = vld [vmem:[%s2268 + $0x1100] sm:$0xff]
        %v2867 = vld [vmem:[%s2268 + $0x1108] sm:$0xff]
        %v2868 = vld [vmem:[%s2268 + $0x1110] sm:$0xff]
        %v2869 = vld [vmem:[%s2268 + $0x1118] sm:$0xff]
        %v2870 = vld [vmem:[%s2268 + $0x1120] sm:$0xff]
        %v2871 = vld [vmem:[%s2268 + $0x1128] sm:$0xff]
        %v2872 = vld [vmem:[%s2268 + $0x1130] sm:$0xff]
        %v2873 = vld [vmem:[%s2268 + $0x1138] sm:$0xff]
        %v2874 = vld [vmem:[%s2268 + $0x1140] sm:$0xff]
        %v2875 = vld [vmem:[%s2268 + $0x1148] sm:$0xff]
        %v2876 = vld [vmem:[%s2268 + $0x1150] sm:$0xff]
        %v2877 = vld [vmem:[%s2268 + $0x1158] sm:$0xff]
        %v2878 = vld [vmem:[%s2268 + $0x1160] sm:$0xff]
        %v2879 = vld [vmem:[%s2268 + $0x1168] sm:$0xff]
        %v2880 = vld [vmem:[%s2268 + $0x1170] sm:$0xff]
        %v2881 = vld [vmem:[%s2268 + $0x1178] sm:$0xff]
        %v2882 = vld [vmem:[%s2268 + $0x1180] sm:$0xff]
        %v2883 = vld [vmem:[%s2268 + $0x1188] sm:$0xff]
        %v2884 = vld [vmem:[%s2268 + $0x1190] sm:$0xff]
        %v2885 = vld [vmem:[%s2268 + $0x1198] sm:$0xff]
        %v2886 = vld [vmem:[%s2268 + $0x11a0] sm:$0xff]
        %v2887 = vld [vmem:[%s2268 + $0x11a8] sm:$0xff]
        %v2888 = vld [vmem:[%s2268 + $0x11b0] sm:$0xff]
        %v2889 = vld [vmem:[%s2268 + $0x11b8] sm:$0xff]
        %v2890 = vld [vmem:[%s2268 + $0x11c0] sm:$0xff]
        %v2891 = vld [vmem:[%s2268 + $0x11c8] sm:$0xff]
        %v2892 = vld [vmem:[%s2268 + $0x11d0] sm:$0xff]
        %v2893 = vld [vmem:[%s2268 + $0x11d8] sm:$0xff]
        %v2894 = vld [vmem:[%s2268 + $0x11e0] sm:$0xff]
        %v2895 = vld [vmem:[%s2268 + $0x11e8] sm:$0xff]
        %v2896 = vld [vmem:[%s2268 + $0x11f0] sm:$0xff]
        %v2897 = vld [vmem:[%s2268 + $0x11f8] sm:$0xff]
        %v2898 = vld [vmem:[%s2268 + $0x1200] sm:$0xff]
        %v2899 = vld [vmem:[%s2268 + $0x1208] sm:$0xff]
        %v2900 = vld [vmem:[%s2268 + $0x1210] sm:$0xff]
        %v2901 = vld [vmem:[%s2268 + $0x1218] sm:$0xff]
        %v2902 = vld [vmem:[%s2268 + $0x1220] sm:$0xff]
        %v2903 = vld [vmem:[%s2268 + $0x1228] sm:$0xff]
        %v2904 = vld [vmem:[%s2268 + $0x1230] sm:$0xff]
        %v2905 = vld [vmem:[%s2268 + $0x1238] sm:$0xff]
        %v2906 = vld [vmem:[%s2268 + $0x1240] sm:$0xff]
        %v2907 = vld [vmem:[%s2268 + $0x1248] sm:$0xff]
        %v2908 = vld [vmem:[%s2268 + $0x1250] sm:$0xff]
        %v2909 = vld [vmem:[%s2268 + $0x1258] sm:$0xff]
        %v2910 = vld [vmem:[%s2268 + $0x1260] sm:$0xff]
        %v2911 = vld [vmem:[%s2268 + $0x1268] sm:$0xff]
        %v2912 = vld [vmem:[%s2268 + $0x1270] sm:$0xff]
        %v2913 = vld [vmem:[%s2268 + $0x1278] sm:$0xff]
        %v2914 = vld [vmem:[%s2268 + $0x1280] sm:$0xff]
        %v2915 = vld [vmem:[%s2268 + $0x1288] sm:$0xff]
        %v2916 = vld [vmem:[%s2268 + $0x1290] sm:$0xff]
        %v2917 = vld [vmem:[%s2268 + $0x1298] sm:$0xff]
        %v2918 = vld [vmem:[%s2268 + $0x12a0] sm:$0xff]
        %v2919 = vld [vmem:[%s2268 + $0x12a8] sm:$0xff]
        %v2920 = vld [vmem:[%s2268 + $0x12b0] sm:$0xff]
        %v2921 = vld [vmem:[%s2268 + $0x12b8] sm:$0xff]
        %v2922 = vld [vmem:[%s2268 + $0x12c0] sm:$0xff]
        %v2923 = vld [vmem:[%s2268 + $0x12c8] sm:$0xff]
        %v2924 = vld [vmem:[%s2268 + $0x12d0] sm:$0xff]
        %v2925 = vld [vmem:[%s2268 + $0x12d8] sm:$0xff]
        %v2926 = vld [vmem:[%s2268 + $0x12e0] sm:$0xff]
        %v2927 = vld [vmem:[%s2268 + $0x12e8] sm:$0xff]
        %v2928 = vld [vmem:[%s2268 + $0x12f0] sm:$0xff]
        %v2929 = vld [vmem:[%s2268 + $0x12f8] sm:$0xff]
        %v2930 = vld [vmem:[%s2268 + $0x1300] sm:$0xff]
        %v2931 = vld [vmem:[%s2268 + $0x1308] sm:$0xff]
        %v2932 = vld [vmem:[%s2268 + $0x1310] sm:$0xff]
        %v2933 = vld [vmem:[%s2268 + $0x1318] sm:$0xff]
        %v2934 = vld [vmem:[%s2268 + $0x1320] sm:$0xff]
        %v2935 = vld [vmem:[%s2268 + $0x1328] sm:$0xff]
        %v2936 = vld [vmem:[%s2268 + $0x1330] sm:$0xff]
        %v2937 = vld [vmem:[%s2268 + $0x1338] sm:$0xff]
        %v2938 = vld [vmem:[%s2268 + $0x1340] sm:$0xff]
        %v2939 = vld [vmem:[%s2268 + $0x1348] sm:$0xff]
        %v2940 = vld [vmem:[%s2268 + $0x1350] sm:$0xff]
        %v2941 = vld [vmem:[%s2268 + $0x1358] sm:$0xff]
        %v2942 = vld [vmem:[%s2268 + $0x1360] sm:$0xff]
        %v2943 = vld [vmem:[%s2268 + $0x1368] sm:$0xff]
        %v2944 = vld [vmem:[%s2268 + $0x1370] sm:$0xff]
        %v2945 = vld [vmem:[%s2268 + $0x1378] sm:$0xff]
        %v2946 = vld [vmem:[%s2268 + $0x1380] sm:$0xff]
        %v2947 = vld [vmem:[%s2268 + $0x1388] sm:$0xff]
        %v2948 = vld [vmem:[%s2268 + $0x1390] sm:$0xff]
        %v2949 = vld [vmem:[%s2268 + $0x1398] sm:$0xff]
        %v2950 = vld [vmem:[%s2268 + $0x13a0] sm:$0xff]
        %v2951 = vld [vmem:[%s2268 + $0x13a8] sm:$0xff]
        %v2952 = vld [vmem:[%s2268 + $0x13b0] sm:$0xff]
        %v2953 = vld [vmem:[%s2268 + $0x13b8] sm:$0xff]
        %v2954 = vld [vmem:[%s2268 + $0x13c0] sm:$0xff]
        %v2955 = vld [vmem:[%s2268 + $0x13c8] sm:$0xff]
        %v2956 = vld [vmem:[%s2268 + $0x13d0] sm:$0xff]
        %v2957 = vld [vmem:[%s2268 + $0x13d8] sm:$0xff]
        %v2958 = vld [vmem:[%s2268 + $0x13e0] sm:$0xff]
        %v2959 = vld [vmem:[%s2268 + $0x13e8] sm:$0xff]
        %v2960 = vld [vmem:[%s2268 + $0x13f0] sm:$0xff]
        %v2961 = vld [vmem:[%s2268 + $0x13f8] sm:$0xff]
        %v2962 = vld [vmem:[%s2268 + $0x1400] sm:$0xff]
        %v2963 = vld [vmem:[%s2268 + $0x1408] sm:$0xff]
        %v2964 = vld [vmem:[%s2268 + $0x1410] sm:$0xff]
        %v2965 = vld [vmem:[%s2268 + $0x1418] sm:$0xff]
        %v2966 = vld [vmem:[%s2268 + $0x1420] sm:$0xff]
        %v2967 = vld [vmem:[%s2268 + $0x1428] sm:$0xff]
        %v2968 = vld [vmem:[%s2268 + $0x1430] sm:$0xff]
        %v2969 = vld [vmem:[%s2268 + $0x1438] sm:$0xff]
        %v2970 = vld [vmem:[%s2268 + $0x1440] sm:$0xff]
        %v2971 = vld [vmem:[%s2268 + $0x1448] sm:$0xff]
        %v2972 = vld [vmem:[%s2268 + $0x1450] sm:$0xff]
        %v2973 = vld [vmem:[%s2268 + $0x1458] sm:$0xff]
        %v2974 = vld [vmem:[%s2268 + $0x1460] sm:$0xff]
        %v2975 = vld [vmem:[%s2268 + $0x1468] sm:$0xff]
        %v2976 = vld [vmem:[%s2268 + $0x1470] sm:$0xff]
        %v2977 = vld [vmem:[%s2268 + $0x1478] sm:$0xff]
        %v2978 = vld [vmem:[%s2268 + $0x1480] sm:$0xff]
        %v2979 = vld [vmem:[%s2268 + $0x1488] sm:$0xff]
        %v2980 = vld [vmem:[%s2268 + $0x1490] sm:$0xff]
        %v2981 = vld [vmem:[%s2268 + $0x1498] sm:$0xff]
        %v2982 = vld [vmem:[%s2268 + $0x14a0] sm:$0xff]
        %v2983 = vld [vmem:[%s2268 + $0x14a8] sm:$0xff]
        %v2984 = vld [vmem:[%s2268 + $0x14b0] sm:$0xff]
        %v2985 = vld [vmem:[%s2268 + $0x14b8] sm:$0xff]
        %v2986 = vld [vmem:[%s2268 + $0x14c0] sm:$0xff]
        %v2987 = vld [vmem:[%s2268 + $0x14c8] sm:$0xff]
        %v2988 = vld [vmem:[%s2268 + $0x14d0] sm:$0xff]
        %v2989 = vld [vmem:[%s2268 + $0x14d8] sm:$0xff]
        %v2990 = vld [vmem:[%s2268 + $0x14e0] sm:$0xff]
        %v2991 = vld [vmem:[%s2268 + $0x14e8] sm:$0xff]
        %v2992 = vld [vmem:[%s2268 + $0x14f0] sm:$0xff]
        %v2993 = vld [vmem:[%s2268 + $0x14f8] sm:$0xff]
        %v2994 = vld [vmem:[%s2268 + $0x1500] sm:$0xff]
        %v2995 = vld [vmem:[%s2268 + $0x1508] sm:$0xff]
        %v2996 = vld [vmem:[%s2268 + $0x1510] sm:$0xff]
        %v2997 = vld [vmem:[%s2268 + $0x1518] sm:$0xff]
        %v2998 = vld [vmem:[%s2268 + $0x1520] sm:$0xff]
        %v2999 = vld [vmem:[%s2268 + $0x1528] sm:$0xff]
        %v3000 = vld [vmem:[%s2268 + $0x1530] sm:$0xff]
        %v3001 = vld [vmem:[%s2268 + $0x1538] sm:$0xff]
        %v3002 = vld [vmem:[%s2268 + $0x1540] sm:$0xff]
        %v3003 = vld [vmem:[%s2268 + $0x1548] sm:$0xff]
        %v3004 = vld [vmem:[%s2268 + $0x1550] sm:$0xff]
        %v3005 = vld [vmem:[%s2268 + $0x1558] sm:$0xff]
        %v3006 = vld [vmem:[%s2268 + $0x1560] sm:$0xff]
        %v3007 = vld [vmem:[%s2268 + $0x1568] sm:$0xff]
        %v3008 = vld [vmem:[%s2268 + $0x1570] sm:$0xff]
        %v3009 = vld [vmem:[%s2268 + $0x1578] sm:$0xff]
        %v3010 = vld [vmem:[%s2268 + $0x1580] sm:$0xff]
        %v3011 = vld [vmem:[%s2268 + $0x1588] sm:$0xff]
        %v3012 = vld [vmem:[%s2268 + $0x1590] sm:$0xff]
        %v3013 = vld [vmem:[%s2268 + $0x1598] sm:$0xff]
        %v3014 = vld [vmem:[%s2268 + $0x15a0] sm:$0xff]
        %v3015 = vld [vmem:[%s2268 + $0x15a8] sm:$0xff]
        %v3016 = vld [vmem:[%s2268 + $0x15b0] sm:$0xff]
        %v3017 = vld [vmem:[%s2268 + $0x15b8] sm:$0xff]
        %v3018 = vld [vmem:[%s2268 + $0x15c0] sm:$0xff]
        %v3019 = vld [vmem:[%s2268 + $0x15c8] sm:$0xff]
        %v3020 = vld [vmem:[%s2268 + $0x15d0] sm:$0xff]
        %v3021 = vld [vmem:[%s2268 + $0x15d8] sm:$0xff]
        %v3022 = vld [vmem:[%s2268 + $0x15e0] sm:$0xff]
        %v3023 = vld [vmem:[%s2268 + $0x15e8] sm:$0xff]
        %v3024 = vld [vmem:[%s2268 + $0x15f0] sm:$0xff]
        %v3025 = vld [vmem:[%s2268 + $0x15f8] sm:$0xff]
        %v3026 = vld [vmem:[%s2268 + $0x1600] sm:$0xff]
        %v3027 = vld [vmem:[%s2268 + $0x1608] sm:$0xff]
        %v3028 = vld [vmem:[%s2268 + $0x1610] sm:$0xff]
        %v3029 = vld [vmem:[%s2268 + $0x1618] sm:$0xff]
        %v3030 = vld [vmem:[%s2268 + $0x1620] sm:$0xff]
        %v3031 = vld [vmem:[%s2268 + $0x1628] sm:$0xff]
        %v3032 = vld [vmem:[%s2268 + $0x1630] sm:$0xff]
        %v3033 = vld [vmem:[%s2268 + $0x1638] sm:$0xff]
        %v3034 = vld [vmem:[%s2268 + $0x1640] sm:$0xff]
        %v3035 = vld [vmem:[%s2268 + $0x1648] sm:$0xff]
        %v3036 = vld [vmem:[%s2268 + $0x1650] sm:$0xff]
        %v3037 = vld [vmem:[%s2268 + $0x1658] sm:$0xff]
        %v3038 = vld [vmem:[%s2268 + $0x1660] sm:$0xff]
        %v3039 = vld [vmem:[%s2268 + $0x1668] sm:$0xff]
        %v3040 = vld [vmem:[%s2268 + $0x1670] sm:$0xff]
        %v3041 = vld [vmem:[%s2268 + $0x1678] sm:$0xff]
        %v3042 = vld [vmem:[%s2268 + $0x1680] sm:$0xff]
        %v3043 = vld [vmem:[%s2268 + $0x1688] sm:$0xff]
        %v3044 = vld [vmem:[%s2268 + $0x1690] sm:$0xff]
        %v3045 = vld [vmem:[%s2268 + $0x1698] sm:$0xff]
        %v3046 = vld [vmem:[%s2268 + $0x16a0] sm:$0xff]
        %v3047 = vld [vmem:[%s2268 + $0x16a8] sm:$0xff]
        %v3048 = vld [vmem:[%s2268 + $0x16b0] sm:$0xff]
        %v3049 = vld [vmem:[%s2268 + $0x16b8] sm:$0xff]
        %v3050 = vld [vmem:[%s2268 + $0x16c0] sm:$0xff]
        %v3051 = vld [vmem:[%s2268 + $0x16c8] sm:$0xff]
        %v3052 = vld [vmem:[%s2268 + $0x16d0] sm:$0xff]
        %v3053 = vld [vmem:[%s2268 + $0x16d8] sm:$0xff]
        %v3054 = vld [vmem:[%s2268 + $0x16e0] sm:$0xff]
        %v3055 = vld [vmem:[%s2268 + $0x16e8] sm:$0xff]
        %v3056 = vld [vmem:[%s2268 + $0x16f0] sm:$0xff]
        %v3057 = vld [vmem:[%s2268 + $0x16f8] sm:$0xff]
        %v3058 = vld [vmem:[%s2268 + $0x1700] sm:$0xff]
        %v3059 = vld [vmem:[%s2268 + $0x1708] sm:$0xff]
        %v3060 = vld [vmem:[%s2268 + $0x1710] sm:$0xff]
        %v3061 = vld [vmem:[%s2268 + $0x1718] sm:$0xff]
        %v3062 = vld [vmem:[%s2268 + $0x1720] sm:$0xff]
        %v3063 = vld [vmem:[%s2268 + $0x1728] sm:$0xff]
        %v3064 = vld [vmem:[%s2268 + $0x1730] sm:$0xff]
        %v3065 = vld [vmem:[%s2268 + $0x1738] sm:$0xff]
        %v3066 = vld [vmem:[%s2268 + $0x1740] sm:$0xff]
        %v3067 = vld [vmem:[%s2268 + $0x1748] sm:$0xff]
        %v3068 = vld [vmem:[%s2268 + $0x1750] sm:$0xff]
        %v3069 = vld [vmem:[%s2268 + $0x1758] sm:$0xff]
        %v3070 = vld [vmem:[%s2268 + $0x1760] sm:$0xff]
        %v3071 = vld [vmem:[%s2268 + $0x1768] sm:$0xff]
        %v3072 = vld [vmem:[%s2268 + $0x1770] sm:$0xff]
        %v3073 = vld [vmem:[%s2268 + $0x1778] sm:$0xff]
        %v3074 = vld [vmem:[%s2268 + $0x1780] sm:$0xff]
        %v3075 = vld [vmem:[%s2268 + $0x1788] sm:$0xff]
        %v3076 = vld [vmem:[%s2268 + $0x1790] sm:$0xff]
        %v3077 = vld [vmem:[%s2268 + $0x1798] sm:$0xff]
        %v3078 = vld [vmem:[%s2268 + $0x17a0] sm:$0xff]
        %v3079 = vld [vmem:[%s2268 + $0x17a8] sm:$0xff]
        %v3080 = vld [vmem:[%s2268 + $0x17b0] sm:$0xff]
        %v3081 = vld [vmem:[%s2268 + $0x17b8] sm:$0xff]
        %v3082 = vld [vmem:[%s2268 + $0x17c0] sm:$0xff]
        %v3083 = vld [vmem:[%s2268 + $0x17c8] sm:$0xff]
        %v3084 = vld [vmem:[%s2268 + $0x17d0] sm:$0xff]
        %v3085 = vld [vmem:[%s2268 + $0x17d8] sm:$0xff]
        %v3086 = vld [vmem:[%s2268 + $0x17e0] sm:$0xff]
        %v3087 = vld [vmem:[%s2268 + $0x17e8] sm:$0xff]
        %v3088 = vld [vmem:[%s2268 + $0x17f0] sm:$0xff]
        %v3089 = vld [vmem:[%s2268 + $0x17f8] sm:$0xff]
        %v3090 = vld [vmem:[%s2268 + $0x1800] sm:$0xff]
        %v3091 = vld [vmem:[%s2268 + $0x1808] sm:$0xff]
        %v3092 = vld [vmem:[%s2268 + $0x1810] sm:$0xff]
        %v3093 = vld [vmem:[%s2268 + $0x1818] sm:$0xff]
        %v3094 = vld [vmem:[%s2268 + $0x1820] sm:$0xff]
        %v3095 = vld [vmem:[%s2268 + $0x1828] sm:$0xff]
        %v3096 = vld [vmem:[%s2268 + $0x1830] sm:$0xff]
        %v3097 = vld [vmem:[%s2268 + $0x1838] sm:$0xff]
        %v3098 = vld [vmem:[%s2268 + $0x1840] sm:$0xff]
        %v3099 = vld [vmem:[%s2268 + $0x1848] sm:$0xff]
        %v3100 = vld [vmem:[%s2268 + $0x1850] sm:$0xff]
        %v3101 = vld [vmem:[%s2268 + $0x1858] sm:$0xff]
        %v3102 = vld [vmem:[%s2268 + $0x1860] sm:$0xff]
        %v3103 = vld [vmem:[%s2268 + $0x1868] sm:$0xff]
        %v3104 = vld [vmem:[%s2268 + $0x1870] sm:$0xff]
        %v3105 = vld [vmem:[%s2268 + $0x1878] sm:$0xff]
        %v3106 = vld [vmem:[%s2268 + $0x1880] sm:$0xff]
        %v3107 = vld [vmem:[%s2268 + $0x1888] sm:$0xff]
        %v3108 = vld [vmem:[%s2268 + $0x1890] sm:$0xff]
        %v3109 = vld [vmem:[%s2268 + $0x1898] sm:$0xff]
        %v3110 = vld [vmem:[%s2268 + $0x18a0] sm:$0xff]
        %v3111 = vld [vmem:[%s2268 + $0x18a8] sm:$0xff]
        %v3112 = vld [vmem:[%s2268 + $0x18b0] sm:$0xff]
        %v3113 = vld [vmem:[%s2268 + $0x18b8] sm:$0xff]
        %v3114 = vld [vmem:[%s2268 + $0x18c0] sm:$0xff]
        %v3115 = vld [vmem:[%s2268 + $0x18c8] sm:$0xff]
        %v3116 = vld [vmem:[%s2268 + $0x18d0] sm:$0xff]
        %v3117 = vld [vmem:[%s2268 + $0x18d8] sm:$0xff]
        %v3118 = vld [vmem:[%s2268 + $0x18e0] sm:$0xff]
        %v3119 = vld [vmem:[%s2268 + $0x18e8] sm:$0xff]
        %v3120 = vld [vmem:[%s2268 + $0x18f0] sm:$0xff]
        %v3121 = vld [vmem:[%s2268 + $0x18f8] sm:$0xff]
        %v3122 = vld [vmem:[%s2268 + $0x1900] sm:$0xff]
        %v3123 = vld [vmem:[%s2268 + $0x1908] sm:$0xff]
        %v3124 = vld [vmem:[%s2268 + $0x1910] sm:$0xff]
        %v3125 = vld [vmem:[%s2268 + $0x1918] sm:$0xff]
        %v3126 = vld [vmem:[%s2268 + $0x1920] sm:$0xff]
        %v3127 = vld [vmem:[%s2268 + $0x1928] sm:$0xff]
        %v3128 = vld [vmem:[%s2268 + $0x1930] sm:$0xff]
        %v3129 = vld [vmem:[%s2268 + $0x1938] sm:$0xff]
        %v3130 = vld [vmem:[%s2268 + $0x1940] sm:$0xff]
        %v3131 = vld [vmem:[%s2268 + $0x1948] sm:$0xff]
        %v3132 = vld [vmem:[%s2268 + $0x1950] sm:$0xff]
        %v3133 = vld [vmem:[%s2268 + $0x1958] sm:$0xff]
        %v3134 = vld [vmem:[%s2268 + $0x1960] sm:$0xff]
        %v3135 = vld [vmem:[%s2268 + $0x1968] sm:$0xff]
        %v3136 = vld [vmem:[%s2268 + $0x1970] sm:$0xff]
        %v3137 = vld [vmem:[%s2268 + $0x1978] sm:$0xff]
        %v3138 = vld [vmem:[%s2268 + $0x1980] sm:$0xff]
        %v3139 = vld [vmem:[%s2268 + $0x1988] sm:$0xff]
        %v3140 = vld [vmem:[%s2268 + $0x1990] sm:$0xff]
        %v3141 = vld [vmem:[%s2268 + $0x1998] sm:$0xff]
        %v3142 = vld [vmem:[%s2268 + $0x19a0] sm:$0xff]
        %v3143 = vld [vmem:[%s2268 + $0x19a8] sm:$0xff]
        %v3144 = vld [vmem:[%s2268 + $0x19b0] sm:$0xff]
        %v3145 = vld [vmem:[%s2268 + $0x19b8] sm:$0xff]
        %v3146 = vld [vmem:[%s2268 + $0x19c0] sm:$0xff]
        %v3147 = vld [vmem:[%s2268 + $0x19c8] sm:$0xff]
        %v3148 = vld [vmem:[%s2268 + $0x19d0] sm:$0xff]
        %v3149 = vld [vmem:[%s2268 + $0x19d8] sm:$0xff]
        %v3150 = vld [vmem:[%s2268 + $0x19e0] sm:$0xff]
        %v3151 = vld [vmem:[%s2268 + $0x19e8] sm:$0xff]
        %v3152 = vld [vmem:[%s2268 + $0x19f0] sm:$0xff]
        %v3153 = vld [vmem:[%s2268 + $0x19f8] sm:$0xff]
        %v3154 = vld [vmem:[%s2268 + $0x1a00] sm:$0xff]
        %v3155 = vld [vmem:[%s2268 + $0x1a08] sm:$0xff]
        %v3156 = vld [vmem:[%s2268 + $0x1a10] sm:$0xff]
        %v3157 = vld [vmem:[%s2268 + $0x1a18] sm:$0xff]
        %v3158 = vld [vmem:[%s2268 + $0x1a20] sm:$0xff]
        %v3159 = vld [vmem:[%s2268 + $0x1a28] sm:$0xff]
        %v3160 = vld [vmem:[%s2268 + $0x1a30] sm:$0xff]
        %v3161 = vld [vmem:[%s2268 + $0x1a38] sm:$0xff]
        %v3162 = vld [vmem:[%s2268 + $0x1a40] sm:$0xff]
        %v3163 = vld [vmem:[%s2268 + $0x1a48] sm:$0xff]
        %v3164 = vld [vmem:[%s2268 + $0x1a50] sm:$0xff]
        %v3165 = vld [vmem:[%s2268 + $0x1a58] sm:$0xff]
        %v3166 = vld [vmem:[%s2268 + $0x1a60] sm:$0xff]
        %v3167 = vld [vmem:[%s2268 + $0x1a68] sm:$0xff]
        %v3168 = vld [vmem:[%s2268 + $0x1a70] sm:$0xff]
        %v3169 = vld [vmem:[%s2268 + $0x1a78] sm:$0xff]
        %v3170 = vld [vmem:[%s2268 + $0x1a80] sm:$0xff]
        %v3171 = vld [vmem:[%s2268 + $0x1a88] sm:$0xff]
        %v3172 = vld [vmem:[%s2268 + $0x1a90] sm:$0xff]
        %v3173 = vld [vmem:[%s2268 + $0x1a98] sm:$0xff]
        %v3174 = vld [vmem:[%s2268 + $0x1aa0] sm:$0xff]
        %v3175 = vld [vmem:[%s2268 + $0x1aa8] sm:$0xff]
        %v3176 = vld [vmem:[%s2268 + $0x1ab0] sm:$0xff]
        %v3177 = vld [vmem:[%s2268 + $0x1ab8] sm:$0xff]
        %v3178 = vld [vmem:[%s2268 + $0x1ac0] sm:$0xff]
        %v3179 = vld [vmem:[%s2268 + $0x1ac8] sm:$0xff]
        %v3180 = vld [vmem:[%s2268 + $0x1ad0] sm:$0xff]
        %v3181 = vld [vmem:[%s2268 + $0x1ad8] sm:$0xff]
        %v3182 = vld [vmem:[%s2268 + $0x1ae0] sm:$0xff]
        %v3183 = vld [vmem:[%s2268 + $0x1ae8] sm:$0xff]
        %v3184 = vld [vmem:[%s2268 + $0x1af0] sm:$0xff]
        %v3185 = vld [vmem:[%s2268 + $0x1af8] sm:$0xff]
        %v3186 = vld [vmem:[%s2268 + $0x1b00] sm:$0xff]
        %v3187 = vld [vmem:[%s2268 + $0x1b08] sm:$0xff]
        %v3188 = vld [vmem:[%s2268 + $0x1b10] sm:$0xff]
        %v3189 = vld [vmem:[%s2268 + $0x1b18] sm:$0xff]
        %v3190 = vld [vmem:[%s2268 + $0x1b20] sm:$0xff]
        %v3191 = vld [vmem:[%s2268 + $0x1b28] sm:$0xff]
        %v3192 = vld [vmem:[%s2268 + $0x1b30] sm:$0xff]
        %v3193 = vld [vmem:[%s2268 + $0x1b38] sm:$0xff]
        %v3194 = vld [vmem:[%s2268 + $0x1b40] sm:$0xff]
        %v3195 = vld [vmem:[%s2268 + $0x1b48] sm:$0xff]
        %v3196 = vld [vmem:[%s2268 + $0x1b50] sm:$0xff]
        %v3197 = vld [vmem:[%s2268 + $0x1b58] sm:$0xff]
        %v3198 = vld [vmem:[%s2268 + $0x1b60] sm:$0xff]
        %v3199 = vld [vmem:[%s2268 + $0x1b68] sm:$0xff]
        %v3200 = vld [vmem:[%s2268 + $0x1b70] sm:$0xff]
        %v3201 = vld [vmem:[%s2268 + $0x1b78] sm:$0xff]
        %v3202 = vld [vmem:[%s2268 + $0x1b80] sm:$0xff]
        %v3203 = vld [vmem:[%s2268 + $0x1b88] sm:$0xff]
        %v3204 = vld [vmem:[%s2268 + $0x1b90] sm:$0xff]
        %v3205 = vld [vmem:[%s2268 + $0x1b98] sm:$0xff]
        %v3206 = vld [vmem:[%s2268 + $0x1ba0] sm:$0xff]
        %v3207 = vld [vmem:[%s2268 + $0x1ba8] sm:$0xff]
        %v3208 = vld [vmem:[%s2268 + $0x1bb0] sm:$0xff]
        %v3209 = vld [vmem:[%s2268 + $0x1bb8] sm:$0xff]
        %v3210 = vld [vmem:[%s2268 + $0x1bc0] sm:$0xff]
        %v3211 = vld [vmem:[%s2268 + $0x1bc8] sm:$0xff]
        %v3212 = vld [vmem:[%s2268 + $0x1bd0] sm:$0xff]
        %v3213 = vld [vmem:[%s2268 + $0x1bd8] sm:$0xff]
        %v3214 = vld [vmem:[%s2268 + $0x1be0] sm:$0xff]
        %v3215 = vld [vmem:[%s2268 + $0x1be8] sm:$0xff]
        %v3216 = vld [vmem:[%s2268 + $0x1bf0] sm:$0xff]
        %v3217 = vld [vmem:[%s2268 + $0x1bf8] sm:$0xff]
        %v3218 = vld [vmem:[%s2268 + $0x1c00] sm:$0xff]
        %v3219 = vld [vmem:[%s2268 + $0x1c08] sm:$0xff]
        %v3220 = vld [vmem:[%s2268 + $0x1c10] sm:$0xff]
        %v3221 = vld [vmem:[%s2268 + $0x1c18] sm:$0xff]
        %v3222 = vld [vmem:[%s2268 + $0x1c20] sm:$0xff]
        %v3223 = vld [vmem:[%s2268 + $0x1c28] sm:$0xff]
        %v3224 = vld [vmem:[%s2268 + $0x1c30] sm:$0xff]
        %v3225 = vld [vmem:[%s2268 + $0x1c38] sm:$0xff]
        %v3226 = vld [vmem:[%s2268 + $0x1c40] sm:$0xff]
        %v3227 = vld [vmem:[%s2268 + $0x1c48] sm:$0xff]
        %v3228 = vld [vmem:[%s2268 + $0x1c50] sm:$0xff]
        %v3229 = vld [vmem:[%s2268 + $0x1c58] sm:$0xff]
        %v3230 = vld [vmem:[%s2268 + $0x1c60] sm:$0xff]
        %v3231 = vld [vmem:[%s2268 + $0x1c68] sm:$0xff]
        %v3232 = vld [vmem:[%s2268 + $0x1c70] sm:$0xff]
        %v3233 = vld [vmem:[%s2268 + $0x1c78] sm:$0xff]
        %v3234 = vld [vmem:[%s2268 + $0x1c80] sm:$0xff]
        %v3235 = vld [vmem:[%s2268 + $0x1c88] sm:$0xff]
        %v3236 = vld [vmem:[%s2268 + $0x1c90] sm:$0xff]
        %v3237 = vld [vmem:[%s2268 + $0x1c98] sm:$0xff]
        %v3238 = vld [vmem:[%s2268 + $0x1ca0] sm:$0xff]
        %v3239 = vld [vmem:[%s2268 + $0x1ca8] sm:$0xff]
        %v3240 = vld [vmem:[%s2268 + $0x1cb0] sm:$0xff]
        %v3241 = vld [vmem:[%s2268 + $0x1cb8] sm:$0xff]
        %v3242 = vld [vmem:[%s2268 + $0x1cc0] sm:$0xff]
        %v3243 = vld [vmem:[%s2268 + $0x1cc8] sm:$0xff]
        %v3244 = vld [vmem:[%s2268 + $0x1cd0] sm:$0xff]
        %v3245 = vld [vmem:[%s2268 + $0x1cd8] sm:$0xff]
        %v3246 = vld [vmem:[%s2268 + $0x1ce0] sm:$0xff]
        %v3247 = vld [vmem:[%s2268 + $0x1ce8] sm:$0xff]
        %v3248 = vld [vmem:[%s2268 + $0x1cf0] sm:$0xff]
        %v3249 = vld [vmem:[%s2268 + $0x1cf8] sm:$0xff]
        %v3250 = vld [vmem:[%s2268 + $0x1d00] sm:$0xff]
        %v3251 = vld [vmem:[%s2268 + $0x1d08] sm:$0xff]
        %v3252 = vld [vmem:[%s2268 + $0x1d10] sm:$0xff]
        %v3253 = vld [vmem:[%s2268 + $0x1d18] sm:$0xff]
        %v3254 = vld [vmem:[%s2268 + $0x1d20] sm:$0xff]
        %v3255 = vld [vmem:[%s2268 + $0x1d28] sm:$0xff]
        %v3256 = vld [vmem:[%s2268 + $0x1d30] sm:$0xff]
        %v3257 = vld [vmem:[%s2268 + $0x1d38] sm:$0xff]
        %v3258 = vld [vmem:[%s2268 + $0x1d40] sm:$0xff]
        %v3259 = vld [vmem:[%s2268 + $0x1d48] sm:$0xff]
        %v3260 = vld [vmem:[%s2268 + $0x1d50] sm:$0xff]
        %v3261 = vld [vmem:[%s2268 + $0x1d58] sm:$0xff]
        %v3262 = vld [vmem:[%s2268 + $0x1d60] sm:$0xff]
        %v3263 = vld [vmem:[%s2268 + $0x1d68] sm:$0xff]
        %v3264 = vld [vmem:[%s2268 + $0x1d70] sm:$0xff]
        %v3265 = vld [vmem:[%s2268 + $0x1d78] sm:$0xff]
        %v3266 = vld [vmem:[%s2268 + $0x1d80] sm:$0xff]
        %v3267 = vld [vmem:[%s2268 + $0x1d88] sm:$0xff]
        %v3268 = vld [vmem:[%s2268 + $0x1d90] sm:$0xff]
        %v3269 = vld [vmem:[%s2268 + $0x1d98] sm:$0xff]
        %v3270 = vld [vmem:[%s2268 + $0x1da0] sm:$0xff]
        %v3271 = vld [vmem:[%s2268 + $0x1da8] sm:$0xff]
        %v3272 = vld [vmem:[%s2268 + $0x1db0] sm:$0xff]
        %v3273 = vld [vmem:[%s2268 + $0x1db8] sm:$0xff]
        %v3274 = vld [vmem:[%s2268 + $0x1dc0] sm:$0xff]
        %v3275 = vld [vmem:[%s2268 + $0x1dc8] sm:$0xff]
        %v3276 = vld [vmem:[%s2268 + $0x1dd0] sm:$0xff]
        %v3277 = vld [vmem:[%s2268 + $0x1dd8] sm:$0xff]
        %v3278 = vld [vmem:[%s2268 + $0x1de0] sm:$0xff]
        %v3279 = vld [vmem:[%s2268 + $0x1de8] sm:$0xff]
        %v3280 = vld [vmem:[%s2268 + $0x1df0] sm:$0xff]
        %v3281 = vld [vmem:[%s2268 + $0x1df8] sm:$0xff]
        %v3282 = vld [vmem:[%s2268 + $0x1e00] sm:$0xff]
        %v3283 = vld [vmem:[%s2268 + $0x1e08] sm:$0xff]
        %v3284 = vld [vmem:[%s2268 + $0x1e10] sm:$0xff]
        %v3285 = vld [vmem:[%s2268 + $0x1e18] sm:$0xff]
        %v3286 = vld [vmem:[%s2268 + $0x1e20] sm:$0xff]
        %v3287 = vld [vmem:[%s2268 + $0x1e28] sm:$0xff]
        %v3288 = vld [vmem:[%s2268 + $0x1e30] sm:$0xff]
        %v3289 = vld [vmem:[%s2268 + $0x1e38] sm:$0xff]
        %v3290 = vld [vmem:[%s2268 + $0x1e40] sm:$0xff]
        %v3291 = vld [vmem:[%s2268 + $0x1e48] sm:$0xff]
        %v3292 = vld [vmem:[%s2268 + $0x1e50] sm:$0xff]
        %v3293 = vld [vmem:[%s2268 + $0x1e58] sm:$0xff]
        %v3294 = vld [vmem:[%s2268 + $0x1e60] sm:$0xff]
        %v3295 = vld [vmem:[%s2268 + $0x1e68] sm:$0xff]
        %v3296 = vld [vmem:[%s2268 + $0x1e70] sm:$0xff]
        %v3297 = vld [vmem:[%s2268 + $0x1e78] sm:$0xff]
        %v3298 = vld [vmem:[%s2268 + $0x1e80] sm:$0xff]
        %v3299 = vld [vmem:[%s2268 + $0x1e88] sm:$0xff]
        %v3300 = vld [vmem:[%s2268 + $0x1e90] sm:$0xff]
        %v3301 = vld [vmem:[%s2268 + $0x1e98] sm:$0xff]
        %v3302 = vld [vmem:[%s2268 + $0x1ea0] sm:$0xff]
        %v3303 = vld [vmem:[%s2268 + $0x1ea8] sm:$0xff]
        %v3304 = vld [vmem:[%s2268 + $0x1eb0] sm:$0xff]
        %v3305 = vld [vmem:[%s2268 + $0x1eb8] sm:$0xff]
        %v3306 = vld [vmem:[%s2268 + $0x1ec0] sm:$0xff]
        %v3307 = vld [vmem:[%s2268 + $0x1ec8] sm:$0xff]
        %v3308 = vld [vmem:[%s2268 + $0x1ed0] sm:$0xff]
        %v3309 = vld [vmem:[%s2268 + $0x1ed8] sm:$0xff]
        %v3310 = vld [vmem:[%s2268 + $0x1ee0] sm:$0xff]
        %v3311 = vld [vmem:[%s2268 + $0x1ee8] sm:$0xff]
        %v3312 = vld [vmem:[%s2268 + $0x1ef0] sm:$0xff]
        %v3313 = vld [vmem:[%s2268 + $0x1ef8] sm:$0xff]
        %v3314 = vld [vmem:[%s2268 + $0x1f00] sm:$0xff]
        %v3315 = vld [vmem:[%s2268 + $0x1f08] sm:$0xff]
        %v3316 = vld [vmem:[%s2268 + $0x1f10] sm:$0xff]
        %v3317 = vld [vmem:[%s2268 + $0x1f18] sm:$0xff]
        %v3318 = vld [vmem:[%s2268 + $0x1f20] sm:$0xff]
        %v3319 = vld [vmem:[%s2268 + $0x1f28] sm:$0xff]
        %v3320 = vld [vmem:[%s2268 + $0x1f30] sm:$0xff]
        %v3321 = vld [vmem:[%s2268 + $0x1f38] sm:$0xff]
        %v3322 = vld [vmem:[%s2268 + $0x1f40] sm:$0xff]
        %v3323 = vld [vmem:[%s2268 + $0x1f48] sm:$0xff]
        %v3324 = vld [vmem:[%s2268 + $0x1f50] sm:$0xff]
        %v3325 = vld [vmem:[%s2268 + $0x1f58] sm:$0xff]
        %v3326 = vld [vmem:[%s2268 + $0x1f60] sm:$0xff]
        %v3327 = vld [vmem:[%s2268 + $0x1f68] sm:$0xff]
        %v3328 = vld [vmem:[%s2268 + $0x1f70] sm:$0xff]
        %v3329 = vld [vmem:[%s2268 + $0x1f78] sm:$0xff]
        %v3330 = vld [vmem:[%s2268 + $0x1f80] sm:$0xff]
        %v3331 = vld [vmem:[%s2268 + $0x1f88] sm:$0xff]
        %v3332 = vld [vmem:[%s2268 + $0x1f90] sm:$0xff]
        %v3333 = vld [vmem:[%s2268 + $0x1f98] sm:$0xff]
        %v3334 = vld [vmem:[%s2268 + $0x1fa0] sm:$0xff]
        %v3335 = vld [vmem:[%s2268 + $0x1fa8] sm:$0xff]
        %v3336 = vld [vmem:[%s2268 + $0x1fb0] sm:$0xff]
        %v3337 = vld [vmem:[%s2268 + $0x1fb8] sm:$0xff]
        %v3338 = vld [vmem:[%s2268 + $0x1fc0] sm:$0xff]
        %v3339 = vld [vmem:[%s2268 + $0x1fc8] sm:$0xff]
        %v3340 = vld [vmem:[%s2268 + $0x1fd0] sm:$0xff]
        %v3341 = vld [vmem:[%s2268 + $0x1fd8] sm:$0xff]
        %v3342 = vld [vmem:[%s2268 + $0x1fe0] sm:$0xff]
        %v3343 = vld [vmem:[%s2268 + $0x1fe8] sm:$0xff]
        %v3344 = vld [vmem:[%s2268 + $0x1ff0] sm:$0xff]
        %v3345 = vld [vmem:[%s2268 + $0x1ff8] sm:$0xff]
        %v3362 = vcombine.high %v2306, %v2306
        %v3364 = vunpack.c.l.s4 1983009808
        %v3365 = vunpack.c.0.s8 %v3364
        %v3366 = vlaneseq
        %v3367 = vshrl.u32 %v3366, 7
        %v3368 = vsub.s32 %v3365, %v3367
        %v3369 = vrot.slane %v2306, %v3368
        %v3371 = vunpack.c.l.s4 1983009808
        %v3372 = vunpack.c.0.s8 %v3371
        %v3373 = vlaneseq
        %v3374 = vshrl.u32 %v3373, 7
        %v3375 = vsub.s32 %v3372, %v3374
        %v3376 = vrot.slane %v3362, %v3375
        %v3377 = vcombine.high %v3369, %v3369
        %v3378 = vcombine.high %v3376, %v3376
        %v3379 = vcombine.high %v2307, %v2307
        %v3381 = vunpack.c.l.s4 1983009808
        %v3382 = vunpack.c.0.s8 %v3381
        %v3383 = vlaneseq
        %v3384 = vshrl.u32 %v3383, 7
        %v3385 = vsub.s32 %v3382, %v3384
        %v3386 = vrot.slane %v2307, %v3385
        %v3388 = vunpack.c.l.s4 1983009808
        %v3389 = vunpack.c.0.s8 %v3388
        %v3390 = vlaneseq
        %v3391 = vshrl.u32 %v3390, 7
        %v3392 = vsub.s32 %v3389, %v3391
        %v3393 = vrot.slane %v3379, %v3392
        %v3394 = vcombine.high %v3386, %v3386
        %v3395 = vcombine.high %v3393, %v3393
        %v3396 = vcombine.high %v2308, %v2308
        %v3398 = vunpack.c.l.s4 1983009808
        %v3399 = vunpack.c.0.s8 %v3398
        %v3400 = vlaneseq
        %v3401 = vshrl.u32 %v3400, 7
        %v3402 = vsub.s32 %v3399, %v3401
        %v3403 = vrot.slane %v2308, %v3402
        %v3405 = vunpack.c.l.s4 1983009808
        %v3406 = vunpack.c.0.s8 %v3405
        %v3407 = vlaneseq
        %v3408 = vshrl.u32 %v3407, 7
        %v3409 = vsub.s32 %v3406, %v3408
        %v3410 = vrot.slane %v3396, %v3409
        %v3411 = vcombine.high %v3403, %v3403
        %v3412 = vcombine.high %v3410, %v3410
        %v3413 = vcombine.high %v2309, %v2309
        %v3415 = vunpack.c.l.s4 1983009808
        %v3416 = vunpack.c.0.s8 %v3415
        %v3417 = vlaneseq
        %v3418 = vshrl.u32 %v3417, 7
        %v3419 = vsub.s32 %v3416, %v3418
        %v3420 = vrot.slane %v2309, %v3419
        %v3422 = vunpack.c.l.s4 1983009808
        %v3423 = vunpack.c.0.s8 %v3422
        %v3424 = vlaneseq
        %v3425 = vshrl.u32 %v3424, 7
        %v3426 = vsub.s32 %v3423, %v3425
        %v3427 = vrot.slane %v3413, %v3426
        %v3428 = vcombine.high %v3420, %v3420
        %v3429 = vcombine.high %v3427, %v3427
        %v3430 = vcombine.high %v2310, %v2310
        %v3432 = vunpack.c.l.s4 1983009808
        %v3433 = vunpack.c.0.s8 %v3432
        %v3434 = vlaneseq
        %v3435 = vshrl.u32 %v3434, 7
        %v3436 = vsub.s32 %v3433, %v3435
        %v3437 = vrot.slane %v2310, %v3436
        %v3439 = vunpack.c.l.s4 1983009808
        %v3440 = vunpack.c.0.s8 %v3439
        %v3441 = vlaneseq
        %v3442 = vshrl.u32 %v3441, 7
        %v3443 = vsub.s32 %v3440, %v3442
        %v3444 = vrot.slane %v3430, %v3443
        %v3445 = vcombine.high %v3437, %v3437
        %v3446 = vcombine.high %v3444, %v3444
        %v3447 = vcombine.high %v2311, %v2311
        %v3449 = vunpack.c.l.s4 1983009808
        %v3450 = vunpack.c.0.s8 %v3449
        %v3451 = vlaneseq
        %v3452 = vshrl.u32 %v3451, 7
        %v3453 = vsub.s32 %v3450, %v3452
        %v3454 = vrot.slane %v2311, %v3453
        %v3456 = vunpack.c.l.s4 1983009808
        %v3457 = vunpack.c.0.s8 %v3456
        %v3458 = vlaneseq
        %v3459 = vshrl.u32 %v3458, 7
        %v3460 = vsub.s32 %v3457, %v3459
        %v3461 = vrot.slane %v3447, %v3460
        %v3462 = vcombine.high %v3454, %v3454
        %v3463 = vcombine.high %v3461, %v3461
        %v3464 = vcombine.high %v2312, %v2312
        %v3466 = vunpack.c.l.s4 1983009808
        %v3467 = vunpack.c.0.s8 %v3466
        %v3468 = vlaneseq
        %v3469 = vshrl.u32 %v3468, 7
        %v3470 = vsub.s32 %v3467, %v3469
        %v3471 = vrot.slane %v2312, %v3470
        %v3473 = vunpack.c.l.s4 1983009808
        %v3474 = vunpack.c.0.s8 %v3473
        %v3475 = vlaneseq
        %v3476 = vshrl.u32 %v3475, 7
        %v3477 = vsub.s32 %v3474, %v3476
        %v3478 = vrot.slane %v3464, %v3477
        %v3479 = vcombine.high %v3471, %v3471
        %v3480 = vcombine.high %v3478, %v3478
        %v3481 = vcombine.high %v2313, %v2313
        %v3483 = vunpack.c.l.s4 1983009808
        %v3484 = vunpack.c.0.s8 %v3483
        %v3485 = vlaneseq
        %v3486 = vshrl.u32 %v3485, 7
        %v3487 = vsub.s32 %v3484, %v3486
        %v3488 = vrot.slane %v2313, %v3487
        %v3490 = vunpack.c.l.s4 1983009808
        %v3491 = vunpack.c.0.s8 %v3490
        %v3492 = vlaneseq
        %v3493 = vshrl.u32 %v3492, 7
        %v3494 = vsub.s32 %v3491, %v3493
        %v3495 = vrot.slane %v3481, %v3494
        %v3496 = vcombine.high %v3488, %v3488
        %v3497 = vcombine.high %v3495, %v3495
        %v3498 = vcombine.high %v2314, %v2314
        %v3500 = vunpack.c.l.s4 1983009808
        %v3501 = vunpack.c.0.s8 %v3500
        %v3502 = vlaneseq
        %v3503 = vshrl.u32 %v3502, 7
        %v3504 = vsub.s32 %v3501, %v3503
        %v3505 = vrot.slane %v2314, %v3504
        %v3507 = vunpack.c.l.s4 1983009808
        %v3508 = vunpack.c.0.s8 %v3507
        %v3509 = vlaneseq
        %v3510 = vshrl.u32 %v3509, 7
        %v3511 = vsub.s32 %v3508, %v3510
        %v3512 = vrot.slane %v3498, %v3511
        %v3513 = vcombine.high %v3505, %v3505
        %v3514 = vcombine.high %v3512, %v3512
        %v3515 = vcombine.high %v2315, %v2315
        %v3517 = vunpack.c.l.s4 1983009808
        %v3518 = vunpack.c.0.s8 %v3517
        %v3519 = vlaneseq
        %v3520 = vshrl.u32 %v3519, 7
        %v3521 = vsub.s32 %v3518, %v3520
        %v3522 = vrot.slane %v2315, %v3521
        %v3524 = vunpack.c.l.s4 1983009808
        %v3525 = vunpack.c.0.s8 %v3524
        %v3526 = vlaneseq
        %v3527 = vshrl.u32 %v3526, 7
        %v3528 = vsub.s32 %v3525, %v3527
        %v3529 = vrot.slane %v3515, %v3528
        %v3530 = vcombine.high %v3522, %v3522
        %v3531 = vcombine.high %v3529, %v3529
        %v3532 = vcombine.high %v2316, %v2316
        %v3534 = vunpack.c.l.s4 1983009808
        %v3535 = vunpack.c.0.s8 %v3534
        %v3536 = vlaneseq
        %v3537 = vshrl.u32 %v3536, 7
        %v3538 = vsub.s32 %v3535, %v3537
        %v3539 = vrot.slane %v2316, %v3538
        %v3541 = vunpack.c.l.s4 1983009808
        %v3542 = vunpack.c.0.s8 %v3541
        %v3543 = vlaneseq
        %v3544 = vshrl.u32 %v3543, 7
        %v3545 = vsub.s32 %v3542, %v3544
        %v3546 = vrot.slane %v3532, %v3545
        %v3547 = vcombine.high %v3539, %v3539
        %v3548 = vcombine.high %v3546, %v3546
        %v3549 = vcombine.high %v2317, %v2317
        %v3551 = vunpack.c.l.s4 1983009808
        %v3552 = vunpack.c.0.s8 %v3551
        %v3553 = vlaneseq
        %v3554 = vshrl.u32 %v3553, 7
        %v3555 = vsub.s32 %v3552, %v3554
        %v3556 = vrot.slane %v2317, %v3555
        %v3558 = vunpack.c.l.s4 1983009808
        %v3559 = vunpack.c.0.s8 %v3558
        %v3560 = vlaneseq
        %v3561 = vshrl.u32 %v3560, 7
        %v3562 = vsub.s32 %v3559, %v3561
        %v3563 = vrot.slane %v3549, %v3562
        %v3564 = vcombine.high %v3556, %v3556
        %v3565 = vcombine.high %v3563, %v3563
        %v3566 = vcombine.high %v2318, %v2318
        %v3568 = vunpack.c.l.s4 1983009808
        %v3569 = vunpack.c.0.s8 %v3568
        %v3570 = vlaneseq
        %v3571 = vshrl.u32 %v3570, 7
        %v3572 = vsub.s32 %v3569, %v3571
        %v3573 = vrot.slane %v2318, %v3572
        %v3575 = vunpack.c.l.s4 1983009808
        %v3576 = vunpack.c.0.s8 %v3575
        %v3577 = vlaneseq
        %v3578 = vshrl.u32 %v3577, 7
        %v3579 = vsub.s32 %v3576, %v3578
        %v3580 = vrot.slane %v3566, %v3579
        %v3581 = vcombine.high %v3573, %v3573
        %v3582 = vcombine.high %v3580, %v3580
        %v3583 = vcombine.high %v2319, %v2319
        %v3585 = vunpack.c.l.s4 1983009808
        %v3586 = vunpack.c.0.s8 %v3585
        %v3587 = vlaneseq
        %v3588 = vshrl.u32 %v3587, 7
        %v3589 = vsub.s32 %v3586, %v3588
        %v3590 = vrot.slane %v2319, %v3589
        %v3592 = vunpack.c.l.s4 1983009808
        %v3593 = vunpack.c.0.s8 %v3592
        %v3594 = vlaneseq
        %v3595 = vshrl.u32 %v3594, 7
        %v3596 = vsub.s32 %v3593, %v3595
        %v3597 = vrot.slane %v3583, %v3596
        %v3598 = vcombine.high %v3590, %v3590
        %v3599 = vcombine.high %v3597, %v3597
        %v3600 = vcombine.high %v2320, %v2320
        %v3602 = vunpack.c.l.s4 1983009808
        %v3603 = vunpack.c.0.s8 %v3602
        %v3604 = vlaneseq
        %v3605 = vshrl.u32 %v3604, 7
        %v3606 = vsub.s32 %v3603, %v3605
        %v3607 = vrot.slane %v2320, %v3606
        %v3609 = vunpack.c.l.s4 1983009808
        %v3610 = vunpack.c.0.s8 %v3609
        %v3611 = vlaneseq
        %v3612 = vshrl.u32 %v3611, 7
        %v3613 = vsub.s32 %v3610, %v3612
        %v3614 = vrot.slane %v3600, %v3613
        %v3615 = vcombine.high %v3607, %v3607
        %v3616 = vcombine.high %v3614, %v3614
        %v3617 = vcombine.high %v2321, %v2321
        %v3619 = vunpack.c.l.s4 1983009808
        %v3620 = vunpack.c.0.s8 %v3619
        %v3621 = vlaneseq
        %v3622 = vshrl.u32 %v3621, 7
        %v3623 = vsub.s32 %v3620, %v3622
        %v3624 = vrot.slane %v2321, %v3623
        %v3626 = vunpack.c.l.s4 1983009808
        %v3627 = vunpack.c.0.s8 %v3626
        %v3628 = vlaneseq
        %v3629 = vshrl.u32 %v3628, 7
        %v3630 = vsub.s32 %v3627, %v3629
        %v3631 = vrot.slane %v3617, %v3630
        %v3632 = vcombine.high %v3624, %v3624
        %v3633 = vcombine.high %v3631, %v3631
        %3698 = vmatprep.subr.mxu0 %v3283
        %3699 = vmatpush1.xpose.msra.mxu0 %v3282
        %3700 = vmatprep.subr.mxu0 %v3219
        %3701 = vmatpush1.xpose.msra.mxu0 %v3218
        %3702 = vmatprep.subr.mxu0 %v3155
        %3703 = vmatpush1.xpose.msra.mxu0 %v3154
        %3704 = vmatprep.subr.mxu0 %v3091
        %3705 = vmatpush1.xpose.msra.mxu0 %v3090
        %3706 = vmatprep.subr.mxu0 %v3027
        %3707 = vmatpush1.xpose.msra.mxu0 %v3026
        %3708 = vmatprep.subr.mxu0 %v2963
        %3709 = vmatpush1.xpose.msra.mxu0 %v2962
        %3710 = vmatprep.subr.mxu0 %v2899
        %3711 = vmatpush1.xpose.msra.mxu0 %v2898
        %3712 = vmatprep.subr.mxu0 %v2835
        %3713 = vmatpush1.xpose.msra.mxu0 %v2834
        %3714 = vmatprep.subr.mxu0 %v2771
        %3715 = vmatpush1.xpose.msra.mxu0 %v2770
        %3716 = vmatprep.subr.mxu0 %v2707
        %3717 = vmatpush1.xpose.msra.mxu0 %v2706
        %3718 = vmatprep.subr.mxu0 %v2643
        %3719 = vmatpush1.xpose.msra.mxu0 %v2642
        %3720 = vmatprep.subr.mxu0 %v2579
        %3721 = vmatpush1.xpose.msra.mxu0 %v2578
        %3722 = vmatprep.subr.mxu0 %v2515
        %3723 = vmatpush1.xpose.msra.mxu0 %v2514
        %3724 = vmatprep.subr.mxu0 %v2451
        %3725 = vmatpush1.xpose.msra.mxu0 %v2450
        %3726 = vmatprep.subr.mxu0 %v2387
        %3727 = vmatpush1.xpose.msra.mxu0 %v2386
        %3728 = vmatprep.subr.mxu0 %v2323
        %3729 = vmatpush1.xpose.msra.mxu0 %v2322
        %3730 = vmatprep.subr.mxu0 0.0
        %3731 = vmatpush2.xpose.msra.mxu0 0.0
        %3732 = vmatprep.subr.mxu0 0.0
        %3733 = vmatpush2.xpose.msra.mxu0 0.0
        %3734 = vmatprep.subr.mxu0 0.0
        %3735 = vmatpush2.xpose.msra.mxu0 0.0
        %3736 = vmatprep.subr.mxu0 0.0
        %3737 = vmatpush2.xpose.msra.mxu0 0.0
        %3738 = vmatprep.subr.mxu0 0.0
        %3739 = vmatpush2.xpose.msra.mxu0 0.0
        %3740 = vmatprep.subr.mxu0 0.0
        %3741 = vmatpush2.xpose.msra.mxu0 0.0
        %3742 = vmatprep.subr.mxu0 0.0
        %3743 = vmatpush2.xpose.msra.mxu0 0.0
        %3744 = vmatprep.subr.mxu0 0.0
        %3745 = vmatpush2.xpose.msra.mxu0 0.0
        %3746 = vmatprep.subr.mxu0 0.0
        %3747 = vmatpush2.xpose.msra.mxu0 0.0
        %3748 = vmatprep.subr.mxu0 0.0
        %3749 = vmatpush2.xpose.msra.mxu0 0.0
        %3750 = vmatprep.subr.mxu0 0.0
        %3751 = vmatpush2.xpose.msra.mxu0 0.0
        %3752 = vmatprep.subr.mxu0 0.0
        %3753 = vmatpush2.xpose.msra.mxu0 0.0
        %3754 = vmatprep.subr.mxu0 0.0
        %3755 = vmatpush2.xpose.msra.mxu0 0.0
        %3756 = vmatprep.subr.mxu0 0.0
        %3757 = vmatpush2.xpose.msra.mxu0 0.0
        %3758 = vmatprep.subr.mxu0 0.0
        %3759 = vmatpush2.xpose.msra.mxu0 0.0
        %3760 = vmatprep.subr.mxu0 0.0
        %3761 = vmatpush2.xpose.msra.mxu0 0.0
        %3762 = vmatprep.mubr.f32.mxu0 %v3377
        %3763 = vmatmul.mubr.f32.gmra.mxu0 %v3369
        %v3764 = vpop.f32.mrf.mxu0
        %v3765 = vadd.f32 0.0, %v3764
        %v3766 = vpop.f32.mrf.mxu0
        %3767 = vdwg.mxu0
        %3768 = vmatprep.subr.mxu0 %v3285
        %3769 = vmatpush1.xpose.msra.mxu0 %v3284
        %3770 = vmatprep.subr.mxu0 %v3221
        %3771 = vmatpush1.xpose.msra.mxu0 %v3220
        %3772 = vmatprep.subr.mxu0 %v3157
        %3773 = vmatpush1.xpose.msra.mxu0 %v3156
        %3774 = vmatprep.subr.mxu0 %v3093
        %3775 = vmatpush1.xpose.msra.mxu0 %v3092
        %3776 = vmatprep.subr.mxu0 %v3029
        %3777 = vmatpush1.xpose.msra.mxu0 %v3028
        %3778 = vmatprep.subr.mxu0 %v2965
        %3779 = vmatpush1.xpose.msra.mxu0 %v2964
        %3780 = vmatprep.subr.mxu0 %v2901
        %3781 = vmatpush1.xpose.msra.mxu0 %v2900
        %3782 = vmatprep.subr.mxu0 %v2837
        %3783 = vmatpush1.xpose.msra.mxu0 %v2836
        %3784 = vmatprep.subr.mxu0 %v2773
        %3785 = vmatpush1.xpose.msra.mxu0 %v2772
        %3786 = vmatprep.subr.mxu0 %v2709
        %3787 = vmatpush1.xpose.msra.mxu0 %v2708
        %3788 = vmatprep.subr.mxu0 %v2645
        %3789 = vmatpush1.xpose.msra.mxu0 %v2644
        %3790 = vmatprep.subr.mxu0 %v2581
        %3791 = vmatpush1.xpose.msra.mxu0 %v2580
        %3792 = vmatprep.subr.mxu0 %v2517
        %3793 = vmatpush1.xpose.msra.mxu0 %v2516
        %3794 = vmatprep.subr.mxu0 %v2453
        %3795 = vmatpush1.xpose.msra.mxu0 %v2452
        %3796 = vmatprep.subr.mxu0 %v2389
        %3797 = vmatpush1.xpose.msra.mxu0 %v2388
        %3798 = vmatprep.subr.mxu0 %v2325
        %3799 = vmatpush1.xpose.msra.mxu0 %v2324
        %3800 = vmatprep.subr.mxu0 0.0
        %3801 = vmatpush2.xpose.msra.mxu0 0.0
        %3802 = vmatprep.subr.mxu0 0.0
        %3803 = vmatpush2.xpose.msra.mxu0 0.0
        %3804 = vmatprep.subr.mxu0 0.0
        %3805 = vmatpush2.xpose.msra.mxu0 0.0
        %3806 = vmatprep.subr.mxu0 0.0
        %3807 = vmatpush2.xpose.msra.mxu0 0.0
        %3808 = vmatprep.subr.mxu0 0.0
        %3809 = vmatpush2.xpose.msra.mxu0 0.0
        %3810 = vmatprep.subr.mxu0 0.0
        %3811 = vmatpush2.xpose.msra.mxu0 0.0
        %3812 = vmatprep.subr.mxu0 0.0
        %3813 = vmatpush2.xpose.msra.mxu0 0.0
        %3814 = vmatprep.subr.mxu0 0.0
        %3815 = vmatpush2.xpose.msra.mxu0 0.0
        %3816 = vmatprep.subr.mxu0 0.0
        %3817 = vmatpush2.xpose.msra.mxu0 0.0
        %3818 = vmatprep.subr.mxu0 0.0
        %3819 = vmatpush2.xpose.msra.mxu0 0.0
        %3820 = vmatprep.subr.mxu0 0.0
        %3821 = vmatpush2.xpose.msra.mxu0 0.0
        %3822 = vmatprep.subr.mxu0 0.0
        %3823 = vmatpush2.xpose.msra.mxu0 0.0
        %3824 = vmatprep.subr.mxu0 0.0
        %3825 = vmatpush2.xpose.msra.mxu0 0.0
        %3826 = vmatprep.subr.mxu0 0.0
        %3827 = vmatpush2.xpose.msra.mxu0 0.0
        %3828 = vmatprep.subr.mxu0 0.0
        %3829 = vmatpush2.xpose.msra.mxu0 0.0
        %3830 = vmatprep.subr.mxu0 0.0
        %3831 = vmatpush2.xpose.msra.mxu0 0.0
        %3832 = vmatprep.mubr.f32.mxu0 %v3378
        %3833 = vmatmul.mubr.f32.gmra.mxu0 %v3376
        %v3834 = vpop.f32.mrf.mxu0
        %v3835 = vadd.f32 %v3765, %v3834
        %v3836 = vpop.f32.mrf.mxu0
        %3837 = vdwg.mxu0
        %3838 = vmatprep.subr.mxu0 %v3287
        %3839 = vmatpush1.xpose.msra.mxu0 %v3286
        %3840 = vmatprep.subr.mxu0 %v3223
        %3841 = vmatpush1.xpose.msra.mxu0 %v3222
        %3842 = vmatprep.subr.mxu0 %v3159
        %3843 = vmatpush1.xpose.msra.mxu0 %v3158
        %3844 = vmatprep.subr.mxu0 %v3095
        %3845 = vmatpush1.xpose.msra.mxu0 %v3094
        %3846 = vmatprep.subr.mxu0 %v3031
        %3847 = vmatpush1.xpose.msra.mxu0 %v3030
        %3848 = vmatprep.subr.mxu0 %v2967
        %3849 = vmatpush1.xpose.msra.mxu0 %v2966
        %3850 = vmatprep.subr.mxu0 %v2903
        %3851 = vmatpush1.xpose.msra.mxu0 %v2902
        %3852 = vmatprep.subr.mxu0 %v2839
        %3853 = vmatpush1.xpose.msra.mxu0 %v2838
        %3854 = vmatprep.subr.mxu0 %v2775
        %3855 = vmatpush1.xpose.msra.mxu0 %v2774
        %3856 = vmatprep.subr.mxu0 %v2711
        %3857 = vmatpush1.xpose.msra.mxu0 %v2710
        %3858 = vmatprep.subr.mxu0 %v2647
        %3859 = vmatpush1.xpose.msra.mxu0 %v2646
        %3860 = vmatprep.subr.mxu0 %v2583
        %3861 = vmatpush1.xpose.msra.mxu0 %v2582
        %3862 = vmatprep.subr.mxu0 %v2519
        %3863 = vmatpush1.xpose.msra.mxu0 %v2518
        %3864 = vmatprep.subr.mxu0 %v2455
        %3865 = vmatpush1.xpose.msra.mxu0 %v2454
        %3866 = vmatprep.subr.mxu0 %v2391
        %3867 = vmatpush1.xpose.msra.mxu0 %v2390
        %3868 = vmatprep.subr.mxu0 %v2327
        %3869 = vmatpush1.xpose.msra.mxu0 %v2326
        %3870 = vmatprep.subr.mxu0 0.0
        %3871 = vmatpush2.xpose.msra.mxu0 0.0
        %3872 = vmatprep.subr.mxu0 0.0
        %3873 = vmatpush2.xpose.msra.mxu0 0.0
        %3874 = vmatprep.subr.mxu0 0.0
        %3875 = vmatpush2.xpose.msra.mxu0 0.0
        %3876 = vmatprep.subr.mxu0 0.0
        %3877 = vmatpush2.xpose.msra.mxu0 0.0
        %3878 = vmatprep.subr.mxu0 0.0
        %3879 = vmatpush2.xpose.msra.mxu0 0.0
        %3880 = vmatprep.subr.mxu0 0.0
        %3881 = vmatpush2.xpose.msra.mxu0 0.0
        %3882 = vmatprep.subr.mxu0 0.0
        %3883 = vmatpush2.xpose.msra.mxu0 0.0
        %3884 = vmatprep.subr.mxu0 0.0
        %3885 = vmatpush2.xpose.msra.mxu0 0.0
        %3886 = vmatprep.subr.mxu0 0.0
        %3887 = vmatpush2.xpose.msra.mxu0 0.0
        %3888 = vmatprep.subr.mxu0 0.0
        %3889 = vmatpush2.xpose.msra.mxu0 0.0
        %3890 = vmatprep.subr.mxu0 0.0
        %3891 = vmatpush2.xpose.msra.mxu0 0.0
        %3892 = vmatprep.subr.mxu0 0.0
        %3893 = vmatpush2.xpose.msra.mxu0 0.0
        %3894 = vmatprep.subr.mxu0 0.0
        %3895 = vmatpush2.xpose.msra.mxu0 0.0
        %3896 = vmatprep.subr.mxu0 0.0
        %3897 = vmatpush2.xpose.msra.mxu0 0.0
        %3898 = vmatprep.subr.mxu0 0.0
        %3899 = vmatpush2.xpose.msra.mxu0 0.0
        %3900 = vmatprep.subr.mxu0 0.0
        %3901 = vmatpush2.xpose.msra.mxu0 0.0
        %3902 = vmatprep.mubr.f32.mxu0 %v3394
        %3903 = vmatmul.mubr.f32.gmra.mxu0 %v3386
        %v3904 = vpop.f32.mrf.mxu0
        %v3905 = vadd.f32 %v3835, %v3904
        %v3906 = vpop.f32.mrf.mxu0
        %3907 = vdwg.mxu0
        %3908 = vmatprep.subr.mxu0 %v3289
        %3909 = vmatpush1.xpose.msra.mxu0 %v3288
        %3910 = vmatprep.subr.mxu0 %v3225
        %3911 = vmatpush1.xpose.msra.mxu0 %v3224
        %3912 = vmatprep.subr.mxu0 %v3161
        %3913 = vmatpush1.xpose.msra.mxu0 %v3160
        %3914 = vmatprep.subr.mxu0 %v3097
        %3915 = vmatpush1.xpose.msra.mxu0 %v3096
        %3916 = vmatprep.subr.mxu0 %v3033
        %3917 = vmatpush1.xpose.msra.mxu0 %v3032
        %3918 = vmatprep.subr.mxu0 %v2969
        %3919 = vmatpush1.xpose.msra.mxu0 %v2968
        %3920 = vmatprep.subr.mxu0 %v2905
        %3921 = vmatpush1.xpose.msra.mxu0 %v2904
        %3922 = vmatprep.subr.mxu0 %v2841
        %3923 = vmatpush1.xpose.msra.mxu0 %v2840
        %3924 = vmatprep.subr.mxu0 %v2777
        %3925 = vmatpush1.xpose.msra.mxu0 %v2776
        %3926 = vmatprep.subr.mxu0 %v2713
        %3927 = vmatpush1.xpose.msra.mxu0 %v2712
        %3928 = vmatprep.subr.mxu0 %v2649
        %3929 = vmatpush1.xpose.msra.mxu0 %v2648
        %3930 = vmatprep.subr.mxu0 %v2585
        %3931 = vmatpush1.xpose.msra.mxu0 %v2584
        %3932 = vmatprep.subr.mxu0 %v2521
        %3933 = vmatpush1.xpose.msra.mxu0 %v2520
        %3934 = vmatprep.subr.mxu0 %v2457
        %3935 = vmatpush1.xpose.msra.mxu0 %v2456
        %3936 = vmatprep.subr.mxu0 %v2393
        %3937 = vmatpush1.xpose.msra.mxu0 %v2392
        %3938 = vmatprep.subr.mxu0 %v2329
        %3939 = vmatpush1.xpose.msra.mxu0 %v2328
        %3940 = vmatprep.subr.mxu0 0.0
        %3941 = vmatpush2.xpose.msra.mxu0 0.0
        %3942 = vmatprep.subr.mxu0 0.0
        %3943 = vmatpush2.xpose.msra.mxu0 0.0
        %3944 = vmatprep.subr.mxu0 0.0
        %3945 = vmatpush2.xpose.msra.mxu0 0.0
        %3946 = vmatprep.subr.mxu0 0.0
        %3947 = vmatpush2.xpose.msra.mxu0 0.0
        %3948 = vmatprep.subr.mxu0 0.0
        %3949 = vmatpush2.xpose.msra.mxu0 0.0
        %3950 = vmatprep.subr.mxu0 0.0
        %3951 = vmatpush2.xpose.msra.mxu0 0.0
        %3952 = vmatprep.subr.mxu0 0.0
        %3953 = vmatpush2.xpose.msra.mxu0 0.0
        %3954 = vmatprep.subr.mxu0 0.0
        %3955 = vmatpush2.xpose.msra.mxu0 0.0
        %3956 = vmatprep.subr.mxu0 0.0
        %3957 = vmatpush2.xpose.msra.mxu0 0.0
        %3958 = vmatprep.subr.mxu0 0.0
        %3959 = vmatpush2.xpose.msra.mxu0 0.0
        %3960 = vmatprep.subr.mxu0 0.0
        %3961 = vmatpush2.xpose.msra.mxu0 0.0
        %3962 = vmatprep.subr.mxu0 0.0
        %3963 = vmatpush2.xpose.msra.mxu0 0.0
        %3964 = vmatprep.subr.mxu0 0.0
        %3965 = vmatpush2.xpose.msra.mxu0 0.0
        %3966 = vmatprep.subr.mxu0 0.0
        %3967 = vmatpush2.xpose.msra.mxu0 0.0
        %3968 = vmatprep.subr.mxu0 0.0
        %3969 = vmatpush2.xpose.msra.mxu0 0.0
        %3970 = vmatprep.subr.mxu0 0.0
        %3971 = vmatpush2.xpose.msra.mxu0 0.0
        %3972 = vmatprep.mubr.f32.mxu0 %v3395
        %3973 = vmatmul.mubr.f32.gmra.mxu0 %v3393
        %v3974 = vpop.f32.mrf.mxu0
        %v3975 = vadd.f32 %v3905, %v3974
        %v3976 = vpop.f32.mrf.mxu0
        %3977 = vdwg.mxu0
        %3978 = vmatprep.subr.mxu0 %v3291
        %3979 = vmatpush1.xpose.msra.mxu0 %v3290
        %3980 = vmatprep.subr.mxu0 %v3227
        %3981 = vmatpush1.xpose.msra.mxu0 %v3226
        %3982 = vmatprep.subr.mxu0 %v3163
        %3983 = vmatpush1.xpose.msra.mxu0 %v3162
        %3984 = vmatprep.subr.mxu0 %v3099
        %3985 = vmatpush1.xpose.msra.mxu0 %v3098
        %3986 = vmatprep.subr.mxu0 %v3035
        %3987 = vmatpush1.xpose.msra.mxu0 %v3034
        %3988 = vmatprep.subr.mxu0 %v2971
        %3989 = vmatpush1.xpose.msra.mxu0 %v2970
        %3990 = vmatprep.subr.mxu0 %v2907
        %3991 = vmatpush1.xpose.msra.mxu0 %v2906
        %3992 = vmatprep.subr.mxu0 %v2843
        %3993 = vmatpush1.xpose.msra.mxu0 %v2842
        %3994 = vmatprep.subr.mxu0 %v2779
        %3995 = vmatpush1.xpose.msra.mxu0 %v2778
        %3996 = vmatprep.subr.mxu0 %v2715
        %3997 = vmatpush1.xpose.msra.mxu0 %v2714
        %3998 = vmatprep.subr.mxu0 %v2651
        %3999 = vmatpush1.xpose.msra.mxu0 %v2650
        %4000 = vmatprep.subr.mxu0 %v2587
        %4001 = vmatpush1.xpose.msra.mxu0 %v2586
        %4002 = vmatprep.subr.mxu0 %v2523
        %4003 = vmatpush1.xpose.msra.mxu0 %v2522
        %4004 = vmatprep.subr.mxu0 %v2459
        %4005 = vmatpush1.xpose.msra.mxu0 %v2458
        %4006 = vmatprep.subr.mxu0 %v2395
        %4007 = vmatpush1.xpose.msra.mxu0 %v2394
        %4008 = vmatprep.subr.mxu0 %v2331
        %4009 = vmatpush1.xpose.msra.mxu0 %v2330
        %4010 = vmatprep.subr.mxu0 0.0
        %4011 = vmatpush2.xpose.msra.mxu0 0.0
        %4012 = vmatprep.subr.mxu0 0.0
        %4013 = vmatpush2.xpose.msra.mxu0 0.0
        %4014 = vmatprep.subr.mxu0 0.0
        %4015 = vmatpush2.xpose.msra.mxu0 0.0
        %4016 = vmatprep.subr.mxu0 0.0
        %4017 = vmatpush2.xpose.msra.mxu0 0.0
        %4018 = vmatprep.subr.mxu0 0.0
        %4019 = vmatpush2.xpose.msra.mxu0 0.0
        %4020 = vmatprep.subr.mxu0 0.0
        %4021 = vmatpush2.xpose.msra.mxu0 0.0
        %4022 = vmatprep.subr.mxu0 0.0
        %4023 = vmatpush2.xpose.msra.mxu0 0.0
        %4024 = vmatprep.subr.mxu0 0.0
        %4025 = vmatpush2.xpose.msra.mxu0 0.0
        %4026 = vmatprep.subr.mxu0 0.0
        %4027 = vmatpush2.xpose.msra.mxu0 0.0
        %4028 = vmatprep.subr.mxu0 0.0
        %4029 = vmatpush2.xpose.msra.mxu0 0.0
        %4030 = vmatprep.subr.mxu0 0.0
        %4031 = vmatpush2.xpose.msra.mxu0 0.0
        %4032 = vmatprep.subr.mxu0 0.0
        %4033 = vmatpush2.xpose.msra.mxu0 0.0
        %4034 = vmatprep.subr.mxu0 0.0
        %4035 = vmatpush2.xpose.msra.mxu0 0.0
        %4036 = vmatprep.subr.mxu0 0.0
        %4037 = vmatpush2.xpose.msra.mxu0 0.0
        %4038 = vmatprep.subr.mxu0 0.0
        %4039 = vmatpush2.xpose.msra.mxu0 0.0
        %4040 = vmatprep.subr.mxu0 0.0
        %4041 = vmatpush2.xpose.msra.mxu0 0.0
        %4042 = vmatprep.mubr.f32.mxu0 %v3411
        %4043 = vmatmul.mubr.f32.gmra.mxu0 %v3403
        %v4044 = vpop.f32.mrf.mxu0
        %v4045 = vadd.f32 %v3975, %v4044
        %v4046 = vpop.f32.mrf.mxu0
        %4047 = vdwg.mxu0
        %4048 = vmatprep.subr.mxu0 %v3293
        %4049 = vmatpush1.xpose.msra.mxu0 %v3292
        %4050 = vmatprep.subr.mxu0 %v3229
        %4051 = vmatpush1.xpose.msra.mxu0 %v3228
        %4052 = vmatprep.subr.mxu0 %v3165
        %4053 = vmatpush1.xpose.msra.mxu0 %v3164
        %4054 = vmatprep.subr.mxu0 %v3101
        %4055 = vmatpush1.xpose.msra.mxu0 %v3100
        %4056 = vmatprep.subr.mxu0 %v3037
        %4057 = vmatpush1.xpose.msra.mxu0 %v3036
        %4058 = vmatprep.subr.mxu0 %v2973
        %4059 = vmatpush1.xpose.msra.mxu0 %v2972
        %4060 = vmatprep.subr.mxu0 %v2909
        %4061 = vmatpush1.xpose.msra.mxu0 %v2908
        %4062 = vmatprep.subr.mxu0 %v2845
        %4063 = vmatpush1.xpose.msra.mxu0 %v2844
        %4064 = vmatprep.subr.mxu0 %v2781
        %4065 = vmatpush1.xpose.msra.mxu0 %v2780
        %4066 = vmatprep.subr.mxu0 %v2717
        %4067 = vmatpush1.xpose.msra.mxu0 %v2716
        %4068 = vmatprep.subr.mxu0 %v2653
        %4069 = vmatpush1.xpose.msra.mxu0 %v2652
        %4070 = vmatprep.subr.mxu0 %v2589
        %4071 = vmatpush1.xpose.msra.mxu0 %v2588
        %4072 = vmatprep.subr.mxu0 %v2525
        %4073 = vmatpush1.xpose.msra.mxu0 %v2524
        %4074 = vmatprep.subr.mxu0 %v2461
        %4075 = vmatpush1.xpose.msra.mxu0 %v2460
        %4076 = vmatprep.subr.mxu0 %v2397
        %4077 = vmatpush1.xpose.msra.mxu0 %v2396
        %4078 = vmatprep.subr.mxu0 %v2333
        %4079 = vmatpush1.xpose.msra.mxu0 %v2332
        %4080 = vmatprep.subr.mxu0 0.0
        %4081 = vmatpush2.xpose.msra.mxu0 0.0
        %4082 = vmatprep.subr.mxu0 0.0
        %4083 = vmatpush2.xpose.msra.mxu0 0.0
        %4084 = vmatprep.subr.mxu0 0.0
        %4085 = vmatpush2.xpose.msra.mxu0 0.0
        %4086 = vmatprep.subr.mxu0 0.0
        %4087 = vmatpush2.xpose.msra.mxu0 0.0
        %4088 = vmatprep.subr.mxu0 0.0
        %4089 = vmatpush2.xpose.msra.mxu0 0.0
        %4090 = vmatprep.subr.mxu0 0.0
        %4091 = vmatpush2.xpose.msra.mxu0 0.0
        %4092 = vmatprep.subr.mxu0 0.0
        %4093 = vmatpush2.xpose.msra.mxu0 0.0
        %4094 = vmatprep.subr.mxu0 0.0
        %4095 = vmatpush2.xpose.msra.mxu0 0.0
        %4096 = vmatprep.subr.mxu0 0.0
        %4097 = vmatpush2.xpose.msra.mxu0 0.0
        %4098 = vmatprep.subr.mxu0 0.0
        %4099 = vmatpush2.xpose.msra.mxu0 0.0
        %4100 = vmatprep.subr.mxu0 0.0
        %4101 = vmatpush2.xpose.msra.mxu0 0.0
        %4102 = vmatprep.subr.mxu0 0.0
        %4103 = vmatpush2.xpose.msra.mxu0 0.0
        %4104 = vmatprep.subr.mxu0 0.0
        %4105 = vmatpush2.xpose.msra.mxu0 0.0
        %4106 = vmatprep.subr.mxu0 0.0
        %4107 = vmatpush2.xpose.msra.mxu0 0.0
        %4108 = vmatprep.subr.mxu0 0.0
        %4109 = vmatpush2.xpose.msra.mxu0 0.0
        %4110 = vmatprep.subr.mxu0 0.0
        %4111 = vmatpush2.xpose.msra.mxu0 0.0
        %4112 = vmatprep.mubr.f32.mxu0 %v3412
        %4113 = vmatmul.mubr.f32.gmra.mxu0 %v3410
        %v4114 = vpop.f32.mrf.mxu0
        %v4115 = vadd.f32 %v4045, %v4114
        %v4116 = vpop.f32.mrf.mxu0
        %4117 = vdwg.mxu0
        %4118 = vmatprep.subr.mxu0 %v3295
        %4119 = vmatpush1.xpose.msra.mxu0 %v3294
        %4120 = vmatprep.subr.mxu0 %v3231
        %4121 = vmatpush1.xpose.msra.mxu0 %v3230
        %4122 = vmatprep.subr.mxu0 %v3167
        %4123 = vmatpush1.xpose.msra.mxu0 %v3166
        %4124 = vmatprep.subr.mxu0 %v3103
        %4125 = vmatpush1.xpose.msra.mxu0 %v3102
        %4126 = vmatprep.subr.mxu0 %v3039
        %4127 = vmatpush1.xpose.msra.mxu0 %v3038
        %4128 = vmatprep.subr.mxu0 %v2975
        %4129 = vmatpush1.xpose.msra.mxu0 %v2974
        %4130 = vmatprep.subr.mxu0 %v2911
        %4131 = vmatpush1.xpose.msra.mxu0 %v2910
        %4132 = vmatprep.subr.mxu0 %v2847
        %4133 = vmatpush1.xpose.msra.mxu0 %v2846
        %4134 = vmatprep.subr.mxu0 %v2783
        %4135 = vmatpush1.xpose.msra.mxu0 %v2782
        %4136 = vmatprep.subr.mxu0 %v2719
        %4137 = vmatpush1.xpose.msra.mxu0 %v2718
        %4138 = vmatprep.subr.mxu0 %v2655
        %4139 = vmatpush1.xpose.msra.mxu0 %v2654
        %4140 = vmatprep.subr.mxu0 %v2591
        %4141 = vmatpush1.xpose.msra.mxu0 %v2590
        %4142 = vmatprep.subr.mxu0 %v2527
        %4143 = vmatpush1.xpose.msra.mxu0 %v2526
        %4144 = vmatprep.subr.mxu0 %v2463
        %4145 = vmatpush1.xpose.msra.mxu0 %v2462
        %4146 = vmatprep.subr.mxu0 %v2399
        %4147 = vmatpush1.xpose.msra.mxu0 %v2398
        %4148 = vmatprep.subr.mxu0 %v2335
        %4149 = vmatpush1.xpose.msra.mxu0 %v2334
        %4150 = vmatprep.subr.mxu0 0.0
        %4151 = vmatpush2.xpose.msra.mxu0 0.0
        %4152 = vmatprep.subr.mxu0 0.0
        %4153 = vmatpush2.xpose.msra.mxu0 0.0
        %4154 = vmatprep.subr.mxu0 0.0
        %4155 = vmatpush2.xpose.msra.mxu0 0.0
        %4156 = vmatprep.subr.mxu0 0.0
        %4157 = vmatpush2.xpose.msra.mxu0 0.0
        %4158 = vmatprep.subr.mxu0 0.0
        %4159 = vmatpush2.xpose.msra.mxu0 0.0
        %4160 = vmatprep.subr.mxu0 0.0
        %4161 = vmatpush2.xpose.msra.mxu0 0.0
        %4162 = vmatprep.subr.mxu0 0.0
        %4163 = vmatpush2.xpose.msra.mxu0 0.0
        %4164 = vmatprep.subr.mxu0 0.0
        %4165 = vmatpush2.xpose.msra.mxu0 0.0
        %4166 = vmatprep.subr.mxu0 0.0
        %4167 = vmatpush2.xpose.msra.mxu0 0.0
        %4168 = vmatprep.subr.mxu0 0.0
        %4169 = vmatpush2.xpose.msra.mxu0 0.0
        %4170 = vmatprep.subr.mxu0 0.0
        %4171 = vmatpush2.xpose.msra.mxu0 0.0
        %4172 = vmatprep.subr.mxu0 0.0
        %4173 = vmatpush2.xpose.msra.mxu0 0.0
        %4174 = vmatprep.subr.mxu0 0.0
        %4175 = vmatpush2.xpose.msra.mxu0 0.0
        %4176 = vmatprep.subr.mxu0 0.0
        %4177 = vmatpush2.xpose.msra.mxu0 0.0
        %4178 = vmatprep.subr.mxu0 0.0
        %4179 = vmatpush2.xpose.msra.mxu0 0.0
        %4180 = vmatprep.subr.mxu0 0.0
        %4181 = vmatpush2.xpose.msra.mxu0 0.0
        %4182 = vmatprep.mubr.f32.mxu0 %v3428
        %4183 = vmatmul.mubr.f32.gmra.mxu0 %v3420
        %v4184 = vpop.f32.mrf.mxu0
        %v4185 = vadd.f32 %v4115, %v4184
        %v4186 = vpop.f32.mrf.mxu0
        %4187 = vdwg.mxu0
        %4188 = vmatprep.subr.mxu0 %v3297
        %4189 = vmatpush1.xpose.msra.mxu0 %v3296
        %4190 = vmatprep.subr.mxu0 %v3233
        %4191 = vmatpush1.xpose.msra.mxu0 %v3232
        %4192 = vmatprep.subr.mxu0 %v3169
        %4193 = vmatpush1.xpose.msra.mxu0 %v3168
        %4194 = vmatprep.subr.mxu0 %v3105
        %4195 = vmatpush1.xpose.msra.mxu0 %v3104
        %4196 = vmatprep.subr.mxu0 %v3041
        %4197 = vmatpush1.xpose.msra.mxu0 %v3040
        %4198 = vmatprep.subr.mxu0 %v2977
        %4199 = vmatpush1.xpose.msra.mxu0 %v2976
        %4200 = vmatprep.subr.mxu0 %v2913
        %4201 = vmatpush1.xpose.msra.mxu0 %v2912
        %4202 = vmatprep.subr.mxu0 %v2849
        %4203 = vmatpush1.xpose.msra.mxu0 %v2848
        %4204 = vmatprep.subr.mxu0 %v2785
        %4205 = vmatpush1.xpose.msra.mxu0 %v2784
        %4206 = vmatprep.subr.mxu0 %v2721
        %4207 = vmatpush1.xpose.msra.mxu0 %v2720
        %4208 = vmatprep.subr.mxu0 %v2657
        %4209 = vmatpush1.xpose.msra.mxu0 %v2656
        %4210 = vmatprep.subr.mxu0 %v2593
        %4211 = vmatpush1.xpose.msra.mxu0 %v2592
        %4212 = vmatprep.subr.mxu0 %v2529
        %4213 = vmatpush1.xpose.msra.mxu0 %v2528
        %4214 = vmatprep.subr.mxu0 %v2465
        %4215 = vmatpush1.xpose.msra.mxu0 %v2464
        %4216 = vmatprep.subr.mxu0 %v2401
        %4217 = vmatpush1.xpose.msra.mxu0 %v2400
        %4218 = vmatprep.subr.mxu0 %v2337
        %4219 = vmatpush1.xpose.msra.mxu0 %v2336
        %4220 = vmatprep.subr.mxu0 0.0
        %4221 = vmatpush2.xpose.msra.mxu0 0.0
        %4222 = vmatprep.subr.mxu0 0.0
        %4223 = vmatpush2.xpose.msra.mxu0 0.0
        %4224 = vmatprep.subr.mxu0 0.0
        %4225 = vmatpush2.xpose.msra.mxu0 0.0
        %4226 = vmatprep.subr.mxu0 0.0
        %4227 = vmatpush2.xpose.msra.mxu0 0.0
        %4228 = vmatprep.subr.mxu0 0.0
        %4229 = vmatpush2.xpose.msra.mxu0 0.0
        %4230 = vmatprep.subr.mxu0 0.0
        %4231 = vmatpush2.xpose.msra.mxu0 0.0
        %4232 = vmatprep.subr.mxu0 0.0
        %4233 = vmatpush2.xpose.msra.mxu0 0.0
        %4234 = vmatprep.subr.mxu0 0.0
        %4235 = vmatpush2.xpose.msra.mxu0 0.0
        %4236 = vmatprep.subr.mxu0 0.0
        %4237 = vmatpush2.xpose.msra.mxu0 0.0
        %4238 = vmatprep.subr.mxu0 0.0
        %4239 = vmatpush2.xpose.msra.mxu0 0.0
        %4240 = vmatprep.subr.mxu0 0.0
        %4241 = vmatpush2.xpose.msra.mxu0 0.0
        %4242 = vmatprep.subr.mxu0 0.0
        %4243 = vmatpush2.xpose.msra.mxu0 0.0
        %4244 = vmatprep.subr.mxu0 0.0
        %4245 = vmatpush2.xpose.msra.mxu0 0.0
        %4246 = vmatprep.subr.mxu0 0.0
        %4247 = vmatpush2.xpose.msra.mxu0 0.0
        %4248 = vmatprep.subr.mxu0 0.0
        %4249 = vmatpush2.xpose.msra.mxu0 0.0
        %4250 = vmatprep.subr.mxu0 0.0
        %4251 = vmatpush2.xpose.msra.mxu0 0.0
        %4252 = vmatprep.mubr.f32.mxu0 %v3429
        %4253 = vmatmul.mubr.f32.gmra.mxu0 %v3427
        %v4254 = vpop.f32.mrf.mxu0
        %v4255 = vadd.f32 %v4185, %v4254
        %v4256 = vpop.f32.mrf.mxu0
        %4257 = vdwg.mxu0
        %4258 = vmatprep.subr.mxu0 %v3299
        %4259 = vmatpush1.xpose.msra.mxu0 %v3298
        %4260 = vmatprep.subr.mxu0 %v3235
        %4261 = vmatpush1.xpose.msra.mxu0 %v3234
        %4262 = vmatprep.subr.mxu0 %v3171
        %4263 = vmatpush1.xpose.msra.mxu0 %v3170
        %4264 = vmatprep.subr.mxu0 %v3107
        %4265 = vmatpush1.xpose.msra.mxu0 %v3106
        %4266 = vmatprep.subr.mxu0 %v3043
        %4267 = vmatpush1.xpose.msra.mxu0 %v3042
        %4268 = vmatprep.subr.mxu0 %v2979
        %4269 = vmatpush1.xpose.msra.mxu0 %v2978
        %4270 = vmatprep.subr.mxu0 %v2915
        %4271 = vmatpush1.xpose.msra.mxu0 %v2914
        %4272 = vmatprep.subr.mxu0 %v2851
        %4273 = vmatpush1.xpose.msra.mxu0 %v2850
        %4274 = vmatprep.subr.mxu0 %v2787
        %4275 = vmatpush1.xpose.msra.mxu0 %v2786
        %4276 = vmatprep.subr.mxu0 %v2723
        %4277 = vmatpush1.xpose.msra.mxu0 %v2722
        %4278 = vmatprep.subr.mxu0 %v2659
        %4279 = vmatpush1.xpose.msra.mxu0 %v2658
        %4280 = vmatprep.subr.mxu0 %v2595
        %4281 = vmatpush1.xpose.msra.mxu0 %v2594
        %4282 = vmatprep.subr.mxu0 %v2531
        %4283 = vmatpush1.xpose.msra.mxu0 %v2530
        %4284 = vmatprep.subr.mxu0 %v2467
        %4285 = vmatpush1.xpose.msra.mxu0 %v2466
        %4286 = vmatprep.subr.mxu0 %v2403
        %4287 = vmatpush1.xpose.msra.mxu0 %v2402
        %4288 = vmatprep.subr.mxu0 %v2339
        %4289 = vmatpush1.xpose.msra.mxu0 %v2338
        %4290 = vmatprep.subr.mxu0 0.0
        %4291 = vmatpush2.xpose.msra.mxu0 0.0
        %4292 = vmatprep.subr.mxu0 0.0
        %4293 = vmatpush2.xpose.msra.mxu0 0.0
        %4294 = vmatprep.subr.mxu0 0.0
        %4295 = vmatpush2.xpose.msra.mxu0 0.0
        %4296 = vmatprep.subr.mxu0 0.0
        %4297 = vmatpush2.xpose.msra.mxu0 0.0
        %4298 = vmatprep.subr.mxu0 0.0
        %4299 = vmatpush2.xpose.msra.mxu0 0.0
        %4300 = vmatprep.subr.mxu0 0.0
        %4301 = vmatpush2.xpose.msra.mxu0 0.0
        %4302 = vmatprep.subr.mxu0 0.0
        %4303 = vmatpush2.xpose.msra.mxu0 0.0
        %4304 = vmatprep.subr.mxu0 0.0
        %4305 = vmatpush2.xpose.msra.mxu0 0.0
        %4306 = vmatprep.subr.mxu0 0.0
        %4307 = vmatpush2.xpose.msra.mxu0 0.0
        %4308 = vmatprep.subr.mxu0 0.0
        %4309 = vmatpush2.xpose.msra.mxu0 0.0
        %4310 = vmatprep.subr.mxu0 0.0
        %4311 = vmatpush2.xpose.msra.mxu0 0.0
        %4312 = vmatprep.subr.mxu0 0.0
        %4313 = vmatpush2.xpose.msra.mxu0 0.0
        %4314 = vmatprep.subr.mxu0 0.0
        %4315 = vmatpush2.xpose.msra.mxu0 0.0
        %4316 = vmatprep.subr.mxu0 0.0
        %4317 = vmatpush2.xpose.msra.mxu0 0.0
        %4318 = vmatprep.subr.mxu0 0.0
        %4319 = vmatpush2.xpose.msra.mxu0 0.0
        %4320 = vmatprep.subr.mxu0 0.0
        %4321 = vmatpush2.xpose.msra.mxu0 0.0
        %4322 = vmatprep.mubr.f32.mxu0 %v3445
        %4323 = vmatmul.mubr.f32.gmra.mxu0 %v3437
        %v4324 = vpop.f32.mrf.mxu0
        %v4325 = vadd.f32 %v4255, %v4324
        %v4326 = vpop.f32.mrf.mxu0
        %4327 = vdwg.mxu0
        %4328 = vmatprep.subr.mxu0 %v3301
        %4329 = vmatpush1.xpose.msra.mxu0 %v3300
        %4330 = vmatprep.subr.mxu0 %v3237
        %4331 = vmatpush1.xpose.msra.mxu0 %v3236
        %4332 = vmatprep.subr.mxu0 %v3173
        %4333 = vmatpush1.xpose.msra.mxu0 %v3172
        %4334 = vmatprep.subr.mxu0 %v3109
        %4335 = vmatpush1.xpose.msra.mxu0 %v3108
        %4336 = vmatprep.subr.mxu0 %v3045
        %4337 = vmatpush1.xpose.msra.mxu0 %v3044
        %4338 = vmatprep.subr.mxu0 %v2981
        %4339 = vmatpush1.xpose.msra.mxu0 %v2980
        %4340 = vmatprep.subr.mxu0 %v2917
        %4341 = vmatpush1.xpose.msra.mxu0 %v2916
        %4342 = vmatprep.subr.mxu0 %v2853
        %4343 = vmatpush1.xpose.msra.mxu0 %v2852
        %4344 = vmatprep.subr.mxu0 %v2789
        %4345 = vmatpush1.xpose.msra.mxu0 %v2788
        %4346 = vmatprep.subr.mxu0 %v2725
        %4347 = vmatpush1.xpose.msra.mxu0 %v2724
        %4348 = vmatprep.subr.mxu0 %v2661
        %4349 = vmatpush1.xpose.msra.mxu0 %v2660
        %4350 = vmatprep.subr.mxu0 %v2597
        %4351 = vmatpush1.xpose.msra.mxu0 %v2596
        %4352 = vmatprep.subr.mxu0 %v2533
        %4353 = vmatpush1.xpose.msra.mxu0 %v2532
        %4354 = vmatprep.subr.mxu0 %v2469
        %4355 = vmatpush1.xpose.msra.mxu0 %v2468
        %4356 = vmatprep.subr.mxu0 %v2405
        %4357 = vmatpush1.xpose.msra.mxu0 %v2404
        %4358 = vmatprep.subr.mxu0 %v2341
        %4359 = vmatpush1.xpose.msra.mxu0 %v2340
        %4360 = vmatprep.subr.mxu0 0.0
        %4361 = vmatpush2.xpose.msra.mxu0 0.0
        %4362 = vmatprep.subr.mxu0 0.0
        %4363 = vmatpush2.xpose.msra.mxu0 0.0
        %4364 = vmatprep.subr.mxu0 0.0
        %4365 = vmatpush2.xpose.msra.mxu0 0.0
        %4366 = vmatprep.subr.mxu0 0.0
        %4367 = vmatpush2.xpose.msra.mxu0 0.0
        %4368 = vmatprep.subr.mxu0 0.0
        %4369 = vmatpush2.xpose.msra.mxu0 0.0
        %4370 = vmatprep.subr.mxu0 0.0
        %4371 = vmatpush2.xpose.msra.mxu0 0.0
        %4372 = vmatprep.subr.mxu0 0.0
        %4373 = vmatpush2.xpose.msra.mxu0 0.0
        %4374 = vmatprep.subr.mxu0 0.0
        %4375 = vmatpush2.xpose.msra.mxu0 0.0
        %4376 = vmatprep.subr.mxu0 0.0
        %4377 = vmatpush2.xpose.msra.mxu0 0.0
        %4378 = vmatprep.subr.mxu0 0.0
        %4379 = vmatpush2.xpose.msra.mxu0 0.0
        %4380 = vmatprep.subr.mxu0 0.0
        %4381 = vmatpush2.xpose.msra.mxu0 0.0
        %4382 = vmatprep.subr.mxu0 0.0
        %4383 = vmatpush2.xpose.msra.mxu0 0.0
        %4384 = vmatprep.subr.mxu0 0.0
        %4385 = vmatpush2.xpose.msra.mxu0 0.0
        %4386 = vmatprep.subr.mxu0 0.0
        %4387 = vmatpush2.xpose.msra.mxu0 0.0
        %4388 = vmatprep.subr.mxu0 0.0
        %4389 = vmatpush2.xpose.msra.mxu0 0.0
        %4390 = vmatprep.subr.mxu0 0.0
        %4391 = vmatpush2.xpose.msra.mxu0 0.0
        %4392 = vmatprep.mubr.f32.mxu0 %v3446
        %4393 = vmatmul.mubr.f32.gmra.mxu0 %v3444
        %v4394 = vpop.f32.mrf.mxu0
        %v4395 = vadd.f32 %v4325, %v4394
        %v4396 = vpop.f32.mrf.mxu0
        %4397 = vdwg.mxu0
        %4398 = vmatprep.subr.mxu0 %v3303
        %4399 = vmatpush1.xpose.msra.mxu0 %v3302
        %4400 = vmatprep.subr.mxu0 %v3239
        %4401 = vmatpush1.xpose.msra.mxu0 %v3238
        %4402 = vmatprep.subr.mxu0 %v3175
        %4403 = vmatpush1.xpose.msra.mxu0 %v3174
        %4404 = vmatprep.subr.mxu0 %v3111
        %4405 = vmatpush1.xpose.msra.mxu0 %v3110
        %4406 = vmatprep.subr.mxu0 %v3047
        %4407 = vmatpush1.xpose.msra.mxu0 %v3046
        %4408 = vmatprep.subr.mxu0 %v2983
        %4409 = vmatpush1.xpose.msra.mxu0 %v2982
        %4410 = vmatprep.subr.mxu0 %v2919
        %4411 = vmatpush1.xpose.msra.mxu0 %v2918
        %4412 = vmatprep.subr.mxu0 %v2855
        %4413 = vmatpush1.xpose.msra.mxu0 %v2854
        %4414 = vmatprep.subr.mxu0 %v2791
        %4415 = vmatpush1.xpose.msra.mxu0 %v2790
        %4416 = vmatprep.subr.mxu0 %v2727
        %4417 = vmatpush1.xpose.msra.mxu0 %v2726
        %4418 = vmatprep.subr.mxu0 %v2663
        %4419 = vmatpush1.xpose.msra.mxu0 %v2662
        %4420 = vmatprep.subr.mxu0 %v2599
        %4421 = vmatpush1.xpose.msra.mxu0 %v2598
        %4422 = vmatprep.subr.mxu0 %v2535
        %4423 = vmatpush1.xpose.msra.mxu0 %v2534
        %4424 = vmatprep.subr.mxu0 %v2471
        %4425 = vmatpush1.xpose.msra.mxu0 %v2470
        %4426 = vmatprep.subr.mxu0 %v2407
        %4427 = vmatpush1.xpose.msra.mxu0 %v2406
        %4428 = vmatprep.subr.mxu0 %v2343
        %4429 = vmatpush1.xpose.msra.mxu0 %v2342
        %4430 = vmatprep.subr.mxu0 0.0
        %4431 = vmatpush2.xpose.msra.mxu0 0.0
        %4432 = vmatprep.subr.mxu0 0.0
        %4433 = vmatpush2.xpose.msra.mxu0 0.0
        %4434 = vmatprep.subr.mxu0 0.0
        %4435 = vmatpush2.xpose.msra.mxu0 0.0
        %4436 = vmatprep.subr.mxu0 0.0
        %4437 = vmatpush2.xpose.msra.mxu0 0.0
        %4438 = vmatprep.subr.mxu0 0.0
        %4439 = vmatpush2.xpose.msra.mxu0 0.0
        %4440 = vmatprep.subr.mxu0 0.0
        %4441 = vmatpush2.xpose.msra.mxu0 0.0
        %4442 = vmatprep.subr.mxu0 0.0
        %4443 = vmatpush2.xpose.msra.mxu0 0.0
        %4444 = vmatprep.subr.mxu0 0.0
        %4445 = vmatpush2.xpose.msra.mxu0 0.0
        %4446 = vmatprep.subr.mxu0 0.0
        %4447 = vmatpush2.xpose.msra.mxu0 0.0
        %4448 = vmatprep.subr.mxu0 0.0
        %4449 = vmatpush2.xpose.msra.mxu0 0.0
        %4450 = vmatprep.subr.mxu0 0.0
        %4451 = vmatpush2.xpose.msra.mxu0 0.0
        %4452 = vmatprep.subr.mxu0 0.0
        %4453 = vmatpush2.xpose.msra.mxu0 0.0
        %4454 = vmatprep.subr.mxu0 0.0
        %4455 = vmatpush2.xpose.msra.mxu0 0.0
        %4456 = vmatprep.subr.mxu0 0.0
        %4457 = vmatpush2.xpose.msra.mxu0 0.0
        %4458 = vmatprep.subr.mxu0 0.0
        %4459 = vmatpush2.xpose.msra.mxu0 0.0
        %4460 = vmatprep.subr.mxu0 0.0
        %4461 = vmatpush2.xpose.msra.mxu0 0.0
        %4462 = vmatprep.mubr.f32.mxu0 %v3462
        %4463 = vmatmul.mubr.f32.gmra.mxu0 %v3454
        %v4464 = vpop.f32.mrf.mxu0
        %v4465 = vadd.f32 %v4395, %v4464
        %v4466 = vpop.f32.mrf.mxu0
        %4467 = vdwg.mxu0
        %4468 = vmatprep.subr.mxu0 %v3305
        %4469 = vmatpush1.xpose.msra.mxu0 %v3304
        %4470 = vmatprep.subr.mxu0 %v3241
        %4471 = vmatpush1.xpose.msra.mxu0 %v3240
        %4472 = vmatprep.subr.mxu0 %v3177
        %4473 = vmatpush1.xpose.msra.mxu0 %v3176
        %4474 = vmatprep.subr.mxu0 %v3113
        %4475 = vmatpush1.xpose.msra.mxu0 %v3112
        %4476 = vmatprep.subr.mxu0 %v3049
        %4477 = vmatpush1.xpose.msra.mxu0 %v3048
        %4478 = vmatprep.subr.mxu0 %v2985
        %4479 = vmatpush1.xpose.msra.mxu0 %v2984
        %4480 = vmatprep.subr.mxu0 %v2921
        %4481 = vmatpush1.xpose.msra.mxu0 %v2920
        %4482 = vmatprep.subr.mxu0 %v2857
        %4483 = vmatpush1.xpose.msra.mxu0 %v2856
        %4484 = vmatprep.subr.mxu0 %v2793
        %4485 = vmatpush1.xpose.msra.mxu0 %v2792
        %4486 = vmatprep.subr.mxu0 %v2729
        %4487 = vmatpush1.xpose.msra.mxu0 %v2728
        %4488 = vmatprep.subr.mxu0 %v2665
        %4489 = vmatpush1.xpose.msra.mxu0 %v2664
        %4490 = vmatprep.subr.mxu0 %v2601
        %4491 = vmatpush1.xpose.msra.mxu0 %v2600
        %4492 = vmatprep.subr.mxu0 %v2537
        %4493 = vmatpush1.xpose.msra.mxu0 %v2536
        %4494 = vmatprep.subr.mxu0 %v2473
        %4495 = vmatpush1.xpose.msra.mxu0 %v2472
        %4496 = vmatprep.subr.mxu0 %v2409
        %4497 = vmatpush1.xpose.msra.mxu0 %v2408
        %4498 = vmatprep.subr.mxu0 %v2345
        %4499 = vmatpush1.xpose.msra.mxu0 %v2344
        %4500 = vmatprep.subr.mxu0 0.0
        %4501 = vmatpush2.xpose.msra.mxu0 0.0
        %4502 = vmatprep.subr.mxu0 0.0
        %4503 = vmatpush2.xpose.msra.mxu0 0.0
        %4504 = vmatprep.subr.mxu0 0.0
        %4505 = vmatpush2.xpose.msra.mxu0 0.0
        %4506 = vmatprep.subr.mxu0 0.0
        %4507 = vmatpush2.xpose.msra.mxu0 0.0
        %4508 = vmatprep.subr.mxu0 0.0
        %4509 = vmatpush2.xpose.msra.mxu0 0.0
        %4510 = vmatprep.subr.mxu0 0.0
        %4511 = vmatpush2.xpose.msra.mxu0 0.0
        %4512 = vmatprep.subr.mxu0 0.0
        %4513 = vmatpush2.xpose.msra.mxu0 0.0
        %4514 = vmatprep.subr.mxu0 0.0
        %4515 = vmatpush2.xpose.msra.mxu0 0.0
        %4516 = vmatprep.subr.mxu0 0.0
        %4517 = vmatpush2.xpose.msra.mxu0 0.0
        %4518 = vmatprep.subr.mxu0 0.0
        %4519 = vmatpush2.xpose.msra.mxu0 0.0
        %4520 = vmatprep.subr.mxu0 0.0
        %4521 = vmatpush2.xpose.msra.mxu0 0.0
        %4522 = vmatprep.subr.mxu0 0.0
        %4523 = vmatpush2.xpose.msra.mxu0 0.0
        %4524 = vmatprep.subr.mxu0 0.0
        %4525 = vmatpush2.xpose.msra.mxu0 0.0
        %4526 = vmatprep.subr.mxu0 0.0
        %4527 = vmatpush2.xpose.msra.mxu0 0.0
        %4528 = vmatprep.subr.mxu0 0.0
        %4529 = vmatpush2.xpose.msra.mxu0 0.0
        %4530 = vmatprep.subr.mxu0 0.0
        %4531 = vmatpush2.xpose.msra.mxu0 0.0
        %4532 = vmatprep.mubr.f32.mxu0 %v3463
        %4533 = vmatmul.mubr.f32.gmra.mxu0 %v3461
        %v4534 = vpop.f32.mrf.mxu0
        %v4535 = vadd.f32 %v4465, %v4534
        %v4536 = vpop.f32.mrf.mxu0
        %4537 = vdwg.mxu0
        %4538 = vmatprep.subr.mxu0 %v3307
        %4539 = vmatpush1.xpose.msra.mxu0 %v3306
        %4540 = vmatprep.subr.mxu0 %v3243
        %4541 = vmatpush1.xpose.msra.mxu0 %v3242
        %4542 = vmatprep.subr.mxu0 %v3179
        %4543 = vmatpush1.xpose.msra.mxu0 %v3178
        %4544 = vmatprep.subr.mxu0 %v3115
        %4545 = vmatpush1.xpose.msra.mxu0 %v3114
        %4546 = vmatprep.subr.mxu0 %v3051
        %4547 = vmatpush1.xpose.msra.mxu0 %v3050
        %4548 = vmatprep.subr.mxu0 %v2987
        %4549 = vmatpush1.xpose.msra.mxu0 %v2986
        %4550 = vmatprep.subr.mxu0 %v2923
        %4551 = vmatpush1.xpose.msra.mxu0 %v2922
        %4552 = vmatprep.subr.mxu0 %v2859
        %4553 = vmatpush1.xpose.msra.mxu0 %v2858
        %4554 = vmatprep.subr.mxu0 %v2795
        %4555 = vmatpush1.xpose.msra.mxu0 %v2794
        %4556 = vmatprep.subr.mxu0 %v2731
        %4557 = vmatpush1.xpose.msra.mxu0 %v2730
        %4558 = vmatprep.subr.mxu0 %v2667
        %4559 = vmatpush1.xpose.msra.mxu0 %v2666
        %4560 = vmatprep.subr.mxu0 %v2603
        %4561 = vmatpush1.xpose.msra.mxu0 %v2602
        %4562 = vmatprep.subr.mxu0 %v2539
        %4563 = vmatpush1.xpose.msra.mxu0 %v2538
        %4564 = vmatprep.subr.mxu0 %v2475
        %4565 = vmatpush1.xpose.msra.mxu0 %v2474
        %4566 = vmatprep.subr.mxu0 %v2411
        %4567 = vmatpush1.xpose.msra.mxu0 %v2410
        %4568 = vmatprep.subr.mxu0 %v2347
        %4569 = vmatpush1.xpose.msra.mxu0 %v2346
        %4570 = vmatprep.subr.mxu0 0.0
        %4571 = vmatpush2.xpose.msra.mxu0 0.0
        %4572 = vmatprep.subr.mxu0 0.0
        %4573 = vmatpush2.xpose.msra.mxu0 0.0
        %4574 = vmatprep.subr.mxu0 0.0
        %4575 = vmatpush2.xpose.msra.mxu0 0.0
        %4576 = vmatprep.subr.mxu0 0.0
        %4577 = vmatpush2.xpose.msra.mxu0 0.0
        %4578 = vmatprep.subr.mxu0 0.0
        %4579 = vmatpush2.xpose.msra.mxu0 0.0
        %4580 = vmatprep.subr.mxu0 0.0
        %4581 = vmatpush2.xpose.msra.mxu0 0.0
        %4582 = vmatprep.subr.mxu0 0.0
        %4583 = vmatpush2.xpose.msra.mxu0 0.0
        %4584 = vmatprep.subr.mxu0 0.0
        %4585 = vmatpush2.xpose.msra.mxu0 0.0
        %4586 = vmatprep.subr.mxu0 0.0
        %4587 = vmatpush2.xpose.msra.mxu0 0.0
        %4588 = vmatprep.subr.mxu0 0.0
        %4589 = vmatpush2.xpose.msra.mxu0 0.0
        %4590 = vmatprep.subr.mxu0 0.0
        %4591 = vmatpush2.xpose.msra.mxu0 0.0
        %4592 = vmatprep.subr.mxu0 0.0
        %4593 = vmatpush2.xpose.msra.mxu0 0.0
        %4594 = vmatprep.subr.mxu0 0.0
        %4595 = vmatpush2.xpose.msra.mxu0 0.0
        %4596 = vmatprep.subr.mxu0 0.0
        %4597 = vmatpush2.xpose.msra.mxu0 0.0
        %4598 = vmatprep.subr.mxu0 0.0
        %4599 = vmatpush2.xpose.msra.mxu0 0.0
        %4600 = vmatprep.subr.mxu0 0.0
        %4601 = vmatpush2.xpose.msra.mxu0 0.0
        %4602 = vmatprep.mubr.f32.mxu0 %v3479
        %4603 = vmatmul.mubr.f32.gmra.mxu0 %v3471
        %v4604 = vpop.f32.mrf.mxu0
        %v4605 = vadd.f32 %v4535, %v4604
        %v4606 = vpop.f32.mrf.mxu0
        %4607 = vdwg.mxu0
        %4608 = vmatprep.subr.mxu0 %v3309
        %4609 = vmatpush1.xpose.msra.mxu0 %v3308
        %4610 = vmatprep.subr.mxu0 %v3245
        %4611 = vmatpush1.xpose.msra.mxu0 %v3244
        %4612 = vmatprep.subr.mxu0 %v3181
        %4613 = vmatpush1.xpose.msra.mxu0 %v3180
        %4614 = vmatprep.subr.mxu0 %v3117
        %4615 = vmatpush1.xpose.msra.mxu0 %v3116
        %4616 = vmatprep.subr.mxu0 %v3053
        %4617 = vmatpush1.xpose.msra.mxu0 %v3052
        %4618 = vmatprep.subr.mxu0 %v2989
        %4619 = vmatpush1.xpose.msra.mxu0 %v2988
        %4620 = vmatprep.subr.mxu0 %v2925
        %4621 = vmatpush1.xpose.msra.mxu0 %v2924
        %4622 = vmatprep.subr.mxu0 %v2861
        %4623 = vmatpush1.xpose.msra.mxu0 %v2860
        %4624 = vmatprep.subr.mxu0 %v2797
        %4625 = vmatpush1.xpose.msra.mxu0 %v2796
        %4626 = vmatprep.subr.mxu0 %v2733
        %4627 = vmatpush1.xpose.msra.mxu0 %v2732
        %4628 = vmatprep.subr.mxu0 %v2669
        %4629 = vmatpush1.xpose.msra.mxu0 %v2668
        %4630 = vmatprep.subr.mxu0 %v2605
        %4631 = vmatpush1.xpose.msra.mxu0 %v2604
        %4632 = vmatprep.subr.mxu0 %v2541
        %4633 = vmatpush1.xpose.msra.mxu0 %v2540
        %4634 = vmatprep.subr.mxu0 %v2477
        %4635 = vmatpush1.xpose.msra.mxu0 %v2476
        %4636 = vmatprep.subr.mxu0 %v2413
        %4637 = vmatpush1.xpose.msra.mxu0 %v2412
        %4638 = vmatprep.subr.mxu0 %v2349
        %4639 = vmatpush1.xpose.msra.mxu0 %v2348
        %4640 = vmatprep.subr.mxu0 0.0
        %4641 = vmatpush2.xpose.msra.mxu0 0.0
        %4642 = vmatprep.subr.mxu0 0.0
        %4643 = vmatpush2.xpose.msra.mxu0 0.0
        %4644 = vmatprep.subr.mxu0 0.0
        %4645 = vmatpush2.xpose.msra.mxu0 0.0
        %4646 = vmatprep.subr.mxu0 0.0
        %4647 = vmatpush2.xpose.msra.mxu0 0.0
        %4648 = vmatprep.subr.mxu0 0.0
        %4649 = vmatpush2.xpose.msra.mxu0 0.0
        %4650 = vmatprep.subr.mxu0 0.0
        %4651 = vmatpush2.xpose.msra.mxu0 0.0
        %4652 = vmatprep.subr.mxu0 0.0
        %4653 = vmatpush2.xpose.msra.mxu0 0.0
        %4654 = vmatprep.subr.mxu0 0.0
        %4655 = vmatpush2.xpose.msra.mxu0 0.0
        %4656 = vmatprep.subr.mxu0 0.0
        %4657 = vmatpush2.xpose.msra.mxu0 0.0
        %4658 = vmatprep.subr.mxu0 0.0
        %4659 = vmatpush2.xpose.msra.mxu0 0.0
        %4660 = vmatprep.subr.mxu0 0.0
        %4661 = vmatpush2.xpose.msra.mxu0 0.0
        %4662 = vmatprep.subr.mxu0 0.0
        %4663 = vmatpush2.xpose.msra.mxu0 0.0
        %4664 = vmatprep.subr.mxu0 0.0
        %4665 = vmatpush2.xpose.msra.mxu0 0.0
        %4666 = vmatprep.subr.mxu0 0.0
        %4667 = vmatpush2.xpose.msra.mxu0 0.0
        %4668 = vmatprep.subr.mxu0 0.0
        %4669 = vmatpush2.xpose.msra.mxu0 0.0
        %4670 = vmatprep.subr.mxu0 0.0
        %4671 = vmatpush2.xpose.msra.mxu0 0.0
        %4672 = vmatprep.mubr.f32.mxu0 %v3480
        %4673 = vmatmul.mubr.f32.gmra.mxu0 %v3478
        %v4674 = vpop.f32.mrf.mxu0
        %v4675 = vadd.f32 %v4605, %v4674
        %v4676 = vpop.f32.mrf.mxu0
        %4677 = vdwg.mxu0
        %4678 = vmatprep.subr.mxu0 %v3311
        %4679 = vmatpush1.xpose.msra.mxu0 %v3310
        %4680 = vmatprep.subr.mxu0 %v3247
        %4681 = vmatpush1.xpose.msra.mxu0 %v3246
        %4682 = vmatprep.subr.mxu0 %v3183
        %4683 = vmatpush1.xpose.msra.mxu0 %v3182
        %4684 = vmatprep.subr.mxu0 %v3119
        %4685 = vmatpush1.xpose.msra.mxu0 %v3118
        %4686 = vmatprep.subr.mxu0 %v3055
        %4687 = vmatpush1.xpose.msra.mxu0 %v3054
        %4688 = vmatprep.subr.mxu0 %v2991
        %4689 = vmatpush1.xpose.msra.mxu0 %v2990
        %4690 = vmatprep.subr.mxu0 %v2927
        %4691 = vmatpush1.xpose.msra.mxu0 %v2926
        %4692 = vmatprep.subr.mxu0 %v2863
        %4693 = vmatpush1.xpose.msra.mxu0 %v2862
        %4694 = vmatprep.subr.mxu0 %v2799
        %4695 = vmatpush1.xpose.msra.mxu0 %v2798
        %4696 = vmatprep.subr.mxu0 %v2735
        %4697 = vmatpush1.xpose.msra.mxu0 %v2734
        %4698 = vmatprep.subr.mxu0 %v2671
        %4699 = vmatpush1.xpose.msra.mxu0 %v2670
        %4700 = vmatprep.subr.mxu0 %v2607
        %4701 = vmatpush1.xpose.msra.mxu0 %v2606
        %4702 = vmatprep.subr.mxu0 %v2543
        %4703 = vmatpush1.xpose.msra.mxu0 %v2542
        %4704 = vmatprep.subr.mxu0 %v2479
        %4705 = vmatpush1.xpose.msra.mxu0 %v2478
        %4706 = vmatprep.subr.mxu0 %v2415
        %4707 = vmatpush1.xpose.msra.mxu0 %v2414
        %4708 = vmatprep.subr.mxu0 %v2351
        %4709 = vmatpush1.xpose.msra.mxu0 %v2350
        %4710 = vmatprep.subr.mxu0 0.0
        %4711 = vmatpush2.xpose.msra.mxu0 0.0
        %4712 = vmatprep.subr.mxu0 0.0
        %4713 = vmatpush2.xpose.msra.mxu0 0.0
        %4714 = vmatprep.subr.mxu0 0.0
        %4715 = vmatpush2.xpose.msra.mxu0 0.0
        %4716 = vmatprep.subr.mxu0 0.0
        %4717 = vmatpush2.xpose.msra.mxu0 0.0
        %4718 = vmatprep.subr.mxu0 0.0
        %4719 = vmatpush2.xpose.msra.mxu0 0.0
        %4720 = vmatprep.subr.mxu0 0.0
        %4721 = vmatpush2.xpose.msra.mxu0 0.0
        %4722 = vmatprep.subr.mxu0 0.0
        %4723 = vmatpush2.xpose.msra.mxu0 0.0
        %4724 = vmatprep.subr.mxu0 0.0
        %4725 = vmatpush2.xpose.msra.mxu0 0.0
        %4726 = vmatprep.subr.mxu0 0.0
        %4727 = vmatpush2.xpose.msra.mxu0 0.0
        %4728 = vmatprep.subr.mxu0 0.0
        %4729 = vmatpush2.xpose.msra.mxu0 0.0
        %4730 = vmatprep.subr.mxu0 0.0
        %4731 = vmatpush2.xpose.msra.mxu0 0.0
        %4732 = vmatprep.subr.mxu0 0.0
        %4733 = vmatpush2.xpose.msra.mxu0 0.0
        %4734 = vmatprep.subr.mxu0 0.0
        %4735 = vmatpush2.xpose.msra.mxu0 0.0
        %4736 = vmatprep.subr.mxu0 0.0
        %4737 = vmatpush2.xpose.msra.mxu0 0.0
        %4738 = vmatprep.subr.mxu0 0.0
        %4739 = vmatpush2.xpose.msra.mxu0 0.0
        %4740 = vmatprep.subr.mxu0 0.0
        %4741 = vmatpush2.xpose.msra.mxu0 0.0
        %4742 = vmatprep.mubr.f32.mxu0 %v3496
        %4743 = vmatmul.mubr.f32.gmra.mxu0 %v3488
        %v4744 = vpop.f32.mrf.mxu0
        %v4745 = vadd.f32 %v4675, %v4744
        %v4746 = vpop.f32.mrf.mxu0
        %4747 = vdwg.mxu0
        %4748 = vmatprep.subr.mxu0 %v3313
        %4749 = vmatpush1.xpose.msra.mxu0 %v3312
        %4750 = vmatprep.subr.mxu0 %v3249
        %4751 = vmatpush1.xpose.msra.mxu0 %v3248
        %4752 = vmatprep.subr.mxu0 %v3185
        %4753 = vmatpush1.xpose.msra.mxu0 %v3184
        %4754 = vmatprep.subr.mxu0 %v3121
        %4755 = vmatpush1.xpose.msra.mxu0 %v3120
        %4756 = vmatprep.subr.mxu0 %v3057
        %4757 = vmatpush1.xpose.msra.mxu0 %v3056
        %4758 = vmatprep.subr.mxu0 %v2993
        %4759 = vmatpush1.xpose.msra.mxu0 %v2992
        %4760 = vmatprep.subr.mxu0 %v2929
        %4761 = vmatpush1.xpose.msra.mxu0 %v2928
        %4762 = vmatprep.subr.mxu0 %v2865
        %4763 = vmatpush1.xpose.msra.mxu0 %v2864
        %4764 = vmatprep.subr.mxu0 %v2801
        %4765 = vmatpush1.xpose.msra.mxu0 %v2800
        %4766 = vmatprep.subr.mxu0 %v2737
        %4767 = vmatpush1.xpose.msra.mxu0 %v2736
        %4768 = vmatprep.subr.mxu0 %v2673
        %4769 = vmatpush1.xpose.msra.mxu0 %v2672
        %4770 = vmatprep.subr.mxu0 %v2609
        %4771 = vmatpush1.xpose.msra.mxu0 %v2608
        %4772 = vmatprep.subr.mxu0 %v2545
        %4773 = vmatpush1.xpose.msra.mxu0 %v2544
        %4774 = vmatprep.subr.mxu0 %v2481
        %4775 = vmatpush1.xpose.msra.mxu0 %v2480
        %4776 = vmatprep.subr.mxu0 %v2417
        %4777 = vmatpush1.xpose.msra.mxu0 %v2416
        %4778 = vmatprep.subr.mxu0 %v2353
        %4779 = vmatpush1.xpose.msra.mxu0 %v2352
        %4780 = vmatprep.subr.mxu0 0.0
        %4781 = vmatpush2.xpose.msra.mxu0 0.0
        %4782 = vmatprep.subr.mxu0 0.0
        %4783 = vmatpush2.xpose.msra.mxu0 0.0
        %4784 = vmatprep.subr.mxu0 0.0
        %4785 = vmatpush2.xpose.msra.mxu0 0.0
        %4786 = vmatprep.subr.mxu0 0.0
        %4787 = vmatpush2.xpose.msra.mxu0 0.0
        %4788 = vmatprep.subr.mxu0 0.0
        %4789 = vmatpush2.xpose.msra.mxu0 0.0
        %4790 = vmatprep.subr.mxu0 0.0
        %4791 = vmatpush2.xpose.msra.mxu0 0.0
        %4792 = vmatprep.subr.mxu0 0.0
        %4793 = vmatpush2.xpose.msra.mxu0 0.0
        %4794 = vmatprep.subr.mxu0 0.0
        %4795 = vmatpush2.xpose.msra.mxu0 0.0
        %4796 = vmatprep.subr.mxu0 0.0
        %4797 = vmatpush2.xpose.msra.mxu0 0.0
        %4798 = vmatprep.subr.mxu0 0.0
        %4799 = vmatpush2.xpose.msra.mxu0 0.0
        %4800 = vmatprep.subr.mxu0 0.0
        %4801 = vmatpush2.xpose.msra.mxu0 0.0
        %4802 = vmatprep.subr.mxu0 0.0
        %4803 = vmatpush2.xpose.msra.mxu0 0.0
        %4804 = vmatprep.subr.mxu0 0.0
        %4805 = vmatpush2.xpose.msra.mxu0 0.0
        %4806 = vmatprep.subr.mxu0 0.0
        %4807 = vmatpush2.xpose.msra.mxu0 0.0
        %4808 = vmatprep.subr.mxu0 0.0
        %4809 = vmatpush2.xpose.msra.mxu0 0.0
        %4810 = vmatprep.subr.mxu0 0.0
        %4811 = vmatpush2.xpose.msra.mxu0 0.0
        %4812 = vmatprep.mubr.f32.mxu0 %v3497
        %4813 = vmatmul.mubr.f32.gmra.mxu0 %v3495
        %v4814 = vpop.f32.mrf.mxu0
        %v4815 = vadd.f32 %v4745, %v4814
        %v4816 = vpop.f32.mrf.mxu0
        %4817 = vdwg.mxu0
        %4818 = vmatprep.subr.mxu0 %v3315
        %4819 = vmatpush1.xpose.msra.mxu0 %v3314
        %4820 = vmatprep.subr.mxu0 %v3251
        %4821 = vmatpush1.xpose.msra.mxu0 %v3250
        %4822 = vmatprep.subr.mxu0 %v3187
        %4823 = vmatpush1.xpose.msra.mxu0 %v3186
        %4824 = vmatprep.subr.mxu0 %v3123
        %4825 = vmatpush1.xpose.msra.mxu0 %v3122
        %4826 = vmatprep.subr.mxu0 %v3059
        %4827 = vmatpush1.xpose.msra.mxu0 %v3058
        %4828 = vmatprep.subr.mxu0 %v2995
        %4829 = vmatpush1.xpose.msra.mxu0 %v2994
        %4830 = vmatprep.subr.mxu0 %v2931
        %4831 = vmatpush1.xpose.msra.mxu0 %v2930
        %4832 = vmatprep.subr.mxu0 %v2867
        %4833 = vmatpush1.xpose.msra.mxu0 %v2866
        %4834 = vmatprep.subr.mxu0 %v2803
        %4835 = vmatpush1.xpose.msra.mxu0 %v2802
        %4836 = vmatprep.subr.mxu0 %v2739
        %4837 = vmatpush1.xpose.msra.mxu0 %v2738
        %4838 = vmatprep.subr.mxu0 %v2675
        %4839 = vmatpush1.xpose.msra.mxu0 %v2674
        %4840 = vmatprep.subr.mxu0 %v2611
        %4841 = vmatpush1.xpose.msra.mxu0 %v2610
        %4842 = vmatprep.subr.mxu0 %v2547
        %4843 = vmatpush1.xpose.msra.mxu0 %v2546
        %4844 = vmatprep.subr.mxu0 %v2483
        %4845 = vmatpush1.xpose.msra.mxu0 %v2482
        %4846 = vmatprep.subr.mxu0 %v2419
        %4847 = vmatpush1.xpose.msra.mxu0 %v2418
        %4848 = vmatprep.subr.mxu0 %v2355
        %4849 = vmatpush1.xpose.msra.mxu0 %v2354
        %4850 = vmatprep.subr.mxu0 0.0
        %4851 = vmatpush2.xpose.msra.mxu0 0.0
        %4852 = vmatprep.subr.mxu0 0.0
        %4853 = vmatpush2.xpose.msra.mxu0 0.0
        %4854 = vmatprep.subr.mxu0 0.0
        %4855 = vmatpush2.xpose.msra.mxu0 0.0
        %4856 = vmatprep.subr.mxu0 0.0
        %4857 = vmatpush2.xpose.msra.mxu0 0.0
        %4858 = vmatprep.subr.mxu0 0.0
        %4859 = vmatpush2.xpose.msra.mxu0 0.0
        %4860 = vmatprep.subr.mxu0 0.0
        %4861 = vmatpush2.xpose.msra.mxu0 0.0
        %4862 = vmatprep.subr.mxu0 0.0
        %4863 = vmatpush2.xpose.msra.mxu0 0.0
        %4864 = vmatprep.subr.mxu0 0.0
        %4865 = vmatpush2.xpose.msra.mxu0 0.0
        %4866 = vmatprep.subr.mxu0 0.0
        %4867 = vmatpush2.xpose.msra.mxu0 0.0
        %4868 = vmatprep.subr.mxu0 0.0
        %4869 = vmatpush2.xpose.msra.mxu0 0.0
        %4870 = vmatprep.subr.mxu0 0.0
        %4871 = vmatpush2.xpose.msra.mxu0 0.0
        %4872 = vmatprep.subr.mxu0 0.0
        %4873 = vmatpush2.xpose.msra.mxu0 0.0
        %4874 = vmatprep.subr.mxu0 0.0
        %4875 = vmatpush2.xpose.msra.mxu0 0.0
        %4876 = vmatprep.subr.mxu0 0.0
        %4877 = vmatpush2.xpose.msra.mxu0 0.0
        %4878 = vmatprep.subr.mxu0 0.0
        %4879 = vmatpush2.xpose.msra.mxu0 0.0
        %4880 = vmatprep.subr.mxu0 0.0
        %4881 = vmatpush2.xpose.msra.mxu0 0.0
        %4882 = vmatprep.mubr.f32.mxu0 %v3513
        %4883 = vmatmul.mubr.f32.gmra.mxu0 %v3505
        %v4884 = vpop.f32.mrf.mxu0
        %v4885 = vadd.f32 %v4815, %v4884
        %v4886 = vpop.f32.mrf.mxu0
        %4887 = vdwg.mxu0
        %4888 = vmatprep.subr.mxu0 %v3317
        %4889 = vmatpush1.xpose.msra.mxu0 %v3316
        %4890 = vmatprep.subr.mxu0 %v3253
        %4891 = vmatpush1.xpose.msra.mxu0 %v3252
        %4892 = vmatprep.subr.mxu0 %v3189
        %4893 = vmatpush1.xpose.msra.mxu0 %v3188
        %4894 = vmatprep.subr.mxu0 %v3125
        %4895 = vmatpush1.xpose.msra.mxu0 %v3124
        %4896 = vmatprep.subr.mxu0 %v3061
        %4897 = vmatpush1.xpose.msra.mxu0 %v3060
        %4898 = vmatprep.subr.mxu0 %v2997
        %4899 = vmatpush1.xpose.msra.mxu0 %v2996
        %4900 = vmatprep.subr.mxu0 %v2933
        %4901 = vmatpush1.xpose.msra.mxu0 %v2932
        %4902 = vmatprep.subr.mxu0 %v2869
        %4903 = vmatpush1.xpose.msra.mxu0 %v2868
        %4904 = vmatprep.subr.mxu0 %v2805
        %4905 = vmatpush1.xpose.msra.mxu0 %v2804
        %4906 = vmatprep.subr.mxu0 %v2741
        %4907 = vmatpush1.xpose.msra.mxu0 %v2740
        %4908 = vmatprep.subr.mxu0 %v2677
        %4909 = vmatpush1.xpose.msra.mxu0 %v2676
        %4910 = vmatprep.subr.mxu0 %v2613
        %4911 = vmatpush1.xpose.msra.mxu0 %v2612
        %4912 = vmatprep.subr.mxu0 %v2549
        %4913 = vmatpush1.xpose.msra.mxu0 %v2548
        %4914 = vmatprep.subr.mxu0 %v2485
        %4915 = vmatpush1.xpose.msra.mxu0 %v2484
        %4916 = vmatprep.subr.mxu0 %v2421
        %4917 = vmatpush1.xpose.msra.mxu0 %v2420
        %4918 = vmatprep.subr.mxu0 %v2357
        %4919 = vmatpush1.xpose.msra.mxu0 %v2356
        %4920 = vmatprep.subr.mxu0 0.0
        %4921 = vmatpush2.xpose.msra.mxu0 0.0
        %4922 = vmatprep.subr.mxu0 0.0
        %4923 = vmatpush2.xpose.msra.mxu0 0.0
        %4924 = vmatprep.subr.mxu0 0.0
        %4925 = vmatpush2.xpose.msra.mxu0 0.0
        %4926 = vmatprep.subr.mxu0 0.0
        %4927 = vmatpush2.xpose.msra.mxu0 0.0
        %4928 = vmatprep.subr.mxu0 0.0
        %4929 = vmatpush2.xpose.msra.mxu0 0.0
        %4930 = vmatprep.subr.mxu0 0.0
        %4931 = vmatpush2.xpose.msra.mxu0 0.0
        %4932 = vmatprep.subr.mxu0 0.0
        %4933 = vmatpush2.xpose.msra.mxu0 0.0
        %4934 = vmatprep.subr.mxu0 0.0
        %4935 = vmatpush2.xpose.msra.mxu0 0.0
        %4936 = vmatprep.subr.mxu0 0.0
        %4937 = vmatpush2.xpose.msra.mxu0 0.0
        %4938 = vmatprep.subr.mxu0 0.0
        %4939 = vmatpush2.xpose.msra.mxu0 0.0
        %4940 = vmatprep.subr.mxu0 0.0
        %4941 = vmatpush2.xpose.msra.mxu0 0.0
        %4942 = vmatprep.subr.mxu0 0.0
        %4943 = vmatpush2.xpose.msra.mxu0 0.0
        %4944 = vmatprep.subr.mxu0 0.0
        %4945 = vmatpush2.xpose.msra.mxu0 0.0
        %4946 = vmatprep.subr.mxu0 0.0
        %4947 = vmatpush2.xpose.msra.mxu0 0.0
        %4948 = vmatprep.subr.mxu0 0.0
        %4949 = vmatpush2.xpose.msra.mxu0 0.0
        %4950 = vmatprep.subr.mxu0 0.0
        %4951 = vmatpush2.xpose.msra.mxu0 0.0
        %4952 = vmatprep.mubr.f32.mxu0 %v3514
        %4953 = vmatmul.mubr.f32.gmra.mxu0 %v3512
        %v4954 = vpop.f32.mrf.mxu0
        %v4955 = vadd.f32 %v4885, %v4954
        %v4956 = vpop.f32.mrf.mxu0
        %4957 = vdwg.mxu0
        %4958 = vmatprep.subr.mxu0 %v3319
        %4959 = vmatpush1.xpose.msra.mxu0 %v3318
        %4960 = vmatprep.subr.mxu0 %v3255
        %4961 = vmatpush1.xpose.msra.mxu0 %v3254
        %4962 = vmatprep.subr.mxu0 %v3191
        %4963 = vmatpush1.xpose.msra.mxu0 %v3190
        %4964 = vmatprep.subr.mxu0 %v3127
        %4965 = vmatpush1.xpose.msra.mxu0 %v3126
        %4966 = vmatprep.subr.mxu0 %v3063
        %4967 = vmatpush1.xpose.msra.mxu0 %v3062
        %4968 = vmatprep.subr.mxu0 %v2999
        %4969 = vmatpush1.xpose.msra.mxu0 %v2998
        %4970 = vmatprep.subr.mxu0 %v2935
        %4971 = vmatpush1.xpose.msra.mxu0 %v2934
        %4972 = vmatprep.subr.mxu0 %v2871
        %4973 = vmatpush1.xpose.msra.mxu0 %v2870
        %4974 = vmatprep.subr.mxu0 %v2807
        %4975 = vmatpush1.xpose.msra.mxu0 %v2806
        %4976 = vmatprep.subr.mxu0 %v2743
        %4977 = vmatpush1.xpose.msra.mxu0 %v2742
        %4978 = vmatprep.subr.mxu0 %v2679
        %4979 = vmatpush1.xpose.msra.mxu0 %v2678
        %4980 = vmatprep.subr.mxu0 %v2615
        %4981 = vmatpush1.xpose.msra.mxu0 %v2614
        %4982 = vmatprep.subr.mxu0 %v2551
        %4983 = vmatpush1.xpose.msra.mxu0 %v2550
        %4984 = vmatprep.subr.mxu0 %v2487
        %4985 = vmatpush1.xpose.msra.mxu0 %v2486
        %4986 = vmatprep.subr.mxu0 %v2423
        %4987 = vmatpush1.xpose.msra.mxu0 %v2422
        %4988 = vmatprep.subr.mxu0 %v2359
        %4989 = vmatpush1.xpose.msra.mxu0 %v2358
        %4990 = vmatprep.subr.mxu0 0.0
        %4991 = vmatpush2.xpose.msra.mxu0 0.0
        %4992 = vmatprep.subr.mxu0 0.0
        %4993 = vmatpush2.xpose.msra.mxu0 0.0
        %4994 = vmatprep.subr.mxu0 0.0
        %4995 = vmatpush2.xpose.msra.mxu0 0.0
        %4996 = vmatprep.subr.mxu0 0.0
        %4997 = vmatpush2.xpose.msra.mxu0 0.0
        %4998 = vmatprep.subr.mxu0 0.0
        %4999 = vmatpush2.xpose.msra.mxu0 0.0
        %5000 = vmatprep.subr.mxu0 0.0
        %5001 = vmatpush2.xpose.msra.mxu0 0.0
        %5002 = vmatprep.subr.mxu0 0.0
        %5003 = vmatpush2.xpose.msra.mxu0 0.0
        %5004 = vmatprep.subr.mxu0 0.0
        %5005 = vmatpush2.xpose.msra.mxu0 0.0
        %5006 = vmatprep.subr.mxu0 0.0
        %5007 = vmatpush2.xpose.msra.mxu0 0.0
        %5008 = vmatprep.subr.mxu0 0.0
        %5009 = vmatpush2.xpose.msra.mxu0 0.0
        %5010 = vmatprep.subr.mxu0 0.0
        %5011 = vmatpush2.xpose.msra.mxu0 0.0
        %5012 = vmatprep.subr.mxu0 0.0
        %5013 = vmatpush2.xpose.msra.mxu0 0.0
        %5014 = vmatprep.subr.mxu0 0.0
        %5015 = vmatpush2.xpose.msra.mxu0 0.0
        %5016 = vmatprep.subr.mxu0 0.0
        %5017 = vmatpush2.xpose.msra.mxu0 0.0
        %5018 = vmatprep.subr.mxu0 0.0
        %5019 = vmatpush2.xpose.msra.mxu0 0.0
        %5020 = vmatprep.subr.mxu0 0.0
        %5021 = vmatpush2.xpose.msra.mxu0 0.0
        %5022 = vmatprep.mubr.f32.mxu0 %v3530
        %5023 = vmatmul.mubr.f32.gmra.mxu0 %v3522
        %v5024 = vpop.f32.mrf.mxu0
        %v5025 = vadd.f32 %v4955, %v5024
        %v5026 = vpop.f32.mrf.mxu0
        %5027 = vdwg.mxu0
        %5028 = vmatprep.subr.mxu0 %v3321
        %5029 = vmatpush1.xpose.msra.mxu0 %v3320
        %5030 = vmatprep.subr.mxu0 %v3257
        %5031 = vmatpush1.xpose.msra.mxu0 %v3256
        %5032 = vmatprep.subr.mxu0 %v3193
        %5033 = vmatpush1.xpose.msra.mxu0 %v3192
        %5034 = vmatprep.subr.mxu0 %v3129
        %5035 = vmatpush1.xpose.msra.mxu0 %v3128
        %5036 = vmatprep.subr.mxu0 %v3065
        %5037 = vmatpush1.xpose.msra.mxu0 %v3064
        %5038 = vmatprep.subr.mxu0 %v3001
        %5039 = vmatpush1.xpose.msra.mxu0 %v3000
        %5040 = vmatprep.subr.mxu0 %v2937
        %5041 = vmatpush1.xpose.msra.mxu0 %v2936
        %5042 = vmatprep.subr.mxu0 %v2873
        %5043 = vmatpush1.xpose.msra.mxu0 %v2872
        %5044 = vmatprep.subr.mxu0 %v2809
        %5045 = vmatpush1.xpose.msra.mxu0 %v2808
        %5046 = vmatprep.subr.mxu0 %v2745
        %5047 = vmatpush1.xpose.msra.mxu0 %v2744
        %5048 = vmatprep.subr.mxu0 %v2681
        %5049 = vmatpush1.xpose.msra.mxu0 %v2680
        %5050 = vmatprep.subr.mxu0 %v2617
        %5051 = vmatpush1.xpose.msra.mxu0 %v2616
        %5052 = vmatprep.subr.mxu0 %v2553
        %5053 = vmatpush1.xpose.msra.mxu0 %v2552
        %5054 = vmatprep.subr.mxu0 %v2489
        %5055 = vmatpush1.xpose.msra.mxu0 %v2488
        %5056 = vmatprep.subr.mxu0 %v2425
        %5057 = vmatpush1.xpose.msra.mxu0 %v2424
        %5058 = vmatprep.subr.mxu0 %v2361
        %5059 = vmatpush1.xpose.msra.mxu0 %v2360
        %5060 = vmatprep.subr.mxu0 0.0
        %5061 = vmatpush2.xpose.msra.mxu0 0.0
        %5062 = vmatprep.subr.mxu0 0.0
        %5063 = vmatpush2.xpose.msra.mxu0 0.0
        %5064 = vmatprep.subr.mxu0 0.0
        %5065 = vmatpush2.xpose.msra.mxu0 0.0
        %5066 = vmatprep.subr.mxu0 0.0
        %5067 = vmatpush2.xpose.msra.mxu0 0.0
        %5068 = vmatprep.subr.mxu0 0.0
        %5069 = vmatpush2.xpose.msra.mxu0 0.0
        %5070 = vmatprep.subr.mxu0 0.0
        %5071 = vmatpush2.xpose.msra.mxu0 0.0
        %5072 = vmatprep.subr.mxu0 0.0
        %5073 = vmatpush2.xpose.msra.mxu0 0.0
        %5074 = vmatprep.subr.mxu0 0.0
        %5075 = vmatpush2.xpose.msra.mxu0 0.0
        %5076 = vmatprep.subr.mxu0 0.0
        %5077 = vmatpush2.xpose.msra.mxu0 0.0
        %5078 = vmatprep.subr.mxu0 0.0
        %5079 = vmatpush2.xpose.msra.mxu0 0.0
        %5080 = vmatprep.subr.mxu0 0.0
        %5081 = vmatpush2.xpose.msra.mxu0 0.0
        %5082 = vmatprep.subr.mxu0 0.0
        %5083 = vmatpush2.xpose.msra.mxu0 0.0
        %5084 = vmatprep.subr.mxu0 0.0
        %5085 = vmatpush2.xpose.msra.mxu0 0.0
        %5086 = vmatprep.subr.mxu0 0.0
        %5087 = vmatpush2.xpose.msra.mxu0 0.0
        %5088 = vmatprep.subr.mxu0 0.0
        %5089 = vmatpush2.xpose.msra.mxu0 0.0
        %5090 = vmatprep.subr.mxu0 0.0
        %5091 = vmatpush2.xpose.msra.mxu0 0.0
        %5092 = vmatprep.mubr.f32.mxu0 %v3531
        %5093 = vmatmul.mubr.f32.gmra.mxu0 %v3529
        %v5094 = vpop.f32.mrf.mxu0
        %v5095 = vadd.f32 %v5025, %v5094
        %v5096 = vpop.f32.mrf.mxu0
        %5097 = vdwg.mxu0
        %5098 = vmatprep.subr.mxu0 %v3323
        %5099 = vmatpush1.xpose.msra.mxu0 %v3322
        %5100 = vmatprep.subr.mxu0 %v3259
        %5101 = vmatpush1.xpose.msra.mxu0 %v3258
        %5102 = vmatprep.subr.mxu0 %v3195
        %5103 = vmatpush1.xpose.msra.mxu0 %v3194
        %5104 = vmatprep.subr.mxu0 %v3131
        %5105 = vmatpush1.xpose.msra.mxu0 %v3130
        %5106 = vmatprep.subr.mxu0 %v3067
        %5107 = vmatpush1.xpose.msra.mxu0 %v3066
        %5108 = vmatprep.subr.mxu0 %v3003
        %5109 = vmatpush1.xpose.msra.mxu0 %v3002
        %5110 = vmatprep.subr.mxu0 %v2939
        %5111 = vmatpush1.xpose.msra.mxu0 %v2938
        %5112 = vmatprep.subr.mxu0 %v2875
        %5113 = vmatpush1.xpose.msra.mxu0 %v2874
        %5114 = vmatprep.subr.mxu0 %v2811
        %5115 = vmatpush1.xpose.msra.mxu0 %v2810
        %5116 = vmatprep.subr.mxu0 %v2747
        %5117 = vmatpush1.xpose.msra.mxu0 %v2746
        %5118 = vmatprep.subr.mxu0 %v2683
        %5119 = vmatpush1.xpose.msra.mxu0 %v2682
        %5120 = vmatprep.subr.mxu0 %v2619
        %5121 = vmatpush1.xpose.msra.mxu0 %v2618
        %5122 = vmatprep.subr.mxu0 %v2555
        %5123 = vmatpush1.xpose.msra.mxu0 %v2554
        %5124 = vmatprep.subr.mxu0 %v2491
        %5125 = vmatpush1.xpose.msra.mxu0 %v2490
        %5126 = vmatprep.subr.mxu0 %v2427
        %5127 = vmatpush1.xpose.msra.mxu0 %v2426
        %5128 = vmatprep.subr.mxu0 %v2363
        %5129 = vmatpush1.xpose.msra.mxu0 %v2362
        %5130 = vmatprep.subr.mxu0 0.0
        %5131 = vmatpush2.xpose.msra.mxu0 0.0
        %5132 = vmatprep.subr.mxu0 0.0
        %5133 = vmatpush2.xpose.msra.mxu0 0.0
        %5134 = vmatprep.subr.mxu0 0.0
        %5135 = vmatpush2.xpose.msra.mxu0 0.0
        %5136 = vmatprep.subr.mxu0 0.0
        %5137 = vmatpush2.xpose.msra.mxu0 0.0
        %5138 = vmatprep.subr.mxu0 0.0
        %5139 = vmatpush2.xpose.msra.mxu0 0.0
        %5140 = vmatprep.subr.mxu0 0.0
        %5141 = vmatpush2.xpose.msra.mxu0 0.0
        %5142 = vmatprep.subr.mxu0 0.0
        %5143 = vmatpush2.xpose.msra.mxu0 0.0
        %5144 = vmatprep.subr.mxu0 0.0
        %5145 = vmatpush2.xpose.msra.mxu0 0.0
        %5146 = vmatprep.subr.mxu0 0.0
        %5147 = vmatpush2.xpose.msra.mxu0 0.0
        %5148 = vmatprep.subr.mxu0 0.0
        %5149 = vmatpush2.xpose.msra.mxu0 0.0
        %5150 = vmatprep.subr.mxu0 0.0
        %5151 = vmatpush2.xpose.msra.mxu0 0.0
        %5152 = vmatprep.subr.mxu0 0.0
        %5153 = vmatpush2.xpose.msra.mxu0 0.0
        %5154 = vmatprep.subr.mxu0 0.0
        %5155 = vmatpush2.xpose.msra.mxu0 0.0
        %5156 = vmatprep.subr.mxu0 0.0
        %5157 = vmatpush2.xpose.msra.mxu0 0.0
        %5158 = vmatprep.subr.mxu0 0.0
        %5159 = vmatpush2.xpose.msra.mxu0 0.0
        %5160 = vmatprep.subr.mxu0 0.0
        %5161 = vmatpush2.xpose.msra.mxu0 0.0
        %5162 = vmatprep.mubr.f32.mxu0 %v3547
        %5163 = vmatmul.mubr.f32.gmra.mxu0 %v3539
        %v5164 = vpop.f32.mrf.mxu0
        %v5165 = vadd.f32 %v5095, %v5164
        %v5166 = vpop.f32.mrf.mxu0
        %5167 = vdwg.mxu0
        %5168 = vmatprep.subr.mxu0 %v3325
        %5169 = vmatpush1.xpose.msra.mxu0 %v3324
        %5170 = vmatprep.subr.mxu0 %v3261
        %5171 = vmatpush1.xpose.msra.mxu0 %v3260
        %5172 = vmatprep.subr.mxu0 %v3197
        %5173 = vmatpush1.xpose.msra.mxu0 %v3196
        %5174 = vmatprep.subr.mxu0 %v3133
        %5175 = vmatpush1.xpose.msra.mxu0 %v3132
        %5176 = vmatprep.subr.mxu0 %v3069
        %5177 = vmatpush1.xpose.msra.mxu0 %v3068
        %5178 = vmatprep.subr.mxu0 %v3005
        %5179 = vmatpush1.xpose.msra.mxu0 %v3004
        %5180 = vmatprep.subr.mxu0 %v2941
        %5181 = vmatpush1.xpose.msra.mxu0 %v2940
        %5182 = vmatprep.subr.mxu0 %v2877
        %5183 = vmatpush1.xpose.msra.mxu0 %v2876
        %5184 = vmatprep.subr.mxu0 %v2813
        %5185 = vmatpush1.xpose.msra.mxu0 %v2812
        %5186 = vmatprep.subr.mxu0 %v2749
        %5187 = vmatpush1.xpose.msra.mxu0 %v2748
        %5188 = vmatprep.subr.mxu0 %v2685
        %5189 = vmatpush1.xpose.msra.mxu0 %v2684
        %5190 = vmatprep.subr.mxu0 %v2621
        %5191 = vmatpush1.xpose.msra.mxu0 %v2620
        %5192 = vmatprep.subr.mxu0 %v2557
        %5193 = vmatpush1.xpose.msra.mxu0 %v2556
        %5194 = vmatprep.subr.mxu0 %v2493
        %5195 = vmatpush1.xpose.msra.mxu0 %v2492
        %5196 = vmatprep.subr.mxu0 %v2429
        %5197 = vmatpush1.xpose.msra.mxu0 %v2428
        %5198 = vmatprep.subr.mxu0 %v2365
        %5199 = vmatpush1.xpose.msra.mxu0 %v2364
        %5200 = vmatprep.subr.mxu0 0.0
        %5201 = vmatpush2.xpose.msra.mxu0 0.0
        %5202 = vmatprep.subr.mxu0 0.0
        %5203 = vmatpush2.xpose.msra.mxu0 0.0
        %5204 = vmatprep.subr.mxu0 0.0
        %5205 = vmatpush2.xpose.msra.mxu0 0.0
        %5206 = vmatprep.subr.mxu0 0.0
        %5207 = vmatpush2.xpose.msra.mxu0 0.0
        %5208 = vmatprep.subr.mxu0 0.0
        %5209 = vmatpush2.xpose.msra.mxu0 0.0
        %5210 = vmatprep.subr.mxu0 0.0
        %5211 = vmatpush2.xpose.msra.mxu0 0.0
        %5212 = vmatprep.subr.mxu0 0.0
        %5213 = vmatpush2.xpose.msra.mxu0 0.0
        %5214 = vmatprep.subr.mxu0 0.0
        %5215 = vmatpush2.xpose.msra.mxu0 0.0
        %5216 = vmatprep.subr.mxu0 0.0
        %5217 = vmatpush2.xpose.msra.mxu0 0.0
        %5218 = vmatprep.subr.mxu0 0.0
        %5219 = vmatpush2.xpose.msra.mxu0 0.0
        %5220 = vmatprep.subr.mxu0 0.0
        %5221 = vmatpush2.xpose.msra.mxu0 0.0
        %5222 = vmatprep.subr.mxu0 0.0
        %5223 = vmatpush2.xpose.msra.mxu0 0.0
        %5224 = vmatprep.subr.mxu0 0.0
        %5225 = vmatpush2.xpose.msra.mxu0 0.0
        %5226 = vmatprep.subr.mxu0 0.0
        %5227 = vmatpush2.xpose.msra.mxu0 0.0
        %5228 = vmatprep.subr.mxu0 0.0
        %5229 = vmatpush2.xpose.msra.mxu0 0.0
        %5230 = vmatprep.subr.mxu0 0.0
        %5231 = vmatpush2.xpose.msra.mxu0 0.0
        %5232 = vmatprep.mubr.f32.mxu0 %v3548
        %5233 = vmatmul.mubr.f32.gmra.mxu0 %v3546
        %v5234 = vpop.f32.mrf.mxu0
        %v5235 = vadd.f32 %v5165, %v5234
        %v5236 = vpop.f32.mrf.mxu0
        %5237 = vdwg.mxu0
        %5238 = vmatprep.subr.mxu0 %v3327
        %5239 = vmatpush1.xpose.msra.mxu0 %v3326
        %5240 = vmatprep.subr.mxu0 %v3263
        %5241 = vmatpush1.xpose.msra.mxu0 %v3262
        %5242 = vmatprep.subr.mxu0 %v3199
        %5243 = vmatpush1.xpose.msra.mxu0 %v3198
        %5244 = vmatprep.subr.mxu0 %v3135
        %5245 = vmatpush1.xpose.msra.mxu0 %v3134
        %5246 = vmatprep.subr.mxu0 %v3071
        %5247 = vmatpush1.xpose.msra.mxu0 %v3070
        %5248 = vmatprep.subr.mxu0 %v3007
        %5249 = vmatpush1.xpose.msra.mxu0 %v3006
        %5250 = vmatprep.subr.mxu0 %v2943
        %5251 = vmatpush1.xpose.msra.mxu0 %v2942
        %5252 = vmatprep.subr.mxu0 %v2879
        %5253 = vmatpush1.xpose.msra.mxu0 %v2878
        %5254 = vmatprep.subr.mxu0 %v2815
        %5255 = vmatpush1.xpose.msra.mxu0 %v2814
        %5256 = vmatprep.subr.mxu0 %v2751
        %5257 = vmatpush1.xpose.msra.mxu0 %v2750
        %5258 = vmatprep.subr.mxu0 %v2687
        %5259 = vmatpush1.xpose.msra.mxu0 %v2686
        %5260 = vmatprep.subr.mxu0 %v2623
        %5261 = vmatpush1.xpose.msra.mxu0 %v2622
        %5262 = vmatprep.subr.mxu0 %v2559
        %5263 = vmatpush1.xpose.msra.mxu0 %v2558
        %5264 = vmatprep.subr.mxu0 %v2495
        %5265 = vmatpush1.xpose.msra.mxu0 %v2494
        %5266 = vmatprep.subr.mxu0 %v2431
        %5267 = vmatpush1.xpose.msra.mxu0 %v2430
        %5268 = vmatprep.subr.mxu0 %v2367
        %5269 = vmatpush1.xpose.msra.mxu0 %v2366
        %5270 = vmatprep.subr.mxu0 0.0
        %5271 = vmatpush2.xpose.msra.mxu0 0.0
        %5272 = vmatprep.subr.mxu0 0.0
        %5273 = vmatpush2.xpose.msra.mxu0 0.0
        %5274 = vmatprep.subr.mxu0 0.0
        %5275 = vmatpush2.xpose.msra.mxu0 0.0
        %5276 = vmatprep.subr.mxu0 0.0
        %5277 = vmatpush2.xpose.msra.mxu0 0.0
        %5278 = vmatprep.subr.mxu0 0.0
        %5279 = vmatpush2.xpose.msra.mxu0 0.0
        %5280 = vmatprep.subr.mxu0 0.0
        %5281 = vmatpush2.xpose.msra.mxu0 0.0
        %5282 = vmatprep.subr.mxu0 0.0
        %5283 = vmatpush2.xpose.msra.mxu0 0.0
        %5284 = vmatprep.subr.mxu0 0.0
        %5285 = vmatpush2.xpose.msra.mxu0 0.0
        %5286 = vmatprep.subr.mxu0 0.0
        %5287 = vmatpush2.xpose.msra.mxu0 0.0
        %5288 = vmatprep.subr.mxu0 0.0
        %5289 = vmatpush2.xpose.msra.mxu0 0.0
        %5290 = vmatprep.subr.mxu0 0.0
        %5291 = vmatpush2.xpose.msra.mxu0 0.0
        %5292 = vmatprep.subr.mxu0 0.0
        %5293 = vmatpush2.xpose.msra.mxu0 0.0
        %5294 = vmatprep.subr.mxu0 0.0
        %5295 = vmatpush2.xpose.msra.mxu0 0.0
        %5296 = vmatprep.subr.mxu0 0.0
        %5297 = vmatpush2.xpose.msra.mxu0 0.0
        %5298 = vmatprep.subr.mxu0 0.0
        %5299 = vmatpush2.xpose.msra.mxu0 0.0
        %5300 = vmatprep.subr.mxu0 0.0
        %5301 = vmatpush2.xpose.msra.mxu0 0.0
        %5302 = vmatprep.mubr.f32.mxu0 %v3564
        %5303 = vmatmul.mubr.f32.gmra.mxu0 %v3556
        %v5304 = vpop.f32.mrf.mxu0
        %v5305 = vadd.f32 %v5235, %v5304
        %v5306 = vpop.f32.mrf.mxu0
        %5307 = vdwg.mxu0
        %5308 = vmatprep.subr.mxu0 %v3329
        %5309 = vmatpush1.xpose.msra.mxu0 %v3328
        %5310 = vmatprep.subr.mxu0 %v3265
        %5311 = vmatpush1.xpose.msra.mxu0 %v3264
        %5312 = vmatprep.subr.mxu0 %v3201
        %5313 = vmatpush1.xpose.msra.mxu0 %v3200
        %5314 = vmatprep.subr.mxu0 %v3137
        %5315 = vmatpush1.xpose.msra.mxu0 %v3136
        %5316 = vmatprep.subr.mxu0 %v3073
        %5317 = vmatpush1.xpose.msra.mxu0 %v3072
        %5318 = vmatprep.subr.mxu0 %v3009
        %5319 = vmatpush1.xpose.msra.mxu0 %v3008
        %5320 = vmatprep.subr.mxu0 %v2945
        %5321 = vmatpush1.xpose.msra.mxu0 %v2944
        %5322 = vmatprep.subr.mxu0 %v2881
        %5323 = vmatpush1.xpose.msra.mxu0 %v2880
        %5324 = vmatprep.subr.mxu0 %v2817
        %5325 = vmatpush1.xpose.msra.mxu0 %v2816
        %5326 = vmatprep.subr.mxu0 %v2753
        %5327 = vmatpush1.xpose.msra.mxu0 %v2752
        %5328 = vmatprep.subr.mxu0 %v2689
        %5329 = vmatpush1.xpose.msra.mxu0 %v2688
        %5330 = vmatprep.subr.mxu0 %v2625
        %5331 = vmatpush1.xpose.msra.mxu0 %v2624
        %5332 = vmatprep.subr.mxu0 %v2561
        %5333 = vmatpush1.xpose.msra.mxu0 %v2560
        %5334 = vmatprep.subr.mxu0 %v2497
        %5335 = vmatpush1.xpose.msra.mxu0 %v2496
        %5336 = vmatprep.subr.mxu0 %v2433
        %5337 = vmatpush1.xpose.msra.mxu0 %v2432
        %5338 = vmatprep.subr.mxu0 %v2369
        %5339 = vmatpush1.xpose.msra.mxu0 %v2368
        %5340 = vmatprep.subr.mxu0 0.0
        %5341 = vmatpush2.xpose.msra.mxu0 0.0
        %5342 = vmatprep.subr.mxu0 0.0
        %5343 = vmatpush2.xpose.msra.mxu0 0.0
        %5344 = vmatprep.subr.mxu0 0.0
        %5345 = vmatpush2.xpose.msra.mxu0 0.0
        %5346 = vmatprep.subr.mxu0 0.0
        %5347 = vmatpush2.xpose.msra.mxu0 0.0
        %5348 = vmatprep.subr.mxu0 0.0
        %5349 = vmatpush2.xpose.msra.mxu0 0.0
        %5350 = vmatprep.subr.mxu0 0.0
        %5351 = vmatpush2.xpose.msra.mxu0 0.0
        %5352 = vmatprep.subr.mxu0 0.0
        %5353 = vmatpush2.xpose.msra.mxu0 0.0
        %5354 = vmatprep.subr.mxu0 0.0
        %5355 = vmatpush2.xpose.msra.mxu0 0.0
        %5356 = vmatprep.subr.mxu0 0.0
        %5357 = vmatpush2.xpose.msra.mxu0 0.0
        %5358 = vmatprep.subr.mxu0 0.0
        %5359 = vmatpush2.xpose.msra.mxu0 0.0
        %5360 = vmatprep.subr.mxu0 0.0
        %5361 = vmatpush2.xpose.msra.mxu0 0.0
        %5362 = vmatprep.subr.mxu0 0.0
        %5363 = vmatpush2.xpose.msra.mxu0 0.0
        %5364 = vmatprep.subr.mxu0 0.0
        %5365 = vmatpush2.xpose.msra.mxu0 0.0
        %5366 = vmatprep.subr.mxu0 0.0
        %5367 = vmatpush2.xpose.msra.mxu0 0.0
        %5368 = vmatprep.subr.mxu0 0.0
        %5369 = vmatpush2.xpose.msra.mxu0 0.0
        %5370 = vmatprep.subr.mxu0 0.0
        %5371 = vmatpush2.xpose.msra.mxu0 0.0
        %5372 = vmatprep.mubr.f32.mxu0 %v3565
        %5373 = vmatmul.mubr.f32.gmra.mxu0 %v3563
        %v5374 = vpop.f32.mrf.mxu0
        %v5375 = vadd.f32 %v5305, %v5374
        %v5376 = vpop.f32.mrf.mxu0
        %5377 = vdwg.mxu0
        %5378 = vmatprep.subr.mxu0 %v3331
        %5379 = vmatpush1.xpose.msra.mxu0 %v3330
        %5380 = vmatprep.subr.mxu0 %v3267
        %5381 = vmatpush1.xpose.msra.mxu0 %v3266
        %5382 = vmatprep.subr.mxu0 %v3203
        %5383 = vmatpush1.xpose.msra.mxu0 %v3202
        %5384 = vmatprep.subr.mxu0 %v3139
        %5385 = vmatpush1.xpose.msra.mxu0 %v3138
        %5386 = vmatprep.subr.mxu0 %v3075
        %5387 = vmatpush1.xpose.msra.mxu0 %v3074
        %5388 = vmatprep.subr.mxu0 %v3011
        %5389 = vmatpush1.xpose.msra.mxu0 %v3010
        %5390 = vmatprep.subr.mxu0 %v2947
        %5391 = vmatpush1.xpose.msra.mxu0 %v2946
        %5392 = vmatprep.subr.mxu0 %v2883
        %5393 = vmatpush1.xpose.msra.mxu0 %v2882
        %5394 = vmatprep.subr.mxu0 %v2819
        %5395 = vmatpush1.xpose.msra.mxu0 %v2818
        %5396 = vmatprep.subr.mxu0 %v2755
        %5397 = vmatpush1.xpose.msra.mxu0 %v2754
        %5398 = vmatprep.subr.mxu0 %v2691
        %5399 = vmatpush1.xpose.msra.mxu0 %v2690
        %5400 = vmatprep.subr.mxu0 %v2627
        %5401 = vmatpush1.xpose.msra.mxu0 %v2626
        %5402 = vmatprep.subr.mxu0 %v2563
        %5403 = vmatpush1.xpose.msra.mxu0 %v2562
        %5404 = vmatprep.subr.mxu0 %v2499
        %5405 = vmatpush1.xpose.msra.mxu0 %v2498
        %5406 = vmatprep.subr.mxu0 %v2435
        %5407 = vmatpush1.xpose.msra.mxu0 %v2434
        %5408 = vmatprep.subr.mxu0 %v2371
        %5409 = vmatpush1.xpose.msra.mxu0 %v2370
        %5410 = vmatprep.subr.mxu0 0.0
        %5411 = vmatpush2.xpose.msra.mxu0 0.0
        %5412 = vmatprep.subr.mxu0 0.0
        %5413 = vmatpush2.xpose.msra.mxu0 0.0
        %5414 = vmatprep.subr.mxu0 0.0
        %5415 = vmatpush2.xpose.msra.mxu0 0.0
        %5416 = vmatprep.subr.mxu0 0.0
        %5417 = vmatpush2.xpose.msra.mxu0 0.0
        %5418 = vmatprep.subr.mxu0 0.0
        %5419 = vmatpush2.xpose.msra.mxu0 0.0
        %5420 = vmatprep.subr.mxu0 0.0
        %5421 = vmatpush2.xpose.msra.mxu0 0.0
        %5422 = vmatprep.subr.mxu0 0.0
        %5423 = vmatpush2.xpose.msra.mxu0 0.0
        %5424 = vmatprep.subr.mxu0 0.0
        %5425 = vmatpush2.xpose.msra.mxu0 0.0
        %5426 = vmatprep.subr.mxu0 0.0
        %5427 = vmatpush2.xpose.msra.mxu0 0.0
        %5428 = vmatprep.subr.mxu0 0.0
        %5429 = vmatpush2.xpose.msra.mxu0 0.0
        %5430 = vmatprep.subr.mxu0 0.0
        %5431 = vmatpush2.xpose.msra.mxu0 0.0
        %5432 = vmatprep.subr.mxu0 0.0
        %5433 = vmatpush2.xpose.msra.mxu0 0.0
        %5434 = vmatprep.subr.mxu0 0.0
        %5435 = vmatpush2.xpose.msra.mxu0 0.0
        %5436 = vmatprep.subr.mxu0 0.0
        %5437 = vmatpush2.xpose.msra.mxu0 0.0
        %5438 = vmatprep.subr.mxu0 0.0
        %5439 = vmatpush2.xpose.msra.mxu0 0.0
        %5440 = vmatprep.subr.mxu0 0.0
        %5441 = vmatpush2.xpose.msra.mxu0 0.0
        %5442 = vmatprep.mubr.f32.mxu0 %v3581
        %5443 = vmatmul.mubr.f32.gmra.mxu0 %v3573
        %v5444 = vpop.f32.mrf.mxu0
        %v5445 = vadd.f32 %v5375, %v5444
        %v5446 = vpop.f32.mrf.mxu0
        %5447 = vdwg.mxu0
        %5448 = vmatprep.subr.mxu0 %v3333
        %5449 = vmatpush1.xpose.msra.mxu0 %v3332
        %5450 = vmatprep.subr.mxu0 %v3269
        %5451 = vmatpush1.xpose.msra.mxu0 %v3268
        %5452 = vmatprep.subr.mxu0 %v3205
        %5453 = vmatpush1.xpose.msra.mxu0 %v3204
        %5454 = vmatprep.subr.mxu0 %v3141
        %5455 = vmatpush1.xpose.msra.mxu0 %v3140
        %5456 = vmatprep.subr.mxu0 %v3077
        %5457 = vmatpush1.xpose.msra.mxu0 %v3076
        %5458 = vmatprep.subr.mxu0 %v3013
        %5459 = vmatpush1.xpose.msra.mxu0 %v3012
        %5460 = vmatprep.subr.mxu0 %v2949
        %5461 = vmatpush1.xpose.msra.mxu0 %v2948
        %5462 = vmatprep.subr.mxu0 %v2885
        %5463 = vmatpush1.xpose.msra.mxu0 %v2884
        %5464 = vmatprep.subr.mxu0 %v2821
        %5465 = vmatpush1.xpose.msra.mxu0 %v2820
        %5466 = vmatprep.subr.mxu0 %v2757
        %5467 = vmatpush1.xpose.msra.mxu0 %v2756
        %5468 = vmatprep.subr.mxu0 %v2693
        %5469 = vmatpush1.xpose.msra.mxu0 %v2692
        %5470 = vmatprep.subr.mxu0 %v2629
        %5471 = vmatpush1.xpose.msra.mxu0 %v2628
        %5472 = vmatprep.subr.mxu0 %v2565
        %5473 = vmatpush1.xpose.msra.mxu0 %v2564
        %5474 = vmatprep.subr.mxu0 %v2501
        %5475 = vmatpush1.xpose.msra.mxu0 %v2500
        %5476 = vmatprep.subr.mxu0 %v2437
        %5477 = vmatpush1.xpose.msra.mxu0 %v2436
        %5478 = vmatprep.subr.mxu0 %v2373
        %5479 = vmatpush1.xpose.msra.mxu0 %v2372
        %5480 = vmatprep.subr.mxu0 0.0
        %5481 = vmatpush2.xpose.msra.mxu0 0.0
        %5482 = vmatprep.subr.mxu0 0.0
        %5483 = vmatpush2.xpose.msra.mxu0 0.0
        %5484 = vmatprep.subr.mxu0 0.0
        %5485 = vmatpush2.xpose.msra.mxu0 0.0
        %5486 = vmatprep.subr.mxu0 0.0
        %5487 = vmatpush2.xpose.msra.mxu0 0.0
        %5488 = vmatprep.subr.mxu0 0.0
        %5489 = vmatpush2.xpose.msra.mxu0 0.0
        %5490 = vmatprep.subr.mxu0 0.0
        %5491 = vmatpush2.xpose.msra.mxu0 0.0
        %5492 = vmatprep.subr.mxu0 0.0
        %5493 = vmatpush2.xpose.msra.mxu0 0.0
        %5494 = vmatprep.subr.mxu0 0.0
        %5495 = vmatpush2.xpose.msra.mxu0 0.0
        %5496 = vmatprep.subr.mxu0 0.0
        %5497 = vmatpush2.xpose.msra.mxu0 0.0
        %5498 = vmatprep.subr.mxu0 0.0
        %5499 = vmatpush2.xpose.msra.mxu0 0.0
        %5500 = vmatprep.subr.mxu0 0.0
        %5501 = vmatpush2.xpose.msra.mxu0 0.0
        %5502 = vmatprep.subr.mxu0 0.0
        %5503 = vmatpush2.xpose.msra.mxu0 0.0
        %5504 = vmatprep.subr.mxu0 0.0
        %5505 = vmatpush2.xpose.msra.mxu0 0.0
        %5506 = vmatprep.subr.mxu0 0.0
        %5507 = vmatpush2.xpose.msra.mxu0 0.0
        %5508 = vmatprep.subr.mxu0 0.0
        %5509 = vmatpush2.xpose.msra.mxu0 0.0
        %5510 = vmatprep.subr.mxu0 0.0
        %5511 = vmatpush2.xpose.msra.mxu0 0.0
        %5512 = vmatprep.mubr.f32.mxu0 %v3582
        %5513 = vmatmul.mubr.f32.gmra.mxu0 %v3580
        %v5514 = vpop.f32.mrf.mxu0
        %v5515 = vadd.f32 %v5445, %v5514
        %v5516 = vpop.f32.mrf.mxu0
        %5517 = vdwg.mxu0
        %5518 = vmatprep.subr.mxu0 %v3335
        %5519 = vmatpush1.xpose.msra.mxu0 %v3334
        %5520 = vmatprep.subr.mxu0 %v3271
        %5521 = vmatpush1.xpose.msra.mxu0 %v3270
        %5522 = vmatprep.subr.mxu0 %v3207
        %5523 = vmatpush1.xpose.msra.mxu0 %v3206
        %5524 = vmatprep.subr.mxu0 %v3143
        %5525 = vmatpush1.xpose.msra.mxu0 %v3142
        %5526 = vmatprep.subr.mxu0 %v3079
        %5527 = vmatpush1.xpose.msra.mxu0 %v3078
        %5528 = vmatprep.subr.mxu0 %v3015
        %5529 = vmatpush1.xpose.msra.mxu0 %v3014
        %5530 = vmatprep.subr.mxu0 %v2951
        %5531 = vmatpush1.xpose.msra.mxu0 %v2950
        %5532 = vmatprep.subr.mxu0 %v2887
        %5533 = vmatpush1.xpose.msra.mxu0 %v2886
        %5534 = vmatprep.subr.mxu0 %v2823
        %5535 = vmatpush1.xpose.msra.mxu0 %v2822
        %5536 = vmatprep.subr.mxu0 %v2759
        %5537 = vmatpush1.xpose.msra.mxu0 %v2758
        %5538 = vmatprep.subr.mxu0 %v2695
        %5539 = vmatpush1.xpose.msra.mxu0 %v2694
        %5540 = vmatprep.subr.mxu0 %v2631
        %5541 = vmatpush1.xpose.msra.mxu0 %v2630
        %5542 = vmatprep.subr.mxu0 %v2567
        %5543 = vmatpush1.xpose.msra.mxu0 %v2566
        %5544 = vmatprep.subr.mxu0 %v2503
        %5545 = vmatpush1.xpose.msra.mxu0 %v2502
        %5546 = vmatprep.subr.mxu0 %v2439
        %5547 = vmatpush1.xpose.msra.mxu0 %v2438
        %5548 = vmatprep.subr.mxu0 %v2375
        %5549 = vmatpush1.xpose.msra.mxu0 %v2374
        %5550 = vmatprep.subr.mxu0 0.0
        %5551 = vmatpush2.xpose.msra.mxu0 0.0
        %5552 = vmatprep.subr.mxu0 0.0
        %5553 = vmatpush2.xpose.msra.mxu0 0.0
        %5554 = vmatprep.subr.mxu0 0.0
        %5555 = vmatpush2.xpose.msra.mxu0 0.0
        %5556 = vmatprep.subr.mxu0 0.0
        %5557 = vmatpush2.xpose.msra.mxu0 0.0
        %5558 = vmatprep.subr.mxu0 0.0
        %5559 = vmatpush2.xpose.msra.mxu0 0.0
        %5560 = vmatprep.subr.mxu0 0.0
        %5561 = vmatpush2.xpose.msra.mxu0 0.0
        %5562 = vmatprep.subr.mxu0 0.0
        %5563 = vmatpush2.xpose.msra.mxu0 0.0
        %5564 = vmatprep.subr.mxu0 0.0
        %5565 = vmatpush2.xpose.msra.mxu0 0.0
        %5566 = vmatprep.subr.mxu0 0.0
        %5567 = vmatpush2.xpose.msra.mxu0 0.0
        %5568 = vmatprep.subr.mxu0 0.0
        %5569 = vmatpush2.xpose.msra.mxu0 0.0
        %5570 = vmatprep.subr.mxu0 0.0
        %5571 = vmatpush2.xpose.msra.mxu0 0.0
        %5572 = vmatprep.subr.mxu0 0.0
        %5573 = vmatpush2.xpose.msra.mxu0 0.0
        %5574 = vmatprep.subr.mxu0 0.0
        %5575 = vmatpush2.xpose.msra.mxu0 0.0
        %5576 = vmatprep.subr.mxu0 0.0
        %5577 = vmatpush2.xpose.msra.mxu0 0.0
        %5578 = vmatprep.subr.mxu0 0.0
        %5579 = vmatpush2.xpose.msra.mxu0 0.0
        %5580 = vmatprep.subr.mxu0 0.0
        %5581 = vmatpush2.xpose.msra.mxu0 0.0
        %5582 = vmatprep.mubr.f32.mxu0 %v3598
        %5583 = vmatmul.mubr.f32.gmra.mxu0 %v3590
        %v5584 = vpop.f32.mrf.mxu0
        %v5585 = vadd.f32 %v5515, %v5584
        %v5586 = vpop.f32.mrf.mxu0
        %5587 = vdwg.mxu0
        %5588 = vmatprep.subr.mxu0 %v3337
        %5589 = vmatpush1.xpose.msra.mxu0 %v3336
        %5590 = vmatprep.subr.mxu0 %v3273
        %5591 = vmatpush1.xpose.msra.mxu0 %v3272
        %5592 = vmatprep.subr.mxu0 %v3209
        %5593 = vmatpush1.xpose.msra.mxu0 %v3208
        %5594 = vmatprep.subr.mxu0 %v3145
        %5595 = vmatpush1.xpose.msra.mxu0 %v3144
        %5596 = vmatprep.subr.mxu0 %v3081
        %5597 = vmatpush1.xpose.msra.mxu0 %v3080
        %5598 = vmatprep.subr.mxu0 %v3017
        %5599 = vmatpush1.xpose.msra.mxu0 %v3016
        %5600 = vmatprep.subr.mxu0 %v2953
        %5601 = vmatpush1.xpose.msra.mxu0 %v2952
        %5602 = vmatprep.subr.mxu0 %v2889
        %5603 = vmatpush1.xpose.msra.mxu0 %v2888
        %5604 = vmatprep.subr.mxu0 %v2825
        %5605 = vmatpush1.xpose.msra.mxu0 %v2824
        %5606 = vmatprep.subr.mxu0 %v2761
        %5607 = vmatpush1.xpose.msra.mxu0 %v2760
        %5608 = vmatprep.subr.mxu0 %v2697
        %5609 = vmatpush1.xpose.msra.mxu0 %v2696
        %5610 = vmatprep.subr.mxu0 %v2633
        %5611 = vmatpush1.xpose.msra.mxu0 %v2632
        %5612 = vmatprep.subr.mxu0 %v2569
        %5613 = vmatpush1.xpose.msra.mxu0 %v2568
        %5614 = vmatprep.subr.mxu0 %v2505
        %5615 = vmatpush1.xpose.msra.mxu0 %v2504
        %5616 = vmatprep.subr.mxu0 %v2441
        %5617 = vmatpush1.xpose.msra.mxu0 %v2440
        %5618 = vmatprep.subr.mxu0 %v2377
        %5619 = vmatpush1.xpose.msra.mxu0 %v2376
        %5620 = vmatprep.subr.mxu0 0.0
        %5621 = vmatpush2.xpose.msra.mxu0 0.0
        %5622 = vmatprep.subr.mxu0 0.0
        %5623 = vmatpush2.xpose.msra.mxu0 0.0
        %5624 = vmatprep.subr.mxu0 0.0
        %5625 = vmatpush2.xpose.msra.mxu0 0.0
        %5626 = vmatprep.subr.mxu0 0.0
        %5627 = vmatpush2.xpose.msra.mxu0 0.0
        %5628 = vmatprep.subr.mxu0 0.0
        %5629 = vmatpush2.xpose.msra.mxu0 0.0
        %5630 = vmatprep.subr.mxu0 0.0
        %5631 = vmatpush2.xpose.msra.mxu0 0.0
        %5632 = vmatprep.subr.mxu0 0.0
        %5633 = vmatpush2.xpose.msra.mxu0 0.0
        %5634 = vmatprep.subr.mxu0 0.0
        %5635 = vmatpush2.xpose.msra.mxu0 0.0
        %5636 = vmatprep.subr.mxu0 0.0
        %5637 = vmatpush2.xpose.msra.mxu0 0.0
        %5638 = vmatprep.subr.mxu0 0.0
        %5639 = vmatpush2.xpose.msra.mxu0 0.0
        %5640 = vmatprep.subr.mxu0 0.0
        %5641 = vmatpush2.xpose.msra.mxu0 0.0
        %5642 = vmatprep.subr.mxu0 0.0
        %5643 = vmatpush2.xpose.msra.mxu0 0.0
        %5644 = vmatprep.subr.mxu0 0.0
        %5645 = vmatpush2.xpose.msra.mxu0 0.0
        %5646 = vmatprep.subr.mxu0 0.0
        %5647 = vmatpush2.xpose.msra.mxu0 0.0
        %5648 = vmatprep.subr.mxu0 0.0
        %5649 = vmatpush2.xpose.msra.mxu0 0.0
        %5650 = vmatprep.subr.mxu0 0.0
        %5651 = vmatpush2.xpose.msra.mxu0 0.0
        %5652 = vmatprep.mubr.f32.mxu0 %v3599
        %5653 = vmatmul.mubr.f32.gmra.mxu0 %v3597
        %v5654 = vpop.f32.mrf.mxu0
        %v5655 = vadd.f32 %v5585, %v5654
        %v5656 = vpop.f32.mrf.mxu0
        %5657 = vdwg.mxu0
        %5658 = vmatprep.subr.mxu0 %v3339
        %5659 = vmatpush1.xpose.msra.mxu0 %v3338
        %5660 = vmatprep.subr.mxu0 %v3275
        %5661 = vmatpush1.xpose.msra.mxu0 %v3274
        %5662 = vmatprep.subr.mxu0 %v3211
        %5663 = vmatpush1.xpose.msra.mxu0 %v3210
        %5664 = vmatprep.subr.mxu0 %v3147
        %5665 = vmatpush1.xpose.msra.mxu0 %v3146
        %5666 = vmatprep.subr.mxu0 %v3083
        %5667 = vmatpush1.xpose.msra.mxu0 %v3082
        %5668 = vmatprep.subr.mxu0 %v3019
        %5669 = vmatpush1.xpose.msra.mxu0 %v3018
        %5670 = vmatprep.subr.mxu0 %v2955
        %5671 = vmatpush1.xpose.msra.mxu0 %v2954
        %5672 = vmatprep.subr.mxu0 %v2891
        %5673 = vmatpush1.xpose.msra.mxu0 %v2890
        %5674 = vmatprep.subr.mxu0 %v2827
        %5675 = vmatpush1.xpose.msra.mxu0 %v2826
        %5676 = vmatprep.subr.mxu0 %v2763
        %5677 = vmatpush1.xpose.msra.mxu0 %v2762
        %5678 = vmatprep.subr.mxu0 %v2699
        %5679 = vmatpush1.xpose.msra.mxu0 %v2698
        %5680 = vmatprep.subr.mxu0 %v2635
        %5681 = vmatpush1.xpose.msra.mxu0 %v2634
        %5682 = vmatprep.subr.mxu0 %v2571
        %5683 = vmatpush1.xpose.msra.mxu0 %v2570
        %5684 = vmatprep.subr.mxu0 %v2507
        %5685 = vmatpush1.xpose.msra.mxu0 %v2506
        %5686 = vmatprep.subr.mxu0 %v2443
        %5687 = vmatpush1.xpose.msra.mxu0 %v2442
        %5688 = vmatprep.subr.mxu0 %v2379
        %5689 = vmatpush1.xpose.msra.mxu0 %v2378
        %5690 = vmatprep.subr.mxu0 0.0
        %5691 = vmatpush2.xpose.msra.mxu0 0.0
        %5692 = vmatprep.subr.mxu0 0.0
        %5693 = vmatpush2.xpose.msra.mxu0 0.0
        %5694 = vmatprep.subr.mxu0 0.0
        %5695 = vmatpush2.xpose.msra.mxu0 0.0
        %5696 = vmatprep.subr.mxu0 0.0
        %5697 = vmatpush2.xpose.msra.mxu0 0.0
        %5698 = vmatprep.subr.mxu0 0.0
        %5699 = vmatpush2.xpose.msra.mxu0 0.0
        %5700 = vmatprep.subr.mxu0 0.0
        %5701 = vmatpush2.xpose.msra.mxu0 0.0
        %5702 = vmatprep.subr.mxu0 0.0
        %5703 = vmatpush2.xpose.msra.mxu0 0.0
        %5704 = vmatprep.subr.mxu0 0.0
        %5705 = vmatpush2.xpose.msra.mxu0 0.0
        %5706 = vmatprep.subr.mxu0 0.0
        %5707 = vmatpush2.xpose.msra.mxu0 0.0
        %5708 = vmatprep.subr.mxu0 0.0
        %5709 = vmatpush2.xpose.msra.mxu0 0.0
        %5710 = vmatprep.subr.mxu0 0.0
        %5711 = vmatpush2.xpose.msra.mxu0 0.0
        %5712 = vmatprep.subr.mxu0 0.0
        %5713 = vmatpush2.xpose.msra.mxu0 0.0
        %5714 = vmatprep.subr.mxu0 0.0
        %5715 = vmatpush2.xpose.msra.mxu0 0.0
        %5716 = vmatprep.subr.mxu0 0.0
        %5717 = vmatpush2.xpose.msra.mxu0 0.0
        %5718 = vmatprep.subr.mxu0 0.0
        %5719 = vmatpush2.xpose.msra.mxu0 0.0
        %5720 = vmatprep.subr.mxu0 0.0
        %5721 = vmatpush2.xpose.msra.mxu0 0.0
        %5722 = vmatprep.mubr.f32.mxu0 %v3615
        %5723 = vmatmul.mubr.f32.gmra.mxu0 %v3607
        %v5724 = vpop.f32.mrf.mxu0
        %v5725 = vadd.f32 %v5655, %v5724
        %v5726 = vpop.f32.mrf.mxu0
        %5727 = vdwg.mxu0
        %5728 = vmatprep.subr.mxu0 %v3341
        %5729 = vmatpush1.xpose.msra.mxu0 %v3340
        %5730 = vmatprep.subr.mxu0 %v3277
        %5731 = vmatpush1.xpose.msra.mxu0 %v3276
        %5732 = vmatprep.subr.mxu0 %v3213
        %5733 = vmatpush1.xpose.msra.mxu0 %v3212
        %5734 = vmatprep.subr.mxu0 %v3149
        %5735 = vmatpush1.xpose.msra.mxu0 %v3148
        %5736 = vmatprep.subr.mxu0 %v3085
        %5737 = vmatpush1.xpose.msra.mxu0 %v3084
        %5738 = vmatprep.subr.mxu0 %v3021
        %5739 = vmatpush1.xpose.msra.mxu0 %v3020
        %5740 = vmatprep.subr.mxu0 %v2957
        %5741 = vmatpush1.xpose.msra.mxu0 %v2956
        %5742 = vmatprep.subr.mxu0 %v2893
        %5743 = vmatpush1.xpose.msra.mxu0 %v2892
        %5744 = vmatprep.subr.mxu0 %v2829
        %5745 = vmatpush1.xpose.msra.mxu0 %v2828
        %5746 = vmatprep.subr.mxu0 %v2765
        %5747 = vmatpush1.xpose.msra.mxu0 %v2764
        %5748 = vmatprep.subr.mxu0 %v2701
        %5749 = vmatpush1.xpose.msra.mxu0 %v2700
        %5750 = vmatprep.subr.mxu0 %v2637
        %5751 = vmatpush1.xpose.msra.mxu0 %v2636
        %5752 = vmatprep.subr.mxu0 %v2573
        %5753 = vmatpush1.xpose.msra.mxu0 %v2572
        %5754 = vmatprep.subr.mxu0 %v2509
        %5755 = vmatpush1.xpose.msra.mxu0 %v2508
        %5756 = vmatprep.subr.mxu0 %v2445
        %5757 = vmatpush1.xpose.msra.mxu0 %v2444
        %5758 = vmatprep.subr.mxu0 %v2381
        %5759 = vmatpush1.xpose.msra.mxu0 %v2380
        %5760 = vmatprep.subr.mxu0 0.0
        %5761 = vmatpush2.xpose.msra.mxu0 0.0
        %5762 = vmatprep.subr.mxu0 0.0
        %5763 = vmatpush2.xpose.msra.mxu0 0.0
        %5764 = vmatprep.subr.mxu0 0.0
        %5765 = vmatpush2.xpose.msra.mxu0 0.0
        %5766 = vmatprep.subr.mxu0 0.0
        %5767 = vmatpush2.xpose.msra.mxu0 0.0
        %5768 = vmatprep.subr.mxu0 0.0
        %5769 = vmatpush2.xpose.msra.mxu0 0.0
        %5770 = vmatprep.subr.mxu0 0.0
        %5771 = vmatpush2.xpose.msra.mxu0 0.0
        %5772 = vmatprep.subr.mxu0 0.0
        %5773 = vmatpush2.xpose.msra.mxu0 0.0
        %5774 = vmatprep.subr.mxu0 0.0
        %5775 = vmatpush2.xpose.msra.mxu0 0.0
        %5776 = vmatprep.subr.mxu0 0.0
        %5777 = vmatpush2.xpose.msra.mxu0 0.0
        %5778 = vmatprep.subr.mxu0 0.0
        %5779 = vmatpush2.xpose.msra.mxu0 0.0
        %5780 = vmatprep.subr.mxu0 0.0
        %5781 = vmatpush2.xpose.msra.mxu0 0.0
        %5782 = vmatprep.subr.mxu0 0.0
        %5783 = vmatpush2.xpose.msra.mxu0 0.0
        %5784 = vmatprep.subr.mxu0 0.0
        %5785 = vmatpush2.xpose.msra.mxu0 0.0
        %5786 = vmatprep.subr.mxu0 0.0
        %5787 = vmatpush2.xpose.msra.mxu0 0.0
        %5788 = vmatprep.subr.mxu0 0.0
        %5789 = vmatpush2.xpose.msra.mxu0 0.0
        %5790 = vmatprep.subr.mxu0 0.0
        %5791 = vmatpush2.xpose.msra.mxu0 0.0
        %5792 = vmatprep.mubr.f32.mxu0 %v3616
        %5793 = vmatmul.mubr.f32.gmra.mxu0 %v3614
        %v5794 = vpop.f32.mrf.mxu0
        %v5795 = vadd.f32 %v5725, %v5794
        %v5796 = vpop.f32.mrf.mxu0
        %5797 = vdwg.mxu0
        %5798 = vmatprep.subr.mxu0 %v3343
        %5799 = vmatpush1.xpose.msra.mxu0 %v3342
        %5800 = vmatprep.subr.mxu0 %v3279
        %5801 = vmatpush1.xpose.msra.mxu0 %v3278
        %5802 = vmatprep.subr.mxu0 %v3215
        %5803 = vmatpush1.xpose.msra.mxu0 %v3214
        %5804 = vmatprep.subr.mxu0 %v3151
        %5805 = vmatpush1.xpose.msra.mxu0 %v3150
        %5806 = vmatprep.subr.mxu0 %v3087
        %5807 = vmatpush1.xpose.msra.mxu0 %v3086
        %5808 = vmatprep.subr.mxu0 %v3023
        %5809 = vmatpush1.xpose.msra.mxu0 %v3022
        %5810 = vmatprep.subr.mxu0 %v2959
        %5811 = vmatpush1.xpose.msra.mxu0 %v2958
        %5812 = vmatprep.subr.mxu0 %v2895
        %5813 = vmatpush1.xpose.msra.mxu0 %v2894
        %5814 = vmatprep.subr.mxu0 %v2831
        %5815 = vmatpush1.xpose.msra.mxu0 %v2830
        %5816 = vmatprep.subr.mxu0 %v2767
        %5817 = vmatpush1.xpose.msra.mxu0 %v2766
        %5818 = vmatprep.subr.mxu0 %v2703
        %5819 = vmatpush1.xpose.msra.mxu0 %v2702
        %5820 = vmatprep.subr.mxu0 %v2639
        %5821 = vmatpush1.xpose.msra.mxu0 %v2638
        %5822 = vmatprep.subr.mxu0 %v2575
        %5823 = vmatpush1.xpose.msra.mxu0 %v2574
        %5824 = vmatprep.subr.mxu0 %v2511
        %5825 = vmatpush1.xpose.msra.mxu0 %v2510
        %5826 = vmatprep.subr.mxu0 %v2447
        %5827 = vmatpush1.xpose.msra.mxu0 %v2446
        %5828 = vmatprep.subr.mxu0 %v2383
        %5829 = vmatpush1.xpose.msra.mxu0 %v2382
        %5830 = vmatprep.subr.mxu0 0.0
        %5831 = vmatpush2.xpose.msra.mxu0 0.0
        %5832 = vmatprep.subr.mxu0 0.0
        %5833 = vmatpush2.xpose.msra.mxu0 0.0
        %5834 = vmatprep.subr.mxu0 0.0
        %5835 = vmatpush2.xpose.msra.mxu0 0.0
        %5836 = vmatprep.subr.mxu0 0.0
        %5837 = vmatpush2.xpose.msra.mxu0 0.0
        %5838 = vmatprep.subr.mxu0 0.0
        %5839 = vmatpush2.xpose.msra.mxu0 0.0
        %5840 = vmatprep.subr.mxu0 0.0
        %5841 = vmatpush2.xpose.msra.mxu0 0.0
        %5842 = vmatprep.subr.mxu0 0.0
        %5843 = vmatpush2.xpose.msra.mxu0 0.0
        %5844 = vmatprep.subr.mxu0 0.0
        %5845 = vmatpush2.xpose.msra.mxu0 0.0
        %5846 = vmatprep.subr.mxu0 0.0
        %5847 = vmatpush2.xpose.msra.mxu0 0.0
        %5848 = vmatprep.subr.mxu0 0.0
        %5849 = vmatpush2.xpose.msra.mxu0 0.0
        %5850 = vmatprep.subr.mxu0 0.0
        %5851 = vmatpush2.xpose.msra.mxu0 0.0
        %5852 = vmatprep.subr.mxu0 0.0
        %5853 = vmatpush2.xpose.msra.mxu0 0.0
        %5854 = vmatprep.subr.mxu0 0.0
        %5855 = vmatpush2.xpose.msra.mxu0 0.0
        %5856 = vmatprep.subr.mxu0 0.0
        %5857 = vmatpush2.xpose.msra.mxu0 0.0
        %5858 = vmatprep.subr.mxu0 0.0
        %5859 = vmatpush2.xpose.msra.mxu0 0.0
        %5860 = vmatprep.subr.mxu0 0.0
        %5861 = vmatpush2.xpose.msra.mxu0 0.0
        %5862 = vmatprep.mubr.f32.mxu0 %v3632
        %5863 = vmatmul.mubr.f32.gmra.mxu0 %v3624
        %v5864 = vpop.f32.mrf.mxu0
        %v5865 = vadd.f32 %v5795, %v5864
        %v5866 = vpop.f32.mrf.mxu0
        %5867 = vdwg.mxu0
        %5868 = vmatprep.subr.mxu0 %v3345
        %5869 = vmatpush1.xpose.msra.mxu0 %v3344
        %5870 = vmatprep.subr.mxu0 %v3281
        %5871 = vmatpush1.xpose.msra.mxu0 %v3280
        %5872 = vmatprep.subr.mxu0 %v3217
        %5873 = vmatpush1.xpose.msra.mxu0 %v3216
        %5874 = vmatprep.subr.mxu0 %v3153
        %5875 = vmatpush1.xpose.msra.mxu0 %v3152
        %5876 = vmatprep.subr.mxu0 %v3089
        %5877 = vmatpush1.xpose.msra.mxu0 %v3088
        %5878 = vmatprep.subr.mxu0 %v3025
        %5879 = vmatpush1.xpose.msra.mxu0 %v3024
        %5880 = vmatprep.subr.mxu0 %v2961
        %5881 = vmatpush1.xpose.msra.mxu0 %v2960
        %5882 = vmatprep.subr.mxu0 %v2897
        %5883 = vmatpush1.xpose.msra.mxu0 %v2896
        %5884 = vmatprep.subr.mxu0 %v2833
        %5885 = vmatpush1.xpose.msra.mxu0 %v2832
        %5886 = vmatprep.subr.mxu0 %v2769
        %5887 = vmatpush1.xpose.msra.mxu0 %v2768
        %5888 = vmatprep.subr.mxu0 %v2705
        %5889 = vmatpush1.xpose.msra.mxu0 %v2704
        %5890 = vmatprep.subr.mxu0 %v2641
        %5891 = vmatpush1.xpose.msra.mxu0 %v2640
        %5892 = vmatprep.subr.mxu0 %v2577
        %5893 = vmatpush1.xpose.msra.mxu0 %v2576
        %5894 = vmatprep.subr.mxu0 %v2513
        %5895 = vmatpush1.xpose.msra.mxu0 %v2512
        %5896 = vmatprep.subr.mxu0 %v2449
        %5897 = vmatpush1.xpose.msra.mxu0 %v2448
        %5898 = vmatprep.subr.mxu0 %v2385
        %5899 = vmatpush1.xpose.msra.mxu0 %v2384
        %5900 = vmatprep.subr.mxu0 0.0
        %5901 = vmatpush2.xpose.msra.mxu0 0.0
        %5902 = vmatprep.subr.mxu0 0.0
        %5903 = vmatpush2.xpose.msra.mxu0 0.0
        %5904 = vmatprep.subr.mxu0 0.0
        %5905 = vmatpush2.xpose.msra.mxu0 0.0
        %5906 = vmatprep.subr.mxu0 0.0
        %5907 = vmatpush2.xpose.msra.mxu0 0.0
        %5908 = vmatprep.subr.mxu0 0.0
        %5909 = vmatpush2.xpose.msra.mxu0 0.0
        %5910 = vmatprep.subr.mxu0 0.0
        %5911 = vmatpush2.xpose.msra.mxu0 0.0
        %5912 = vmatprep.subr.mxu0 0.0
        %5913 = vmatpush2.xpose.msra.mxu0 0.0
        %5914 = vmatprep.subr.mxu0 0.0
        %5915 = vmatpush2.xpose.msra.mxu0 0.0
        %5916 = vmatprep.subr.mxu0 0.0
        %5917 = vmatpush2.xpose.msra.mxu0 0.0
        %5918 = vmatprep.subr.mxu0 0.0
        %5919 = vmatpush2.xpose.msra.mxu0 0.0
        %5920 = vmatprep.subr.mxu0 0.0
        %5921 = vmatpush2.xpose.msra.mxu0 0.0
        %5922 = vmatprep.subr.mxu0 0.0
        %5923 = vmatpush2.xpose.msra.mxu0 0.0
        %5924 = vmatprep.subr.mxu0 0.0
        %5925 = vmatpush2.xpose.msra.mxu0 0.0
        %5926 = vmatprep.subr.mxu0 0.0
        %5927 = vmatpush2.xpose.msra.mxu0 0.0
        %5928 = vmatprep.subr.mxu0 0.0
        %5929 = vmatpush2.xpose.msra.mxu0 0.0
        %5930 = vmatprep.subr.mxu0 0.0
        %5931 = vmatpush2.xpose.msra.mxu0 0.0
        %5932 = vmatprep.mubr.f32.mxu0 %v3633
        %5933 = vmatmul.mubr.f32.gmra.mxu0 %v3631
        %v5934 = vpop.f32.mrf.mxu0
        %v5935 = vadd.f32 %v5865, %v5934
        %v5936 = vpop.f32.mrf.mxu0
        %5937 = vdwg.mxu0
        %v5938 = vadd.f32 %v2305, %v5935
        %5939 = vst [vmem:[#allocation2] sm:$0x3] %v5938
        %p5940 = scmp.eq.s32.totalorder %s17, 1
        // Predicated region
        $region68: #{anime_cnn_forward.5} parent=58 // pred_check
          %p5941 = pneg %p5940
        $region69: #{anime_cnn_forward.5} parent=58 // pred_check_branch
          %5943 = sbr.rel (%p5941) target = $region71
        $region70: #{anime_cnn_forward.5} parent=58 // pred_region
          %v5944 = vld [vmem:[#allocation2] sm:$0x3]
          %v5945 = vld [vmem:[%s2] sm:$0x1]
          %v5947 = vlaneseq
          %v5948 = vshrl.u32 %v5947, 7
          %v5949 = vsub.s32 0, %v5948
          %v5950 = vrot.slane %v5945, %v5949
          %v5952 = vadd.f32 %v5944, %v5950
          %vm5953 = vcmp.gt.f32.partialorder %v5952, 0.0
          %v5954 = vmul.f32 %v5952, 0.01
          %v5955 = vsel %vm5953, %v5952, %v5954
          %v5956 = vld [vmem:[%s3] sm:$0x3]
          %v5957 = vld [vmem:[%s4] sm:$0x1]
          %v5959 = vlaneseq
          %v5960 = vshrl.u32 %v5959, 7
          %v5961 = vsub.s32 0, %v5960
          %v5962 = vrot.slane %v5957, %v5961
          %5964 = vmatprep.subr.mxu0 0.0
          %5965 = vmatpush1.xpose.msra.mxu0 0.0
          %5966 = vmatprep.subr.mxu0 0.0
          %5967 = vmatpush1.xpose.msra.mxu0 0.0
          %5968 = vmatprep.subr.mxu0 0.0
          %5969 = vmatpush1.xpose.msra.mxu0 0.0
          %5970 = vmatprep.subr.mxu0 0.0
          %5971 = vmatpush1.xpose.msra.mxu0 0.0
          %5972 = vmatprep.subr.mxu0 0.0
          %5973 = vmatpush1.xpose.msra.mxu0 0.0
          %5974 = vmatprep.subr.mxu0 0.0
          %5975 = vmatpush1.xpose.msra.mxu0 0.0
          %5976 = vmatprep.subr.mxu0 0.0
          %5977 = vmatpush1.xpose.msra.mxu0 0.0
          %5978 = vmatprep.subr.mxu0 0.0
          %5979 = vmatpush1.xpose.msra.mxu0 0.0
          %5980 = vmatprep.subr.mxu0 0.0
          %5981 = vmatpush1.xpose.msra.mxu0 0.0
          %5982 = vmatprep.subr.mxu0 0.0
          %5983 = vmatpush1.xpose.msra.mxu0 0.0
          %5984 = vmatprep.subr.mxu0 0.0
          %5985 = vmatpush1.xpose.msra.mxu0 0.0
          %5986 = vmatprep.subr.mxu0 0.0
          %5987 = vmatpush1.xpose.msra.mxu0 0.0
          %5988 = vmatprep.subr.mxu0 0.0
          %5989 = vmatpush1.xpose.msra.mxu0 0.0
          %5990 = vmatprep.subr.mxu0 0.0
          %5991 = vmatpush1.xpose.msra.mxu0 0.0
          %5992 = vmatprep.subr.mxu0 0.0
          %5993 = vmatpush1.xpose.msra.mxu0 0.0
          %5994 = vmatprep.subr.mxu0 0.0
          %5995 = vmatpush1.xpose.msra.mxu0 %v5956
          %5996 = vmatprep.subr.mxu0 0.0
          %5997 = vmatpush2.xpose.msra.mxu0 0.0
          %5998 = vmatprep.subr.mxu0 0.0
          %5999 = vmatpush2.xpose.msra.mxu0 0.0
          %6000 = vmatprep.subr.mxu0 0.0
          %6001 = vmatpush2.xpose.msra.mxu0 0.0
          %6002 = vmatprep.subr.mxu0 0.0
          %6003 = vmatpush2.xpose.msra.mxu0 0.0
          %6004 = vmatprep.subr.mxu0 0.0
          %6005 = vmatpush2.xpose.msra.mxu0 0.0
          %6006 = vmatprep.subr.mxu0 0.0
          %6007 = vmatpush2.xpose.msra.mxu0 0.0
          %6008 = vmatprep.subr.mxu0 0.0
          %6009 = vmatpush2.xpose.msra.mxu0 0.0
          %6010 = vmatprep.subr.mxu0 0.0
          %6011 = vmatpush2.xpose.msra.mxu0 0.0
          %6012 = vmatprep.subr.mxu0 0.0
          %6013 = vmatpush2.xpose.msra.mxu0 0.0
          %6014 = vmatprep.subr.mxu0 0.0
          %6015 = vmatpush2.xpose.msra.mxu0 0.0
          %6016 = vmatprep.subr.mxu0 0.0
          %6017 = vmatpush2.xpose.msra.mxu0 0.0
          %6018 = vmatprep.subr.mxu0 0.0
          %6019 = vmatpush2.xpose.msra.mxu0 0.0
          %6020 = vmatprep.subr.mxu0 0.0
          %6021 = vmatpush2.xpose.msra.mxu0 0.0
          %6022 = vmatprep.subr.mxu0 0.0
          %6023 = vmatpush2.xpose.msra.mxu0 0.0
          %6024 = vmatprep.subr.mxu0 0.0
          %6025 = vmatpush2.xpose.msra.mxu0 0.0
          %6026 = vmatprep.subr.mxu0 0.0
          %6027 = vmatpush2.xpose.msra.mxu0 0.0
          %6028 = vmatprep.mubr.f32.mxu0 0.0
          %6029 = vmatmul.mubr.f32.gmra.mxu0 %v5955
          %v6030 = vpop.f32.mrf.mxu0
          %v6031 = vadd.f32 %v5962, %v6030
          %v6032 = vpop.f32.mrf.mxu0
          %6033 = vdwg.mxu0
          %vm6034 = vcmask 9216
          %6035 = vst.msk [vmem:[#allocation4] sm:$0x3] %vm6034, %v6031
        $region71: #{anime_cnn_forward.5} parent=58 // pred_fallthru
          _
        // Predicated region
        $region72: #{anime_cnn_forward.5} parent=58 // pred_check
          %p6036 = pneg %p145
        $region73: #{anime_cnn_forward.5} parent=58 // pred_check_branch
          %6038 = sbr.rel (%p6036) target = $region75
        $region74: #{anime_cnn_forward.5} parent=58 // pred_region
          %s6040 = ssub.s32 32, 32
          %6041 = vsyncadd [#allocation5], %s6040
          %s6043 = sshll.u32 [#allocation4], 4
          %s6044 = int_to_ptr.vmem [resolvable:$true] %s6043
          %6046 = dma.vmem_to_hbm [thread:$0]  %s6044, 32, %s5, [#allocation5]
        $region75: #{anime_cnn_forward.5} parent=58 // pred_fallthru
          _
        // Predicated region
        $region76: #{anime_cnn_forward.5} parent=58 // pred_check
          %p6047 = pneg %p145
        $region77: #{anime_cnn_forward.5} parent=58 // pred_check_branch
          %6049 = sbr.rel (%p6047) target = $region79
        $region78: #{anime_cnn_forward.5} parent=58 // pred_region
          %6050 = dma.done [#allocation5], 32
        $region79: #{anime_cnn_forward.5} parent=58 // pred_fallthru
          _
      $region59: #{anime_cnn_forward.5} parent=5 // pred_fallthru
        _
      %p6051 = scmp.le.s32.totalorder 2, %s12
      // Predicated region
      $region80: #{anime_cnn_forward.5} parent=5 // pred_check
        %p6052 = pneg %p6051
      $region81: #{anime_cnn_forward.5} parent=5 // pred_check_branch
        %6054 = sbr.rel (%p6052) target = $region83
      $region82: #{anime_cnn_forward.5} parent=5 // pred_region
        %s6055 = ssub.s32 %s12, 2
      $region83: #{anime_cnn_forward.5} parent=5 // pred_fallthru
        _
    $region6: #{anime_cnn_forward.5} parent=1 // loop_footer
      %s16 = sadd.s32 1, %s12
    $region7: #{anime_cnn_forward.5} parent=1 // loop_footer_branch
      %11 = sbr.rel target = $region3
    $region8: #{anime_cnn_forward.5} parent=1 // loop_exit
      _
    %6056 = vsyncpa [#allocation5], 1
    %s6057 = scalar_lea.sflag [#allocation5], 1
    %6058 = vsyncpa %s6057, 1

</llo_original>
